<compile_context>
chip_gen: v7x
topology: tpu7x:2x2x1
jax: 0.10.0
libtpu: 0.0.40
codegen_flags: <defaults>
</compile_context>

<pallas_src>
import math
import numpy as np

import jax
import jax.numpy as jnp
from jax.experimental import pallas as pl
from jax.experimental.pallas import tpu as pltpu

# Problem sizes (BasicBlock(inplanes=32, planes=32, num_group=32), stride=1, no downsample)
N = 2
H = 16
W = 16
CIN = 32
COUT = 32
G = 32                      # num_group (PyTorch BasicBlock default)
CPG = COUT // G             # channels per group (== 1 here)
EPS = 1e-5                  # nn.GroupNorm default eps

assert CIN == COUT, "identity residual / shared padded scratch requires CIN == COUT"
assert COUT % G == 0

LANES = W * CIN             # 512 interior lanes (4 x 128, lane-aligned)
PADL = (W + 2) * CIN        # 576 = interior + 2 pad column blocks (at lanes [512, 576))
HP = H + 2                  # padded rows per image
ROWS = N * H                # stacked output rows (both images along M)
PROWS = N * HP              # stacked padded rows
MROWS = PROWS - 2           # contiguous LHS rows per ky band matmul (junk rows 16..17 ignored)


def _gn_rows(y, pool, bcast, gamma_c, beta_c, *, relu):
    """GroupNorm (+ optional ReLU) on one image's lane-dense (H, W*C) slab.

    y: (H, W*C) f32; pool: (W*C, C) 0/1 f32; bcast: (C, W*C) 0/1 f32 (== pool^T);
    gamma_c / beta_c: (1, C) f32.
    """
    n = float(H * W * CPG)
    # One MXU push for both sum and sum-of-squares pooling (avoids XLU cross-lane reshapes).
    stacked = jnp.concatenate([y, y * y], axis=0)                        # (2H, W*C)
    stats = jnp.dot(stacked, pool, preferred_element_type=jnp.float32)   # (2H, C)
    sum_c = jnp.sum(stats[0:H], axis=0, keepdims=True)                   # (1, C)
    sumsq_c = jnp.sum(stats[H:2 * H], axis=0, keepdims=True)             # (1, C)
    if CPG > 1:
        # General GroupNorm path (kept behind a static check; not traced for this config).
        sum_g = jnp.sum(sum_c.reshape(G, CPG), axis=1, keepdims=True)
        sumsq_g = jnp.sum(sumsq_c.reshape(G, CPG), axis=1, keepdims=True)
        sum_c = jnp.broadcast_to(sum_g, (G, CPG)).reshape(1, COUT)
        sumsq_c = jnp.broadcast_to(sumsq_g, (G, CPG)).reshape(1, COUT)
    mean_c = sum_c / n
    var_c = sumsq_c / n - mean_c * mean_c
    scale_c = jax.lax.rsqrt(var_c + EPS) * gamma_c                       # (1, C)
    shift_c = beta_c - mean_c * scale_c                                  # (1, C)
    # Lane-replicate (1, C) -> (1, W*C) on the MXU (exact 0/1 matrix) instead of jnp.tile.
    ss = jnp.dot(jnp.concatenate([scale_c, shift_c], axis=0), bcast,
                 preferred_element_type=jnp.float32)                     # (2, W*C)
    out = y * ss[0:1, :] + ss[1:2, :]
    if relu:
        out = jnp.maximum(out, 0.0)
    return out


def basic_block_kernel(x_ref, b1_ref, g1_ref, be1_ref, b2_hbm, g2_ref, be2_ref,
                       pool_ref, bcast_ref, out_ref, pad_scr, b2_vmem, b2_sem):
    # x_ref:    (N*H, W*CIN)              lane-dense NHWC rows, both images stacked, f32
    # b1_ref:   (3, (W+2)*CIN, W*COUT)    bf16 banded block-Toeplitz conv1 weights (VMEM)
    # b2_hbm:   same shape                conv2 weights, raw HBM ref (manual overlapped DMA)
    # g*/be*:   (1, COUT)                 GroupNorm affine params, f32
    # pool_ref: (W*COUT, COUT)            constant 0/1 channel-pooling matrix, f32
    # bcast_ref:(COUT, W*COUT)            constant 0/1 lane-broadcast matrix (pool^T), f32
    # out_ref:  (N*H, W*COUT)             lane-dense output rows
    # pad_scr:  VMEM (N*(H+2), (W+2)*CIN) f32 zero-padded activation slab, reused by both convs
    # b2_vmem:  VMEM landing buffer for the conv2 weights
    # b2_sem:   DMA semaphore

    # Kick off the conv2 weight DMA immediately; it overlaps conv1 + GN1.
    b2_copy = pltpu.make_async_copy(b2_hbm, b2_vmem, b2_sem)
    b2_copy.start()

    # Zero only the pad border; interiors are fully overwritten below.  Column layout
    # (after the host-side band-row permutation):
    #   lanes [0, 512)   = interior activations (lane-aligned stores)
    #   lanes [512, 576) = left / right zero-pad columns
    pad_scr[:, LANES:PADL] = jnp.zeros((PROWS, PADL - LANES), jnp.float32)
    for b in range(N):
        pad_scr[b * HP:b * HP + 1, 0:LANES] = jnp.zeros((1, LANES), jnp.float32)
        pad_scr[b * HP + H + 1:b * HP + H + 2, 0:LANES] = jnp.zeros((1, LANES), jnp.float32)

    pool = pool_ref[...]
    bcast = bcast_ref[...]

    def conv3x3(b_ref):
        # Banded block-Toeplitz conv over the stacked slab:
        #   out[b*HP + h, :] = sum_ky pad[b*HP + h + ky, :] @ B[ky]
        # One bf16 cast of the whole padded slab per conv; per-ky windows are value slices.
        pad_bf = pad_scr[...].astype(jnp.bfloat16)                       # (PROWS, PADL)
        acc = jnp.zeros((MROWS, LANES), jnp.float32)
        for ky in range(3):
            acc = acc + jnp.dot(pad_bf[ky:ky + MROWS, :], b_ref[ky],
                                preferred_element_type=jnp.float32)
        return acc  # rows 16..17 (between the stacked images) are junk and ignored

    # conv1 -> GroupNorm1 -> ReLU (per-image GN), written back into the padded slab.
    for b in range(N):
        pad_scr[b * HP + 1:b * HP + 1 + H, 0:LANES] = x_ref[b * H:(b + 1) * H, :]
    acc1 = conv3x3(b1_ref)
    for b in range(N):
        y = _gn_rows(acc1[b * HP:b * HP + H, :], pool, bcast,
                     g1_ref[...], be1_ref[...], relu=True)
        pad_scr[b * HP + 1:b * HP + 1 + H, 0:LANES] = y

    # conv2 -> GroupNorm2 -> +residual -> ReLU  (border of the slab is still zero).
    b2_copy.wait()
    acc2 = conv3x3(b2_vmem)
    for b in range(N):
        y = _gn_rows(acc2[b * HP:b * HP + H, :], pool, bcast,
                     g2_ref[...], be2_ref[...], relu=False)
        out_ref[b * H:(b + 1) * H, :] = jnp.maximum(
            y + x_ref[b * H:(b + 1) * H, :], 0.0)


def _toeplitz_bands(w_oihw):
    """OIHW (Cout, Cin, 3, 3) conv weights -> (3, (W+2)*Cin, W*Cout) banded block-Toeplitz
    matrices (one per ky) so that out[h] = pad_row[h+ky] @ B[ky].  The K rows are permuted so
    the interior activation columns come first (lane-aligned) and the two zero-pad column
    blocks land at lanes [W*Cin, (W+2)*Cin).  Built host-side."""
    w = np.asarray(w_oihw, np.float32).transpose(2, 3, 1, 0)       # (ky, kx, Cin, Cout)
    cin, cout = w.shape[2], w.shape[3]
    B = np.zeros((3, (W + 2) * cin, W * cout), np.float32)
    for ky in range(3):
        for kx in range(3):
            for wo in range(W):
                B[ky, (wo + kx) * cin:(wo + kx + 1) * cin,
                      wo * cout:(wo + 1) * cout] = w[ky, kx]
    # new column block j -> old wpos: interior (1..W) first, then left pad (0), right pad (W+1)
    perm = np.concatenate([np.arange(1, W + 1), np.array([0, W + 1])])
    row_perm = (perm[:, None] * cin + np.arange(cin)[None, :]).reshape(-1)
    B = B[:, row_perm, :]
    return jnp.asarray(B, jnp.bfloat16)


# Constant 0/1 channel-pooling matrix (pool[w*C + c, c] = 1) and its transpose for the
# MXU-based (1, C) -> (1, W*C) broadcast.
_POOL_NP = np.tile(np.eye(COUT, dtype=np.float32), (W, 1))          # (W*COUT, COUT)
_POOL = jnp.asarray(_POOL_NP)
_BCAST = jnp.asarray(np.ascontiguousarray(_POOL_NP.T))              # (COUT, W*COUT)


@jax.jit
def _basic_block_pallas(x_nchw, B1, g1, be1, B2, g2, be2):
    # NCHW -> lane-dense stacked rows (N*H, W*C) (layout glue only; contiguous in W, C).
    x_rows = jnp.transpose(x_nchw, (0, 2, 3, 1)).reshape(ROWS, W * CIN)

    out_rows = pl.pallas_call(
        basic_block_kernel,
        out_shape=jax.ShapeDtypeStruct((ROWS, W * COUT), jnp.float32),
        grid_spec=pltpu.PrefetchScalarGridSpec(
            num_scalar_prefetch=0,
            grid=(1,),   # batch folded into one step (stacked along M of the conv matmuls)
            in_specs=[
                pl.BlockSpec((ROWS, W * CIN), lambda i: (0, 0)),            # x
                pl.BlockSpec((3, PADL, W * COUT), lambda i: (0, 0, 0)),     # B1 (resident)
                pl.BlockSpec((1, COUT), lambda i: (0, 0)),                  # gamma1
                pl.BlockSpec((1, COUT), lambda i: (0, 0)),                  # beta1
                pl.BlockSpec(memory_space=pl.ANY),                          # B2 (manual DMA)
                pl.BlockSpec((1, COUT), lambda i: (0, 0)),                  # gamma2
                pl.BlockSpec((1, COUT), lambda i: (0, 0)),                  # beta2
                pl.BlockSpec((W * COUT, COUT), lambda i: (0, 0)),           # pool
                pl.BlockSpec((COUT, W * COUT), lambda i: (0, 0)),           # bcast
            ],
            out_specs=pl.BlockSpec((ROWS, W * COUT), lambda i: (0, 0)),
            scratch_shapes=[
                pltpu.VMEM((PROWS, PADL), jnp.float32),          # padded activation slab
                pltpu.VMEM((3, PADL, W * COUT), jnp.bfloat16),   # B2 landing buffer
                pltpu.SemaphoreType.DMA,                         # B2 copy semaphore
            ],
        ),
        compiler_params=pltpu.CompilerParams(
            dimension_semantics=("arbitrary",)),
    )(x_rows, B1, g1, be1, B2, g2, be2, _POOL, _BCAST)

    return jnp.transpose(out_rows.reshape(N, H, W, COUT), (0, 3, 1, 2))


def basic_block(x_nchw, w1_oihw, g1, b1, w2_oihw, g2, b2):
    """PyTorch-facing entry: x (N,CIN,H,W) f32, conv weights OIHW, GN affine params (C,)."""
    B1 = _toeplitz_bands(w1_oihw)
    B2 = _toeplitz_bands(w2_oihw)
    row = lambda v: jnp.asarray(v, jnp.float32).reshape(1, COUT)
    return _basic_block_pallas(x_nchw, B1, row(g1), row(b1), B2, row(g2), row(b2))


def reference(x, w1, g1, b1, w2, g2, b2):
    """Pure-JAX reference matching PyTorch BasicBlock semantics (f32)."""
    def conv(y, w):
        return jax.lax.conv_general_dilated(
            y, w, window_strides=(1, 1), padding="SAME",
            dimension_numbers=("NCHW", "OIHW", "NCHW"))

    def gn(y, gamma, beta):
        n_, c, hh, ww = y.shape
        yg = y.reshape(n_, G, c // G, hh, ww)
        mean = yg.mean(axis=(2, 3, 4), keepdims=True)
        var = ((yg - mean) ** 2).mean(axis=(2, 3, 4), keepdims=True)
        yn = ((yg - mean) / jnp.sqrt(var + EPS)).reshape(n_, c, hh, ww)
        return yn * gamma.reshape(1, c, 1, 1) + beta.reshape(1, c, 1, 1)

    out = jnp.maximum(gn(conv(x, w1), g1, b1), 0.0)
    out = gn(conv(out, w2), g2, b2)
    return jnp.maximum(out + x, 0.0)


if __name__ == "__main__":
    key = jax.random.PRNGKey(0)
    kx, kw1, kw2, kg1, kb1, kg2, kb2 = jax.random.split(key, 7)

    # Input in PyTorch NCHW convention.
    x = jax.random.normal(kx, (N, CIN, H, W), jnp.float32)

    # Conv weights in PyTorch OIHW shape (He-style init).
    fan1 = 9 * CIN
    w1 = jax.random.normal(kw1, (COUT, CIN, 3, 3), jnp.float32) * math.sqrt(2.0 / fan1)
    fan2 = 9 * COUT
    w2 = jax.random.normal(kw2, (COUT, COUT, 3, 3), jnp.float32) * math.sqrt(2.0 / fan2)

    # GroupNorm affine params (PyTorch shape (C,); perturbed deterministically).
    g1 = 1.0 + 0.1 * jax.random.normal(kg1, (COUT,), jnp.float32)
    b1 = 0.1 * jax.random.normal(kb1, (COUT,), jnp.float32)
    g2 = 1.0 + 0.1 * jax.random.normal(kg2, (COUT,), jnp.float32)
    b2 = 0.1 * jax.random.normal(kb2, (COUT,), jnp.float32)

    out = jax.block_until_ready(basic_block(x, w1, g1, b1, w2, g2, b2))
    ref = jax.block_until_ready(reference(x, w1, g1, b1, w2, g2, b2))

    # Tolerance accounts for bf16 MXU conv operands in the kernel vs the f32 reference
    # (two stacked 3x3 convs -> ~1e-2 worst-case absolute deviation at this scale).
    max_err = float(jnp.max(jnp.abs(out - ref)))
    if max_err > 3e-2:
        raise AssertionError(f"Pallas kernel mismatch vs reference, max|err|={max_err}")
    print("KERNEL_OK")
</pallas_src>

<mosaic_0001>
module attributes {stable_mosaic.version = 11 : i64} {
  func.func @basic_block_kernel(%arg0: i32, %arg1: memref<32x512xf32, #tpu.memory_space<vmem>>, %arg2: memref<3x576x512xbf16, #tpu.memory_space<vmem>>, %arg3: memref<1x32xf32, #tpu.memory_space<vmem>>, %arg4: memref<1x32xf32, #tpu.memory_space<vmem>>, %arg5: memref<3x576x512xbf16, #tpu.memory_space<any>>, %arg6: memref<1x32xf32, #tpu.memory_space<vmem>>, %arg7: memref<1x32xf32, #tpu.memory_space<vmem>>, %arg8: memref<512x32xf32, #tpu.memory_space<vmem>>, %arg9: memref<32x512xf32, #tpu.memory_space<vmem>>, %arg10: memref<32x512xf32, #tpu.memory_space<vmem>>, %arg11: memref<36x576xf32, #tpu.memory_space<vmem>>, %arg12: memref<3x576x512xbf16, #tpu.memory_space<vmem>>, %arg13: memref<!tpu.dma_semaphore, #tpu.memory_space<semaphore_mem>>) attributes {dimension_semantics = [#tpu.dimension_semantics<arbitrary>], iteration_bounds = array<i64: 1>, scalar_prefetch = 0 : i64, scratch_operands = 3 : i64, tpu.core_type = #tpu.core_type<tc>, window_params = [{pipeline_mode = #tpu.pipeline_mode<synchronous>, transform_indices = @transform_0, window_bounds = array<i64: 32, 512>}, {pipeline_mode = #tpu.pipeline_mode<synchronous>, transform_indices = @transform_1, window_bounds = array<i64: 3, 576, 512>}, {pipeline_mode = #tpu.pipeline_mode<synchronous>, transform_indices = @transform_2, window_bounds = array<i64: 1, 32>}, {pipeline_mode = #tpu.pipeline_mode<synchronous>, transform_indices = @transform_3, window_bounds = array<i64: 1, 32>}, {}, {pipeline_mode = #tpu.pipeline_mode<synchronous>, transform_indices = @transform_5, window_bounds = array<i64: 1, 32>}, {pipeline_mode = #tpu.pipeline_mode<synchronous>, transform_indices = @transform_6, window_bounds = array<i64: 1, 32>}, {pipeline_mode = #tpu.pipeline_mode<synchronous>, transform_indices = @transform_7, window_bounds = array<i64: 512, 32>}, {pipeline_mode = #tpu.pipeline_mode<synchronous>, transform_indices = @transform_8, window_bounds = array<i64: 32, 512>}, {pipeline_mode = #tpu.pipeline_mode<synchronous>, transform_indices = @transform_9, window_bounds = array<i64: 32, 512>}]} {
    tpu.enqueue_dma source(%arg5 : memref<3x576x512xbf16, #tpu.memory_space<any>>) target(%arg12 : memref<3x576x512xbf16, #tpu.memory_space<vmem>>) target_semaphore(%arg13 : memref<!tpu.dma_semaphore, #tpu.memory_space<semaphore_mem>>)
    %cst = arith.constant 0.000000e+00 : f32
    %0 = vector.broadcast %cst : f32 to vector<36x64xf32>
    %c0 = arith.constant 0 : index
    %c512 = arith.constant 512 : index
    %1 = vector.load %arg11[%c0, %c512] : memref<36x576xf32, #tpu.memory_space<vmem>>, vector<36x64xf32>
    tpu.vector_store %arg11[%c0, %c512], %0 {strides = array<i32>} : memref<36x576xf32, #tpu.memory_space<vmem>>, vector<36x64xf32>,
    %cst_0 = arith.constant 0.000000e+00 : f32
    %2 = vector.broadcast %cst_0 : f32 to vector<1x512xf32>
    %c0_1 = arith.constant 0 : index
    %c0_2 = arith.constant 0 : index
    %3 = vector.load %arg11[%c0_1, %c0_2] : memref<36x576xf32, #tpu.memory_space<vmem>>, vector<1x512xf32>
    tpu.vector_store %arg11[%c0_1, %c0_2], %2 {strides = array<i32>} : memref<36x576xf32, #tpu.memory_space<vmem>>, vector<1x512xf32>,
    %cst_3 = arith.constant 0.000000e+00 : f32
    %4 = vector.broadcast %cst_3 : f32 to vector<1x512xf32>
    %c17 = arith.constant 17 : index
    %c0_4 = arith.constant 0 : index
    %5 = vector.load %arg11[%c17, %c0_4] : memref<36x576xf32, #tpu.memory_space<vmem>>, vector<1x512xf32>
    tpu.vector_store %arg11[%c17, %c0_4], %4 {strides = array<i32>} : memref<36x576xf32, #tpu.memory_space<vmem>>, vector<1x512xf32>,
    %cst_5 = arith.constant 0.000000e+00 : f32
    %6 = vector.broadcast %cst_5 : f32 to vector<1x512xf32>
    %c18 = arith.constant 18 : index
    %c0_6 = arith.constant 0 : index
    %7 = vector.load %arg11[%c18, %c0_6] : memref<36x576xf32, #tpu.memory_space<vmem>>, vector<1x512xf32>
    tpu.vector_store %arg11[%c18, %c0_6], %6 {strides = array<i32>} : memref<36x576xf32, #tpu.memory_space<vmem>>, vector<1x512xf32>,
    %cst_7 = arith.constant 0.000000e+00 : f32
    %8 = vector.broadcast %cst_7 : f32 to vector<1x512xf32>
    %c35 = arith.constant 35 : index
    %c0_8 = arith.constant 0 : index
    %9 = vector.load %arg11[%c35, %c0_8] : memref<36x576xf32, #tpu.memory_space<vmem>>, vector<1x512xf32>
    tpu.vector_store %arg11[%c35, %c0_8], %8 {strides = array<i32>} : memref<36x576xf32, #tpu.memory_space<vmem>>, vector<1x512xf32>,
    %c0_9 = arith.constant 0 : index
    %c0_10 = arith.constant 0 : index
    %10 = vector.load %arg8[%c0_9, %c0_10] : memref<512x32xf32, #tpu.memory_space<vmem>>, vector<512x32xf32>
    %c0_11 = arith.constant 0 : index
    %c0_12 = arith.constant 0 : index
    %11 = vector.load %arg9[%c0_11, %c0_12] : memref<32x512xf32, #tpu.memory_space<vmem>>, vector<32x512xf32>
    %c0_13 = arith.constant 0 : index
    %c0_14 = arith.constant 0 : index
    %12 = vector.load %arg1[%c0_13, %c0_14] : memref<32x512xf32, #tpu.memory_space<vmem>>, vector<16x512xf32>
    %c1 = arith.constant 1 : index
    %c0_15 = arith.constant 0 : index
    %13 = vector.load %arg11[%c1, %c0_15] : memref<36x576xf32, #tpu.memory_space<vmem>>, vector<16x512xf32>
    tpu.vector_store %arg11[%c1, %c0_15], %12 {strides = array<i32>} : memref<36x576xf32, #tpu.memory_space<vmem>>, vector<16x512xf32>,
    %c16 = arith.constant 16 : index
    %c0_16 = arith.constant 0 : index
    %14 = vector.load %arg1[%c16, %c0_16] : memref<32x512xf32, #tpu.memory_space<vmem>>, vector<16x512xf32>
    %c19 = arith.constant 19 : index
    %c0_17 = arith.constant 0 : index
    %15 = vector.load %arg11[%c19, %c0_17] : memref<36x576xf32, #tpu.memory_space<vmem>>, vector<16x512xf32>
    tpu.vector_store %arg11[%c19, %c0_17], %14 {strides = array<i32>} : memref<36x576xf32, #tpu.memory_space<vmem>>, vector<16x512xf32>,
    %c0_18 = arith.constant 0 : index
    %c0_19 = arith.constant 0 : index
    %16 = vector.load %arg11[%c0_18, %c0_19] : memref<36x576xf32, #tpu.memory_space<vmem>>, vector<36x576xf32>
    %17 = arith.truncf %16 : vector<36x576xf32> to vector<36x576xbf16>
    %cst_20 = arith.constant 0.000000e+00 : f32
    %18 = vector.broadcast %cst_20 : f32 to vector<34x512xf32>
    %19 = vector.extract_strided_slice %17 {offsets = [0, 0], sizes = [34, 576], strides = [1, 1]} : vector<36x576xbf16> to vector<34x576xbf16>
    %c0_21 = arith.constant 0 : index
    %c0_22 = arith.constant 0 : index
    %c0_23 = arith.constant 0 : index
    %20 = vector.load %arg2[%c0_21, %c0_22, %c0_23] : memref<3x576x512xbf16, #tpu.memory_space<vmem>>, vector<1x576x512xbf16>
    %21 = vector.shape_cast %20 : vector<1x576x512xbf16> to vector<576x512xbf16>
    %cst_24 = arith.constant dense<0.000000e+00> : vector<34x512xf32>
    %22 = tpu.matmul %19, %21, %cst_24 {dimension_numbers = #tpu.dot_dimension_numbers<[1], [0], [0], [1], [0, 0, 1, 1], [], []>} : vector<34x576xbf16>, vector<576x512xbf16>, vector<34x512xf32> -> vector<34x512xf32>
    %23 = arith.addf %18, %22 : vector<34x512xf32>
    %24 = vector.extract_strided_slice %17 {offsets = [1, 0], sizes = [34, 576], strides = [1, 1]} : vector<36x576xbf16> to vector<34x576xbf16>
    %c1_25 = arith.constant 1 : index
    %c0_26 = arith.constant 0 : index
    %c0_27 = arith.constant 0 : index
    %25 = vector.load %arg2[%c1_25, %c0_26, %c0_27] : memref<3x576x512xbf16, #tpu.memory_space<vmem>>, vector<1x576x512xbf16>
    %26 = vector.shape_cast %25 : vector<1x576x512xbf16> to vector<576x512xbf16>
    %cst_28 = arith.constant dense<0.000000e+00> : vector<34x512xf32>
    %27 = tpu.matmul %24, %26, %cst_28 {dimension_numbers = #tpu.dot_dimension_numbers<[1], [0], [0], [1], [0, 0, 1, 1], [], []>} : vector<34x576xbf16>, vector<576x512xbf16>, vector<34x512xf32> -> vector<34x512xf32>
    %28 = arith.addf %23, %27 : vector<34x512xf32>
    %29 = vector.extract_strided_slice %17 {offsets = [2, 0], sizes = [34, 576], strides = [1, 1]} : vector<36x576xbf16> to vector<34x576xbf16>
    %c2 = arith.constant 2 : index
    %c0_29 = arith.constant 0 : index
    %c0_30 = arith.constant 0 : index
    %30 = vector.load %arg2[%c2, %c0_29, %c0_30] : memref<3x576x512xbf16, #tpu.memory_space<vmem>>, vector<1x576x512xbf16>
    %31 = vector.shape_cast %30 : vector<1x576x512xbf16> to vector<576x512xbf16>
    %cst_31 = arith.constant dense<0.000000e+00> : vector<34x512xf32>
    %32 = tpu.matmul %29, %31, %cst_31 {dimension_numbers = #tpu.dot_dimension_numbers<[1], [0], [0], [1], [0, 0, 1, 1], [], []>} : vector<34x576xbf16>, vector<576x512xbf16>, vector<34x512xf32> -> vector<34x512xf32>
    %33 = arith.addf %28, %32 : vector<34x512xf32>
    %34 = vector.extract_strided_slice %33 {offsets = [0, 0], sizes = [16, 512], strides = [1, 1]} : vector<34x512xf32> to vector<16x512xf32>
    %c0_32 = arith.constant 0 : index
    %c0_33 = arith.constant 0 : index
    %35 = vector.load %arg3[%c0_32, %c0_33] : memref<1x32xf32, #tpu.memory_space<vmem>>, vector<1x32xf32>
    %c0_34 = arith.constant 0 : index
    %c0_35 = arith.constant 0 : index
    %36 = vector.load %arg4[%c0_34, %c0_35] : memref<1x32xf32, #tpu.memory_space<vmem>>, vector<1x32xf32>
    %37 = arith.mulf %34, %34 : vector<16x512xf32>
    %38 = tpu.concatenate %34, %37 in 0 : vector<16x512xf32>, vector<16x512xf32> -> vector<32x512xf32>
    %cst_36 = arith.constant dense<0.000000e+00> : vector<32x32xf32>
    %39 = tpu.matmul %38, %10, %cst_36 {dimension_numbers = #tpu.dot_dimension_numbers<[1], [0], [0], [1], [0, 0, 1, 1], [], []>} : vector<32x512xf32>, vector<512x32xf32>, vector<32x32xf32> -> vector<32x32xf32>
    %40 = vector.extract_strided_slice %39 {offsets = [0, 0], sizes = [16, 32], strides = [1, 1]} : vector<32x32xf32> to vector<16x32xf32>
    %cst_37 = arith.constant dense<0.000000e+00> : vector<32xf32>
    %41 = vector.multi_reduction <add>, %40, %cst_37 [0] : vector<16x32xf32> to vector<32xf32>
    %42 = vector.shape_cast %41 : vector<32xf32> to vector<1x32xf32>
    %43 = vector.extract_strided_slice %39 {offsets = [16, 0], sizes = [16, 32], strides = [1, 1]} : vector<32x32xf32> to vector<16x32xf32>
    %cst_38 = arith.constant dense<0.000000e+00> : vector<32xf32>
    %44 = vector.multi_reduction <add>, %43, %cst_38 [0] : vector<16x32xf32> to vector<32xf32>
    %45 = vector.shape_cast %44 : vector<32xf32> to vector<1x32xf32>
    %cst_39 = arith.constant 2.560000e+02 : f32
    %46 = vector.broadcast %cst_39 : f32 to vector<1x32xf32>
    %47 = arith.divf %42, %46 : vector<1x32xf32>
    %cst_40 = arith.constant 2.560000e+02 : f32
    %48 = vector.broadcast %cst_40 : f32 to vector<1x32xf32>
    %49 = arith.divf %45, %48 : vector<1x32xf32>
    %50 = arith.mulf %47, %47 : vector<1x32xf32>
    %51 = arith.subf %49, %50 : vector<1x32xf32>
    %cst_41 = arith.constant 9.99999974E-6 : f32
    %52 = vector.broadcast %cst_41 : f32 to vector<1x32xf32>
    %53 = arith.addf %51, %52 : vector<1x32xf32>
    %54 = math.rsqrt %53 : vector<1x32xf32>
    %55 = arith.mulf %54, %35 : vector<1x32xf32>
    %56 = arith.mulf %47, %55 : vector<1x32xf32>
    %57 = arith.subf %36, %56 : vector<1x32xf32>
    %58 = tpu.concatenate %55, %57 in 0 : vector<1x32xf32>, vector<1x32xf32> -> vector<2x32xf32>
    %cst_42 = arith.constant dense<0.000000e+00> : vector<2x512xf32>
    %59 = tpu.matmul %58, %11, %cst_42 {dimension_numbers = #tpu.dot_dimension_numbers<[1], [0], [0], [1], [0, 0, 1, 1], [], []>} : vector<2x32xf32>, vector<32x512xf32>, vector<2x512xf32> -> vector<2x512xf32>
    %60 = vector.extract_strided_slice %59 {offsets = [0, 0], sizes = [1, 512], strides = [1, 1]} : vector<2x512xf32> to vector<1x512xf32>
    %61 = vector.broadcast %60 : vector<1x512xf32> to vector<16x512xf32>
    %62 = arith.mulf %34, %61 : vector<16x512xf32>
    %63 = vector.extract_strided_slice %59 {offsets = [1, 0], sizes = [1, 512], strides = [1, 1]} : vector<2x512xf32> to vector<1x512xf32>
    %64 = vector.broadcast %63 : vector<1x512xf32> to vector<16x512xf32>
    %65 = arith.addf %62, %64 : vector<16x512xf32>
    %cst_43 = arith.constant 0.000000e+00 : f32
    %66 = vector.broadcast %cst_43 : f32 to vector<16x512xf32>
    %67 = arith.maximumf %65, %66 : vector<16x512xf32>
    %c1_44 = arith.constant 1 : index
    %c0_45 = arith.constant 0 : index
    %68 = vector.load %arg11[%c1_44, %c0_45] : memref<36x576xf32, #tpu.memory_space<vmem>>, vector<16x512xf32>
    tpu.vector_store %arg11[%c1_44, %c0_45], %67 {strides = array<i32>} : memref<36x576xf32, #tpu.memory_space<vmem>>, vector<16x512xf32>,
    %69 = vector.extract_strided_slice %33 {offsets = [18, 0], sizes = [16, 512], strides = [1, 1]} : vector<34x512xf32> to vector<16x512xf32>
    %c0_46 = arith.constant 0 : index
    %c0_47 = arith.constant 0 : index
    %70 = vector.load %arg3[%c0_46, %c0_47] : memref<1x32xf32, #tpu.memory_space<vmem>>, vector<1x32xf32>
    %c0_48 = arith.constant 0 : index
    %c0_49 = arith.constant 0 : index
    %71 = vector.load %arg4[%c0_48, %c0_49] : memref<1x32xf32, #tpu.memory_space<vmem>>, vector<1x32xf32>
    %72 = arith.mulf %69, %69 : vector<16x512xf32>
    %73 = tpu.concatenate %69, %72 in 0 : vector<16x512xf32>, vector<16x512xf32> -> vector<32x512xf32>
    %cst_50 = arith.constant dense<0.000000e+00> : vector<32x32xf32>
    %74 = tpu.matmul %73, %10, %cst_50 {dimension_numbers = #tpu.dot_dimension_numbers<[1], [0], [0], [1], [0, 0, 1, 1], [], []>} : vector<32x512xf32>, vector<512x32xf32>, vector<32x32xf32> -> vector<32x32xf32>
    %75 = vector.extract_strided_slice %74 {offsets = [0, 0], sizes = [16, 32], strides = [1, 1]} : vector<32x32xf32> to vector<16x32xf32>
    %cst_51 = arith.constant dense<0.000000e+00> : vector<32xf32>
    %76 = vector.multi_reduction <add>, %75, %cst_51 [0] : vector<16x32xf32> to vector<32xf32>
    %77 = vector.shape_cast %76 : vector<32xf32> to vector<1x32xf32>
    %78 = vector.extract_strided_slice %74 {offsets = [16, 0], sizes = [16, 32], strides = [1, 1]} : vector<32x32xf32> to vector<16x32xf32>
    %cst_52 = arith.constant dense<0.000000e+00> : vector<32xf32>
    %79 = vector.multi_reduction <add>, %78, %cst_52 [0] : vector<16x32xf32> to vector<32xf32>
    %80 = vector.shape_cast %79 : vector<32xf32> to vector<1x32xf32>
    %cst_53 = arith.constant 2.560000e+02 : f32
    %81 = vector.broadcast %cst_53 : f32 to vector<1x32xf32>
    %82 = arith.divf %77, %81 : vector<1x32xf32>
    %cst_54 = arith.constant 2.560000e+02 : f32
    %83 = vector.broadcast %cst_54 : f32 to vector<1x32xf32>
    %84 = arith.divf %80, %83 : vector<1x32xf32>
    %85 = arith.mulf %82, %82 : vector<1x32xf32>
    %86 = arith.subf %84, %85 : vector<1x32xf32>
    %cst_55 = arith.constant 9.99999974E-6 : f32
    %87 = vector.broadcast %cst_55 : f32 to vector<1x32xf32>
    %88 = arith.addf %86, %87 : vector<1x32xf32>
    %89 = math.rsqrt %88 : vector<1x32xf32>
    %90 = arith.mulf %89, %70 : vector<1x32xf32>
    %91 = arith.mulf %82, %90 : vector<1x32xf32>
    %92 = arith.subf %71, %91 : vector<1x32xf32>
    %93 = tpu.concatenate %90, %92 in 0 : vector<1x32xf32>, vector<1x32xf32> -> vector<2x32xf32>
    %cst_56 = arith.constant dense<0.000000e+00> : vector<2x512xf32>
    %94 = tpu.matmul %93, %11, %cst_56 {dimension_numbers = #tpu.dot_dimension_numbers<[1], [0], [0], [1], [0, 0, 1, 1], [], []>} : vector<2x32xf32>, vector<32x512xf32>, vector<2x512xf32> -> vector<2x512xf32>
    %95 = vector.extract_strided_slice %94 {offsets = [0, 0], sizes = [1, 512], strides = [1, 1]} : vector<2x512xf32> to vector<1x512xf32>
    %96 = vector.broadcast %95 : vector<1x512xf32> to vector<16x512xf32>
    %97 = arith.mulf %69, %96 : vector<16x512xf32>
    %98 = vector.extract_strided_slice %94 {offsets = [1, 0], sizes = [1, 512], strides = [1, 1]} : vector<2x512xf32> to vector<1x512xf32>
    %99 = vector.broadcast %98 : vector<1x512xf32> to vector<16x512xf32>
    %100 = arith.addf %97, %99 : vector<16x512xf32>
    %cst_57 = arith.constant 0.000000e+00 : f32
    %101 = vector.broadcast %cst_57 : f32 to vector<16x512xf32>
    %102 = arith.maximumf %100, %101 : vector<16x512xf32>
    %c19_58 = arith.constant 19 : index
    %c0_59 = arith.constant 0 : index
    %103 = vector.load %arg11[%c19_58, %c0_59] : memref<36x576xf32, #tpu.memory_space<vmem>>, vector<16x512xf32>
    tpu.vector_store %arg11[%c19_58, %c0_59], %102 {strides = array<i32>} : memref<36x576xf32, #tpu.memory_space<vmem>>, vector<16x512xf32>,
    tpu.wait_dma2 semaphore(%arg13 : memref<!tpu.dma_semaphore, #tpu.memory_space<semaphore_mem>>) src(%arg5 : memref<3x576x512xbf16, #tpu.memory_space<any>>) dst(%arg12 : memref<3x576x512xbf16, #tpu.memory_space<vmem>>)
    %c0_60 = arith.constant 0 : index
    %c0_61 = arith.constant 0 : index
    %104 = vector.load %arg11[%c0_60, %c0_61] : memref<36x576xf32, #tpu.memory_space<vmem>>, vector<36x576xf32>
    %105 = arith.truncf %104 : vector<36x576xf32> to vector<36x576xbf16>
    %cst_62 = arith.constant 0.000000e+00 : f32
    %106 = vector.broadcast %cst_62 : f32 to vector<34x512xf32>
    %107 = vector.extract_strided_slice %105 {offsets = [0, 0], sizes = [34, 576], strides = [1, 1]} : vector<36x576xbf16> to vector<34x576xbf16>
    %c0_63 = arith.constant 0 : index
    %c0_64 = arith.constant 0 : index
    %c0_65 = arith.constant 0 : index
    %108 = vector.load %arg12[%c0_63, %c0_64, %c0_65] : memref<3x576x512xbf16, #tpu.memory_space<vmem>>, vector<1x576x512xbf16>
    %109 = vector.shape_cast %108 : vector<1x576x512xbf16> to vector<576x512xbf16>
    %cst_66 = arith.constant dense<0.000000e+00> : vector<34x512xf32>
    %110 = tpu.matmul %107, %109, %cst_66 {dimension_numbers = #tpu.dot_dimension_numbers<[1], [0], [0], [1], [0, 0, 1, 1], [], []>} : vector<34x576xbf16>, vector<576x512xbf16>, vector<34x512xf32> -> vector<34x512xf32>
    %111 = arith.addf %106, %110 : vector<34x512xf32>
    %112 = vector.extract_strided_slice %105 {offsets = [1, 0], sizes = [34, 576], strides = [1, 1]} : vector<36x576xbf16> to vector<34x576xbf16>
    %c1_67 = arith.constant 1 : index
    %c0_68 = arith.constant 0 : index
    %c0_69 = arith.constant 0 : index
    %113 = vector.load %arg12[%c1_67, %c0_68, %c0_69] : memref<3x576x512xbf16, #tpu.memory_space<vmem>>, vector<1x576x512xbf16>
    %114 = vector.shape_cast %113 : vector<1x576x512xbf16> to vector<576x512xbf16>
    %cst_70 = arith.constant dense<0.000000e+00> : vector<34x512xf32>
    %115 = tpu.matmul %112, %114, %cst_70 {dimension_numbers = #tpu.dot_dimension_numbers<[1], [0], [0], [1], [0, 0, 1, 1], [], []>} : vector<34x576xbf16>, vector<576x512xbf16>, vector<34x512xf32> -> vector<34x512xf32>
    %116 = arith.addf %111, %115 : vector<34x512xf32>
    %117 = vector.extract_strided_slice %105 {offsets = [2, 0], sizes = [34, 576], strides = [1, 1]} : vector<36x576xbf16> to vector<34x576xbf16>
    %c2_71 = arith.constant 2 : index
    %c0_72 = arith.constant 0 : index
    %c0_73 = arith.constant 0 : index
    %118 = vector.load %arg12[%c2_71, %c0_72, %c0_73] : memref<3x576x512xbf16, #tpu.memory_space<vmem>>, vector<1x576x512xbf16>
    %119 = vector.shape_cast %118 : vector<1x576x512xbf16> to vector<576x512xbf16>
    %cst_74 = arith.constant dense<0.000000e+00> : vector<34x512xf32>
    %120 = tpu.matmul %117, %119, %cst_74 {dimension_numbers = #tpu.dot_dimension_numbers<[1], [0], [0], [1], [0, 0, 1, 1], [], []>} : vector<34x576xbf16>, vector<576x512xbf16>, vector<34x512xf32> -> vector<34x512xf32>
    %121 = arith.addf %116, %120 : vector<34x512xf32>
    %122 = vector.extract_strided_slice %121 {offsets = [0, 0], sizes = [16, 512], strides = [1, 1]} : vector<34x512xf32> to vector<16x512xf32>
    %c0_75 = arith.constant 0 : index
    %c0_76 = arith.constant 0 : index
    %123 = vector.load %arg6[%c0_75, %c0_76] : memref<1x32xf32, #tpu.memory_space<vmem>>, vector<1x32xf32>
    %c0_77 = arith.constant 0 : index
    %c0_78 = arith.constant 0 : index
    %124 = vector.load %arg7[%c0_77, %c0_78] : memref<1x32xf32, #tpu.memory_space<vmem>>, vector<1x32xf32>
    %125 = arith.mulf %122, %122 : vector<16x512xf32>
    %126 = tpu.concatenate %122, %125 in 0 : vector<16x512xf32>, vector<16x512xf32> -> vector<32x512xf32>
    %cst_79 = arith.constant dense<0.000000e+00> : vector<32x32xf32>
    %127 = tpu.matmul %126, %10, %cst_79 {dimension_numbers = #tpu.dot_dimension_numbers<[1], [0], [0], [1], [0, 0, 1, 1], [], []>} : vector<32x512xf32>, vector<512x32xf32>, vector<32x32xf32> -> vector<32x32xf32>
    %128 = vector.extract_strided_slice %127 {offsets = [0, 0], sizes = [16, 32], strides = [1, 1]} : vector<32x32xf32> to vector<16x32xf32>
    %cst_80 = arith.constant dense<0.000000e+00> : vector<32xf32>
    %129 = vector.multi_reduction <add>, %128, %cst_80 [0] : vector<16x32xf32> to vector<32xf32>
    %130 = vector.shape_cast %129 : vector<32xf32> to vector<1x32xf32>
    %131 = vector.extract_strided_slice %127 {offsets = [16, 0], sizes = [16, 32], strides = [1, 1]} : vector<32x32xf32> to vector<16x32xf32>
    %cst_81 = arith.constant dense<0.000000e+00> : vector<32xf32>
    %132 = vector.multi_reduction <add>, %131, %cst_81 [0] : vector<16x32xf32> to vector<32xf32>
    %133 = vector.shape_cast %132 : vector<32xf32> to vector<1x32xf32>
    %cst_82 = arith.constant 2.560000e+02 : f32
    %134 = vector.broadcast %cst_82 : f32 to vector<1x32xf32>
    %135 = arith.divf %130, %134 : vector<1x32xf32>
    %cst_83 = arith.constant 2.560000e+02 : f32
    %136 = vector.broadcast %cst_83 : f32 to vector<1x32xf32>
    %137 = arith.divf %133, %136 : vector<1x32xf32>
    %138 = arith.mulf %135, %135 : vector<1x32xf32>
    %139 = arith.subf %137, %138 : vector<1x32xf32>
    %cst_84 = arith.constant 9.99999974E-6 : f32
    %140 = vector.broadcast %cst_84 : f32 to vector<1x32xf32>
    %141 = arith.addf %139, %140 : vector<1x32xf32>
    %142 = math.rsqrt %141 : vector<1x32xf32>
    %143 = arith.mulf %142, %123 : vector<1x32xf32>
    %144 = arith.mulf %135, %143 : vector<1x32xf32>
    %145 = arith.subf %124, %144 : vector<1x32xf32>
    %146 = tpu.concatenate %143, %145 in 0 : vector<1x32xf32>, vector<1x32xf32> -> vector<2x32xf32>
    %cst_85 = arith.constant dense<0.000000e+00> : vector<2x512xf32>
    %147 = tpu.matmul %146, %11, %cst_85 {dimension_numbers = #tpu.dot_dimension_numbers<[1], [0], [0], [1], [0, 0, 1, 1], [], []>} : vector<2x32xf32>, vector<32x512xf32>, vector<2x512xf32> -> vector<2x512xf32>
    %148 = vector.extract_strided_slice %147 {offsets = [0, 0], sizes = [1, 512], strides = [1, 1]} : vector<2x512xf32> to vector<1x512xf32>
    %149 = vector.broadcast %148 : vector<1x512xf32> to vector<16x512xf32>
    %150 = arith.mulf %122, %149 : vector<16x512xf32>
    %151 = vector.extract_strided_slice %147 {offsets = [1, 0], sizes = [1, 512], strides = [1, 1]} : vector<2x512xf32> to vector<1x512xf32>
    %152 = vector.broadcast %151 : vector<1x512xf32> to vector<16x512xf32>
    %153 = arith.addf %150, %152 : vector<16x512xf32>
    %c0_86 = arith.constant 0 : index
    %c0_87 = arith.constant 0 : index
    %154 = vector.load %arg1[%c0_86, %c0_87] : memref<32x512xf32, #tpu.memory_space<vmem>>, vector<16x512xf32>
    %155 = arith.addf %153, %154 : vector<16x512xf32>
    %cst_88 = arith.constant 0.000000e+00 : f32
    %156 = vector.broadcast %cst_88 : f32 to vector<16x512xf32>
    %157 = arith.maximumf %155, %156 : vector<16x512xf32>
    %c0_89 = arith.constant 0 : index
    %c0_90 = arith.constant 0 : index
    %158 = vector.load %arg10[%c0_89, %c0_90] : memref<32x512xf32, #tpu.memory_space<vmem>>, vector<16x512xf32>
    tpu.vector_store %arg10[%c0_89, %c0_90], %157 {strides = array<i32>} : memref<32x512xf32, #tpu.memory_space<vmem>>, vector<16x512xf32>,
    %159 = vector.extract_strided_slice %121 {offsets = [18, 0], sizes = [16, 512], strides = [1, 1]} : vector<34x512xf32> to vector<16x512xf32>
    %c0_91 = arith.constant 0 : index
    %c0_92 = arith.constant 0 : index
    %160 = vector.load %arg6[%c0_91, %c0_92] : memref<1x32xf32, #tpu.memory_space<vmem>>, vector<1x32xf32>
    %c0_93 = arith.constant 0 : index
    %c0_94 = arith.constant 0 : index
    %161 = vector.load %arg7[%c0_93, %c0_94] : memref<1x32xf32, #tpu.memory_space<vmem>>, vector<1x32xf32>
    %162 = arith.mulf %159, %159 : vector<16x512xf32>
    %163 = tpu.concatenate %159, %162 in 0 : vector<16x512xf32>, vector<16x512xf32> -> vector<32x512xf32>
    %cst_95 = arith.constant dense<0.000000e+00> : vector<32x32xf32>
    %164 = tpu.matmul %163, %10, %cst_95 {dimension_numbers = #tpu.dot_dimension_numbers<[1], [0], [0], [1], [0, 0, 1, 1], [], []>} : vector<32x512xf32>, vector<512x32xf32>, vector<32x32xf32> -> vector<32x32xf32>
    %165 = vector.extract_strided_slice %164 {offsets = [0, 0], sizes = [16, 32], strides = [1, 1]} : vector<32x32xf32> to vector<16x32xf32>
    %cst_96 = arith.constant dense<0.000000e+00> : vector<32xf32>
    %166 = vector.multi_reduction <add>, %165, %cst_96 [0] : vector<16x32xf32> to vector<32xf32>
    %167 = vector.shape_cast %166 : vector<32xf32> to vector<1x32xf32>
    %168 = vector.extract_strided_slice %164 {offsets = [16, 0], sizes = [16, 32], strides = [1, 1]} : vector<32x32xf32> to vector<16x32xf32>
    %cst_97 = arith.constant dense<0.000000e+00> : vector<32xf32>
    %169 = vector.multi_reduction <add>, %168, %cst_97 [0] : vector<16x32xf32> to vector<32xf32>
    %170 = vector.shape_cast %169 : vector<32xf32> to vector<1x32xf32>
    %cst_98 = arith.constant 2.560000e+02 : f32
    %171 = vector.broadcast %cst_98 : f32 to vector<1x32xf32>
    %172 = arith.divf %167, %171 : vector<1x32xf32>
    %cst_99 = arith.constant 2.560000e+02 : f32
    %173 = vector.broadcast %cst_99 : f32 to vector<1x32xf32>
    %174 = arith.divf %170, %173 : vector<1x32xf32>
    %175 = arith.mulf %172, %172 : vector<1x32xf32>
    %176 = arith.subf %174, %175 : vector<1x32xf32>
    %cst_100 = arith.constant 9.99999974E-6 : f32
    %177 = vector.broadcast %cst_100 : f32 to vector<1x32xf32>
    %178 = arith.addf %176, %177 : vector<1x32xf32>
    %179 = math.rsqrt %178 : vector<1x32xf32>
    %180 = arith.mulf %179, %160 : vector<1x32xf32>
    %181 = arith.mulf %172, %180 : vector<1x32xf32>
    %182 = arith.subf %161, %181 : vector<1x32xf32>
    %183 = tpu.concatenate %180, %182 in 0 : vector<1x32xf32>, vector<1x32xf32> -> vector<2x32xf32>
    %cst_101 = arith.constant dense<0.000000e+00> : vector<2x512xf32>
    %184 = tpu.matmul %183, %11, %cst_101 {dimension_numbers = #tpu.dot_dimension_numbers<[1], [0], [0], [1], [0, 0, 1, 1], [], []>} : vector<2x32xf32>, vector<32x512xf32>, vector<2x512xf32> -> vector<2x512xf32>
    %185 = vector.extract_strided_slice %184 {offsets = [0, 0], sizes = [1, 512], strides = [1, 1]} : vector<2x512xf32> to vector<1x512xf32>
    %186 = vector.broadcast %185 : vector<1x512xf32> to vector<16x512xf32>
    %187 = arith.mulf %159, %186 : vector<16x512xf32>
    %188 = vector.extract_strided_slice %184 {offsets = [1, 0], sizes = [1, 512], strides = [1, 1]} : vector<2x512xf32> to vector<1x512xf32>
    %189 = vector.broadcast %188 : vector<1x512xf32> to vector<16x512xf32>
    %190 = arith.addf %187, %189 : vector<16x512xf32>
    %c16_102 = arith.constant 16 : index
    %c0_103 = arith.constant 0 : index
    %191 = vector.load %arg1[%c16_102, %c0_103] : memref<32x512xf32, #tpu.memory_space<vmem>>, vector<16x512xf32>
    %192 = arith.addf %190, %191 : vector<16x512xf32>
    %cst_104 = arith.constant 0.000000e+00 : f32
    %193 = vector.broadcast %cst_104 : f32 to vector<16x512xf32>
    %194 = arith.maximumf %192, %193 : vector<16x512xf32>
    %c16_105 = arith.constant 16 : index
    %c0_106 = arith.constant 0 : index
    %195 = vector.load %arg10[%c16_105, %c0_106] : memref<32x512xf32, #tpu.memory_space<vmem>>, vector<16x512xf32>
    tpu.vector_store %arg10[%c16_105, %c0_106], %194 {strides = array<i32>} : memref<32x512xf32, #tpu.memory_space<vmem>>, vector<16x512xf32>,
    return
  }
  func.func @transform_0(%arg0: i32) -> (i32, i32) {
    %c0_i32 = arith.constant 0 : i32
    %c0_i32_0 = arith.constant 0 : i32
    %c0_i32_1 = arith.constant 0 : i32
    return %c0_i32, %c0_i32_0 : i32, i32
  }
  func.func @transform_1(%arg0: i32) -> (i32, i32, i32) {
    %c0_i32 = arith.constant 0 : i32
    %c0_i32_0 = arith.constant 0 : i32
    %c0_i32_1 = arith.constant 0 : i32
    %c0_i32_2 = arith.constant 0 : i32
    return %c0_i32, %c0_i32_0, %c0_i32_1 : i32, i32, i32
  }
  func.func @transform_2(%arg0: i32) -> (i32, i32) {
    %c0_i32 = arith.constant 0 : i32
    %c0_i32_0 = arith.constant 0 : i32
    %c0_i32_1 = arith.constant 0 : i32
    return %c0_i32, %c0_i32_0 : i32, i32
  }
  func.func @transform_3(%arg0: i32) -> (i32, i32) {
    %c0_i32 = arith.constant 0 : i32
    %c0_i32_0 = arith.constant 0 : i32
    %c0_i32_1 = arith.constant 0 : i32
    return %c0_i32, %c0_i32_0 : i32, i32
  }
  func.func @transform_5(%arg0: i32) -> (i32, i32) {
    %c0_i32 = arith.constant 0 : i32
    %c0_i32_0 = arith.constant 0 : i32
    %c0_i32_1 = arith.constant 0 : i32
    return %c0_i32, %c0_i32_0 : i32, i32
  }
  func.func @transform_6(%arg0: i32) -> (i32, i32) {
    %c0_i32 = arith.constant 0 : i32
    %c0_i32_0 = arith.constant 0 : i32
    %c0_i32_1 = arith.constant 0 : i32
    return %c0_i32, %c0_i32_0 : i32, i32
  }
  func.func @transform_7(%arg0: i32) -> (i32, i32) {
    %c0_i32 = arith.constant 0 : i32
    %c0_i32_0 = arith.constant 0 : i32
    %c0_i32_1 = arith.constant 0 : i32
    return %c0_i32, %c0_i32_0 : i32, i32
  }
  func.func @transform_8(%arg0: i32) -> (i32, i32) {
    %c0_i32 = arith.constant 0 : i32
    %c0_i32_0 = arith.constant 0 : i32
    %c0_i32_1 = arith.constant 0 : i32
    return %c0_i32, %c0_i32_0 : i32, i32
  }
  func.func @transform_9(%arg0: i32) -> (i32, i32) {
    %c0_i32 = arith.constant 0 : i32
    %c0_i32_0 = arith.constant 0 : i32
    %c0_i32_1 = arith.constant 0 : i32
    return %c0_i32, %c0_i32_0 : i32, i32
  }
}

</mosaic_0001>

<llo_original>
// kernel: _basic_block_pallas.1
$region0: #{_basic_block_pallas.1}
  #allocation0 [shape = 'u32[]', space=smem, size = 0x4, offset = 0x4, fixed_abs, tag = 'smem constant byte address 0x4 - core index']
  #allocation1 [shape = 'u32[144,128]{1,0:T(1,128)}', space=vmem, size = 0x12000, scoped, tag = 'internal scratch']
  #allocation2 [shape = 'f32[36,576]{1,0:T(8,128)}', space=vmem, size = 0x19000, scoped, tag = 'scratch operand']
  #allocation3 [shape = 'bf16[3,576,512]{2,1,0:T(16,128)(2,1)}', space=vmem, size = 0x1b0000, scoped, tag = 'scratch operand']
  #allocation4 [shape = 's32[1]{0}', space=sflag, size = 0x4, scoped, tag = 'scratch operand']
  #allocation16 [shape = 's32[]', space=sflag, size = 0x4, offset = 0, fixed_abs, tag = 'sflag constant byte address 0x0 - dummy sync flag']
  %s0 = inlined_call_operand.vmem [shape: f32[32,512], index: 0, kind: input, shape index: {}]
  %s1 = inlined_call_operand.hbm [shape: bf16[3,576,512], index: 1, kind: input, shape index: {}]
  %s2 = inlined_call_operand.hbm [shape: f32[1,32], index: 2, kind: input, shape index: {}]
  %s3 = inlined_call_operand.hbm [shape: f32[1,32], index: 3, kind: input, shape index: {}]
  %s4 = inlined_call_operand.hbm [shape: bf16[3,576,512], index: 4, kind: input, shape index: {}]
  %s5 = inlined_call_operand.hbm [shape: f32[1,32], index: 5, kind: input, shape index: {}]
  %s6 = inlined_call_operand.hbm [shape: f32[1,32], index: 6, kind: input, shape index: {}]
  %s7 = inlined_call_operand.hbm [shape: f32[512,32], index: 7, kind: input, shape index: {}]
  %s8 = inlined_call_operand.hbm [shape: f32[32,512], index: 8, kind: input, shape index: {}]
  %s9 = inlined_call_operand.vmem [shape: f32[32,512], index: 9, kind: output, shape index: {}]
  %s10 = sld [smem:[#allocation0]]
  $region70: #{_basic_block_pallas.1} parent=0
    _
  %s12 = ssub.s32 1, %s10
  %s13 = scalar_select 0, %s12, %s10
  $region1: #{_basic_block_pallas.1} parent=0
    #allocation5 [shape = 'u8[1769472]{0}', space=vmem, size = 0x1b0000, scoped, tag = 'input window, operand 1, single buffered']
    #allocation6 [shape = 's32[1]{0}', space=sflag, size = 0x4, scoped, tag = 'scoped memory for _basic_block_pallas.1']
    #allocation7 [shape = 'u8[512]{0}', space=vmem, size = 0x400, scoped, tag = 'input window, operand 2, single buffered']
    #allocation8 [shape = 's32[1]{0}', space=sflag, size = 0x4, scoped, tag = 'scoped memory for _basic_block_pallas.1']
    #allocation9 [shape = 'u8[512]{0}', space=vmem, size = 0x400, scoped, tag = 'input window, operand 3, single buffered']
    #allocation10 [shape = 'u8[512]{0}', space=vmem, size = 0x400, scoped, tag = 'input window, operand 5, single buffered']
    #allocation11 [shape = 's32[1]{0}', space=sflag, size = 0x4, scoped, tag = 'scoped memory for _basic_block_pallas.1']
    #allocation12 [shape = 'u8[512]{0}', space=vmem, size = 0x400, scoped, tag = 'input window, operand 6, single buffered']
    #allocation13 [shape = 'u8[262144]{0}', space=vmem, size = 0x40000, scoped, tag = 'input window, operand 7, single buffered']
    #allocation14 [shape = 's32[1]{0}', space=sflag, size = 0x4, scoped, tag = 'scoped memory for _basic_block_pallas.1']
    #allocation15 [shape = 'u8[65536]{0}', space=vmem, size = 0x10000, scoped, tag = 'input window, operand 8, single buffered']
    #allocation17 [shape = 'u32[9]{0}', space=smem, size = 0x24, scoped, tag = 'DMA stride descriptor']
    %14 = vsyncpa [#allocation6], 0
    %15 = vsyncpa [#allocation8], 0
    %16 = vsyncpa [#allocation11], 0
    %17 = vsyncpa [#allocation14], 0
    // Predicated region
    $region2: #{_basic_block_pallas.1} parent=1 // pred_check
      _
    $region3: #{_basic_block_pallas.1} parent=1 // pred_check_branch
      %19 = sbr.rel (0) target = $region5
    $region4: #{_basic_block_pallas.1} parent=1 // pred_region
      _
    $region5: #{_basic_block_pallas.1} parent=1 // pred_fallthru
      _
    // Predicated region
    $region6: #{_basic_block_pallas.1} parent=1 // pred_check
      _
    $region7: #{_basic_block_pallas.1} parent=1 // pred_check_branch
      %21 = sbr.rel (0) target = $region9
    $region8: #{_basic_block_pallas.1} parent=1 // pred_region
      %s23 = ssub.s32 55296, 55296
      %24 = vsyncadd [#allocation6], %s23
      %s25 = sshll.u32 [#allocation5], 4
      %s26 = int_to_ptr.vmem [resolvable:$true] %s25
      %31 = dma.hbm_to_vmem [thread:$0]  %s1, 55296, %s26, [#allocation6], 256, 256, 16
    $region9: #{_basic_block_pallas.1} parent=1 // pred_fallthru
      _
    // Predicated region
    $region10: #{_basic_block_pallas.1} parent=1 // pred_check
      _
    $region11: #{_basic_block_pallas.1} parent=1 // pred_check_branch
      %33 = sbr.rel (0) target = $region13
    $region12: #{_basic_block_pallas.1} parent=1 // pred_region
      %s35 = ssub.s32 16, 16
      %36 = vsyncadd [#allocation8], %s35
      %s38 = sshll.u32 [#allocation7], 4
      %s39 = int_to_ptr.vmem [resolvable:$true] %s38
      %41 = dma.hbm_to_vmem [thread:$0]  %s2, 16, %s39, [#allocation8]
    $region13: #{_basic_block_pallas.1} parent=1 // pred_fallthru
      _
    // Predicated region
    $region14: #{_basic_block_pallas.1} parent=1 // pred_check
      _
    $region15: #{_basic_block_pallas.1} parent=1 // pred_check_branch
      %43 = sbr.rel (0) target = $region17
    $region16: #{_basic_block_pallas.1} parent=1 // pred_region
      %s45 = ssub.s32 16, 16
      %46 = vsyncadd [#allocation8], %s45
      %s48 = sshll.u32 [#allocation9], 4
      %s49 = int_to_ptr.vmem [resolvable:$true] %s48
      %51 = dma.hbm_to_vmem [thread:$0]  %s3, 16, %s49, [#allocation8]
    $region17: #{_basic_block_pallas.1} parent=1 // pred_fallthru
      _
    // Predicated region
    $region18: #{_basic_block_pallas.1} parent=1 // pred_check
      _
    $region19: #{_basic_block_pallas.1} parent=1 // pred_check_branch
      %53 = sbr.rel (0) target = $region21
    $region20: #{_basic_block_pallas.1} parent=1 // pred_region
      %s55 = ssub.s32 16, 16
      %56 = vsyncadd [#allocation11], %s55
      %s58 = sshll.u32 [#allocation10], 4
      %s59 = int_to_ptr.vmem [resolvable:$true] %s58
      %61 = dma.hbm_to_vmem [thread:$0]  %s5, 16, %s59, [#allocation11]
    $region21: #{_basic_block_pallas.1} parent=1 // pred_fallthru
      _
    // Predicated region
    $region22: #{_basic_block_pallas.1} parent=1 // pred_check
      _
    $region23: #{_basic_block_pallas.1} parent=1 // pred_check_branch
      %63 = sbr.rel (0) target = $region25
    $region24: #{_basic_block_pallas.1} parent=1 // pred_region
      %s65 = ssub.s32 16, 16
      %66 = vsyncadd [#allocation11], %s65
      %s68 = sshll.u32 [#allocation12], 4
      %s69 = int_to_ptr.vmem [resolvable:$true] %s68
      %71 = dma.hbm_to_vmem [thread:$0]  %s6, 16, %s69, [#allocation11]
    $region25: #{_basic_block_pallas.1} parent=1 // pred_fallthru
      _
    // Predicated region
    $region26: #{_basic_block_pallas.1} parent=1 // pred_check
      _
    $region27: #{_basic_block_pallas.1} parent=1 // pred_check_branch
      %73 = sbr.rel (0) target = $region29
    $region28: #{_basic_block_pallas.1} parent=1 // pred_region
      %s75 = ssub.s32 8192, 8192
      %76 = vsyncadd [#allocation14], %s75
      %s77 = sshll.u32 [#allocation13], 4
      %s78 = int_to_ptr.vmem [resolvable:$true] %s77
      %83 = dma.hbm_to_vmem [thread:$0]  %s7, 8192, %s78, [#allocation14], 128, 128, 8
    $region29: #{_basic_block_pallas.1} parent=1 // pred_fallthru
      _
    // Predicated region
    $region30: #{_basic_block_pallas.1} parent=1 // pred_check
      _
    $region31: #{_basic_block_pallas.1} parent=1 // pred_check_branch
      %85 = sbr.rel (0) target = $region33
    $region32: #{_basic_block_pallas.1} parent=1 // pred_region
      %s87 = ssub.s32 2048, 2048
      %88 = vsyncadd [#allocation14], %s87
      %s89 = sshll.u32 [#allocation15], 4
      %s90 = int_to_ptr.vmem [resolvable:$true] %s89
      %95 = dma.hbm_to_vmem [thread:$0]  %s8, 2048, %s90, [#allocation14], 512, 512, 32
    $region33: #{_basic_block_pallas.1} parent=1 // pred_fallthru
      _
    // Predicated region
    $region34: #{_basic_block_pallas.1} parent=1 // pred_check
      _
    $region35: #{_basic_block_pallas.1} parent=1 // pred_check_branch
      %97 = sbr.rel (0) target = $region37
    $region36: #{_basic_block_pallas.1} parent=1 // pred_region
      %98 = dma.done [#allocation6], 55296
    $region37: #{_basic_block_pallas.1} parent=1 // pred_fallthru
      _
    // Predicated region
    $region38: #{_basic_block_pallas.1} parent=1 // pred_check
      _
    $region39: #{_basic_block_pallas.1} parent=1 // pred_check_branch
      %100 = sbr.rel (0) target = $region41
    $region40: #{_basic_block_pallas.1} parent=1 // pred_region
      %101 = dma.done [#allocation8], 16
    $region41: #{_basic_block_pallas.1} parent=1 // pred_fallthru
      _
    // Predicated region
    $region42: #{_basic_block_pallas.1} parent=1 // pred_check
      _
    $region43: #{_basic_block_pallas.1} parent=1 // pred_check_branch
      %103 = sbr.rel (0) target = $region45
    $region44: #{_basic_block_pallas.1} parent=1 // pred_region
      %104 = dma.done [#allocation8], 16
    $region45: #{_basic_block_pallas.1} parent=1 // pred_fallthru
      _
    // Predicated region
    $region46: #{_basic_block_pallas.1} parent=1 // pred_check
      _
    $region47: #{_basic_block_pallas.1} parent=1 // pred_check_branch
      %106 = sbr.rel (0) target = $region49
    $region48: #{_basic_block_pallas.1} parent=1 // pred_region
      %107 = dma.done [#allocation11], 16
    $region49: #{_basic_block_pallas.1} parent=1 // pred_fallthru
      _
    // Predicated region
    $region50: #{_basic_block_pallas.1} parent=1 // pred_check
      _
    $region51: #{_basic_block_pallas.1} parent=1 // pred_check_branch
      %109 = sbr.rel (0) target = $region53
    $region52: #{_basic_block_pallas.1} parent=1 // pred_region
      %110 = dma.done [#allocation11], 16
    $region53: #{_basic_block_pallas.1} parent=1 // pred_fallthru
      _
    // Predicated region
    $region54: #{_basic_block_pallas.1} parent=1 // pred_check
      _
    $region55: #{_basic_block_pallas.1} parent=1 // pred_check_branch
      %112 = sbr.rel (0) target = $region57
    $region56: #{_basic_block_pallas.1} parent=1 // pred_region
      %113 = dma.done [#allocation14], 8192
    $region57: #{_basic_block_pallas.1} parent=1 // pred_fallthru
      _
    // Predicated region
    $region58: #{_basic_block_pallas.1} parent=1 // pred_check
      _
    $region59: #{_basic_block_pallas.1} parent=1 // pred_check_branch
      %115 = sbr.rel (0) target = $region61
    $region60: #{_basic_block_pallas.1} parent=1 // pred_region
      %116 = dma.done [#allocation14], 2048
    $region61: #{_basic_block_pallas.1} parent=1 // pred_fallthru
      _
    %s119 = sshll.u32 1, 14
    %s120 = sxor.u32 4294967295, %s119
    %s122 = sld [smem:[#allocation0]]
    %s123 = sadd.s32 2, %s122
    %s125 = sshll.u32 7, 26
    %s126 = sxor.u32 4294967295, %s125
    %s127 = sand.u32 0, %s126
    %s128 = sshll.u32 %s123, 26
    %s129 = sor.u32 %s127, %s128
    %s130 = sshll.u32 [#allocation3], 4
    %s131 = int_to_ptr.vmem [resolvable:$true] %s130
    %134 = sst [smem:[#allocation17]] 512
    %s135 = scalar_lea.smem [#allocation17], 1
    %136 = sst [smem:[%s135]] 512
    %s137 = scalar_lea.smem [#allocation17], 2
    %138 = sst [smem:[%s137]] 4
    %s139 = scalar_lea.smem [#allocation17], 3
    %140 = sst [smem:[%s139]] 64
    %s141 = scalar_lea.smem [#allocation17], 4
    %142 = sst [smem:[%s141]] 128
    %s143 = scalar_lea.smem [#allocation17], 5
    %144 = sst [smem:[%s143]] 2
    %s145 = scalar_lea.smem [#allocation17], 6
    %146 = sst [smem:[%s145]] 256
    %s147 = scalar_lea.smem [#allocation17], 7
    %148 = sst [smem:[%s147]] 64
    %s149 = scalar_lea.smem [#allocation17], 8
    %150 = sst [smem:[%s149]] 4
    %152 = dma.general %s4, 55296, %s131, [#allocation4], [#allocation16], [#allocation17], %s129, 0
    %vm153 = vcmask 523264
    %154 = vst.msk [vmem:[#allocation2 + $0x20] sm:$0xff] %vm153, 0.0
    %155 = vst.msk [vmem:[#allocation2 + $0x48] sm:$0xff] %vm153, 0.0
    %156 = vst.msk [vmem:[#allocation2 + $0x70] sm:$0xff] %vm153, 0.0
    %157 = vst.msk [vmem:[#allocation2 + $0x98] sm:$0xff] %vm153, 0.0
    %vm158 = vcmask 519168
    %159 = vst.msk [vmem:[#allocation2 + $0xc0] sm:$0xf] %vm158, 0.0
    %v160 = vlaneseq
    %vm161 = vcmp.ge.s32.totalorder %v160, 0
    %vm162 = vcmp.lt.s32.totalorder %v160, 512
    %vm163 = vmand %vm161, %vm162
    %164 = vst.msk [vmem:[#allocation2] ss:$8 sm:$0xf] %vm163, 0.0
    %165 = vst.msk [vmem:[#allocation2] ss:$8 sm:$0x0] %vm163, 0.0
    %s166 = scalar_lea.vmem [#allocation2], 81
    %167 = vst.msk [vmem:[%s166] ss:$8 sm:$0xf] %vm163, 0.0
    %168 = vst.msk [vmem:[%s166] ss:$8 sm:$0x0] %vm163, 0.0
    %s169 = scalar_lea.vmem [#allocation2], 82
    %170 = vst.msk [vmem:[%s169] ss:$8 sm:$0xf] %vm163, 0.0
    %171 = vst.msk [vmem:[%s169] ss:$8 sm:$0x0] %vm163, 0.0
    %s172 = scalar_lea.vmem [#allocation2], 163
    %173 = vst.msk [vmem:[%s172] ss:$8 sm:$0xf] %vm163, 0.0
    %174 = vst.msk [vmem:[%s172] ss:$8 sm:$0x0] %vm163, 0.0
    %v175 = vld [vmem:[#allocation13] sm:$0xff]
    %v176 = vld [vmem:[#allocation13 + $0x8] sm:$0xff]
    %v177 = vld [vmem:[#allocation13 + $0x10] sm:$0xff]
    %v178 = vld [vmem:[#allocation13 + $0x18] sm:$0xff]
    %v179 = vld [vmem:[#allocation13 + $0x20] sm:$0xff]
    %v180 = vld [vmem:[#allocation13 + $0x28] sm:$0xff]
    %v181 = vld [vmem:[#allocation13 + $0x30] sm:$0xff]
    %v182 = vld [vmem:[#allocation13 + $0x38] sm:$0xff]
    %v183 = vld [vmem:[#allocation13 + $0x40] sm:$0xff]
    %v184 = vld [vmem:[#allocation13 + $0x48] sm:$0xff]
    %v185 = vld [vmem:[#allocation13 + $0x50] sm:$0xff]
    %v186 = vld [vmem:[#allocation13 + $0x58] sm:$0xff]
    %v187 = vld [vmem:[#allocation13 + $0x60] sm:$0xff]
    %v188 = vld [vmem:[#allocation13 + $0x68] sm:$0xff]
    %v189 = vld [vmem:[#allocation13 + $0x70] sm:$0xff]
    %v190 = vld [vmem:[#allocation13 + $0x78] sm:$0xff]
    %v191 = vld [vmem:[#allocation13 + $0x80] sm:$0xff]
    %v192 = vld [vmem:[#allocation13 + $0x88] sm:$0xff]
    %v193 = vld [vmem:[#allocation13 + $0x90] sm:$0xff]
    %v194 = vld [vmem:[#allocation13 + $0x98] sm:$0xff]
    %v195 = vld [vmem:[#allocation13 + $0xa0] sm:$0xff]
    %v196 = vld [vmem:[#allocation13 + $0xa8] sm:$0xff]
    %v197 = vld [vmem:[#allocation13 + $0xb0] sm:$0xff]
    %v198 = vld [vmem:[#allocation13 + $0xb8] sm:$0xff]
    %v199 = vld [vmem:[#allocation13 + $0xc0] sm:$0xff]
    %v200 = vld [vmem:[#allocation13 + $0xc8] sm:$0xff]
    %v201 = vld [vmem:[#allocation13 + $0xd0] sm:$0xff]
    %v202 = vld [vmem:[#allocation13 + $0xd8] sm:$0xff]
    %v203 = vld [vmem:[#allocation13 + $0xe0] sm:$0xff]
    %v204 = vld [vmem:[#allocation13 + $0xe8] sm:$0xff]
    %v205 = vld [vmem:[#allocation13 + $0xf0] sm:$0xff]
    %v206 = vld [vmem:[#allocation13 + $0xf8] sm:$0xff]
    %v207 = vld [vmem:[#allocation13 + $0x100] sm:$0xff]
    %v208 = vld [vmem:[#allocation13 + $0x108] sm:$0xff]
    %v209 = vld [vmem:[#allocation13 + $0x110] sm:$0xff]
    %v210 = vld [vmem:[#allocation13 + $0x118] sm:$0xff]
    %v211 = vld [vmem:[#allocation13 + $0x120] sm:$0xff]
    %v212 = vld [vmem:[#allocation13 + $0x128] sm:$0xff]
    %v213 = vld [vmem:[#allocation13 + $0x130] sm:$0xff]
    %v214 = vld [vmem:[#allocation13 + $0x138] sm:$0xff]
    %v215 = vld [vmem:[#allocation13 + $0x140] sm:$0xff]
    %v216 = vld [vmem:[#allocation13 + $0x148] sm:$0xff]
    %v217 = vld [vmem:[#allocation13 + $0x150] sm:$0xff]
    %v218 = vld [vmem:[#allocation13 + $0x158] sm:$0xff]
    %v219 = vld [vmem:[#allocation13 + $0x160] sm:$0xff]
    %v220 = vld [vmem:[#allocation13 + $0x168] sm:$0xff]
    %v221 = vld [vmem:[#allocation13 + $0x170] sm:$0xff]
    %v222 = vld [vmem:[#allocation13 + $0x178] sm:$0xff]
    %v223 = vld [vmem:[#allocation13 + $0x180] sm:$0xff]
    %v224 = vld [vmem:[#allocation13 + $0x188] sm:$0xff]
    %v225 = vld [vmem:[#allocation13 + $0x190] sm:$0xff]
    %v226 = vld [vmem:[#allocation13 + $0x198] sm:$0xff]
    %v227 = vld [vmem:[#allocation13 + $0x1a0] sm:$0xff]
    %v228 = vld [vmem:[#allocation13 + $0x1a8] sm:$0xff]
    %v229 = vld [vmem:[#allocation13 + $0x1b0] sm:$0xff]
    %v230 = vld [vmem:[#allocation13 + $0x1b8] sm:$0xff]
    %v231 = vld [vmem:[#allocation13 + $0x1c0] sm:$0xff]
    %v232 = vld [vmem:[#allocation13 + $0x1c8] sm:$0xff]
    %v233 = vld [vmem:[#allocation13 + $0x1d0] sm:$0xff]
    %v234 = vld [vmem:[#allocation13 + $0x1d8] sm:$0xff]
    %v235 = vld [vmem:[#allocation13 + $0x1e0] sm:$0xff]
    %v236 = vld [vmem:[#allocation13 + $0x1e8] sm:$0xff]
    %v237 = vld [vmem:[#allocation13 + $0x1f0] sm:$0xff]
    %v238 = vld [vmem:[#allocation13 + $0x1f8] sm:$0xff]
    %v239 = vld [vmem:[#allocation15] sm:$0xff]
    %v240 = vld [vmem:[#allocation15 + $0x8] sm:$0xff]
    %v241 = vld [vmem:[#allocation15 + $0x10] sm:$0xff]
    %v242 = vld [vmem:[#allocation15 + $0x18] sm:$0xff]
    %v243 = vld [vmem:[#allocation15 + $0x20] sm:$0xff]
    %v244 = vld [vmem:[#allocation15 + $0x28] sm:$0xff]
    %v245 = vld [vmem:[#allocation15 + $0x30] sm:$0xff]
    %v246 = vld [vmem:[#allocation15 + $0x38] sm:$0xff]
    %v247 = vld [vmem:[#allocation15 + $0x40] sm:$0xff]
    %v248 = vld [vmem:[#allocation15 + $0x48] sm:$0xff]
    %v249 = vld [vmem:[#allocation15 + $0x50] sm:$0xff]
    %v250 = vld [vmem:[#allocation15 + $0x58] sm:$0xff]
    %v251 = vld [vmem:[#allocation15 + $0x60] sm:$0xff]
    %v252 = vld [vmem:[#allocation15 + $0x68] sm:$0xff]
    %v253 = vld [vmem:[#allocation15 + $0x70] sm:$0xff]
    %v254 = vld [vmem:[#allocation15 + $0x78] sm:$0xff]
    %v255 = vld [vmem:[%s0] sm:$0xff]
    %v256 = vld [vmem:[%s0 + $0x8] sm:$0xff]
    %v257 = vld [vmem:[%s0 + $0x10] sm:$0xff]
    %v258 = vld [vmem:[%s0 + $0x18] sm:$0xff]
    %v259 = vld [vmem:[%s0 + $0x20] sm:$0xff]
    %v260 = vld [vmem:[%s0 + $0x28] sm:$0xff]
    %v261 = vld [vmem:[%s0 + $0x30] sm:$0xff]
    %v262 = vld [vmem:[%s0 + $0x38] sm:$0xff]
    %vm271 = vcmask 1040384
    %v272 = vrot.slane %v255, 7
    %v273 = vrot.slane %v256, 7
    %v274 = vrot.slane %v257, 7
    %v275 = vrot.slane %v258, 7
    %v276 = vrot.slane %v259, 7
    %v277 = vsel %vm271, %v272, %v276
    %v278 = vrot.slane %v260, 7
    %v279 = vsel %vm271, %v273, %v278
    %v280 = vrot.slane %v261, 7
    %v281 = vsel %vm271, %v274, %v280
    %v282 = vrot.slane %v262, 7
    %v283 = vsel %vm271, %v275, %v282
    %296 = vst [vmem:[#allocation2] sm:$0xfe] %v272
    %297 = vst [vmem:[#allocation2 + $0x8] sm:$0xfe] %v273
    %298 = vst [vmem:[#allocation2 + $0x10] sm:$0xfe] %v274
    %299 = vst [vmem:[#allocation2 + $0x18] sm:$0xfe] %v275
    %300 = vst [vmem:[#allocation2 + $0x28] sm:$0xff] %v277
    %301 = vst [vmem:[#allocation2 + $0x30] sm:$0xff] %v279
    %302 = vst [vmem:[#allocation2 + $0x38] sm:$0xff] %v281
    %303 = vst [vmem:[#allocation2 + $0x40] sm:$0xff] %v283
    %304 = vst [vmem:[#allocation2 + $0x50] sm:$0x1] %v276
    %305 = vst [vmem:[#allocation2 + $0x58] sm:$0x1] %v278
    %306 = vst [vmem:[#allocation2 + $0x60] sm:$0x1] %v280
    %307 = vst [vmem:[#allocation2 + $0x68] sm:$0x1] %v282
    %v308 = vld [vmem:[%s0 + $0x40] sm:$0xff]
    %v309 = vld [vmem:[%s0 + $0x48] sm:$0xff]
    %v310 = vld [vmem:[%s0 + $0x50] sm:$0xff]
    %v311 = vld [vmem:[%s0 + $0x58] sm:$0xff]
    %v312 = vld [vmem:[%s0 + $0x60] sm:$0xff]
    %v313 = vld [vmem:[%s0 + $0x68] sm:$0xff]
    %v314 = vld [vmem:[%s0 + $0x70] sm:$0xff]
    %v315 = vld [vmem:[%s0 + $0x78] sm:$0xff]
    %vm324 = vcmask 1042432
    %v325 = vrot.slane %v308, 5
    %v326 = vrot.slane %v309, 5
    %v327 = vrot.slane %v310, 5
    %v328 = vrot.slane %v311, 5
    %v329 = vrot.slane %v312, 5
    %v330 = vsel %vm324, %v325, %v329
    %v331 = vrot.slane %v313, 5
    %v332 = vsel %vm324, %v326, %v331
    %v333 = vrot.slane %v314, 5
    %v334 = vsel %vm324, %v327, %v333
    %v335 = vrot.slane %v315, 5
    %v336 = vsel %vm324, %v328, %v335
    %349 = vst [vmem:[#allocation2 + $0x50] sm:$0xf8] %v325
    %350 = vst [vmem:[#allocation2 + $0x58] sm:$0xf8] %v326
    %351 = vst [vmem:[#allocation2 + $0x60] sm:$0xf8] %v327
    %352 = vst [vmem:[#allocation2 + $0x68] sm:$0xf8] %v328
    %353 = vst [vmem:[#allocation2 + $0x78] sm:$0xff] %v330
    %354 = vst [vmem:[#allocation2 + $0x80] sm:$0xff] %v332
    %355 = vst [vmem:[#allocation2 + $0x88] sm:$0xff] %v334
    %356 = vst [vmem:[#allocation2 + $0x90] sm:$0xff] %v336
    %357 = vst [vmem:[#allocation2 + $0xa0] sm:$0x7] %v329
    %358 = vst [vmem:[#allocation2 + $0xa8] sm:$0x7] %v331
    %359 = vst [vmem:[#allocation2 + $0xb0] sm:$0x7] %v333
    %360 = vst [vmem:[#allocation2 + $0xb8] sm:$0x7] %v335
    %v361 = vld [vmem:[#allocation2] sm:$0xff]
    %v362 = vld [vmem:[#allocation2 + $0x8] sm:$0xff]
    %v363 = vld [vmem:[#allocation2 + $0x10] sm:$0xff]
    %v364 = vld [vmem:[#allocation2 + $0x18] sm:$0xff]
    %v365 = vld [vmem:[#allocation2 + $0x20] sm:$0xff]
    %v366 = vld [vmem:[#allocation2 + $0x28] sm:$0xff]
    %v367 = vld [vmem:[#allocation2 + $0x30] sm:$0xff]
    %v368 = vld [vmem:[#allocation2 + $0x38] sm:$0xff]
    %v369 = vld [vmem:[#allocation2 + $0x40] sm:$0xff]
    %v370 = vld [vmem:[#allocation2 + $0x48] sm:$0xff]
    %v371 = vld [vmem:[#allocation2 + $0x50] sm:$0xff]
    %v372 = vld [vmem:[#allocation2 + $0x58] sm:$0xff]
    %v373 = vld [vmem:[#allocation2 + $0x60] sm:$0xff]
    %v374 = vld [vmem:[#allocation2 + $0x68] sm:$0xff]
    %v375 = vld [vmem:[#allocation2 + $0x70] sm:$0xff]
    %v376 = vld [vmem:[#allocation2 + $0x78] sm:$0xff]
    %v377 = vld [vmem:[#allocation2 + $0x80] sm:$0xff]
    %v378 = vld [vmem:[#allocation2 + $0x88] sm:$0xff]
    %v379 = vld [vmem:[#allocation2 + $0x90] sm:$0xff]
    %v380 = vld [vmem:[#allocation2 + $0x98] sm:$0xff]
    %v381 = vld [vmem:[#allocation2 + $0xa0] sm:$0xf]
    %v382 = vld [vmem:[#allocation2 + $0xa8] sm:$0xf]
    %v383 = vld [vmem:[#allocation2 + $0xb0] sm:$0xf]
    %v384 = vld [vmem:[#allocation2 + $0xb8] sm:$0xf]
    %v385 = vld [vmem:[#allocation2 + $0xc0] sm:$0xf]
    %v386 = vpack.c.bf16 %v366, %v361
    %v387 = vpack.c.bf16 %v367, %v362
    %v388 = vpack.c.bf16 %v368, %v363
    %v389 = vpack.c.bf16 %v369, %v364
    %v390 = vpack.c.bf16 %v370, %v365
    %v391 = vpack.c.bf16 %v376, %v371
    %v392 = vpack.c.bf16 %v377, %v372
    %v393 = vpack.c.bf16 %v378, %v373
    %v394 = vpack.c.bf16 %v379, %v374
    %v395 = vpack.c.bf16 %v380, %v375
    %v396 = vpack.c.bf16 %v381, %v381
    %v397 = vpack.c.bf16 %v382, %v382
    %v398 = vpack.c.bf16 %v383, %v383
    %v399 = vpack.c.bf16 %v384, %v384
    %v400 = vpack.c.bf16 %v385, %v385
    %v401 = vld [vmem:[#allocation5] sm:$0xff]
    %v402 = vld [vmem:[#allocation5 + $0x8] sm:$0xff]
    %v403 = vld [vmem:[#allocation5 + $0x10] sm:$0xff]
    %v404 = vld [vmem:[#allocation5 + $0x18] sm:$0xff]
    %v405 = vld [vmem:[#allocation5 + $0x20] sm:$0xff]
    %v406 = vld [vmem:[#allocation5 + $0x28] sm:$0xff]
    %v407 = vld [vmem:[#allocation5 + $0x30] sm:$0xff]
    %v408 = vld [vmem:[#allocation5 + $0x38] sm:$0xff]
    %v409 = vld [vmem:[#allocation5 + $0x40] sm:$0xff]
    %v410 = vld [vmem:[#allocation5 + $0x48] sm:$0xff]
    %v411 = vld [vmem:[#allocation5 + $0x50] sm:$0xff]
    %v412 = vld [vmem:[#allocation5 + $0x58] sm:$0xff]
    %v413 = vld [vmem:[#allocation5 + $0x60] sm:$0xff]
    %v414 = vld [vmem:[#allocation5 + $0x68] sm:$0xff]
    %v415 = vld [vmem:[#allocation5 + $0x70] sm:$0xff]
    %v416 = vld [vmem:[#allocation5 + $0x78] sm:$0xff]
    %v417 = vld [vmem:[#allocation5 + $0x80] sm:$0xff]
    %v418 = vld [vmem:[#allocation5 + $0x88] sm:$0xff]
    %v419 = vld [vmem:[#allocation5 + $0x90] sm:$0xff]
    %v420 = vld [vmem:[#allocation5 + $0x98] sm:$0xff]
    %v421 = vld [vmem:[#allocation5 + $0xa0] sm:$0xff]
    %v422 = vld [vmem:[#allocation5 + $0xa8] sm:$0xff]
    %v423 = vld [vmem:[#allocation5 + $0xb0] sm:$0xff]
    %v424 = vld [vmem:[#allocation5 + $0xb8] sm:$0xff]
    %v425 = vld [vmem:[#allocation5 + $0xc0] sm:$0xff]
    %v426 = vld [vmem:[#allocation5 + $0xc8] sm:$0xff]
    %v427 = vld [vmem:[#allocation5 + $0xd0] sm:$0xff]
    %v428 = vld [vmem:[#allocation5 + $0xd8] sm:$0xff]
    %v429 = vld [vmem:[#allocation5 + $0xe0] sm:$0xff]
    %v430 = vld [vmem:[#allocation5 + $0xe8] sm:$0xff]
    %v431 = vld [vmem:[#allocation5 + $0xf0] sm:$0xff]
    %v432 = vld [vmem:[#allocation5 + $0xf8] sm:$0xff]
    %v433 = vld [vmem:[#allocation5 + $0x100] sm:$0xff]
    %v434 = vld [vmem:[#allocation5 + $0x108] sm:$0xff]
    %v435 = vld [vmem:[#allocation5 + $0x110] sm:$0xff]
    %v436 = vld [vmem:[#allocation5 + $0x118] sm:$0xff]
    %v437 = vld [vmem:[#allocation5 + $0x120] sm:$0xff]
    %v438 = vld [vmem:[#allocation5 + $0x128] sm:$0xff]
    %v439 = vld [vmem:[#allocation5 + $0x130] sm:$0xff]
    %v440 = vld [vmem:[#allocation5 + $0x138] sm:$0xff]
    %v441 = vld [vmem:[#allocation5 + $0x140] sm:$0xff]
    %v442 = vld [vmem:[#allocation5 + $0x148] sm:$0xff]
    %v443 = vld [vmem:[#allocation5 + $0x150] sm:$0xff]
    %v444 = vld [vmem:[#allocation5 + $0x158] sm:$0xff]
    %v445 = vld [vmem:[#allocation5 + $0x160] sm:$0xff]
    %v446 = vld [vmem:[#allocation5 + $0x168] sm:$0xff]
    %v447 = vld [vmem:[#allocation5 + $0x170] sm:$0xff]
    %v448 = vld [vmem:[#allocation5 + $0x178] sm:$0xff]
    %v449 = vld [vmem:[#allocation5 + $0x180] sm:$0xff]
    %v450 = vld [vmem:[#allocation5 + $0x188] sm:$0xff]
    %v451 = vld [vmem:[#allocation5 + $0x190] sm:$0xff]
    %v452 = vld [vmem:[#allocation5 + $0x198] sm:$0xff]
    %v453 = vld [vmem:[#allocation5 + $0x1a0] sm:$0xff]
    %v454 = vld [vmem:[#allocation5 + $0x1a8] sm:$0xff]
    %v455 = vld [vmem:[#allocation5 + $0x1b0] sm:$0xff]
    %v456 = vld [vmem:[#allocation5 + $0x1b8] sm:$0xff]
    %v457 = vld [vmem:[#allocation5 + $0x1c0] sm:$0xff]
    %v458 = vld [vmem:[#allocation5 + $0x1c8] sm:$0xff]
    %v459 = vld [vmem:[#allocation5 + $0x1d0] sm:$0xff]
    %v460 = vld [vmem:[#allocation5 + $0x1d8] sm:$0xff]
    %v461 = vld [vmem:[#allocation5 + $0x1e0] sm:$0xff]
    %v462 = vld [vmem:[#allocation5 + $0x1e8] sm:$0xff]
    %v463 = vld [vmem:[#allocation5 + $0x1f0] sm:$0xff]
    %v464 = vld [vmem:[#allocation5 + $0x1f8] sm:$0xff]
    %v465 = vld [vmem:[#allocation5 + $0x200] sm:$0xff]
    %v466 = vld [vmem:[#allocation5 + $0x208] sm:$0xff]
    %v467 = vld [vmem:[#allocation5 + $0x210] sm:$0xff]
    %v468 = vld [vmem:[#allocation5 + $0x218] sm:$0xff]
    %v469 = vld [vmem:[#allocation5 + $0x220] sm:$0xff]
    %v470 = vld [vmem:[#allocation5 + $0x228] sm:$0xff]
    %v471 = vld [vmem:[#allocation5 + $0x230] sm:$0xff]
    %v472 = vld [vmem:[#allocation5 + $0x238] sm:$0xff]
    %v473 = vld [vmem:[#allocation5 + $0x240] sm:$0xff]
    %v474 = vld [vmem:[#allocation5 + $0x248] sm:$0xff]
    %v475 = vld [vmem:[#allocation5 + $0x250] sm:$0xff]
    %v476 = vld [vmem:[#allocation5 + $0x258] sm:$0xff]
    %v477 = vld [vmem:[#allocation5 + $0x260] sm:$0xff]
    %v478 = vld [vmem:[#allocation5 + $0x268] sm:$0xff]
    %v479 = vld [vmem:[#allocation5 + $0x270] sm:$0xff]
    %v480 = vld [vmem:[#allocation5 + $0x278] sm:$0xff]
    %v481 = vld [vmem:[#allocation5 + $0x280] sm:$0xff]
    %v482 = vld [vmem:[#allocation5 + $0x288] sm:$0xff]
    %v483 = vld [vmem:[#allocation5 + $0x290] sm:$0xff]
    %v484 = vld [vmem:[#allocation5 + $0x298] sm:$0xff]
    %v485 = vld [vmem:[#allocation5 + $0x2a0] sm:$0xff]
    %v486 = vld [vmem:[#allocation5 + $0x2a8] sm:$0xff]
    %v487 = vld [vmem:[#allocation5 + $0x2b0] sm:$0xff]
    %v488 = vld [vmem:[#allocation5 + $0x2b8] sm:$0xff]
    %v489 = vld [vmem:[#allocation5 + $0x2c0] sm:$0xff]
    %v490 = vld [vmem:[#allocation5 + $0x2c8] sm:$0xff]
    %v491 = vld [vmem:[#allocation5 + $0x2d0] sm:$0xff]
    %v492 = vld [vmem:[#allocation5 + $0x2d8] sm:$0xff]
    %v493 = vld [vmem:[#allocation5 + $0x2e0] sm:$0xff]
    %v494 = vld [vmem:[#allocation5 + $0x2e8] sm:$0xff]
    %v495 = vld [vmem:[#allocation5 + $0x2f0] sm:$0xff]
    %v496 = vld [vmem:[#allocation5 + $0x2f8] sm:$0xff]
    %v497 = vld [vmem:[#allocation5 + $0x300] sm:$0xff]
    %v498 = vld [vmem:[#allocation5 + $0x308] sm:$0xff]
    %v499 = vld [vmem:[#allocation5 + $0x310] sm:$0xff]
    %v500 = vld [vmem:[#allocation5 + $0x318] sm:$0xff]
    %v501 = vld [vmem:[#allocation5 + $0x320] sm:$0xff]
    %v502 = vld [vmem:[#allocation5 + $0x328] sm:$0xff]
    %v503 = vld [vmem:[#allocation5 + $0x330] sm:$0xff]
    %v504 = vld [vmem:[#allocation5 + $0x338] sm:$0xff]
    %v505 = vld [vmem:[#allocation5 + $0x340] sm:$0xff]
    %v506 = vld [vmem:[#allocation5 + $0x348] sm:$0xff]
    %v507 = vld [vmem:[#allocation5 + $0x350] sm:$0xff]
    %v508 = vld [vmem:[#allocation5 + $0x358] sm:$0xff]
    %v509 = vld [vmem:[#allocation5 + $0x360] sm:$0xff]
    %v510 = vld [vmem:[#allocation5 + $0x368] sm:$0xff]
    %v511 = vld [vmem:[#allocation5 + $0x370] sm:$0xff]
    %v512 = vld [vmem:[#allocation5 + $0x378] sm:$0xff]
    %v513 = vld [vmem:[#allocation5 + $0x380] sm:$0xff]
    %v514 = vld [vmem:[#allocation5 + $0x388] sm:$0xff]
    %v515 = vld [vmem:[#allocation5 + $0x390] sm:$0xff]
    %v516 = vld [vmem:[#allocation5 + $0x398] sm:$0xff]
    %v517 = vld [vmem:[#allocation5 + $0x3a0] sm:$0xff]
    %v518 = vld [vmem:[#allocation5 + $0x3a8] sm:$0xff]
    %v519 = vld [vmem:[#allocation5 + $0x3b0] sm:$0xff]
    %v520 = vld [vmem:[#allocation5 + $0x3b8] sm:$0xff]
    %v521 = vld [vmem:[#allocation5 + $0x3c0] sm:$0xff]
    %v522 = vld [vmem:[#allocation5 + $0x3c8] sm:$0xff]
    %v523 = vld [vmem:[#allocation5 + $0x3d0] sm:$0xff]
    %v524 = vld [vmem:[#allocation5 + $0x3d8] sm:$0xff]
    %v525 = vld [vmem:[#allocation5 + $0x3e0] sm:$0xff]
    %v526 = vld [vmem:[#allocation5 + $0x3e8] sm:$0xff]
    %v527 = vld [vmem:[#allocation5 + $0x3f0] sm:$0xff]
    %v528 = vld [vmem:[#allocation5 + $0x3f8] sm:$0xff]
    %v529 = vld [vmem:[#allocation5 + $0x400] sm:$0xff]
    %v530 = vld [vmem:[#allocation5 + $0x408] sm:$0xff]
    %v531 = vld [vmem:[#allocation5 + $0x410] sm:$0xff]
    %v532 = vld [vmem:[#allocation5 + $0x418] sm:$0xff]
    %v533 = vld [vmem:[#allocation5 + $0x420] sm:$0xff]
    %v534 = vld [vmem:[#allocation5 + $0x428] sm:$0xff]
    %v535 = vld [vmem:[#allocation5 + $0x430] sm:$0xff]
    %v536 = vld [vmem:[#allocation5 + $0x438] sm:$0xff]
    %v537 = vld [vmem:[#allocation5 + $0x440] sm:$0xff]
    %v538 = vld [vmem:[#allocation5 + $0x448] sm:$0xff]
    %v539 = vld [vmem:[#allocation5 + $0x450] sm:$0xff]
    %v540 = vld [vmem:[#allocation5 + $0x458] sm:$0xff]
    %v541 = vld [vmem:[#allocation5 + $0x460] sm:$0xff]
    %v542 = vld [vmem:[#allocation5 + $0x468] sm:$0xff]
    %v543 = vld [vmem:[#allocation5 + $0x470] sm:$0xff]
    %v544 = vld [vmem:[#allocation5 + $0x478] sm:$0xff]
    %s545 = scalar_lea.vmem [#allocation5], 1152
    %v546 = vld [vmem:[%s545] sm:$0xff]
    %v547 = vld [vmem:[%s545 + $0x8] sm:$0xff]
    %v548 = vld [vmem:[%s545 + $0x10] sm:$0xff]
    %v549 = vld [vmem:[%s545 + $0x18] sm:$0xff]
    %v550 = vld [vmem:[%s545 + $0x20] sm:$0xff]
    %v551 = vld [vmem:[%s545 + $0x28] sm:$0xff]
    %v552 = vld [vmem:[%s545 + $0x30] sm:$0xff]
    %v553 = vld [vmem:[%s545 + $0x38] sm:$0xff]
    %v554 = vld [vmem:[%s545 + $0x40] sm:$0xff]
    %v555 = vld [vmem:[%s545 + $0x48] sm:$0xff]
    %v556 = vld [vmem:[%s545 + $0x50] sm:$0xff]
    %v557 = vld [vmem:[%s545 + $0x58] sm:$0xff]
    %v558 = vld [vmem:[%s545 + $0x60] sm:$0xff]
    %v559 = vld [vmem:[%s545 + $0x68] sm:$0xff]
    %v560 = vld [vmem:[%s545 + $0x70] sm:$0xff]
    %v561 = vld [vmem:[%s545 + $0x78] sm:$0xff]
    %v562 = vld [vmem:[%s545 + $0x80] sm:$0xff]
    %v563 = vld [vmem:[%s545 + $0x88] sm:$0xff]
    %v564 = vld [vmem:[%s545 + $0x90] sm:$0xff]
    %v565 = vld [vmem:[%s545 + $0x98] sm:$0xff]
    %v566 = vld [vmem:[%s545 + $0xa0] sm:$0xff]
    %v567 = vld [vmem:[%s545 + $0xa8] sm:$0xff]
    %v568 = vld [vmem:[%s545 + $0xb0] sm:$0xff]
    %v569 = vld [vmem:[%s545 + $0xb8] sm:$0xff]
    %v570 = vld [vmem:[%s545 + $0xc0] sm:$0xff]
    %v571 = vld [vmem:[%s545 + $0xc8] sm:$0xff]
    %v572 = vld [vmem:[%s545 + $0xd0] sm:$0xff]
    %v573 = vld [vmem:[%s545 + $0xd8] sm:$0xff]
    %v574 = vld [vmem:[%s545 + $0xe0] sm:$0xff]
    %v575 = vld [vmem:[%s545 + $0xe8] sm:$0xff]
    %v576 = vld [vmem:[%s545 + $0xf0] sm:$0xff]
    %v577 = vld [vmem:[%s545 + $0xf8] sm:$0xff]
    %v578 = vld [vmem:[%s545 + $0x100] sm:$0xff]
    %v579 = vld [vmem:[%s545 + $0x108] sm:$0xff]
    %v580 = vld [vmem:[%s545 + $0x110] sm:$0xff]
    %v581 = vld [vmem:[%s545 + $0x118] sm:$0xff]
    %v582 = vld [vmem:[%s545 + $0x120] sm:$0xff]
    %v583 = vld [vmem:[%s545 + $0x128] sm:$0xff]
    %v584 = vld [vmem:[%s545 + $0x130] sm:$0xff]
    %v585 = vld [vmem:[%s545 + $0x138] sm:$0xff]
    %v586 = vld [vmem:[%s545 + $0x140] sm:$0xff]
    %v587 = vld [vmem:[%s545 + $0x148] sm:$0xff]
    %v588 = vld [vmem:[%s545 + $0x150] sm:$0xff]
    %v589 = vld [vmem:[%s545 + $0x158] sm:$0xff]
    %v590 = vld [vmem:[%s545 + $0x160] sm:$0xff]
    %v591 = vld [vmem:[%s545 + $0x168] sm:$0xff]
    %v592 = vld [vmem:[%s545 + $0x170] sm:$0xff]
    %v593 = vld [vmem:[%s545 + $0x178] sm:$0xff]
    %v594 = vld [vmem:[%s545 + $0x180] sm:$0xff]
    %v595 = vld [vmem:[%s545 + $0x188] sm:$0xff]
    %v596 = vld [vmem:[%s545 + $0x190] sm:$0xff]
    %v597 = vld [vmem:[%s545 + $0x198] sm:$0xff]
    %v598 = vld [vmem:[%s545 + $0x1a0] sm:$0xff]
    %v599 = vld [vmem:[%s545 + $0x1a8] sm:$0xff]
    %v600 = vld [vmem:[%s545 + $0x1b0] sm:$0xff]
    %v601 = vld [vmem:[%s545 + $0x1b8] sm:$0xff]
    %v602 = vld [vmem:[%s545 + $0x1c0] sm:$0xff]
    %v603 = vld [vmem:[%s545 + $0x1c8] sm:$0xff]
    %v604 = vld [vmem:[%s545 + $0x1d0] sm:$0xff]
    %v605 = vld [vmem:[%s545 + $0x1d8] sm:$0xff]
    %v606 = vld [vmem:[%s545 + $0x1e0] sm:$0xff]
    %v607 = vld [vmem:[%s545 + $0x1e8] sm:$0xff]
    %v608 = vld [vmem:[%s545 + $0x1f0] sm:$0xff]
    %v609 = vld [vmem:[%s545 + $0x1f8] sm:$0xff]
    %v610 = vld [vmem:[%s545 + $0x200] sm:$0xff]
    %v611 = vld [vmem:[%s545 + $0x208] sm:$0xff]
    %v612 = vld [vmem:[%s545 + $0x210] sm:$0xff]
    %v613 = vld [vmem:[%s545 + $0x218] sm:$0xff]
    %v614 = vld [vmem:[%s545 + $0x220] sm:$0xff]
    %v615 = vld [vmem:[%s545 + $0x228] sm:$0xff]
    %v616 = vld [vmem:[%s545 + $0x230] sm:$0xff]
    %v617 = vld [vmem:[%s545 + $0x238] sm:$0xff]
    %v618 = vld [vmem:[%s545 + $0x240] sm:$0xff]
    %v619 = vld [vmem:[%s545 + $0x248] sm:$0xff]
    %v620 = vld [vmem:[%s545 + $0x250] sm:$0xff]
    %v621 = vld [vmem:[%s545 + $0x258] sm:$0xff]
    %v622 = vld [vmem:[%s545 + $0x260] sm:$0xff]
    %v623 = vld [vmem:[%s545 + $0x268] sm:$0xff]
    %v624 = vld [vmem:[%s545 + $0x270] sm:$0xff]
    %v625 = vld [vmem:[%s545 + $0x278] sm:$0xff]
    %v626 = vld [vmem:[%s545 + $0x280] sm:$0xff]
    %v627 = vld [vmem:[%s545 + $0x288] sm:$0xff]
    %v628 = vld [vmem:[%s545 + $0x290] sm:$0xff]
    %v629 = vld [vmem:[%s545 + $0x298] sm:$0xff]
    %v630 = vld [vmem:[%s545 + $0x2a0] sm:$0xff]
    %v631 = vld [vmem:[%s545 + $0x2a8] sm:$0xff]
    %v632 = vld [vmem:[%s545 + $0x2b0] sm:$0xff]
    %v633 = vld [vmem:[%s545 + $0x2b8] sm:$0xff]
    %v634 = vld [vmem:[%s545 + $0x2c0] sm:$0xff]
    %v635 = vld [vmem:[%s545 + $0x2c8] sm:$0xff]
    %v636 = vld [vmem:[%s545 + $0x2d0] sm:$0xff]
    %v637 = vld [vmem:[%s545 + $0x2d8] sm:$0xff]
    %v638 = vld [vmem:[%s545 + $0x2e0] sm:$0xff]
    %v639 = vld [vmem:[%s545 + $0x2e8] sm:$0xff]
    %v640 = vld [vmem:[%s545 + $0x2f0] sm:$0xff]
    %v641 = vld [vmem:[%s545 + $0x2f8] sm:$0xff]
    %v642 = vld [vmem:[%s545 + $0x300] sm:$0xff]
    %v643 = vld [vmem:[%s545 + $0x308] sm:$0xff]
    %v644 = vld [vmem:[%s545 + $0x310] sm:$0xff]
    %v645 = vld [vmem:[%s545 + $0x318] sm:$0xff]
    %v646 = vld [vmem:[%s545 + $0x320] sm:$0xff]
    %v647 = vld [vmem:[%s545 + $0x328] sm:$0xff]
    %v648 = vld [vmem:[%s545 + $0x330] sm:$0xff]
    %v649 = vld [vmem:[%s545 + $0x338] sm:$0xff]
    %v650 = vld [vmem:[%s545 + $0x340] sm:$0xff]
    %v651 = vld [vmem:[%s545 + $0x348] sm:$0xff]
    %v652 = vld [vmem:[%s545 + $0x350] sm:$0xff]
    %v653 = vld [vmem:[%s545 + $0x358] sm:$0xff]
    %v654 = vld [vmem:[%s545 + $0x360] sm:$0xff]
    %v655 = vld [vmem:[%s545 + $0x368] sm:$0xff]
    %v656 = vld [vmem:[%s545 + $0x370] sm:$0xff]
    %v657 = vld [vmem:[%s545 + $0x378] sm:$0xff]
    %v658 = vld [vmem:[%s545 + $0x380] sm:$0xff]
    %v659 = vld [vmem:[%s545 + $0x388] sm:$0xff]
    %v660 = vld [vmem:[%s545 + $0x390] sm:$0xff]
    %v661 = vld [vmem:[%s545 + $0x398] sm:$0xff]
    %v662 = vld [vmem:[%s545 + $0x3a0] sm:$0xff]
    %v663 = vld [vmem:[%s545 + $0x3a8] sm:$0xff]
    %v664 = vld [vmem:[%s545 + $0x3b0] sm:$0xff]
    %v665 = vld [vmem:[%s545 + $0x3b8] sm:$0xff]
    %v666 = vld [vmem:[%s545 + $0x3c0] sm:$0xff]
    %v667 = vld [vmem:[%s545 + $0x3c8] sm:$0xff]
    %v668 = vld [vmem:[%s545 + $0x3d0] sm:$0xff]
    %v669 = vld [vmem:[%s545 + $0x3d8] sm:$0xff]
    %v670 = vld [vmem:[%s545 + $0x3e0] sm:$0xff]
    %v671 = vld [vmem:[%s545 + $0x3e8] sm:$0xff]
    %v672 = vld [vmem:[%s545 + $0x3f0] sm:$0xff]
    %v673 = vld [vmem:[%s545 + $0x3f8] sm:$0xff]
    %v674 = vld [vmem:[%s545 + $0x400] sm:$0xff]
    %v675 = vld [vmem:[%s545 + $0x408] sm:$0xff]
    %v676 = vld [vmem:[%s545 + $0x410] sm:$0xff]
    %v677 = vld [vmem:[%s545 + $0x418] sm:$0xff]
    %v678 = vld [vmem:[%s545 + $0x420] sm:$0xff]
    %v679 = vld [vmem:[%s545 + $0x428] sm:$0xff]
    %v680 = vld [vmem:[%s545 + $0x430] sm:$0xff]
    %v681 = vld [vmem:[%s545 + $0x438] sm:$0xff]
    %v682 = vld [vmem:[%s545 + $0x440] sm:$0xff]
    %v683 = vld [vmem:[%s545 + $0x448] sm:$0xff]
    %v684 = vld [vmem:[%s545 + $0x450] sm:$0xff]
    %v685 = vld [vmem:[%s545 + $0x458] sm:$0xff]
    %v686 = vld [vmem:[%s545 + $0x460] sm:$0xff]
    %v687 = vld [vmem:[%s545 + $0x468] sm:$0xff]
    %v688 = vld [vmem:[%s545 + $0x470] sm:$0xff]
    %v689 = vld [vmem:[%s545 + $0x478] sm:$0xff]
    %vm690 = vsmask.f32 7424
    %v692 = vshrl.u32 %v386, 16
    %v694 = vshll.u32 %v386, 16
    %v696 = vrot.slane %v694, 1
    %v697 = vor.u32 %v692, %v696
    %v699 = vshll.u32 %v391, 16
    %v701 = vrot.slane %v699, 1
    %v702 = vsel %vm690, %v697, %v701
    %v704 = vshrl.u32 %v387, 16
    %v706 = vshll.u32 %v387, 16
    %v708 = vrot.slane %v706, 1
    %v709 = vor.u32 %v704, %v708
    %v711 = vshll.u32 %v392, 16
    %v713 = vrot.slane %v711, 1
    %v714 = vsel %vm690, %v709, %v713
    %v716 = vshrl.u32 %v388, 16
    %v718 = vshll.u32 %v388, 16
    %v720 = vrot.slane %v718, 1
    %v721 = vor.u32 %v716, %v720
    %v723 = vshll.u32 %v393, 16
    %v725 = vrot.slane %v723, 1
    %v726 = vsel %vm690, %v721, %v725
    %v728 = vshrl.u32 %v389, 16
    %v730 = vshll.u32 %v389, 16
    %v732 = vrot.slane %v730, 1
    %v733 = vor.u32 %v728, %v732
    %v735 = vshll.u32 %v394, 16
    %v737 = vrot.slane %v735, 1
    %v738 = vsel %vm690, %v733, %v737
    %v740 = vshrl.u32 %v390, 16
    %v742 = vshll.u32 %v390, 16
    %v744 = vrot.slane %v742, 1
    %v745 = vor.u32 %v740, %v744
    %v747 = vshll.u32 %v395, 16
    %v749 = vrot.slane %v747, 1
    %v750 = vsel %vm690, %v745, %v749
    %v751 = vshrl.u32 %v391, 16
    %v753 = vor.u32 %v751, %v701
    %v755 = vshll.u32 %v396, 16
    %v757 = vrot.slane %v755, 1
    %v758 = vsel %vm690, %v753, %v757
    %v759 = vshrl.u32 %v392, 16
    %v761 = vor.u32 %v759, %v713
    %v763 = vshll.u32 %v397, 16
    %v765 = vrot.slane %v763, 1
    %v766 = vsel %vm690, %v761, %v765
    %v767 = vshrl.u32 %v393, 16
    %v769 = vor.u32 %v767, %v725
    %v771 = vshll.u32 %v398, 16
    %v773 = vrot.slane %v771, 1
    %v774 = vsel %vm690, %v769, %v773
    %v775 = vshrl.u32 %v394, 16
    %v777 = vor.u32 %v775, %v737
    %v779 = vshll.u32 %v399, 16
    %v781 = vrot.slane %v779, 1
    %v782 = vsel %vm690, %v777, %v781
    %v783 = vshrl.u32 %v395, 16
    %v785 = vor.u32 %v783, %v749
    %v787 = vshll.u32 %v400, 16
    %v789 = vrot.slane %v787, 1
    %v790 = vsel %vm690, %v785, %v789
    %v791 = vshrl.u32 %v396, 16
    %v793 = vor.u32 %v791, %v757
    %v794 = vshrl.u32 %v397, 16
    %v796 = vor.u32 %v794, %v765
    %v797 = vshrl.u32 %v398, 16
    %v799 = vor.u32 %v797, %v773
    %v800 = vshrl.u32 %v399, 16
    %v802 = vor.u32 %v800, %v781
    %v803 = vshrl.u32 %v400, 16
    %v805 = vor.u32 %v803, %v789
    %v962 = vunpack.c.l.b16 %v546
    %v963 = vunpack.c.h.b16 %v546
    %v964 = vunpack.c.l.b16 %v547
    %v965 = vunpack.c.h.b16 %v547
    %v966 = vunpack.c.l.b16 %v548
    %v967 = vunpack.c.h.b16 %v548
    %v968 = vunpack.c.l.b16 %v549
    %v969 = vunpack.c.h.b16 %v549
    %v970 = vunpack.c.l.b16 %v550
    %v971 = vunpack.c.h.b16 %v550
    %v972 = vunpack.c.l.b16 %v551
    %v973 = vunpack.c.h.b16 %v551
    %v974 = vunpack.c.l.b16 %v552
    %v975 = vunpack.c.h.b16 %v552
    %v976 = vunpack.c.l.b16 %v553
    %v977 = vunpack.c.h.b16 %v553
    %v978 = vunpack.c.l.b16 %v554
    %v979 = vunpack.c.h.b16 %v554
    %v980 = vunpack.c.l.b16 %v555
    %v981 = vunpack.c.h.b16 %v555
    %v982 = vunpack.c.l.b16 %v556
    %v983 = vunpack.c.h.b16 %v556
    %v984 = vunpack.c.l.b16 %v557
    %v985 = vunpack.c.h.b16 %v557
    %v986 = vunpack.c.l.b16 %v558
    %v987 = vunpack.c.h.b16 %v558
    %v988 = vunpack.c.l.b16 %v559
    %v989 = vunpack.c.h.b16 %v559
    %v990 = vunpack.c.l.b16 %v560
    %v991 = vunpack.c.h.b16 %v560
    %v992 = vunpack.c.l.b16 %v561
    %v993 = vunpack.c.h.b16 %v561
    %v994 = vunpack.c.l.b16 %v562
    %v995 = vunpack.c.h.b16 %v562
    %v996 = vunpack.c.l.b16 %v563
    %v997 = vunpack.c.h.b16 %v563
    %v998 = vunpack.c.l.b16 %v564
    %v999 = vunpack.c.h.b16 %v564
    %v1000 = vunpack.c.l.b16 %v565
    %v1001 = vunpack.c.h.b16 %v565
    %v1002 = vunpack.c.l.b16 %v566
    %v1003 = vunpack.c.h.b16 %v566
    %v1004 = vunpack.c.l.b16 %v567
    %v1005 = vunpack.c.h.b16 %v567
    %v1006 = vunpack.c.l.b16 %v568
    %v1007 = vunpack.c.h.b16 %v568
    %v1008 = vunpack.c.l.b16 %v569
    %v1009 = vunpack.c.h.b16 %v569
    %v1010 = vunpack.c.l.b16 %v570
    %v1011 = vunpack.c.h.b16 %v570
    %v1012 = vunpack.c.l.b16 %v571
    %v1013 = vunpack.c.h.b16 %v571
    %v1014 = vunpack.c.l.b16 %v572
    %v1015 = vunpack.c.h.b16 %v572
    %v1016 = vunpack.c.l.b16 %v573
    %v1017 = vunpack.c.h.b16 %v573
    %v1018 = vunpack.c.l.b16 %v574
    %v1019 = vunpack.c.h.b16 %v574
    %v1020 = vunpack.c.l.b16 %v575
    %v1021 = vunpack.c.h.b16 %v575
    %v1022 = vunpack.c.l.b16 %v576
    %v1023 = vunpack.c.h.b16 %v576
    %v1024 = vunpack.c.l.b16 %v577
    %v1025 = vunpack.c.h.b16 %v577
    %v1026 = vunpack.c.l.b16 %v578
    %v1027 = vunpack.c.h.b16 %v578
    %v1028 = vunpack.c.l.b16 %v579
    %v1029 = vunpack.c.h.b16 %v579
    %v1030 = vunpack.c.l.b16 %v580
    %v1031 = vunpack.c.h.b16 %v580
    %v1032 = vunpack.c.l.b16 %v581
    %v1033 = vunpack.c.h.b16 %v581
    %v1034 = vunpack.c.l.b16 %v582
    %v1035 = vunpack.c.h.b16 %v582
    %v1036 = vunpack.c.l.b16 %v583
    %v1037 = vunpack.c.h.b16 %v583
    %v1038 = vunpack.c.l.b16 %v584
    %v1039 = vunpack.c.h.b16 %v584
    %v1040 = vunpack.c.l.b16 %v585
    %v1041 = vunpack.c.h.b16 %v585
    %v1042 = vunpack.c.l.b16 %v586
    %v1043 = vunpack.c.h.b16 %v586
    %v1044 = vunpack.c.l.b16 %v587
    %v1045 = vunpack.c.h.b16 %v587
    %v1046 = vunpack.c.l.b16 %v588
    %v1047 = vunpack.c.h.b16 %v588
    %v1048 = vunpack.c.l.b16 %v589
    %v1049 = vunpack.c.h.b16 %v589
    %v1050 = vunpack.c.l.b16 %v590
    %v1051 = vunpack.c.h.b16 %v590
    %v1052 = vunpack.c.l.b16 %v591
    %v1053 = vunpack.c.h.b16 %v591
    %v1054 = vunpack.c.l.b16 %v592
    %v1055 = vunpack.c.h.b16 %v592
    %v1056 = vunpack.c.l.b16 %v593
    %v1057 = vunpack.c.h.b16 %v593
    %v1058 = vunpack.c.l.b16 %v594
    %v1059 = vunpack.c.h.b16 %v594
    %v1060 = vunpack.c.l.b16 %v595
    %v1061 = vunpack.c.h.b16 %v595
    %v1062 = vunpack.c.l.b16 %v596
    %v1063 = vunpack.c.h.b16 %v596
    %v1064 = vunpack.c.l.b16 %v597
    %v1065 = vunpack.c.h.b16 %v597
    %v1066 = vunpack.c.l.b16 %v598
    %v1067 = vunpack.c.h.b16 %v598
    %v1068 = vunpack.c.l.b16 %v599
    %v1069 = vunpack.c.h.b16 %v599
    %v1070 = vunpack.c.l.b16 %v600
    %v1071 = vunpack.c.h.b16 %v600
    %v1072 = vunpack.c.l.b16 %v601
    %v1073 = vunpack.c.h.b16 %v601
    %v1074 = vunpack.c.l.b16 %v602
    %v1075 = vunpack.c.h.b16 %v602
    %v1076 = vunpack.c.l.b16 %v603
    %v1077 = vunpack.c.h.b16 %v603
    %v1078 = vunpack.c.l.b16 %v604
    %v1079 = vunpack.c.h.b16 %v604
    %v1080 = vunpack.c.l.b16 %v605
    %v1081 = vunpack.c.h.b16 %v605
    %v1082 = vunpack.c.l.b16 %v606
    %v1083 = vunpack.c.h.b16 %v606
    %v1084 = vunpack.c.l.b16 %v607
    %v1085 = vunpack.c.h.b16 %v607
    %v1086 = vunpack.c.l.b16 %v608
    %v1087 = vunpack.c.h.b16 %v608
    %v1088 = vunpack.c.l.b16 %v609
    %v1089 = vunpack.c.h.b16 %v609
    %v1090 = vunpack.c.l.b16 %v610
    %v1091 = vunpack.c.h.b16 %v610
    %v1092 = vunpack.c.l.b16 %v611
    %v1093 = vunpack.c.h.b16 %v611
    %v1094 = vunpack.c.l.b16 %v612
    %v1095 = vunpack.c.h.b16 %v612
    %v1096 = vunpack.c.l.b16 %v613
    %v1097 = vunpack.c.h.b16 %v613
    %v1098 = vunpack.c.l.b16 %v614
    %v1099 = vunpack.c.h.b16 %v614
    %v1100 = vunpack.c.l.b16 %v615
    %v1101 = vunpack.c.h.b16 %v615
    %v1102 = vunpack.c.l.b16 %v616
    %v1103 = vunpack.c.h.b16 %v616
    %v1104 = vunpack.c.l.b16 %v617
    %v1105 = vunpack.c.h.b16 %v617
    %v1106 = vunpack.c.l.b16 %v618
    %v1107 = vunpack.c.h.b16 %v618
    %v1108 = vunpack.c.l.b16 %v619
    %v1109 = vunpack.c.h.b16 %v619
    %v1110 = vunpack.c.l.b16 %v620
    %v1111 = vunpack.c.h.b16 %v620
    %v1112 = vunpack.c.l.b16 %v621
    %v1113 = vunpack.c.h.b16 %v621
    %v1114 = vunpack.c.l.b16 %v622
    %v1115 = vunpack.c.h.b16 %v622
    %v1116 = vunpack.c.l.b16 %v623
    %v1117 = vunpack.c.h.b16 %v623
    %v1118 = vunpack.c.l.b16 %v624
    %v1119 = vunpack.c.h.b16 %v624
    %v1120 = vunpack.c.l.b16 %v625
    %v1121 = vunpack.c.h.b16 %v625
    %v1122 = vunpack.c.l.b16 %v626
    %v1123 = vunpack.c.h.b16 %v626
    %v1124 = vunpack.c.l.b16 %v627
    %v1125 = vunpack.c.h.b16 %v627
    %v1126 = vunpack.c.l.b16 %v628
    %v1127 = vunpack.c.h.b16 %v628
    %v1128 = vunpack.c.l.b16 %v629
    %v1129 = vunpack.c.h.b16 %v629
    %v1130 = vunpack.c.l.b16 %v630
    %v1131 = vunpack.c.h.b16 %v630
    %v1132 = vunpack.c.l.b16 %v631
    %v1133 = vunpack.c.h.b16 %v631
    %v1134 = vunpack.c.l.b16 %v632
    %v1135 = vunpack.c.h.b16 %v632
    %v1136 = vunpack.c.l.b16 %v633
    %v1137 = vunpack.c.h.b16 %v633
    %v1138 = vunpack.c.l.b16 %v634
    %v1139 = vunpack.c.h.b16 %v634
    %v1140 = vunpack.c.l.b16 %v635
    %v1141 = vunpack.c.h.b16 %v635
    %v1142 = vunpack.c.l.b16 %v636
    %v1143 = vunpack.c.h.b16 %v636
    %v1144 = vunpack.c.l.b16 %v637
    %v1145 = vunpack.c.h.b16 %v637
    %v1146 = vunpack.c.l.b16 %v638
    %v1147 = vunpack.c.h.b16 %v638
    %v1148 = vunpack.c.l.b16 %v639
    %v1149 = vunpack.c.h.b16 %v639
    %v1150 = vunpack.c.l.b16 %v640
    %v1151 = vunpack.c.h.b16 %v640
    %v1152 = vunpack.c.l.b16 %v641
    %v1153 = vunpack.c.h.b16 %v641
    %v1154 = vunpack.c.l.b16 %v642
    %v1155 = vunpack.c.h.b16 %v642
    %v1156 = vunpack.c.l.b16 %v643
    %v1157 = vunpack.c.h.b16 %v643
    %v1158 = vunpack.c.l.b16 %v644
    %v1159 = vunpack.c.h.b16 %v644
    %v1160 = vunpack.c.l.b16 %v645
    %v1161 = vunpack.c.h.b16 %v645
    %v1162 = vunpack.c.l.b16 %v646
    %v1163 = vunpack.c.h.b16 %v646
    %v1164 = vunpack.c.l.b16 %v647
    %v1165 = vunpack.c.h.b16 %v647
    %v1166 = vunpack.c.l.b16 %v648
    %v1167 = vunpack.c.h.b16 %v648
    %v1168 = vunpack.c.l.b16 %v649
    %v1169 = vunpack.c.h.b16 %v649
    %v1170 = vunpack.c.l.b16 %v650
    %v1171 = vunpack.c.h.b16 %v650
    %v1172 = vunpack.c.l.b16 %v651
    %v1173 = vunpack.c.h.b16 %v651
    %v1174 = vunpack.c.l.b16 %v652
    %v1175 = vunpack.c.h.b16 %v652
    %v1176 = vunpack.c.l.b16 %v653
    %v1177 = vunpack.c.h.b16 %v653
    %v1178 = vunpack.c.l.b16 %v654
    %v1179 = vunpack.c.h.b16 %v654
    %v1180 = vunpack.c.l.b16 %v655
    %v1181 = vunpack.c.h.b16 %v655
    %v1182 = vunpack.c.l.b16 %v656
    %v1183 = vunpack.c.h.b16 %v656
    %v1184 = vunpack.c.l.b16 %v657
    %v1185 = vunpack.c.h.b16 %v657
    %v1186 = vunpack.c.l.b16 %v658
    %v1187 = vunpack.c.h.b16 %v658
    %v1188 = vunpack.c.l.b16 %v659
    %v1189 = vunpack.c.h.b16 %v659
    %v1190 = vunpack.c.l.b16 %v660
    %v1191 = vunpack.c.h.b16 %v660
    %v1192 = vunpack.c.l.b16 %v661
    %v1193 = vunpack.c.h.b16 %v661
    %v1194 = vunpack.c.l.b16 %v662
    %v1195 = vunpack.c.h.b16 %v662
    %v1196 = vunpack.c.l.b16 %v663
    %v1197 = vunpack.c.h.b16 %v663
    %v1198 = vunpack.c.l.b16 %v664
    %v1199 = vunpack.c.h.b16 %v664
    %v1200 = vunpack.c.l.b16 %v665
    %v1201 = vunpack.c.h.b16 %v665
    %v1202 = vunpack.c.l.b16 %v666
    %v1203 = vunpack.c.h.b16 %v666
    %v1204 = vunpack.c.l.b16 %v667
    %v1205 = vunpack.c.h.b16 %v667
    %v1206 = vunpack.c.l.b16 %v668
    %v1207 = vunpack.c.h.b16 %v668
    %v1208 = vunpack.c.l.b16 %v669
    %v1209 = vunpack.c.h.b16 %v669
    %v1210 = vunpack.c.l.b16 %v670
    %v1211 = vunpack.c.h.b16 %v670
    %v1212 = vunpack.c.l.b16 %v671
    %v1213 = vunpack.c.h.b16 %v671
    %v1214 = vunpack.c.l.b16 %v672
    %v1215 = vunpack.c.h.b16 %v672
    %v1216 = vunpack.c.l.b16 %v673
    %v1217 = vunpack.c.h.b16 %v673
    %v1218 = vunpack.c.l.b16 %v674
    %v1219 = vunpack.c.h.b16 %v674
    %v1220 = vunpack.c.l.b16 %v675
    %v1221 = vunpack.c.h.b16 %v675
    %v1222 = vunpack.c.l.b16 %v676
    %v1223 = vunpack.c.h.b16 %v676
    %v1224 = vunpack.c.l.b16 %v677
    %v1225 = vunpack.c.h.b16 %v677
    %v1226 = vunpack.c.l.b16 %v678
    %v1227 = vunpack.c.h.b16 %v678
    %v1228 = vunpack.c.l.b16 %v679
    %v1229 = vunpack.c.h.b16 %v679
    %v1230 = vunpack.c.l.b16 %v680
    %v1231 = vunpack.c.h.b16 %v680
    %v1232 = vunpack.c.l.b16 %v681
    %v1233 = vunpack.c.h.b16 %v681
    %v1234 = vunpack.c.l.b16 %v682
    %v1235 = vunpack.c.h.b16 %v682
    %v1236 = vunpack.c.l.b16 %v683
    %v1237 = vunpack.c.h.b16 %v683
    %v1238 = vunpack.c.l.b16 %v684
    %v1239 = vunpack.c.h.b16 %v684
    %v1240 = vunpack.c.l.b16 %v685
    %v1241 = vunpack.c.h.b16 %v685
    %v1242 = vunpack.c.l.b16 %v686
    %v1243 = vunpack.c.h.b16 %v686
    %v1244 = vunpack.c.l.b16 %v687
    %v1245 = vunpack.c.h.b16 %v687
    %v1246 = vunpack.c.l.b16 %v688
    %v1247 = vunpack.c.h.b16 %v688
    %v1248 = vunpack.c.l.b16 %v689
    %v1249 = vunpack.c.h.b16 %v689
    %v1250 = vpack.c.b16 %v966, %v962
    %v1251 = vpack.c.b16 %v967, %v963
    %v1252 = vpack.c.b16 %v968, %v964
    %v1253 = vpack.c.b16 %v969, %v965
    %v1254 = vpack.c.b16 %v974, %v970
    %v1255 = vpack.c.b16 %v975, %v971
    %v1256 = vpack.c.b16 %v976, %v972
    %v1257 = vpack.c.b16 %v977, %v973
    %v1258 = vpack.c.b16 %v982, %v978
    %v1259 = vpack.c.b16 %v983, %v979
    %v1260 = vpack.c.b16 %v984, %v980
    %v1261 = vpack.c.b16 %v985, %v981
    %v1262 = vpack.c.b16 %v990, %v986
    %v1263 = vpack.c.b16 %v991, %v987
    %v1264 = vpack.c.b16 %v992, %v988
    %v1265 = vpack.c.b16 %v993, %v989
    %v1266 = vpack.c.b16 %v998, %v994
    %v1267 = vpack.c.b16 %v999, %v995
    %v1268 = vpack.c.b16 %v1000, %v996
    %v1269 = vpack.c.b16 %v1001, %v997
    %v1270 = vpack.c.b16 %v1006, %v1002
    %v1271 = vpack.c.b16 %v1007, %v1003
    %v1272 = vpack.c.b16 %v1008, %v1004
    %v1273 = vpack.c.b16 %v1009, %v1005
    %v1274 = vpack.c.b16 %v1014, %v1010
    %v1275 = vpack.c.b16 %v1015, %v1011
    %v1276 = vpack.c.b16 %v1016, %v1012
    %v1277 = vpack.c.b16 %v1017, %v1013
    %v1278 = vpack.c.b16 %v1022, %v1018
    %v1279 = vpack.c.b16 %v1023, %v1019
    %v1280 = vpack.c.b16 %v1024, %v1020
    %v1281 = vpack.c.b16 %v1025, %v1021
    %v1282 = vpack.c.b16 %v1030, %v1026
    %v1283 = vpack.c.b16 %v1031, %v1027
    %v1284 = vpack.c.b16 %v1032, %v1028
    %v1285 = vpack.c.b16 %v1033, %v1029
    %v1286 = vpack.c.b16 %v1038, %v1034
    %v1287 = vpack.c.b16 %v1039, %v1035
    %v1288 = vpack.c.b16 %v1040, %v1036
    %v1289 = vpack.c.b16 %v1041, %v1037
    %v1290 = vpack.c.b16 %v1046, %v1042
    %v1291 = vpack.c.b16 %v1047, %v1043
    %v1292 = vpack.c.b16 %v1048, %v1044
    %v1293 = vpack.c.b16 %v1049, %v1045
    %v1294 = vpack.c.b16 %v1054, %v1050
    %v1295 = vpack.c.b16 %v1055, %v1051
    %v1296 = vpack.c.b16 %v1056, %v1052
    %v1297 = vpack.c.b16 %v1057, %v1053
    %v1298 = vpack.c.b16 %v1062, %v1058
    %v1299 = vpack.c.b16 %v1063, %v1059
    %v1300 = vpack.c.b16 %v1064, %v1060
    %v1301 = vpack.c.b16 %v1065, %v1061
    %v1302 = vpack.c.b16 %v1070, %v1066
    %v1303 = vpack.c.b16 %v1071, %v1067
    %v1304 = vpack.c.b16 %v1072, %v1068
    %v1305 = vpack.c.b16 %v1073, %v1069
    %v1306 = vpack.c.b16 %v1078, %v1074
    %v1307 = vpack.c.b16 %v1079, %v1075
    %v1308 = vpack.c.b16 %v1080, %v1076
    %v1309 = vpack.c.b16 %v1081, %v1077
    %v1310 = vpack.c.b16 %v1086, %v1082
    %v1311 = vpack.c.b16 %v1087, %v1083
    %v1312 = vpack.c.b16 %v1088, %v1084
    %v1313 = vpack.c.b16 %v1089, %v1085
    %v1314 = vpack.c.b16 %v1094, %v1090
    %v1315 = vpack.c.b16 %v1095, %v1091
    %v1316 = vpack.c.b16 %v1096, %v1092
    %v1317 = vpack.c.b16 %v1097, %v1093
    %v1318 = vpack.c.b16 %v1102, %v1098
    %v1319 = vpack.c.b16 %v1103, %v1099
    %v1320 = vpack.c.b16 %v1104, %v1100
    %v1321 = vpack.c.b16 %v1105, %v1101
    %v1322 = vpack.c.b16 %v1110, %v1106
    %v1323 = vpack.c.b16 %v1111, %v1107
    %v1324 = vpack.c.b16 %v1112, %v1108
    %v1325 = vpack.c.b16 %v1113, %v1109
    %v1326 = vpack.c.b16 %v1118, %v1114
    %v1327 = vpack.c.b16 %v1119, %v1115
    %v1328 = vpack.c.b16 %v1120, %v1116
    %v1329 = vpack.c.b16 %v1121, %v1117
    %v1330 = vpack.c.b16 %v1126, %v1122
    %v1331 = vpack.c.b16 %v1127, %v1123
    %v1332 = vpack.c.b16 %v1128, %v1124
    %v1333 = vpack.c.b16 %v1129, %v1125
    %v1334 = vpack.c.b16 %v1134, %v1130
    %v1335 = vpack.c.b16 %v1135, %v1131
    %v1336 = vpack.c.b16 %v1136, %v1132
    %v1337 = vpack.c.b16 %v1137, %v1133
    %v1338 = vpack.c.b16 %v1142, %v1138
    %v1339 = vpack.c.b16 %v1143, %v1139
    %v1340 = vpack.c.b16 %v1144, %v1140
    %v1341 = vpack.c.b16 %v1145, %v1141
    %v1342 = vpack.c.b16 %v1150, %v1146
    %v1343 = vpack.c.b16 %v1151, %v1147
    %v1344 = vpack.c.b16 %v1152, %v1148
    %v1345 = vpack.c.b16 %v1153, %v1149
    %v1346 = vpack.c.b16 %v1158, %v1154
    %v1347 = vpack.c.b16 %v1159, %v1155
    %v1348 = vpack.c.b16 %v1160, %v1156
    %v1349 = vpack.c.b16 %v1161, %v1157
    %v1350 = vpack.c.b16 %v1166, %v1162
    %v1351 = vpack.c.b16 %v1167, %v1163
    %v1352 = vpack.c.b16 %v1168, %v1164
    %v1353 = vpack.c.b16 %v1169, %v1165
    %v1354 = vpack.c.b16 %v1174, %v1170
    %v1355 = vpack.c.b16 %v1175, %v1171
    %v1356 = vpack.c.b16 %v1176, %v1172
    %v1357 = vpack.c.b16 %v1177, %v1173
    %v1358 = vpack.c.b16 %v1182, %v1178
    %v1359 = vpack.c.b16 %v1183, %v1179
    %v1360 = vpack.c.b16 %v1184, %v1180
    %v1361 = vpack.c.b16 %v1185, %v1181
    %v1362 = vpack.c.b16 %v1190, %v1186
    %v1363 = vpack.c.b16 %v1191, %v1187
    %v1364 = vpack.c.b16 %v1192, %v1188
    %v1365 = vpack.c.b16 %v1193, %v1189
    %v1366 = vpack.c.b16 %v1198, %v1194
    %v1367 = vpack.c.b16 %v1199, %v1195
    %v1368 = vpack.c.b16 %v1200, %v1196
    %v1369 = vpack.c.b16 %v1201, %v1197
    %v1370 = vpack.c.b16 %v1206, %v1202
    %v1371 = vpack.c.b16 %v1207, %v1203
    %v1372 = vpack.c.b16 %v1208, %v1204
    %v1373 = vpack.c.b16 %v1209, %v1205
    %v1374 = vpack.c.b16 %v1214, %v1210
    %v1375 = vpack.c.b16 %v1215, %v1211
    %v1376 = vpack.c.b16 %v1216, %v1212
    %v1377 = vpack.c.b16 %v1217, %v1213
    %v1378 = vpack.c.b16 %v1222, %v1218
    %v1379 = vpack.c.b16 %v1223, %v1219
    %v1380 = vpack.c.b16 %v1224, %v1220
    %v1381 = vpack.c.b16 %v1225, %v1221
    %v1382 = vpack.c.b16 %v1230, %v1226
    %v1383 = vpack.c.b16 %v1231, %v1227
    %v1384 = vpack.c.b16 %v1232, %v1228
    %v1385 = vpack.c.b16 %v1233, %v1229
    %v1386 = vpack.c.b16 %v1238, %v1234
    %v1387 = vpack.c.b16 %v1239, %v1235
    %v1388 = vpack.c.b16 %v1240, %v1236
    %v1389 = vpack.c.b16 %v1241, %v1237
    %v1390 = vpack.c.b16 %v1246, %v1242
    %v1391 = vpack.c.b16 %v1247, %v1243
    %v1392 = vpack.c.b16 %v1248, %v1244
    %v1393 = vpack.c.b16 %v1249, %v1245
    %v1539 = vsel %vm153, %v750, 0
    %v1542 = vsel %vm153, %v790, 0
    %v1545 = vsel %vm153, %v805, 0
    %1547 = vmatprep.subr.bf16.mxu0 %v1251
    %1548 = vmatpush1.bf16.msra.mxu0 %v1250
    %1549 = vmatprep.subr.bf16.mxu0 %v1255
    %1550 = vmatpush1.bf16.msra.mxu0 %v1254
    %1551 = vmatprep.subr.bf16.mxu0 %v1259
    %1552 = vmatpush1.bf16.msra.mxu0 %v1258
    %1553 = vmatprep.subr.bf16.mxu0 %v1263
    %1554 = vmatpush1.bf16.msra.mxu0 %v1262
    %1555 = vmatprep.subr.bf16.mxu0 %v1267
    %1556 = vmatpush1.bf16.msra.mxu0 %v1266
    %1557 = vmatprep.subr.bf16.mxu0 %v1271
    %1558 = vmatpush1.bf16.msra.mxu0 %v1270
    %1559 = vmatprep.subr.bf16.mxu0 %v1275
    %1560 = vmatpush1.bf16.msra.mxu0 %v1274
    %1561 = vmatprep.subr.bf16.mxu0 %v1279
    %1562 = vmatpush1.bf16.msra.mxu0 %v1278
    %1563 = vmatprep.subr.bf16.mxu0 %v1283
    %1564 = vmatpush1.bf16.msra.mxu0 %v1282
    %1565 = vmatprep.subr.bf16.mxu0 %v1287
    %1566 = vmatpush1.bf16.msra.mxu0 %v1286
    %1567 = vmatprep.subr.bf16.mxu0 %v1291
    %1568 = vmatpush1.bf16.msra.mxu0 %v1290
    %1569 = vmatprep.subr.bf16.mxu0 %v1295
    %1570 = vmatpush1.bf16.msra.mxu0 %v1294
    %1571 = vmatprep.subr.bf16.mxu0 %v1299
    %1572 = vmatpush1.bf16.msra.mxu0 %v1298
    %1573 = vmatprep.subr.bf16.mxu0 %v1303
    %1574 = vmatpush1.bf16.msra.mxu0 %v1302
    %1575 = vmatprep.subr.bf16.mxu0 %v1307
    %1576 = vmatpush1.bf16.msra.mxu0 %v1306
    %1577 = vmatprep.subr.bf16.mxu0 %v1311
    %1578 = vmatpush1.bf16.msra.mxu0 %v1310
    %1579 = vmatprep.mubr.bf16.mxu0 %v714
    %1580 = vmatmul.mubr.bf16.gmra.mrb[0].mxu0 %v702
    %v1581 = vpop.f32.mrb[0].mxu0
    %v1582 = vadd.f32 0.0, %v1581
    %v1583 = vpop.f32.mrb[0].mxu0
    %v1584 = vadd.f32 0.0, %v1583
    %v1585 = vpop.f32.mrb[0].mxu0
    %v1586 = vadd.f32 0.0, %v1585
    %v1587 = vpop.f32.mrb[0].mxu0
    %v1588 = vadd.f32 0.0, %v1587
    %1589 = vmatprep.mubr.bf16.mxu0 %v766
    %1590 = vmatmul.mubr.bf16.gmra.mrb[0].mxu0 %v758
    %v1591 = vpop.f32.mrb[0].mxu0
    %v1592 = vadd.f32 0.0, %v1591
    %v1593 = vpop.f32.mrb[0].mxu0
    %v1594 = vadd.f32 0.0, %v1593
    %v1595 = vpop.f32.mrb[0].mxu0
    %v1596 = vadd.f32 0.0, %v1595
    %v1597 = vpop.f32.mrb[0].mxu0
    %v1598 = vadd.f32 0.0, %v1597
    %1599 = vmatprep.mubr.bf16.mxu0 %v796
    %1600 = vmatmul.mubr.bf16.gmra.mrb[0].mxu0 %v793
    %v1601 = vpop.f32.mrb[0].mxu0
    %v1602 = vadd.f32 0.0, %v1601
    %v1603 = vpop.f32.mrb[0].mxu0
    %v1604 = vadd.f32 0.0, %v1603
    %v1605 = vpop.f32.mrb[0].mxu0
    %v1606 = vpop.f32.mrb[0].mxu0
    %1607 = vdwg.mxu0
    %1608 = vmatprep.subr.bf16.mxu0 %v1315
    %1609 = vmatpush1.bf16.msra.mxu0 %v1314
    %1610 = vmatprep.subr.bf16.mxu0 %v1319
    %1611 = vmatpush1.bf16.msra.mxu0 %v1318
    %1612 = vmatprep.subr.bf16.mxu0 %v1323
    %1613 = vmatpush1.bf16.msra.mxu0 %v1322
    %1614 = vmatprep.subr.bf16.mxu0 %v1327
    %1615 = vmatpush1.bf16.msra.mxu0 %v1326
    %1616 = vmatprep.subr.bf16.mxu0 %v1331
    %1617 = vmatpush1.bf16.msra.mxu0 %v1330
    %1618 = vmatprep.subr.bf16.mxu0 %v1335
    %1619 = vmatpush1.bf16.msra.mxu0 %v1334
    %1620 = vmatprep.subr.bf16.mxu0 %v1339
    %1621 = vmatpush1.bf16.msra.mxu0 %v1338
    %1622 = vmatprep.subr.bf16.mxu0 %v1343
    %1623 = vmatpush1.bf16.msra.mxu0 %v1342
    %1624 = vmatprep.subr.bf16.mxu0 %v1347
    %1625 = vmatpush1.bf16.msra.mxu0 %v1346
    %1626 = vmatprep.subr.bf16.mxu0 %v1351
    %1627 = vmatpush1.bf16.msra.mxu0 %v1350
    %1628 = vmatprep.subr.bf16.mxu0 %v1355
    %1629 = vmatpush1.bf16.msra.mxu0 %v1354
    %1630 = vmatprep.subr.bf16.mxu0 %v1359
    %1631 = vmatpush1.bf16.msra.mxu0 %v1358
    %1632 = vmatprep.subr.bf16.mxu0 %v1363
    %1633 = vmatpush1.bf16.msra.mxu0 %v1362
    %1634 = vmatprep.subr.bf16.mxu0 %v1367
    %1635 = vmatpush1.bf16.msra.mxu0 %v1366
    %1636 = vmatprep.subr.bf16.mxu0 %v1371
    %1637 = vmatpush1.bf16.msra.mxu0 %v1370
    %1638 = vmatprep.subr.bf16.mxu0 %v1375
    %1639 = vmatpush1.bf16.msra.mxu0 %v1374
    %1640 = vmatprep.mubr.bf16.mxu0 %v738
    %1641 = vmatmul.mubr.bf16.gmra.mrb[0].mxu0 %v726
    %v1642 = vpop.f32.mrb[0].mxu0
    %v1643 = vadd.f32 %v1582, %v1642
    %v1644 = vpop.f32.mrb[0].mxu0
    %v1645 = vadd.f32 %v1584, %v1644
    %v1646 = vpop.f32.mrb[0].mxu0
    %v1647 = vadd.f32 %v1586, %v1646
    %v1648 = vpop.f32.mrb[0].mxu0
    %v1649 = vadd.f32 %v1588, %v1648
    %1650 = vmatprep.mubr.bf16.mxu0 %v782
    %1651 = vmatmul.mubr.bf16.gmra.mrb[0].mxu0 %v774
    %v1652 = vpop.f32.mrb[0].mxu0
    %v1653 = vadd.f32 %v1592, %v1652
    %v1654 = vpop.f32.mrb[0].mxu0
    %v1655 = vadd.f32 %v1594, %v1654
    %v1656 = vpop.f32.mrb[0].mxu0
    %v1657 = vadd.f32 %v1596, %v1656
    %v1658 = vpop.f32.mrb[0].mxu0
    %v1659 = vadd.f32 %v1598, %v1658
    %1660 = vmatprep.mubr.bf16.mxu0 %v802
    %1661 = vmatmul.mubr.bf16.gmra.mrb[0].mxu0 %v799
    %v1662 = vpop.f32.mrb[0].mxu0
    %v1663 = vadd.f32 %v1602, %v1662
    %v1664 = vpop.f32.mrb[0].mxu0
    %v1665 = vadd.f32 %v1604, %v1664
    %v1666 = vpop.f32.mrb[0].mxu0
    %v1667 = vpop.f32.mrb[0].mxu0
    %1668 = vdwg.mxu0
    %1669 = vmatprep.subr.bf16.mxu0 %v1379
    %1670 = vmatpush1.bf16.msra.mxu0 %v1378
    %1671 = vmatprep.subr.bf16.mxu0 %v1383
    %1672 = vmatpush1.bf16.msra.mxu0 %v1382
    %1673 = vmatprep.subr.bf16.mxu0 %v1387
    %1674 = vmatpush1.bf16.msra.mxu0 %v1386
    %1675 = vmatprep.subr.bf16.mxu0 %v1391
    %1676 = vmatpush1.bf16.msra.mxu0 %v1390
    %1677 = vmatprep.subr.bf16.mxu0 0
    %1678 = vmatpush1.bf16.msra.mxu0 0
    %1679 = vmatprep.subr.bf16.mxu0 0
    %1680 = vmatpush1.bf16.msra.mxu0 0
    %1681 = vmatprep.subr.bf16.mxu0 0
    %1682 = vmatpush1.bf16.msra.mxu0 0
    %1683 = vmatprep.subr.bf16.mxu0 0
    %1684 = vmatpush1.bf16.msra.mxu0 0
    %1685 = vmatprep.subr.bf16.mxu0 0
    %1686 = vmatpush1.bf16.msra.mxu0 0
    %1687 = vmatprep.subr.bf16.mxu0 0
    %1688 = vmatpush1.bf16.msra.mxu0 0
    %1689 = vmatprep.subr.bf16.mxu0 0
    %1690 = vmatpush1.bf16.msra.mxu0 0
    %1691 = vmatprep.subr.bf16.mxu0 0
    %1692 = vmatpush1.bf16.msra.mxu0 0
    %1693 = vmatprep.subr.bf16.mxu0 0
    %1694 = vmatpush1.bf16.msra.mxu0 0
    %1695 = vmatprep.subr.bf16.mxu0 0
    %1696 = vmatpush1.bf16.msra.mxu0 0
    %1697 = vmatprep.subr.bf16.mxu0 0
    %1698 = vmatpush1.bf16.msra.mxu0 0
    %1699 = vmatprep.subr.bf16.mxu0 0
    %1700 = vmatpush1.bf16.msra.mxu0 0
    %1701 = vmatprep.mubr.bf16.mxu0 0
    %1702 = vmatmul.mubr.bf16.gmra.mrb[0].mxu0 %v1539
    %v1703 = vpop.f32.mrb[0].mxu0
    %v1704 = vadd.f32 %v1643, %v1703
    %v1705 = vpop.f32.mrb[0].mxu0
    %v1706 = vadd.f32 %v1645, %v1705
    %v1707 = vpop.f32.mrb[0].mxu0
    %v1708 = vadd.f32 %v1647, %v1707
    %v1709 = vpop.f32.mrb[0].mxu0
    %v1710 = vadd.f32 %v1649, %v1709
    %1711 = vmatprep.mubr.bf16.mxu0 0
    %1712 = vmatmul.mubr.bf16.gmra.mrb[0].mxu0 %v1542
    %v1713 = vpop.f32.mrb[0].mxu0
    %v1714 = vadd.f32 %v1653, %v1713
    %v1715 = vpop.f32.mrb[0].mxu0
    %v1716 = vadd.f32 %v1655, %v1715
    %v1717 = vpop.f32.mrb[0].mxu0
    %v1718 = vadd.f32 %v1657, %v1717
    %v1719 = vpop.f32.mrb[0].mxu0
    %v1720 = vadd.f32 %v1659, %v1719
    %1721 = vmatprep.mubr.bf16.mxu0 0
    %1722 = vmatmul.mubr.bf16.gmra.mrb[0].mxu0 %v1545
    %v1723 = vpop.f32.mrb[0].mxu0
    %v1724 = vadd.f32 %v1663, %v1723
    %v1725 = vpop.f32.mrb[0].mxu0
    %v1726 = vadd.f32 %v1665, %v1725
    %v1727 = vpop.f32.mrb[0].mxu0
    %v1728 = vpop.f32.mrb[0].mxu0
    %1729 = vdwg.mxu0
    %1730 = vmatprep.subr.bf16.mxu0 %v1253
    %1731 = vmatpush1.bf16.msra.mxu0 %v1252
    %1732 = vmatprep.subr.bf16.mxu0 %v1257
    %1733 = vmatpush1.bf16.msra.mxu0 %v1256
    %1734 = vmatprep.subr.bf16.mxu0 %v1261
    %1735 = vmatpush1.bf16.msra.mxu0 %v1260
    %1736 = vmatprep.subr.bf16.mxu0 %v1265
    %1737 = vmatpush1.bf16.msra.mxu0 %v1264
    %1738 = vmatprep.subr.bf16.mxu0 %v1269
    %1739 = vmatpush1.bf16.msra.mxu0 %v1268
    %1740 = vmatprep.subr.bf16.mxu0 %v1273
    %1741 = vmatpush1.bf16.msra.mxu0 %v1272
    %1742 = vmatprep.subr.bf16.mxu0 %v1277
    %1743 = vmatpush1.bf16.msra.mxu0 %v1276
    %1744 = vmatprep.subr.bf16.mxu0 %v1281
    %1745 = vmatpush1.bf16.msra.mxu0 %v1280
    %1746 = vmatprep.subr.bf16.mxu0 %v1285
    %1747 = vmatpush1.bf16.msra.mxu0 %v1284
    %1748 = vmatprep.subr.bf16.mxu0 %v1289
    %1749 = vmatpush1.bf16.msra.mxu0 %v1288
    %1750 = vmatprep.subr.bf16.mxu0 %v1293
    %1751 = vmatpush1.bf16.msra.mxu0 %v1292
    %1752 = vmatprep.subr.bf16.mxu0 %v1297
    %1753 = vmatpush1.bf16.msra.mxu0 %v1296
    %1754 = vmatprep.subr.bf16.mxu0 %v1301
    %1755 = vmatpush1.bf16.msra.mxu0 %v1300
    %1756 = vmatprep.subr.bf16.mxu0 %v1305
    %1757 = vmatpush1.bf16.msra.mxu0 %v1304
    %1758 = vmatprep.subr.bf16.mxu0 %v1309
    %1759 = vmatpush1.bf16.msra.mxu0 %v1308
    %1760 = vmatprep.subr.bf16.mxu0 %v1313
    %1761 = vmatpush1.bf16.msra.mxu0 %v1312
    %1762 = vmatprep.mubr.bf16.mxu0 %v714
    %1763 = vmatmul.mubr.bf16.gmra.mrb[0].mxu0 %v702
    %v1764 = vpop.f32.mrb[0].mxu0
    %v1765 = vadd.f32 0.0, %v1764
    %v1766 = vpop.f32.mrb[0].mxu0
    %v1767 = vadd.f32 0.0, %v1766
    %v1768 = vpop.f32.mrb[0].mxu0
    %v1769 = vadd.f32 0.0, %v1768
    %v1770 = vpop.f32.mrb[0].mxu0
    %v1771 = vadd.f32 0.0, %v1770
    %1772 = vmatprep.mubr.bf16.mxu0 %v766
    %1773 = vmatmul.mubr.bf16.gmra.mrb[0].mxu0 %v758
    %v1774 = vpop.f32.mrb[0].mxu0
    %v1775 = vadd.f32 0.0, %v1774
    %v1776 = vpop.f32.mrb[0].mxu0
    %v1777 = vadd.f32 0.0, %v1776
    %v1778 = vpop.f32.mrb[0].mxu0
    %v1779 = vadd.f32 0.0, %v1778
    %v1780 = vpop.f32.mrb[0].mxu0
    %v1781 = vadd.f32 0.0, %v1780
    %1782 = vmatprep.mubr.bf16.mxu0 %v796
    %1783 = vmatmul.mubr.bf16.gmra.mrb[0].mxu0 %v793
    %v1784 = vpop.f32.mrb[0].mxu0
    %v1785 = vadd.f32 0.0, %v1784
    %v1786 = vpop.f32.mrb[0].mxu0
    %v1787 = vadd.f32 0.0, %v1786
    %v1788 = vpop.f32.mrb[0].mxu0
    %v1789 = vpop.f32.mrb[0].mxu0
    %1790 = vdwg.mxu0
    %1791 = vmatprep.subr.bf16.mxu0 %v1317
    %1792 = vmatpush1.bf16.msra.mxu0 %v1316
    %1793 = vmatprep.subr.bf16.mxu0 %v1321
    %1794 = vmatpush1.bf16.msra.mxu0 %v1320
    %1795 = vmatprep.subr.bf16.mxu0 %v1325
    %1796 = vmatpush1.bf16.msra.mxu0 %v1324
    %1797 = vmatprep.subr.bf16.mxu0 %v1329
    %1798 = vmatpush1.bf16.msra.mxu0 %v1328
    %1799 = vmatprep.subr.bf16.mxu0 %v1333
    %1800 = vmatpush1.bf16.msra.mxu0 %v1332
    %1801 = vmatprep.subr.bf16.mxu0 %v1337
    %1802 = vmatpush1.bf16.msra.mxu0 %v1336
    %1803 = vmatprep.subr.bf16.mxu0 %v1341
    %1804 = vmatpush1.bf16.msra.mxu0 %v1340
    %1805 = vmatprep.subr.bf16.mxu0 %v1345
    %1806 = vmatpush1.bf16.msra.mxu0 %v1344
    %1807 = vmatprep.subr.bf16.mxu0 %v1349
    %1808 = vmatpush1.bf16.msra.mxu0 %v1348
    %1809 = vmatprep.subr.bf16.mxu0 %v1353
    %1810 = vmatpush1.bf16.msra.mxu0 %v1352
    %1811 = vmatprep.subr.bf16.mxu0 %v1357
    %1812 = vmatpush1.bf16.msra.mxu0 %v1356
    %1813 = vmatprep.subr.bf16.mxu0 %v1361
    %1814 = vmatpush1.bf16.msra.mxu0 %v1360
    %1815 = vmatprep.subr.bf16.mxu0 %v1365
    %1816 = vmatpush1.bf16.msra.mxu0 %v1364
    %1817 = vmatprep.subr.bf16.mxu0 %v1369
    %1818 = vmatpush1.bf16.msra.mxu0 %v1368
    %1819 = vmatprep.subr.bf16.mxu0 %v1373
    %1820 = vmatpush1.bf16.msra.mxu0 %v1372
    %1821 = vmatprep.subr.bf16.mxu0 %v1377
    %1822 = vmatpush1.bf16.msra.mxu0 %v1376
    %1823 = vmatprep.mubr.bf16.mxu0 %v738
    %1824 = vmatmul.mubr.bf16.gmra.mrb[0].mxu0 %v726
    %v1825 = vpop.f32.mrb[0].mxu0
    %v1826 = vadd.f32 %v1765, %v1825
    %v1827 = vpop.f32.mrb[0].mxu0
    %v1828 = vadd.f32 %v1767, %v1827
    %v1829 = vpop.f32.mrb[0].mxu0
    %v1830 = vadd.f32 %v1769, %v1829
    %v1831 = vpop.f32.mrb[0].mxu0
    %v1832 = vadd.f32 %v1771, %v1831
    %1833 = vmatprep.mubr.bf16.mxu0 %v782
    %1834 = vmatmul.mubr.bf16.gmra.mrb[0].mxu0 %v774
    %v1835 = vpop.f32.mrb[0].mxu0
    %v1836 = vadd.f32 %v1775, %v1835
    %v1837 = vpop.f32.mrb[0].mxu0
    %v1838 = vadd.f32 %v1777, %v1837
    %v1839 = vpop.f32.mrb[0].mxu0
    %v1840 = vadd.f32 %v1779, %v1839
    %v1841 = vpop.f32.mrb[0].mxu0
    %v1842 = vadd.f32 %v1781, %v1841
    %1843 = vmatprep.mubr.bf16.mxu0 %v802
    %1844 = vmatmul.mubr.bf16.gmra.mrb[0].mxu0 %v799
    %v1845 = vpop.f32.mrb[0].mxu0
    %v1846 = vadd.f32 %v1785, %v1845
    %v1847 = vpop.f32.mrb[0].mxu0
    %v1848 = vadd.f32 %v1787, %v1847
    %v1849 = vpop.f32.mrb[0].mxu0
    %v1850 = vpop.f32.mrb[0].mxu0
    %1851 = vdwg.mxu0
    %1852 = vmatprep.subr.bf16.mxu0 %v1381
    %1853 = vmatpush1.bf16.msra.mxu0 %v1380
    %1854 = vmatprep.subr.bf16.mxu0 %v1385
    %1855 = vmatpush1.bf16.msra.mxu0 %v1384
    %1856 = vmatprep.subr.bf16.mxu0 %v1389
    %1857 = vmatpush1.bf16.msra.mxu0 %v1388
    %1858 = vmatprep.subr.bf16.mxu0 %v1393
    %1859 = vmatpush1.bf16.msra.mxu0 %v1392
    %1860 = vmatprep.subr.bf16.mxu0 0
    %1861 = vmatpush1.bf16.msra.mxu0 0
    %1862 = vmatprep.subr.bf16.mxu0 0
    %1863 = vmatpush1.bf16.msra.mxu0 0
    %1864 = vmatprep.subr.bf16.mxu0 0
    %1865 = vmatpush1.bf16.msra.mxu0 0
    %1866 = vmatprep.subr.bf16.mxu0 0
    %1867 = vmatpush1.bf16.msra.mxu0 0
    %1868 = vmatprep.subr.bf16.mxu0 0
    %1869 = vmatpush1.bf16.msra.mxu0 0
    %1870 = vmatprep.subr.bf16.mxu0 0
    %1871 = vmatpush1.bf16.msra.mxu0 0
    %1872 = vmatprep.subr.bf16.mxu0 0
    %1873 = vmatpush1.bf16.msra.mxu0 0
    %1874 = vmatprep.subr.bf16.mxu0 0
    %1875 = vmatpush1.bf16.msra.mxu0 0
    %1876 = vmatprep.subr.bf16.mxu0 0
    %1877 = vmatpush1.bf16.msra.mxu0 0
    %1878 = vmatprep.subr.bf16.mxu0 0
    %1879 = vmatpush1.bf16.msra.mxu0 0
    %1880 = vmatprep.subr.bf16.mxu0 0
    %1881 = vmatpush1.bf16.msra.mxu0 0
    %1882 = vmatprep.subr.bf16.mxu0 0
    %1883 = vmatpush1.bf16.msra.mxu0 0
    %1884 = vmatprep.mubr.bf16.mxu0 0
    %1885 = vmatmul.mubr.bf16.gmra.mrb[0].mxu0 %v1539
    %v1886 = vpop.f32.mrb[0].mxu0
    %v1887 = vadd.f32 %v1826, %v1886
    %v1888 = vpop.f32.mrb[0].mxu0
    %v1889 = vadd.f32 %v1828, %v1888
    %v1890 = vpop.f32.mrb[0].mxu0
    %v1891 = vadd.f32 %v1830, %v1890
    %v1892 = vpop.f32.mrb[0].mxu0
    %v1893 = vadd.f32 %v1832, %v1892
    %1894 = vmatprep.mubr.bf16.mxu0 0
    %1895 = vmatmul.mubr.bf16.gmra.mrb[0].mxu0 %v1542
    %v1896 = vpop.f32.mrb[0].mxu0
    %v1897 = vadd.f32 %v1836, %v1896
    %v1898 = vpop.f32.mrb[0].mxu0
    %v1899 = vadd.f32 %v1838, %v1898
    %v1900 = vpop.f32.mrb[0].mxu0
    %v1901 = vadd.f32 %v1840, %v1900
    %v1902 = vpop.f32.mrb[0].mxu0
    %v1903 = vadd.f32 %v1842, %v1902
    %1904 = vmatprep.mubr.bf16.mxu0 0
    %1905 = vmatmul.mubr.bf16.gmra.mrb[0].mxu0 %v1545
    %v1906 = vpop.f32.mrb[0].mxu0
    %v1907 = vadd.f32 %v1846, %v1906
    %v1908 = vpop.f32.mrb[0].mxu0
    %v1909 = vadd.f32 %v1848, %v1908
    %v1910 = vpop.f32.mrb[0].mxu0
    %v1911 = vpop.f32.mrb[0].mxu0
    %1912 = vdwg.mxu0
    %v2057 = vunpack.c.l.b16 %v401
    %v2058 = vunpack.c.h.b16 %v401
    %v2059 = vunpack.c.l.b16 %v402
    %v2060 = vunpack.c.h.b16 %v402
    %v2061 = vunpack.c.l.b16 %v403
    %v2062 = vunpack.c.h.b16 %v403
    %v2063 = vunpack.c.l.b16 %v404
    %v2064 = vunpack.c.h.b16 %v404
    %v2065 = vunpack.c.l.b16 %v405
    %v2066 = vunpack.c.h.b16 %v405
    %v2067 = vunpack.c.l.b16 %v406
    %v2068 = vunpack.c.h.b16 %v406
    %v2069 = vunpack.c.l.b16 %v407
    %v2070 = vunpack.c.h.b16 %v407
    %v2071 = vunpack.c.l.b16 %v408
    %v2072 = vunpack.c.h.b16 %v408
    %v2073 = vunpack.c.l.b16 %v409
    %v2074 = vunpack.c.h.b16 %v409
    %v2075 = vunpack.c.l.b16 %v410
    %v2076 = vunpack.c.h.b16 %v410
    %v2077 = vunpack.c.l.b16 %v411
    %v2078 = vunpack.c.h.b16 %v411
    %v2079 = vunpack.c.l.b16 %v412
    %v2080 = vunpack.c.h.b16 %v412
    %v2081 = vunpack.c.l.b16 %v413
    %v2082 = vunpack.c.h.b16 %v413
    %v2083 = vunpack.c.l.b16 %v414
    %v2084 = vunpack.c.h.b16 %v414
    %v2085 = vunpack.c.l.b16 %v415
    %v2086 = vunpack.c.h.b16 %v415
    %v2087 = vunpack.c.l.b16 %v416
    %v2088 = vunpack.c.h.b16 %v416
    %v2089 = vunpack.c.l.b16 %v417
    %v2090 = vunpack.c.h.b16 %v417
    %v2091 = vunpack.c.l.b16 %v418
    %v2092 = vunpack.c.h.b16 %v418
    %v2093 = vunpack.c.l.b16 %v419
    %v2094 = vunpack.c.h.b16 %v419
    %v2095 = vunpack.c.l.b16 %v420
    %v2096 = vunpack.c.h.b16 %v420
    %v2097 = vunpack.c.l.b16 %v421
    %v2098 = vunpack.c.h.b16 %v421
    %v2099 = vunpack.c.l.b16 %v422
    %v2100 = vunpack.c.h.b16 %v422
    %v2101 = vunpack.c.l.b16 %v423
    %v2102 = vunpack.c.h.b16 %v423
    %v2103 = vunpack.c.l.b16 %v424
    %v2104 = vunpack.c.h.b16 %v424
    %v2105 = vunpack.c.l.b16 %v425
    %v2106 = vunpack.c.h.b16 %v425
    %v2107 = vunpack.c.l.b16 %v426
    %v2108 = vunpack.c.h.b16 %v426
    %v2109 = vunpack.c.l.b16 %v427
    %v2110 = vunpack.c.h.b16 %v427
    %v2111 = vunpack.c.l.b16 %v428
    %v2112 = vunpack.c.h.b16 %v428
    %v2113 = vunpack.c.l.b16 %v429
    %v2114 = vunpack.c.h.b16 %v429
    %v2115 = vunpack.c.l.b16 %v430
    %v2116 = vunpack.c.h.b16 %v430
    %v2117 = vunpack.c.l.b16 %v431
    %v2118 = vunpack.c.h.b16 %v431
    %v2119 = vunpack.c.l.b16 %v432
    %v2120 = vunpack.c.h.b16 %v432
    %v2121 = vunpack.c.l.b16 %v433
    %v2122 = vunpack.c.h.b16 %v433
    %v2123 = vunpack.c.l.b16 %v434
    %v2124 = vunpack.c.h.b16 %v434
    %v2125 = vunpack.c.l.b16 %v435
    %v2126 = vunpack.c.h.b16 %v435
    %v2127 = vunpack.c.l.b16 %v436
    %v2128 = vunpack.c.h.b16 %v436
    %v2129 = vunpack.c.l.b16 %v437
    %v2130 = vunpack.c.h.b16 %v437
    %v2131 = vunpack.c.l.b16 %v438
    %v2132 = vunpack.c.h.b16 %v438
    %v2133 = vunpack.c.l.b16 %v439
    %v2134 = vunpack.c.h.b16 %v439
    %v2135 = vunpack.c.l.b16 %v440
    %v2136 = vunpack.c.h.b16 %v440
    %v2137 = vunpack.c.l.b16 %v441
    %v2138 = vunpack.c.h.b16 %v441
    %v2139 = vunpack.c.l.b16 %v442
    %v2140 = vunpack.c.h.b16 %v442
    %v2141 = vunpack.c.l.b16 %v443
    %v2142 = vunpack.c.h.b16 %v443
    %v2143 = vunpack.c.l.b16 %v444
    %v2144 = vunpack.c.h.b16 %v444
    %v2145 = vunpack.c.l.b16 %v445
    %v2146 = vunpack.c.h.b16 %v445
    %v2147 = vunpack.c.l.b16 %v446
    %v2148 = vunpack.c.h.b16 %v446
    %v2149 = vunpack.c.l.b16 %v447
    %v2150 = vunpack.c.h.b16 %v447
    %v2151 = vunpack.c.l.b16 %v448
    %v2152 = vunpack.c.h.b16 %v448
    %v2153 = vunpack.c.l.b16 %v449
    %v2154 = vunpack.c.h.b16 %v449
    %v2155 = vunpack.c.l.b16 %v450
    %v2156 = vunpack.c.h.b16 %v450
    %v2157 = vunpack.c.l.b16 %v451
    %v2158 = vunpack.c.h.b16 %v451
    %v2159 = vunpack.c.l.b16 %v452
    %v2160 = vunpack.c.h.b16 %v452
    %v2161 = vunpack.c.l.b16 %v453
    %v2162 = vunpack.c.h.b16 %v453
    %v2163 = vunpack.c.l.b16 %v454
    %v2164 = vunpack.c.h.b16 %v454
    %v2165 = vunpack.c.l.b16 %v455
    %v2166 = vunpack.c.h.b16 %v455
    %v2167 = vunpack.c.l.b16 %v456
    %v2168 = vunpack.c.h.b16 %v456
    %v2169 = vunpack.c.l.b16 %v457
    %v2170 = vunpack.c.h.b16 %v457
    %v2171 = vunpack.c.l.b16 %v458
    %v2172 = vunpack.c.h.b16 %v458
    %v2173 = vunpack.c.l.b16 %v459
    %v2174 = vunpack.c.h.b16 %v459
    %v2175 = vunpack.c.l.b16 %v460
    %v2176 = vunpack.c.h.b16 %v460
    %v2177 = vunpack.c.l.b16 %v461
    %v2178 = vunpack.c.h.b16 %v461
    %v2179 = vunpack.c.l.b16 %v462
    %v2180 = vunpack.c.h.b16 %v462
    %v2181 = vunpack.c.l.b16 %v463
    %v2182 = vunpack.c.h.b16 %v463
    %v2183 = vunpack.c.l.b16 %v464
    %v2184 = vunpack.c.h.b16 %v464
    %v2185 = vunpack.c.l.b16 %v465
    %v2186 = vunpack.c.h.b16 %v465
    %v2187 = vunpack.c.l.b16 %v466
    %v2188 = vunpack.c.h.b16 %v466
    %v2189 = vunpack.c.l.b16 %v467
    %v2190 = vunpack.c.h.b16 %v467
    %v2191 = vunpack.c.l.b16 %v468
    %v2192 = vunpack.c.h.b16 %v468
    %v2193 = vunpack.c.l.b16 %v469
    %v2194 = vunpack.c.h.b16 %v469
    %v2195 = vunpack.c.l.b16 %v470
    %v2196 = vunpack.c.h.b16 %v470
    %v2197 = vunpack.c.l.b16 %v471
    %v2198 = vunpack.c.h.b16 %v471
    %v2199 = vunpack.c.l.b16 %v472
    %v2200 = vunpack.c.h.b16 %v472
    %v2201 = vunpack.c.l.b16 %v473
    %v2202 = vunpack.c.h.b16 %v473
    %v2203 = vunpack.c.l.b16 %v474
    %v2204 = vunpack.c.h.b16 %v474
    %v2205 = vunpack.c.l.b16 %v475
    %v2206 = vunpack.c.h.b16 %v475
    %v2207 = vunpack.c.l.b16 %v476
    %v2208 = vunpack.c.h.b16 %v476
    %v2209 = vunpack.c.l.b16 %v477
    %v2210 = vunpack.c.h.b16 %v477
    %v2211 = vunpack.c.l.b16 %v478
    %v2212 = vunpack.c.h.b16 %v478
    %v2213 = vunpack.c.l.b16 %v479
    %v2214 = vunpack.c.h.b16 %v479
    %v2215 = vunpack.c.l.b16 %v480
    %v2216 = vunpack.c.h.b16 %v480
    %v2217 = vunpack.c.l.b16 %v481
    %v2218 = vunpack.c.h.b16 %v481
    %v2219 = vunpack.c.l.b16 %v482
    %v2220 = vunpack.c.h.b16 %v482
    %v2221 = vunpack.c.l.b16 %v483
    %v2222 = vunpack.c.h.b16 %v483
    %v2223 = vunpack.c.l.b16 %v484
    %v2224 = vunpack.c.h.b16 %v484
    %v2225 = vunpack.c.l.b16 %v485
    %v2226 = vunpack.c.h.b16 %v485
    %v2227 = vunpack.c.l.b16 %v486
    %v2228 = vunpack.c.h.b16 %v486
    %v2229 = vunpack.c.l.b16 %v487
    %v2230 = vunpack.c.h.b16 %v487
    %v2231 = vunpack.c.l.b16 %v488
    %v2232 = vunpack.c.h.b16 %v488
    %v2233 = vunpack.c.l.b16 %v489
    %v2234 = vunpack.c.h.b16 %v489
    %v2235 = vunpack.c.l.b16 %v490
    %v2236 = vunpack.c.h.b16 %v490
    %v2237 = vunpack.c.l.b16 %v491
    %v2238 = vunpack.c.h.b16 %v491
    %v2239 = vunpack.c.l.b16 %v492
    %v2240 = vunpack.c.h.b16 %v492
    %v2241 = vunpack.c.l.b16 %v493
    %v2242 = vunpack.c.h.b16 %v493
    %v2243 = vunpack.c.l.b16 %v494
    %v2244 = vunpack.c.h.b16 %v494
    %v2245 = vunpack.c.l.b16 %v495
    %v2246 = vunpack.c.h.b16 %v495
    %v2247 = vunpack.c.l.b16 %v496
    %v2248 = vunpack.c.h.b16 %v496
    %v2249 = vunpack.c.l.b16 %v497
    %v2250 = vunpack.c.h.b16 %v497
    %v2251 = vunpack.c.l.b16 %v498
    %v2252 = vunpack.c.h.b16 %v498
    %v2253 = vunpack.c.l.b16 %v499
    %v2254 = vunpack.c.h.b16 %v499
    %v2255 = vunpack.c.l.b16 %v500
    %v2256 = vunpack.c.h.b16 %v500
    %v2257 = vunpack.c.l.b16 %v501
    %v2258 = vunpack.c.h.b16 %v501
    %v2259 = vunpack.c.l.b16 %v502
    %v2260 = vunpack.c.h.b16 %v502
    %v2261 = vunpack.c.l.b16 %v503
    %v2262 = vunpack.c.h.b16 %v503
    %v2263 = vunpack.c.l.b16 %v504
    %v2264 = vunpack.c.h.b16 %v504
    %v2265 = vunpack.c.l.b16 %v505
    %v2266 = vunpack.c.h.b16 %v505
    %v2267 = vunpack.c.l.b16 %v506
    %v2268 = vunpack.c.h.b16 %v506
    %v2269 = vunpack.c.l.b16 %v507
    %v2270 = vunpack.c.h.b16 %v507
    %v2271 = vunpack.c.l.b16 %v508
    %v2272 = vunpack.c.h.b16 %v508
    %v2273 = vunpack.c.l.b16 %v509
    %v2274 = vunpack.c.h.b16 %v509
    %v2275 = vunpack.c.l.b16 %v510
    %v2276 = vunpack.c.h.b16 %v510
    %v2277 = vunpack.c.l.b16 %v511
    %v2278 = vunpack.c.h.b16 %v511
    %v2279 = vunpack.c.l.b16 %v512
    %v2280 = vunpack.c.h.b16 %v512
    %v2281 = vunpack.c.l.b16 %v513
    %v2282 = vunpack.c.h.b16 %v513
    %v2283 = vunpack.c.l.b16 %v514
    %v2284 = vunpack.c.h.b16 %v514
    %v2285 = vunpack.c.l.b16 %v515
    %v2286 = vunpack.c.h.b16 %v515
    %v2287 = vunpack.c.l.b16 %v516
    %v2288 = vunpack.c.h.b16 %v516
    %v2289 = vunpack.c.l.b16 %v517
    %v2290 = vunpack.c.h.b16 %v517
    %v2291 = vunpack.c.l.b16 %v518
    %v2292 = vunpack.c.h.b16 %v518
    %v2293 = vunpack.c.l.b16 %v519
    %v2294 = vunpack.c.h.b16 %v519
    %v2295 = vunpack.c.l.b16 %v520
    %v2296 = vunpack.c.h.b16 %v520
    %v2297 = vunpack.c.l.b16 %v521
    %v2298 = vunpack.c.h.b16 %v521
    %v2299 = vunpack.c.l.b16 %v522
    %v2300 = vunpack.c.h.b16 %v522
    %v2301 = vunpack.c.l.b16 %v523
    %v2302 = vunpack.c.h.b16 %v523
    %v2303 = vunpack.c.l.b16 %v524
    %v2304 = vunpack.c.h.b16 %v524
    %v2305 = vunpack.c.l.b16 %v525
    %v2306 = vunpack.c.h.b16 %v525
    %v2307 = vunpack.c.l.b16 %v526
    %v2308 = vunpack.c.h.b16 %v526
    %v2309 = vunpack.c.l.b16 %v527
    %v2310 = vunpack.c.h.b16 %v527
    %v2311 = vunpack.c.l.b16 %v528
    %v2312 = vunpack.c.h.b16 %v528
    %v2313 = vunpack.c.l.b16 %v529
    %v2314 = vunpack.c.h.b16 %v529
    %v2315 = vunpack.c.l.b16 %v530
    %v2316 = vunpack.c.h.b16 %v530
    %v2317 = vunpack.c.l.b16 %v531
    %v2318 = vunpack.c.h.b16 %v531
    %v2319 = vunpack.c.l.b16 %v532
    %v2320 = vunpack.c.h.b16 %v532
    %v2321 = vunpack.c.l.b16 %v533
    %v2322 = vunpack.c.h.b16 %v533
    %v2323 = vunpack.c.l.b16 %v534
    %v2324 = vunpack.c.h.b16 %v534
    %v2325 = vunpack.c.l.b16 %v535
    %v2326 = vunpack.c.h.b16 %v535
    %v2327 = vunpack.c.l.b16 %v536
    %v2328 = vunpack.c.h.b16 %v536
    %v2329 = vunpack.c.l.b16 %v537
    %v2330 = vunpack.c.h.b16 %v537
    %v2331 = vunpack.c.l.b16 %v538
    %v2332 = vunpack.c.h.b16 %v538
    %v2333 = vunpack.c.l.b16 %v539
    %v2334 = vunpack.c.h.b16 %v539
    %v2335 = vunpack.c.l.b16 %v540
    %v2336 = vunpack.c.h.b16 %v540
    %v2337 = vunpack.c.l.b16 %v541
    %v2338 = vunpack.c.h.b16 %v541
    %v2339 = vunpack.c.l.b16 %v542
    %v2340 = vunpack.c.h.b16 %v542
    %v2341 = vunpack.c.l.b16 %v543
    %v2342 = vunpack.c.h.b16 %v543
    %v2343 = vunpack.c.l.b16 %v544
    %v2344 = vunpack.c.h.b16 %v544
    %v2345 = vpack.c.b16 %v2061, %v2057
    %v2346 = vpack.c.b16 %v2062, %v2058
    %v2347 = vpack.c.b16 %v2063, %v2059
    %v2348 = vpack.c.b16 %v2064, %v2060
    %v2349 = vpack.c.b16 %v2069, %v2065
    %v2350 = vpack.c.b16 %v2070, %v2066
    %v2351 = vpack.c.b16 %v2071, %v2067
    %v2352 = vpack.c.b16 %v2072, %v2068
    %v2353 = vpack.c.b16 %v2077, %v2073
    %v2354 = vpack.c.b16 %v2078, %v2074
    %v2355 = vpack.c.b16 %v2079, %v2075
    %v2356 = vpack.c.b16 %v2080, %v2076
    %v2357 = vpack.c.b16 %v2085, %v2081
    %v2358 = vpack.c.b16 %v2086, %v2082
    %v2359 = vpack.c.b16 %v2087, %v2083
    %v2360 = vpack.c.b16 %v2088, %v2084
    %v2361 = vpack.c.b16 %v2093, %v2089
    %v2362 = vpack.c.b16 %v2094, %v2090
    %v2363 = vpack.c.b16 %v2095, %v2091
    %v2364 = vpack.c.b16 %v2096, %v2092
    %v2365 = vpack.c.b16 %v2101, %v2097
    %v2366 = vpack.c.b16 %v2102, %v2098
    %v2367 = vpack.c.b16 %v2103, %v2099
    %v2368 = vpack.c.b16 %v2104, %v2100
    %v2369 = vpack.c.b16 %v2109, %v2105
    %v2370 = vpack.c.b16 %v2110, %v2106
    %v2371 = vpack.c.b16 %v2111, %v2107
    %v2372 = vpack.c.b16 %v2112, %v2108
    %v2373 = vpack.c.b16 %v2117, %v2113
    %v2374 = vpack.c.b16 %v2118, %v2114
    %v2375 = vpack.c.b16 %v2119, %v2115
    %v2376 = vpack.c.b16 %v2120, %v2116
    %v2377 = vpack.c.b16 %v2125, %v2121
    %v2378 = vpack.c.b16 %v2126, %v2122
    %v2379 = vpack.c.b16 %v2127, %v2123
    %v2380 = vpack.c.b16 %v2128, %v2124
    %v2381 = vpack.c.b16 %v2133, %v2129
    %v2382 = vpack.c.b16 %v2134, %v2130
    %v2383 = vpack.c.b16 %v2135, %v2131
    %v2384 = vpack.c.b16 %v2136, %v2132
    %v2385 = vpack.c.b16 %v2141, %v2137
    %v2386 = vpack.c.b16 %v2142, %v2138
    %v2387 = vpack.c.b16 %v2143, %v2139
    %v2388 = vpack.c.b16 %v2144, %v2140
    %v2389 = vpack.c.b16 %v2149, %v2145
    %v2390 = vpack.c.b16 %v2150, %v2146
    %v2391 = vpack.c.b16 %v2151, %v2147
    %v2392 = vpack.c.b16 %v2152, %v2148
    %v2393 = vpack.c.b16 %v2157, %v2153
    %v2394 = vpack.c.b16 %v2158, %v2154
    %v2395 = vpack.c.b16 %v2159, %v2155
    %v2396 = vpack.c.b16 %v2160, %v2156
    %v2397 = vpack.c.b16 %v2165, %v2161
    %v2398 = vpack.c.b16 %v2166, %v2162
    %v2399 = vpack.c.b16 %v2167, %v2163
    %v2400 = vpack.c.b16 %v2168, %v2164
    %v2401 = vpack.c.b16 %v2173, %v2169
    %v2402 = vpack.c.b16 %v2174, %v2170
    %v2403 = vpack.c.b16 %v2175, %v2171
    %v2404 = vpack.c.b16 %v2176, %v2172
    %v2405 = vpack.c.b16 %v2181, %v2177
    %v2406 = vpack.c.b16 %v2182, %v2178
    %v2407 = vpack.c.b16 %v2183, %v2179
    %v2408 = vpack.c.b16 %v2184, %v2180
    %v2409 = vpack.c.b16 %v2189, %v2185
    %v2410 = vpack.c.b16 %v2190, %v2186
    %v2411 = vpack.c.b16 %v2191, %v2187
    %v2412 = vpack.c.b16 %v2192, %v2188
    %v2413 = vpack.c.b16 %v2197, %v2193
    %v2414 = vpack.c.b16 %v2198, %v2194
    %v2415 = vpack.c.b16 %v2199, %v2195
    %v2416 = vpack.c.b16 %v2200, %v2196
    %v2417 = vpack.c.b16 %v2205, %v2201
    %v2418 = vpack.c.b16 %v2206, %v2202
    %v2419 = vpack.c.b16 %v2207, %v2203
    %v2420 = vpack.c.b16 %v2208, %v2204
    %v2421 = vpack.c.b16 %v2213, %v2209
    %v2422 = vpack.c.b16 %v2214, %v2210
    %v2423 = vpack.c.b16 %v2215, %v2211
    %v2424 = vpack.c.b16 %v2216, %v2212
    %v2425 = vpack.c.b16 %v2221, %v2217
    %v2426 = vpack.c.b16 %v2222, %v2218
    %v2427 = vpack.c.b16 %v2223, %v2219
    %v2428 = vpack.c.b16 %v2224, %v2220
    %v2429 = vpack.c.b16 %v2229, %v2225
    %v2430 = vpack.c.b16 %v2230, %v2226
    %v2431 = vpack.c.b16 %v2231, %v2227
    %v2432 = vpack.c.b16 %v2232, %v2228
    %v2433 = vpack.c.b16 %v2237, %v2233
    %v2434 = vpack.c.b16 %v2238, %v2234
    %v2435 = vpack.c.b16 %v2239, %v2235
    %v2436 = vpack.c.b16 %v2240, %v2236
    %v2437 = vpack.c.b16 %v2245, %v2241
    %v2438 = vpack.c.b16 %v2246, %v2242
    %v2439 = vpack.c.b16 %v2247, %v2243
    %v2440 = vpack.c.b16 %v2248, %v2244
    %v2441 = vpack.c.b16 %v2253, %v2249
    %v2442 = vpack.c.b16 %v2254, %v2250
    %v2443 = vpack.c.b16 %v2255, %v2251
    %v2444 = vpack.c.b16 %v2256, %v2252
    %v2445 = vpack.c.b16 %v2261, %v2257
    %v2446 = vpack.c.b16 %v2262, %v2258
    %v2447 = vpack.c.b16 %v2263, %v2259
    %v2448 = vpack.c.b16 %v2264, %v2260
    %v2449 = vpack.c.b16 %v2269, %v2265
    %v2450 = vpack.c.b16 %v2270, %v2266
    %v2451 = vpack.c.b16 %v2271, %v2267
    %v2452 = vpack.c.b16 %v2272, %v2268
    %v2453 = vpack.c.b16 %v2277, %v2273
    %v2454 = vpack.c.b16 %v2278, %v2274
    %v2455 = vpack.c.b16 %v2279, %v2275
    %v2456 = vpack.c.b16 %v2280, %v2276
    %v2457 = vpack.c.b16 %v2285, %v2281
    %v2458 = vpack.c.b16 %v2286, %v2282
    %v2459 = vpack.c.b16 %v2287, %v2283
    %v2460 = vpack.c.b16 %v2288, %v2284
    %v2461 = vpack.c.b16 %v2293, %v2289
    %v2462 = vpack.c.b16 %v2294, %v2290
    %v2463 = vpack.c.b16 %v2295, %v2291
    %v2464 = vpack.c.b16 %v2296, %v2292
    %v2465 = vpack.c.b16 %v2301, %v2297
    %v2466 = vpack.c.b16 %v2302, %v2298
    %v2467 = vpack.c.b16 %v2303, %v2299
    %v2468 = vpack.c.b16 %v2304, %v2300
    %v2469 = vpack.c.b16 %v2309, %v2305
    %v2470 = vpack.c.b16 %v2310, %v2306
    %v2471 = vpack.c.b16 %v2311, %v2307
    %v2472 = vpack.c.b16 %v2312, %v2308
    %v2473 = vpack.c.b16 %v2317, %v2313
    %v2474 = vpack.c.b16 %v2318, %v2314
    %v2475 = vpack.c.b16 %v2319, %v2315
    %v2476 = vpack.c.b16 %v2320, %v2316
    %v2477 = vpack.c.b16 %v2325, %v2321
    %v2478 = vpack.c.b16 %v2326, %v2322
    %v2479 = vpack.c.b16 %v2327, %v2323
    %v2480 = vpack.c.b16 %v2328, %v2324
    %v2481 = vpack.c.b16 %v2333, %v2329
    %v2482 = vpack.c.b16 %v2334, %v2330
    %v2483 = vpack.c.b16 %v2335, %v2331
    %v2484 = vpack.c.b16 %v2336, %v2332
    %v2485 = vpack.c.b16 %v2341, %v2337
    %v2486 = vpack.c.b16 %v2342, %v2338
    %v2487 = vpack.c.b16 %v2343, %v2339
    %v2488 = vpack.c.b16 %v2344, %v2340
    %v2633 = vsel %vm153, %v390, 0
    %v2635 = vsel %vm153, %v395, 0
    %v2637 = vsel %vm153, %v400, 0
    %2639 = vmatprep.subr.bf16.mxu0 %v2346
    %2640 = vmatpush1.bf16.msra.mxu0 %v2345
    %2641 = vmatprep.subr.bf16.mxu0 %v2350
    %2642 = vmatpush1.bf16.msra.mxu0 %v2349
    %2643 = vmatprep.subr.bf16.mxu0 %v2354
    %2644 = vmatpush1.bf16.msra.mxu0 %v2353
    %2645 = vmatprep.subr.bf16.mxu0 %v2358
    %2646 = vmatpush1.bf16.msra.mxu0 %v2357
    %2647 = vmatprep.subr.bf16.mxu0 %v2362
    %2648 = vmatpush1.bf16.msra.mxu0 %v2361
    %2649 = vmatprep.subr.bf16.mxu0 %v2366
    %2650 = vmatpush1.bf16.msra.mxu0 %v2365
    %2651 = vmatprep.subr.bf16.mxu0 %v2370
    %2652 = vmatpush1.bf16.msra.mxu0 %v2369
    %2653 = vmatprep.subr.bf16.mxu0 %v2374
    %2654 = vmatpush1.bf16.msra.mxu0 %v2373
    %2655 = vmatprep.subr.bf16.mxu0 %v2378
    %2656 = vmatpush1.bf16.msra.mxu0 %v2377
    %2657 = vmatprep.subr.bf16.mxu0 %v2382
    %2658 = vmatpush1.bf16.msra.mxu0 %v2381
    %2659 = vmatprep.subr.bf16.mxu0 %v2386
    %2660 = vmatpush1.bf16.msra.mxu0 %v2385
    %2661 = vmatprep.subr.bf16.mxu0 %v2390
    %2662 = vmatpush1.bf16.msra.mxu0 %v2389
    %2663 = vmatprep.subr.bf16.mxu0 %v2394
    %2664 = vmatpush1.bf16.msra.mxu0 %v2393
    %2665 = vmatprep.subr.bf16.mxu0 %v2398
    %2666 = vmatpush1.bf16.msra.mxu0 %v2397
    %2667 = vmatprep.subr.bf16.mxu0 %v2402
    %2668 = vmatpush1.bf16.msra.mxu0 %v2401
    %2669 = vmatprep.subr.bf16.mxu0 %v2406
    %2670 = vmatpush1.bf16.msra.mxu0 %v2405
    %2671 = vmatprep.mubr.bf16.mxu0 %v387
    %2672 = vmatmul.mubr.bf16.gmra.mrb[0].mxu0 %v386
    %v2673 = vpop.f32.mrb[0].mxu0
    %v2674 = vadd.f32 %v1704, %v2673
    %v2675 = vpop.f32.mrb[0].mxu0
    %v2676 = vadd.f32 %v1706, %v2675
    %v2677 = vpop.f32.mrb[0].mxu0
    %v2678 = vadd.f32 %v1708, %v2677
    %v2679 = vpop.f32.mrb[0].mxu0
    %v2680 = vadd.f32 %v1710, %v2679
    %2681 = vmatprep.mubr.bf16.mxu0 %v392
    %2682 = vmatmul.mubr.bf16.gmra.mrb[0].mxu0 %v391
    %v2683 = vpop.f32.mrb[0].mxu0
    %v2684 = vadd.f32 %v1714, %v2683
    %v2685 = vpop.f32.mrb[0].mxu0
    %v2686 = vadd.f32 %v1716, %v2685
    %v2687 = vpop.f32.mrb[0].mxu0
    %v2688 = vadd.f32 %v1718, %v2687
    %v2689 = vpop.f32.mrb[0].mxu0
    %v2690 = vadd.f32 %v1720, %v2689
    %2691 = vmatprep.mubr.bf16.mxu0 %v397
    %2692 = vmatmul.mubr.bf16.gmra.mrb[0].mxu0 %v396
    %v2693 = vpop.f32.mrb[0].mxu0
    %v2694 = vadd.f32 %v1724, %v2693
    %v2695 = vpop.f32.mrb[0].mxu0
    %v2696 = vadd.f32 %v1726, %v2695
    %v2697 = vpop.f32.mrb[0].mxu0
    %v2698 = vpop.f32.mrb[0].mxu0
    %2699 = vdwg.mxu0
    %2700 = vmatprep.subr.bf16.mxu0 %v2410
    %2701 = vmatpush1.bf16.msra.mxu0 %v2409
    %2702 = vmatprep.subr.bf16.mxu0 %v2414
    %2703 = vmatpush1.bf16.msra.mxu0 %v2413
    %2704 = vmatprep.subr.bf16.mxu0 %v2418
    %2705 = vmatpush1.bf16.msra.mxu0 %v2417
    %2706 = vmatprep.subr.bf16.mxu0 %v2422
    %2707 = vmatpush1.bf16.msra.mxu0 %v2421
    %2708 = vmatprep.subr.bf16.mxu0 %v2426
    %2709 = vmatpush1.bf16.msra.mxu0 %v2425
    %2710 = vmatprep.subr.bf16.mxu0 %v2430
    %2711 = vmatpush1.bf16.msra.mxu0 %v2429
    %2712 = vmatprep.subr.bf16.mxu0 %v2434
    %2713 = vmatpush1.bf16.msra.mxu0 %v2433
    %2714 = vmatprep.subr.bf16.mxu0 %v2438
    %2715 = vmatpush1.bf16.msra.mxu0 %v2437
    %2716 = vmatprep.subr.bf16.mxu0 %v2442
    %2717 = vmatpush1.bf16.msra.mxu0 %v2441
    %2718 = vmatprep.subr.bf16.mxu0 %v2446
    %2719 = vmatpush1.bf16.msra.mxu0 %v2445
    %2720 = vmatprep.subr.bf16.mxu0 %v2450
    %2721 = vmatpush1.bf16.msra.mxu0 %v2449
    %2722 = vmatprep.subr.bf16.mxu0 %v2454
    %2723 = vmatpush1.bf16.msra.mxu0 %v2453
    %2724 = vmatprep.subr.bf16.mxu0 %v2458
    %2725 = vmatpush1.bf16.msra.mxu0 %v2457
    %2726 = vmatprep.subr.bf16.mxu0 %v2462
    %2727 = vmatpush1.bf16.msra.mxu0 %v2461
    %2728 = vmatprep.subr.bf16.mxu0 %v2466
    %2729 = vmatpush1.bf16.msra.mxu0 %v2465
    %2730 = vmatprep.subr.bf16.mxu0 %v2470
    %2731 = vmatpush1.bf16.msra.mxu0 %v2469
    %2732 = vmatprep.mubr.bf16.mxu0 %v389
    %2733 = vmatmul.mubr.bf16.gmra.mrb[0].mxu0 %v388
    %v2734 = vpop.f32.mrb[0].mxu0
    %v2735 = vadd.f32 %v2674, %v2734
    %v2736 = vpop.f32.mrb[0].mxu0
    %v2737 = vadd.f32 %v2676, %v2736
    %v2738 = vpop.f32.mrb[0].mxu0
    %v2739 = vadd.f32 %v2678, %v2738
    %v2740 = vpop.f32.mrb[0].mxu0
    %v2741 = vadd.f32 %v2680, %v2740
    %2742 = vmatprep.mubr.bf16.mxu0 %v394
    %2743 = vmatmul.mubr.bf16.gmra.mrb[0].mxu0 %v393
    %v2744 = vpop.f32.mrb[0].mxu0
    %v2745 = vadd.f32 %v2684, %v2744
    %v2746 = vpop.f32.mrb[0].mxu0
    %v2747 = vadd.f32 %v2686, %v2746
    %v2748 = vpop.f32.mrb[0].mxu0
    %v2749 = vadd.f32 %v2688, %v2748
    %v2750 = vpop.f32.mrb[0].mxu0
    %v2751 = vadd.f32 %v2690, %v2750
    %2752 = vmatprep.mubr.bf16.mxu0 %v399
    %2753 = vmatmul.mubr.bf16.gmra.mrb[0].mxu0 %v398
    %v2754 = vpop.f32.mrb[0].mxu0
    %v2755 = vadd.f32 %v2694, %v2754
    %v2756 = vpop.f32.mrb[0].mxu0
    %v2757 = vadd.f32 %v2696, %v2756
    %v2758 = vpop.f32.mrb[0].mxu0
    %v2759 = vpop.f32.mrb[0].mxu0
    %2760 = vdwg.mxu0
    %2761 = vmatprep.subr.bf16.mxu0 %v2474
    %2762 = vmatpush1.bf16.msra.mxu0 %v2473
    %2763 = vmatprep.subr.bf16.mxu0 %v2478
    %2764 = vmatpush1.bf16.msra.mxu0 %v2477
    %2765 = vmatprep.subr.bf16.mxu0 %v2482
    %2766 = vmatpush1.bf16.msra.mxu0 %v2481
    %2767 = vmatprep.subr.bf16.mxu0 %v2486
    %2768 = vmatpush1.bf16.msra.mxu0 %v2485
    %2769 = vmatprep.subr.bf16.mxu0 0
    %2770 = vmatpush1.bf16.msra.mxu0 0
    %2771 = vmatprep.subr.bf16.mxu0 0
    %2772 = vmatpush1.bf16.msra.mxu0 0
    %2773 = vmatprep.subr.bf16.mxu0 0
    %2774 = vmatpush1.bf16.msra.mxu0 0
    %2775 = vmatprep.subr.bf16.mxu0 0
    %2776 = vmatpush1.bf16.msra.mxu0 0
    %2777 = vmatprep.subr.bf16.mxu0 0
    %2778 = vmatpush1.bf16.msra.mxu0 0
    %2779 = vmatprep.subr.bf16.mxu0 0
    %2780 = vmatpush1.bf16.msra.mxu0 0
    %2781 = vmatprep.subr.bf16.mxu0 0
    %2782 = vmatpush1.bf16.msra.mxu0 0
    %2783 = vmatprep.subr.bf16.mxu0 0
    %2784 = vmatpush1.bf16.msra.mxu0 0
    %2785 = vmatprep.subr.bf16.mxu0 0
    %2786 = vmatpush1.bf16.msra.mxu0 0
    %2787 = vmatprep.subr.bf16.mxu0 0
    %2788 = vmatpush1.bf16.msra.mxu0 0
    %2789 = vmatprep.subr.bf16.mxu0 0
    %2790 = vmatpush1.bf16.msra.mxu0 0
    %2791 = vmatprep.subr.bf16.mxu0 0
    %2792 = vmatpush1.bf16.msra.mxu0 0
    %2793 = vmatprep.mubr.bf16.mxu0 0
    %2794 = vmatmul.mubr.bf16.gmra.mrb[0].mxu0 %v2633
    %v2795 = vpop.f32.mrb[0].mxu0
    %v2796 = vadd.f32 %v2735, %v2795
    %v2797 = vpop.f32.mrb[0].mxu0
    %v2798 = vadd.f32 %v2737, %v2797
    %v2799 = vpop.f32.mrb[0].mxu0
    %v2800 = vadd.f32 %v2739, %v2799
    %v2801 = vpop.f32.mrb[0].mxu0
    %v2802 = vadd.f32 %v2741, %v2801
    %2803 = vmatprep.mubr.bf16.mxu0 0
    %2804 = vmatmul.mubr.bf16.gmra.mrb[0].mxu0 %v2635
    %v2805 = vpop.f32.mrb[0].mxu0
    %v2806 = vadd.f32 %v2745, %v2805
    %v2807 = vpop.f32.mrb[0].mxu0
    %v2808 = vadd.f32 %v2747, %v2807
    %v2809 = vpop.f32.mrb[0].mxu0
    %v2810 = vadd.f32 %v2749, %v2809
    %v2811 = vpop.f32.mrb[0].mxu0
    %v2812 = vadd.f32 %v2751, %v2811
    %2813 = vmatprep.mubr.bf16.mxu0 0
    %2814 = vmatmul.mubr.bf16.gmra.mrb[0].mxu0 %v2637
    %v2815 = vpop.f32.mrb[0].mxu0
    %v2816 = vadd.f32 %v2755, %v2815
    %v2817 = vpop.f32.mrb[0].mxu0
    %v2818 = vadd.f32 %v2757, %v2817
    %v2819 = vpop.f32.mrb[0].mxu0
    %v2820 = vpop.f32.mrb[0].mxu0
    %2821 = vdwg.mxu0
    %2822 = vmatprep.subr.bf16.mxu0 %v2348
    %2823 = vmatpush1.bf16.msra.mxu0 %v2347
    %2824 = vmatprep.subr.bf16.mxu0 %v2352
    %2825 = vmatpush1.bf16.msra.mxu0 %v2351
    %2826 = vmatprep.subr.bf16.mxu0 %v2356
    %2827 = vmatpush1.bf16.msra.mxu0 %v2355
    %2828 = vmatprep.subr.bf16.mxu0 %v2360
    %2829 = vmatpush1.bf16.msra.mxu0 %v2359
    %2830 = vmatprep.subr.bf16.mxu0 %v2364
    %2831 = vmatpush1.bf16.msra.mxu0 %v2363
    %2832 = vmatprep.subr.bf16.mxu0 %v2368
    %2833 = vmatpush1.bf16.msra.mxu0 %v2367
    %2834 = vmatprep.subr.bf16.mxu0 %v2372
    %2835 = vmatpush1.bf16.msra.mxu0 %v2371
    %2836 = vmatprep.subr.bf16.mxu0 %v2376
    %2837 = vmatpush1.bf16.msra.mxu0 %v2375
    %2838 = vmatprep.subr.bf16.mxu0 %v2380
    %2839 = vmatpush1.bf16.msra.mxu0 %v2379
    %2840 = vmatprep.subr.bf16.mxu0 %v2384
    %2841 = vmatpush1.bf16.msra.mxu0 %v2383
    %2842 = vmatprep.subr.bf16.mxu0 %v2388
    %2843 = vmatpush1.bf16.msra.mxu0 %v2387
    %2844 = vmatprep.subr.bf16.mxu0 %v2392
    %2845 = vmatpush1.bf16.msra.mxu0 %v2391
    %2846 = vmatprep.subr.bf16.mxu0 %v2396
    %2847 = vmatpush1.bf16.msra.mxu0 %v2395
    %2848 = vmatprep.subr.bf16.mxu0 %v2400
    %2849 = vmatpush1.bf16.msra.mxu0 %v2399
    %2850 = vmatprep.subr.bf16.mxu0 %v2404
    %2851 = vmatpush1.bf16.msra.mxu0 %v2403
    %2852 = vmatprep.subr.bf16.mxu0 %v2408
    %2853 = vmatpush1.bf16.msra.mxu0 %v2407
    %2854 = vmatprep.mubr.bf16.mxu0 %v387
    %2855 = vmatmul.mubr.bf16.gmra.mrb[0].mxu0 %v386
    %v2856 = vpop.f32.mrb[0].mxu0
    %v2857 = vadd.f32 %v1887, %v2856
    %v2858 = vpop.f32.mrb[0].mxu0
    %v2859 = vadd.f32 %v1889, %v2858
    %v2860 = vpop.f32.mrb[0].mxu0
    %v2861 = vadd.f32 %v1891, %v2860
    %v2862 = vpop.f32.mrb[0].mxu0
    %v2863 = vadd.f32 %v1893, %v2862
    %2864 = vmatprep.mubr.bf16.mxu0 %v392
    %2865 = vmatmul.mubr.bf16.gmra.mrb[0].mxu0 %v391
    %v2866 = vpop.f32.mrb[0].mxu0
    %v2867 = vadd.f32 %v1897, %v2866
    %v2868 = vpop.f32.mrb[0].mxu0
    %v2869 = vadd.f32 %v1899, %v2868
    %v2870 = vpop.f32.mrb[0].mxu0
    %v2871 = vadd.f32 %v1901, %v2870
    %v2872 = vpop.f32.mrb[0].mxu0
    %v2873 = vadd.f32 %v1903, %v2872
    %2874 = vmatprep.mubr.bf16.mxu0 %v397
    %2875 = vmatmul.mubr.bf16.gmra.mrb[0].mxu0 %v396
    %v2876 = vpop.f32.mrb[0].mxu0
    %v2877 = vadd.f32 %v1907, %v2876
    %v2878 = vpop.f32.mrb[0].mxu0
    %v2879 = vadd.f32 %v1909, %v2878
    %v2880 = vpop.f32.mrb[0].mxu0
    %v2881 = vpop.f32.mrb[0].mxu0
    %2882 = vdwg.mxu0
    %2883 = vmatprep.subr.bf16.mxu0 %v2412
    %2884 = vmatpush1.bf16.msra.mxu0 %v2411
    %2885 = vmatprep.subr.bf16.mxu0 %v2416
    %2886 = vmatpush1.bf16.msra.mxu0 %v2415
    %2887 = vmatprep.subr.bf16.mxu0 %v2420
    %2888 = vmatpush1.bf16.msra.mxu0 %v2419
    %2889 = vmatprep.subr.bf16.mxu0 %v2424
    %2890 = vmatpush1.bf16.msra.mxu0 %v2423
    %2891 = vmatprep.subr.bf16.mxu0 %v2428
    %2892 = vmatpush1.bf16.msra.mxu0 %v2427
    %2893 = vmatprep.subr.bf16.mxu0 %v2432
    %2894 = vmatpush1.bf16.msra.mxu0 %v2431
    %2895 = vmatprep.subr.bf16.mxu0 %v2436
    %2896 = vmatpush1.bf16.msra.mxu0 %v2435
    %2897 = vmatprep.subr.bf16.mxu0 %v2440
    %2898 = vmatpush1.bf16.msra.mxu0 %v2439
    %2899 = vmatprep.subr.bf16.mxu0 %v2444
    %2900 = vmatpush1.bf16.msra.mxu0 %v2443
    %2901 = vmatprep.subr.bf16.mxu0 %v2448
    %2902 = vmatpush1.bf16.msra.mxu0 %v2447
    %2903 = vmatprep.subr.bf16.mxu0 %v2452
    %2904 = vmatpush1.bf16.msra.mxu0 %v2451
    %2905 = vmatprep.subr.bf16.mxu0 %v2456
    %2906 = vmatpush1.bf16.msra.mxu0 %v2455
    %2907 = vmatprep.subr.bf16.mxu0 %v2460
    %2908 = vmatpush1.bf16.msra.mxu0 %v2459
    %2909 = vmatprep.subr.bf16.mxu0 %v2464
    %2910 = vmatpush1.bf16.msra.mxu0 %v2463
    %2911 = vmatprep.subr.bf16.mxu0 %v2468
    %2912 = vmatpush1.bf16.msra.mxu0 %v2467
    %2913 = vmatprep.subr.bf16.mxu0 %v2472
    %2914 = vmatpush1.bf16.msra.mxu0 %v2471
    %2915 = vmatprep.mubr.bf16.mxu0 %v389
    %2916 = vmatmul.mubr.bf16.gmra.mrb[0].mxu0 %v388
    %v2917 = vpop.f32.mrb[0].mxu0
    %v2918 = vadd.f32 %v2857, %v2917
    %v2919 = vpop.f32.mrb[0].mxu0
    %v2920 = vadd.f32 %v2859, %v2919
    %v2921 = vpop.f32.mrb[0].mxu0
    %v2922 = vadd.f32 %v2861, %v2921
    %v2923 = vpop.f32.mrb[0].mxu0
    %v2924 = vadd.f32 %v2863, %v2923
    %2925 = vmatprep.mubr.bf16.mxu0 %v394
    %2926 = vmatmul.mubr.bf16.gmra.mrb[0].mxu0 %v393
    %v2927 = vpop.f32.mrb[0].mxu0
    %v2928 = vadd.f32 %v2867, %v2927
    %v2929 = vpop.f32.mrb[0].mxu0
    %v2930 = vadd.f32 %v2869, %v2929
    %v2931 = vpop.f32.mrb[0].mxu0
    %v2932 = vadd.f32 %v2871, %v2931
    %v2933 = vpop.f32.mrb[0].mxu0
    %v2934 = vadd.f32 %v2873, %v2933
    %2935 = vmatprep.mubr.bf16.mxu0 %v399
    %2936 = vmatmul.mubr.bf16.gmra.mrb[0].mxu0 %v398
    %v2937 = vpop.f32.mrb[0].mxu0
    %v2938 = vadd.f32 %v2877, %v2937
    %v2939 = vpop.f32.mrb[0].mxu0
    %v2940 = vadd.f32 %v2879, %v2939
    %v2941 = vpop.f32.mrb[0].mxu0
    %v2942 = vpop.f32.mrb[0].mxu0
    %2943 = vdwg.mxu0
    %2944 = vmatprep.subr.bf16.mxu0 %v2476
    %2945 = vmatpush1.bf16.msra.mxu0 %v2475
    %2946 = vmatprep.subr.bf16.mxu0 %v2480
    %2947 = vmatpush1.bf16.msra.mxu0 %v2479
    %2948 = vmatprep.subr.bf16.mxu0 %v2484
    %2949 = vmatpush1.bf16.msra.mxu0 %v2483
    %2950 = vmatprep.subr.bf16.mxu0 %v2488
    %2951 = vmatpush1.bf16.msra.mxu0 %v2487
    %2952 = vmatprep.subr.bf16.mxu0 0
    %2953 = vmatpush1.bf16.msra.mxu0 0
    %2954 = vmatprep.subr.bf16.mxu0 0
    %2955 = vmatpush1.bf16.msra.mxu0 0
    %2956 = vmatprep.subr.bf16.mxu0 0
    %2957 = vmatpush1.bf16.msra.mxu0 0
    %2958 = vmatprep.subr.bf16.mxu0 0
    %2959 = vmatpush1.bf16.msra.mxu0 0
    %2960 = vmatprep.subr.bf16.mxu0 0
    %2961 = vmatpush1.bf16.msra.mxu0 0
    %2962 = vmatprep.subr.bf16.mxu0 0
    %2963 = vmatpush1.bf16.msra.mxu0 0
    %2964 = vmatprep.subr.bf16.mxu0 0
    %2965 = vmatpush1.bf16.msra.mxu0 0
    %2966 = vmatprep.subr.bf16.mxu0 0
    %2967 = vmatpush1.bf16.msra.mxu0 0
    %2968 = vmatprep.subr.bf16.mxu0 0
    %2969 = vmatpush1.bf16.msra.mxu0 0
    %2970 = vmatprep.subr.bf16.mxu0 0
    %2971 = vmatpush1.bf16.msra.mxu0 0
    %2972 = vmatprep.subr.bf16.mxu0 0
    %2973 = vmatpush1.bf16.msra.mxu0 0
    %2974 = vmatprep.subr.bf16.mxu0 0
    %2975 = vmatpush1.bf16.msra.mxu0 0
    %2976 = vmatprep.mubr.bf16.mxu0 0
    %2977 = vmatmul.mubr.bf16.gmra.mrb[0].mxu0 %v2633
    %v2978 = vpop.f32.mrb[0].mxu0
    %v2979 = vadd.f32 %v2918, %v2978
    %v2980 = vpop.f32.mrb[0].mxu0
    %v2981 = vadd.f32 %v2920, %v2980
    %v2982 = vpop.f32.mrb[0].mxu0
    %v2983 = vadd.f32 %v2922, %v2982
    %v2984 = vpop.f32.mrb[0].mxu0
    %v2985 = vadd.f32 %v2924, %v2984
    %2986 = vmatprep.mubr.bf16.mxu0 0
    %2987 = vmatmul.mubr.bf16.gmra.mrb[0].mxu0 %v2635
    %v2988 = vpop.f32.mrb[0].mxu0
    %v2989 = vadd.f32 %v2928, %v2988
    %v2990 = vpop.f32.mrb[0].mxu0
    %v2991 = vadd.f32 %v2930, %v2990
    %v2992 = vpop.f32.mrb[0].mxu0
    %v2993 = vadd.f32 %v2932, %v2992
    %v2994 = vpop.f32.mrb[0].mxu0
    %v2995 = vadd.f32 %v2934, %v2994
    %2996 = vmatprep.mubr.bf16.mxu0 0
    %2997 = vmatmul.mubr.bf16.gmra.mrb[0].mxu0 %v2637
    %v2998 = vpop.f32.mrb[0].mxu0
    %v2999 = vadd.f32 %v2938, %v2998
    %v3000 = vpop.f32.mrb[0].mxu0
    %v3001 = vadd.f32 %v2940, %v3000
    %v3002 = vpop.f32.mrb[0].mxu0
    %v3003 = vpop.f32.mrb[0].mxu0
    %3004 = vdwg.mxu0
    %s3005 = scalar_lea.vmem [#allocation5], 2304
    %v3006 = vld [vmem:[%s3005] sm:$0xff]
    %v3007 = vld [vmem:[%s3005 + $0x8] sm:$0xff]
    %v3008 = vld [vmem:[%s3005 + $0x10] sm:$0xff]
    %v3009 = vld [vmem:[%s3005 + $0x18] sm:$0xff]
    %v3010 = vld [vmem:[%s3005 + $0x20] sm:$0xff]
    %v3011 = vld [vmem:[%s3005 + $0x28] sm:$0xff]
    %v3012 = vld [vmem:[%s3005 + $0x30] sm:$0xff]
    %v3013 = vld [vmem:[%s3005 + $0x38] sm:$0xff]
    %v3014 = vld [vmem:[%s3005 + $0x40] sm:$0xff]
    %v3015 = vld [vmem:[%s3005 + $0x48] sm:$0xff]
    %v3016 = vld [vmem:[%s3005 + $0x50] sm:$0xff]
    %v3017 = vld [vmem:[%s3005 + $0x58] sm:$0xff]
    %v3018 = vld [vmem:[%s3005 + $0x60] sm:$0xff]
    %v3019 = vld [vmem:[%s3005 + $0x68] sm:$0xff]
    %v3020 = vld [vmem:[%s3005 + $0x70] sm:$0xff]
    %v3021 = vld [vmem:[%s3005 + $0x78] sm:$0xff]
    %v3022 = vld [vmem:[%s3005 + $0x80] sm:$0xff]
    %v3023 = vld [vmem:[%s3005 + $0x88] sm:$0xff]
    %v3024 = vld [vmem:[%s3005 + $0x90] sm:$0xff]
    %v3025 = vld [vmem:[%s3005 + $0x98] sm:$0xff]
    %v3026 = vld [vmem:[%s3005 + $0xa0] sm:$0xff]
    %v3027 = vld [vmem:[%s3005 + $0xa8] sm:$0xff]
    %v3028 = vld [vmem:[%s3005 + $0xb0] sm:$0xff]
    %v3029 = vld [vmem:[%s3005 + $0xb8] sm:$0xff]
    %v3030 = vld [vmem:[%s3005 + $0xc0] sm:$0xff]
    %v3031 = vld [vmem:[%s3005 + $0xc8] sm:$0xff]
    %v3032 = vld [vmem:[%s3005 + $0xd0] sm:$0xff]
    %v3033 = vld [vmem:[%s3005 + $0xd8] sm:$0xff]
    %v3034 = vld [vmem:[%s3005 + $0xe0] sm:$0xff]
    %v3035 = vld [vmem:[%s3005 + $0xe8] sm:$0xff]
    %v3036 = vld [vmem:[%s3005 + $0xf0] sm:$0xff]
    %v3037 = vld [vmem:[%s3005 + $0xf8] sm:$0xff]
    %v3038 = vld [vmem:[%s3005 + $0x100] sm:$0xff]
    %v3039 = vld [vmem:[%s3005 + $0x108] sm:$0xff]
    %v3040 = vld [vmem:[%s3005 + $0x110] sm:$0xff]
    %v3041 = vld [vmem:[%s3005 + $0x118] sm:$0xff]
    %v3042 = vld [vmem:[%s3005 + $0x120] sm:$0xff]
    %v3043 = vld [vmem:[%s3005 + $0x128] sm:$0xff]
    %v3044 = vld [vmem:[%s3005 + $0x130] sm:$0xff]
    %v3045 = vld [vmem:[%s3005 + $0x138] sm:$0xff]
    %v3046 = vld [vmem:[%s3005 + $0x140] sm:$0xff]
    %v3047 = vld [vmem:[%s3005 + $0x148] sm:$0xff]
    %v3048 = vld [vmem:[%s3005 + $0x150] sm:$0xff]
    %v3049 = vld [vmem:[%s3005 + $0x158] sm:$0xff]
    %v3050 = vld [vmem:[%s3005 + $0x160] sm:$0xff]
    %v3051 = vld [vmem:[%s3005 + $0x168] sm:$0xff]
    %v3052 = vld [vmem:[%s3005 + $0x170] sm:$0xff]
    %v3053 = vld [vmem:[%s3005 + $0x178] sm:$0xff]
    %v3054 = vld [vmem:[%s3005 + $0x180] sm:$0xff]
    %v3055 = vld [vmem:[%s3005 + $0x188] sm:$0xff]
    %v3056 = vld [vmem:[%s3005 + $0x190] sm:$0xff]
    %v3057 = vld [vmem:[%s3005 + $0x198] sm:$0xff]
    %v3058 = vld [vmem:[%s3005 + $0x1a0] sm:$0xff]
    %v3059 = vld [vmem:[%s3005 + $0x1a8] sm:$0xff]
    %v3060 = vld [vmem:[%s3005 + $0x1b0] sm:$0xff]
    %v3061 = vld [vmem:[%s3005 + $0x1b8] sm:$0xff]
    %v3062 = vld [vmem:[%s3005 + $0x1c0] sm:$0xff]
    %v3063 = vld [vmem:[%s3005 + $0x1c8] sm:$0xff]
    %v3064 = vld [vmem:[%s3005 + $0x1d0] sm:$0xff]
    %v3065 = vld [vmem:[%s3005 + $0x1d8] sm:$0xff]
    %v3066 = vld [vmem:[%s3005 + $0x1e0] sm:$0xff]
    %v3067 = vld [vmem:[%s3005 + $0x1e8] sm:$0xff]
    %v3068 = vld [vmem:[%s3005 + $0x1f0] sm:$0xff]
    %v3069 = vld [vmem:[%s3005 + $0x1f8] sm:$0xff]
    %v3070 = vld [vmem:[%s3005 + $0x200] sm:$0xff]
    %v3071 = vld [vmem:[%s3005 + $0x208] sm:$0xff]
    %v3072 = vld [vmem:[%s3005 + $0x210] sm:$0xff]
    %v3073 = vld [vmem:[%s3005 + $0x218] sm:$0xff]
    %v3074 = vld [vmem:[%s3005 + $0x220] sm:$0xff]
    %v3075 = vld [vmem:[%s3005 + $0x228] sm:$0xff]
    %v3076 = vld [vmem:[%s3005 + $0x230] sm:$0xff]
    %v3077 = vld [vmem:[%s3005 + $0x238] sm:$0xff]
    %v3078 = vld [vmem:[%s3005 + $0x240] sm:$0xff]
    %v3079 = vld [vmem:[%s3005 + $0x248] sm:$0xff]
    %v3080 = vld [vmem:[%s3005 + $0x250] sm:$0xff]
    %v3081 = vld [vmem:[%s3005 + $0x258] sm:$0xff]
    %v3082 = vld [vmem:[%s3005 + $0x260] sm:$0xff]
    %v3083 = vld [vmem:[%s3005 + $0x268] sm:$0xff]
    %v3084 = vld [vmem:[%s3005 + $0x270] sm:$0xff]
    %v3085 = vld [vmem:[%s3005 + $0x278] sm:$0xff]
    %v3086 = vld [vmem:[%s3005 + $0x280] sm:$0xff]
    %v3087 = vld [vmem:[%s3005 + $0x288] sm:$0xff]
    %v3088 = vld [vmem:[%s3005 + $0x290] sm:$0xff]
    %v3089 = vld [vmem:[%s3005 + $0x298] sm:$0xff]
    %v3090 = vld [vmem:[%s3005 + $0x2a0] sm:$0xff]
    %v3091 = vld [vmem:[%s3005 + $0x2a8] sm:$0xff]
    %v3092 = vld [vmem:[%s3005 + $0x2b0] sm:$0xff]
    %v3093 = vld [vmem:[%s3005 + $0x2b8] sm:$0xff]
    %v3094 = vld [vmem:[%s3005 + $0x2c0] sm:$0xff]
    %v3095 = vld [vmem:[%s3005 + $0x2c8] sm:$0xff]
    %v3096 = vld [vmem:[%s3005 + $0x2d0] sm:$0xff]
    %v3097 = vld [vmem:[%s3005 + $0x2d8] sm:$0xff]
    %v3098 = vld [vmem:[%s3005 + $0x2e0] sm:$0xff]
    %v3099 = vld [vmem:[%s3005 + $0x2e8] sm:$0xff]
    %v3100 = vld [vmem:[%s3005 + $0x2f0] sm:$0xff]
    %v3101 = vld [vmem:[%s3005 + $0x2f8] sm:$0xff]
    %v3102 = vld [vmem:[%s3005 + $0x300] sm:$0xff]
    %v3103 = vld [vmem:[%s3005 + $0x308] sm:$0xff]
    %v3104 = vld [vmem:[%s3005 + $0x310] sm:$0xff]
    %v3105 = vld [vmem:[%s3005 + $0x318] sm:$0xff]
    %v3106 = vld [vmem:[%s3005 + $0x320] sm:$0xff]
    %v3107 = vld [vmem:[%s3005 + $0x328] sm:$0xff]
    %v3108 = vld [vmem:[%s3005 + $0x330] sm:$0xff]
    %v3109 = vld [vmem:[%s3005 + $0x338] sm:$0xff]
    %v3110 = vld [vmem:[%s3005 + $0x340] sm:$0xff]
    %v3111 = vld [vmem:[%s3005 + $0x348] sm:$0xff]
    %v3112 = vld [vmem:[%s3005 + $0x350] sm:$0xff]
    %v3113 = vld [vmem:[%s3005 + $0x358] sm:$0xff]
    %v3114 = vld [vmem:[%s3005 + $0x360] sm:$0xff]
    %v3115 = vld [vmem:[%s3005 + $0x368] sm:$0xff]
    %v3116 = vld [vmem:[%s3005 + $0x370] sm:$0xff]
    %v3117 = vld [vmem:[%s3005 + $0x378] sm:$0xff]
    %v3118 = vld [vmem:[%s3005 + $0x380] sm:$0xff]
    %v3119 = vld [vmem:[%s3005 + $0x388] sm:$0xff]
    %v3120 = vld [vmem:[%s3005 + $0x390] sm:$0xff]
    %v3121 = vld [vmem:[%s3005 + $0x398] sm:$0xff]
    %v3122 = vld [vmem:[%s3005 + $0x3a0] sm:$0xff]
    %v3123 = vld [vmem:[%s3005 + $0x3a8] sm:$0xff]
    %v3124 = vld [vmem:[%s3005 + $0x3b0] sm:$0xff]
    %v3125 = vld [vmem:[%s3005 + $0x3b8] sm:$0xff]
    %v3126 = vld [vmem:[%s3005 + $0x3c0] sm:$0xff]
    %v3127 = vld [vmem:[%s3005 + $0x3c8] sm:$0xff]
    %v3128 = vld [vmem:[%s3005 + $0x3d0] sm:$0xff]
    %v3129 = vld [vmem:[%s3005 + $0x3d8] sm:$0xff]
    %v3130 = vld [vmem:[%s3005 + $0x3e0] sm:$0xff]
    %v3131 = vld [vmem:[%s3005 + $0x3e8] sm:$0xff]
    %v3132 = vld [vmem:[%s3005 + $0x3f0] sm:$0xff]
    %v3133 = vld [vmem:[%s3005 + $0x3f8] sm:$0xff]
    %v3134 = vld [vmem:[%s3005 + $0x400] sm:$0xff]
    %v3135 = vld [vmem:[%s3005 + $0x408] sm:$0xff]
    %v3136 = vld [vmem:[%s3005 + $0x410] sm:$0xff]
    %v3137 = vld [vmem:[%s3005 + $0x418] sm:$0xff]
    %v3138 = vld [vmem:[%s3005 + $0x420] sm:$0xff]
    %v3139 = vld [vmem:[%s3005 + $0x428] sm:$0xff]
    %v3140 = vld [vmem:[%s3005 + $0x430] sm:$0xff]
    %v3141 = vld [vmem:[%s3005 + $0x438] sm:$0xff]
    %v3142 = vld [vmem:[%s3005 + $0x440] sm:$0xff]
    %v3143 = vld [vmem:[%s3005 + $0x448] sm:$0xff]
    %v3144 = vld [vmem:[%s3005 + $0x450] sm:$0xff]
    %v3145 = vld [vmem:[%s3005 + $0x458] sm:$0xff]
    %v3146 = vld [vmem:[%s3005 + $0x460] sm:$0xff]
    %v3147 = vld [vmem:[%s3005 + $0x468] sm:$0xff]
    %v3148 = vld [vmem:[%s3005 + $0x470] sm:$0xff]
    %v3149 = vld [vmem:[%s3005 + $0x478] sm:$0xff]
    %vm3165 = vcmask 1046528
    %v3166 = vrot.slane %v386, 1
    %v3167 = vrot.slane %v391, 1
    %v3168 = vsel %vm3165, %v3166, %v3167
    %v3169 = vrot.slane %v387, 1
    %v3170 = vrot.slane %v392, 1
    %v3171 = vsel %vm3165, %v3169, %v3170
    %v3172 = vrot.slane %v388, 1
    %v3173 = vrot.slane %v393, 1
    %v3174 = vsel %vm3165, %v3172, %v3173
    %v3175 = vrot.slane %v389, 1
    %v3176 = vrot.slane %v394, 1
    %v3177 = vsel %vm3165, %v3175, %v3176
    %v3178 = vrot.slane %v390, 1
    %v3179 = vrot.slane %v395, 1
    %v3180 = vsel %vm3165, %v3178, %v3179
    %v3181 = vrot.slane %v396, 1
    %v3182 = vsel %vm3165, %v3167, %v3181
    %v3183 = vrot.slane %v397, 1
    %v3184 = vsel %vm3165, %v3170, %v3183
    %v3185 = vrot.slane %v398, 1
    %v3186 = vsel %vm3165, %v3173, %v3185
    %v3187 = vrot.slane %v399, 1
    %v3188 = vsel %vm3165, %v3176, %v3187
    %v3189 = vrot.slane %v400, 1
    %v3190 = vsel %vm3165, %v3179, %v3189
    %v3347 = vunpack.c.l.b16 %v3006
    %v3348 = vunpack.c.h.b16 %v3006
    %v3349 = vunpack.c.l.b16 %v3007
    %v3350 = vunpack.c.h.b16 %v3007
    %v3351 = vunpack.c.l.b16 %v3008
    %v3352 = vunpack.c.h.b16 %v3008
    %v3353 = vunpack.c.l.b16 %v3009
    %v3354 = vunpack.c.h.b16 %v3009
    %v3355 = vunpack.c.l.b16 %v3010
    %v3356 = vunpack.c.h.b16 %v3010
    %v3357 = vunpack.c.l.b16 %v3011
    %v3358 = vunpack.c.h.b16 %v3011
    %v3359 = vunpack.c.l.b16 %v3012
    %v3360 = vunpack.c.h.b16 %v3012
    %v3361 = vunpack.c.l.b16 %v3013
    %v3362 = vunpack.c.h.b16 %v3013
    %v3363 = vunpack.c.l.b16 %v3014
    %v3364 = vunpack.c.h.b16 %v3014
    %v3365 = vunpack.c.l.b16 %v3015
    %v3366 = vunpack.c.h.b16 %v3015
    %v3367 = vunpack.c.l.b16 %v3016
    %v3368 = vunpack.c.h.b16 %v3016
    %v3369 = vunpack.c.l.b16 %v3017
    %v3370 = vunpack.c.h.b16 %v3017
    %v3371 = vunpack.c.l.b16 %v3018
    %v3372 = vunpack.c.h.b16 %v3018
    %v3373 = vunpack.c.l.b16 %v3019
    %v3374 = vunpack.c.h.b16 %v3019
    %v3375 = vunpack.c.l.b16 %v3020
    %v3376 = vunpack.c.h.b16 %v3020
    %v3377 = vunpack.c.l.b16 %v3021
    %v3378 = vunpack.c.h.b16 %v3021
    %v3379 = vunpack.c.l.b16 %v3022
    %v3380 = vunpack.c.h.b16 %v3022
    %v3381 = vunpack.c.l.b16 %v3023
    %v3382 = vunpack.c.h.b16 %v3023
    %v3383 = vunpack.c.l.b16 %v3024
    %v3384 = vunpack.c.h.b16 %v3024
    %v3385 = vunpack.c.l.b16 %v3025
    %v3386 = vunpack.c.h.b16 %v3025
    %v3387 = vunpack.c.l.b16 %v3026
    %v3388 = vunpack.c.h.b16 %v3026
    %v3389 = vunpack.c.l.b16 %v3027
    %v3390 = vunpack.c.h.b16 %v3027
    %v3391 = vunpack.c.l.b16 %v3028
    %v3392 = vunpack.c.h.b16 %v3028
    %v3393 = vunpack.c.l.b16 %v3029
    %v3394 = vunpack.c.h.b16 %v3029
    %v3395 = vunpack.c.l.b16 %v3030
    %v3396 = vunpack.c.h.b16 %v3030
    %v3397 = vunpack.c.l.b16 %v3031
    %v3398 = vunpack.c.h.b16 %v3031
    %v3399 = vunpack.c.l.b16 %v3032
    %v3400 = vunpack.c.h.b16 %v3032
    %v3401 = vunpack.c.l.b16 %v3033
    %v3402 = vunpack.c.h.b16 %v3033
    %v3403 = vunpack.c.l.b16 %v3034
    %v3404 = vunpack.c.h.b16 %v3034
    %v3405 = vunpack.c.l.b16 %v3035
    %v3406 = vunpack.c.h.b16 %v3035
    %v3407 = vunpack.c.l.b16 %v3036
    %v3408 = vunpack.c.h.b16 %v3036
    %v3409 = vunpack.c.l.b16 %v3037
    %v3410 = vunpack.c.h.b16 %v3037
    %v3411 = vunpack.c.l.b16 %v3038
    %v3412 = vunpack.c.h.b16 %v3038
    %v3413 = vunpack.c.l.b16 %v3039
    %v3414 = vunpack.c.h.b16 %v3039
    %v3415 = vunpack.c.l.b16 %v3040
    %v3416 = vunpack.c.h.b16 %v3040
    %v3417 = vunpack.c.l.b16 %v3041
    %v3418 = vunpack.c.h.b16 %v3041
    %v3419 = vunpack.c.l.b16 %v3042
    %v3420 = vunpack.c.h.b16 %v3042
    %v3421 = vunpack.c.l.b16 %v3043
    %v3422 = vunpack.c.h.b16 %v3043
    %v3423 = vunpack.c.l.b16 %v3044
    %v3424 = vunpack.c.h.b16 %v3044
    %v3425 = vunpack.c.l.b16 %v3045
    %v3426 = vunpack.c.h.b16 %v3045
    %v3427 = vunpack.c.l.b16 %v3046
    %v3428 = vunpack.c.h.b16 %v3046
    %v3429 = vunpack.c.l.b16 %v3047
    %v3430 = vunpack.c.h.b16 %v3047
    %v3431 = vunpack.c.l.b16 %v3048
    %v3432 = vunpack.c.h.b16 %v3048
    %v3433 = vunpack.c.l.b16 %v3049
    %v3434 = vunpack.c.h.b16 %v3049
    %v3435 = vunpack.c.l.b16 %v3050
    %v3436 = vunpack.c.h.b16 %v3050
    %v3437 = vunpack.c.l.b16 %v3051
    %v3438 = vunpack.c.h.b16 %v3051
    %v3439 = vunpack.c.l.b16 %v3052
    %v3440 = vunpack.c.h.b16 %v3052
    %v3441 = vunpack.c.l.b16 %v3053
    %v3442 = vunpack.c.h.b16 %v3053
    %v3443 = vunpack.c.l.b16 %v3054
    %v3444 = vunpack.c.h.b16 %v3054
    %v3445 = vunpack.c.l.b16 %v3055
    %v3446 = vunpack.c.h.b16 %v3055
    %v3447 = vunpack.c.l.b16 %v3056
    %v3448 = vunpack.c.h.b16 %v3056
    %v3449 = vunpack.c.l.b16 %v3057
    %v3450 = vunpack.c.h.b16 %v3057
    %v3451 = vunpack.c.l.b16 %v3058
    %v3452 = vunpack.c.h.b16 %v3058
    %v3453 = vunpack.c.l.b16 %v3059
    %v3454 = vunpack.c.h.b16 %v3059
    %v3455 = vunpack.c.l.b16 %v3060
    %v3456 = vunpack.c.h.b16 %v3060
    %v3457 = vunpack.c.l.b16 %v3061
    %v3458 = vunpack.c.h.b16 %v3061
    %v3459 = vunpack.c.l.b16 %v3062
    %v3460 = vunpack.c.h.b16 %v3062
    %v3461 = vunpack.c.l.b16 %v3063
    %v3462 = vunpack.c.h.b16 %v3063
    %v3463 = vunpack.c.l.b16 %v3064
    %v3464 = vunpack.c.h.b16 %v3064
    %v3465 = vunpack.c.l.b16 %v3065
    %v3466 = vunpack.c.h.b16 %v3065
    %v3467 = vunpack.c.l.b16 %v3066
    %v3468 = vunpack.c.h.b16 %v3066
    %v3469 = vunpack.c.l.b16 %v3067
    %v3470 = vunpack.c.h.b16 %v3067
    %v3471 = vunpack.c.l.b16 %v3068
    %v3472 = vunpack.c.h.b16 %v3068
    %v3473 = vunpack.c.l.b16 %v3069
    %v3474 = vunpack.c.h.b16 %v3069
    %v3475 = vunpack.c.l.b16 %v3070
    %v3476 = vunpack.c.h.b16 %v3070
    %v3477 = vunpack.c.l.b16 %v3071
    %v3478 = vunpack.c.h.b16 %v3071
    %v3479 = vunpack.c.l.b16 %v3072
    %v3480 = vunpack.c.h.b16 %v3072
    %v3481 = vunpack.c.l.b16 %v3073
    %v3482 = vunpack.c.h.b16 %v3073
    %v3483 = vunpack.c.l.b16 %v3074
    %v3484 = vunpack.c.h.b16 %v3074
    %v3485 = vunpack.c.l.b16 %v3075
    %v3486 = vunpack.c.h.b16 %v3075
    %v3487 = vunpack.c.l.b16 %v3076
    %v3488 = vunpack.c.h.b16 %v3076
    %v3489 = vunpack.c.l.b16 %v3077
    %v3490 = vunpack.c.h.b16 %v3077
    %v3491 = vunpack.c.l.b16 %v3078
    %v3492 = vunpack.c.h.b16 %v3078
    %v3493 = vunpack.c.l.b16 %v3079
    %v3494 = vunpack.c.h.b16 %v3079
    %v3495 = vunpack.c.l.b16 %v3080
    %v3496 = vunpack.c.h.b16 %v3080
    %v3497 = vunpack.c.l.b16 %v3081
    %v3498 = vunpack.c.h.b16 %v3081
    %v3499 = vunpack.c.l.b16 %v3082
    %v3500 = vunpack.c.h.b16 %v3082
    %v3501 = vunpack.c.l.b16 %v3083
    %v3502 = vunpack.c.h.b16 %v3083
    %v3503 = vunpack.c.l.b16 %v3084
    %v3504 = vunpack.c.h.b16 %v3084
    %v3505 = vunpack.c.l.b16 %v3085
    %v3506 = vunpack.c.h.b16 %v3085
    %v3507 = vunpack.c.l.b16 %v3086
    %v3508 = vunpack.c.h.b16 %v3086
    %v3509 = vunpack.c.l.b16 %v3087
    %v3510 = vunpack.c.h.b16 %v3087
    %v3511 = vunpack.c.l.b16 %v3088
    %v3512 = vunpack.c.h.b16 %v3088
    %v3513 = vunpack.c.l.b16 %v3089
    %v3514 = vunpack.c.h.b16 %v3089
    %v3515 = vunpack.c.l.b16 %v3090
    %v3516 = vunpack.c.h.b16 %v3090
    %v3517 = vunpack.c.l.b16 %v3091
    %v3518 = vunpack.c.h.b16 %v3091
    %v3519 = vunpack.c.l.b16 %v3092
    %v3520 = vunpack.c.h.b16 %v3092
    %v3521 = vunpack.c.l.b16 %v3093
    %v3522 = vunpack.c.h.b16 %v3093
    %v3523 = vunpack.c.l.b16 %v3094
    %v3524 = vunpack.c.h.b16 %v3094
    %v3525 = vunpack.c.l.b16 %v3095
    %v3526 = vunpack.c.h.b16 %v3095
    %v3527 = vunpack.c.l.b16 %v3096
    %v3528 = vunpack.c.h.b16 %v3096
    %v3529 = vunpack.c.l.b16 %v3097
    %v3530 = vunpack.c.h.b16 %v3097
    %v3531 = vunpack.c.l.b16 %v3098
    %v3532 = vunpack.c.h.b16 %v3098
    %v3533 = vunpack.c.l.b16 %v3099
    %v3534 = vunpack.c.h.b16 %v3099
    %v3535 = vunpack.c.l.b16 %v3100
    %v3536 = vunpack.c.h.b16 %v3100
    %v3537 = vunpack.c.l.b16 %v3101
    %v3538 = vunpack.c.h.b16 %v3101
    %v3539 = vunpack.c.l.b16 %v3102
    %v3540 = vunpack.c.h.b16 %v3102
    %v3541 = vunpack.c.l.b16 %v3103
    %v3542 = vunpack.c.h.b16 %v3103
    %v3543 = vunpack.c.l.b16 %v3104
    %v3544 = vunpack.c.h.b16 %v3104
    %v3545 = vunpack.c.l.b16 %v3105
    %v3546 = vunpack.c.h.b16 %v3105
    %v3547 = vunpack.c.l.b16 %v3106
    %v3548 = vunpack.c.h.b16 %v3106
    %v3549 = vunpack.c.l.b16 %v3107
    %v3550 = vunpack.c.h.b16 %v3107
    %v3551 = vunpack.c.l.b16 %v3108
    %v3552 = vunpack.c.h.b16 %v3108
    %v3553 = vunpack.c.l.b16 %v3109
    %v3554 = vunpack.c.h.b16 %v3109
    %v3555 = vunpack.c.l.b16 %v3110
    %v3556 = vunpack.c.h.b16 %v3110
    %v3557 = vunpack.c.l.b16 %v3111
    %v3558 = vunpack.c.h.b16 %v3111
    %v3559 = vunpack.c.l.b16 %v3112
    %v3560 = vunpack.c.h.b16 %v3112
    %v3561 = vunpack.c.l.b16 %v3113
    %v3562 = vunpack.c.h.b16 %v3113
    %v3563 = vunpack.c.l.b16 %v3114
    %v3564 = vunpack.c.h.b16 %v3114
    %v3565 = vunpack.c.l.b16 %v3115
    %v3566 = vunpack.c.h.b16 %v3115
    %v3567 = vunpack.c.l.b16 %v3116
    %v3568 = vunpack.c.h.b16 %v3116
    %v3569 = vunpack.c.l.b16 %v3117
    %v3570 = vunpack.c.h.b16 %v3117
    %v3571 = vunpack.c.l.b16 %v3118
    %v3572 = vunpack.c.h.b16 %v3118
    %v3573 = vunpack.c.l.b16 %v3119
    %v3574 = vunpack.c.h.b16 %v3119
    %v3575 = vunpack.c.l.b16 %v3120
    %v3576 = vunpack.c.h.b16 %v3120
    %v3577 = vunpack.c.l.b16 %v3121
    %v3578 = vunpack.c.h.b16 %v3121
    %v3579 = vunpack.c.l.b16 %v3122
    %v3580 = vunpack.c.h.b16 %v3122
    %v3581 = vunpack.c.l.b16 %v3123
    %v3582 = vunpack.c.h.b16 %v3123
    %v3583 = vunpack.c.l.b16 %v3124
    %v3584 = vunpack.c.h.b16 %v3124
    %v3585 = vunpack.c.l.b16 %v3125
    %v3586 = vunpack.c.h.b16 %v3125
    %v3587 = vunpack.c.l.b16 %v3126
    %v3588 = vunpack.c.h.b16 %v3126
    %v3589 = vunpack.c.l.b16 %v3127
    %v3590 = vunpack.c.h.b16 %v3127
    %v3591 = vunpack.c.l.b16 %v3128
    %v3592 = vunpack.c.h.b16 %v3128
    %v3593 = vunpack.c.l.b16 %v3129
    %v3594 = vunpack.c.h.b16 %v3129
    %v3595 = vunpack.c.l.b16 %v3130
    %v3596 = vunpack.c.h.b16 %v3130
    %v3597 = vunpack.c.l.b16 %v3131
    %v3598 = vunpack.c.h.b16 %v3131
    %v3599 = vunpack.c.l.b16 %v3132
    %v3600 = vunpack.c.h.b16 %v3132
    %v3601 = vunpack.c.l.b16 %v3133
    %v3602 = vunpack.c.h.b16 %v3133
    %v3603 = vunpack.c.l.b16 %v3134
    %v3604 = vunpack.c.h.b16 %v3134
    %v3605 = vunpack.c.l.b16 %v3135
    %v3606 = vunpack.c.h.b16 %v3135
    %v3607 = vunpack.c.l.b16 %v3136
    %v3608 = vunpack.c.h.b16 %v3136
    %v3609 = vunpack.c.l.b16 %v3137
    %v3610 = vunpack.c.h.b16 %v3137
    %v3611 = vunpack.c.l.b16 %v3138
    %v3612 = vunpack.c.h.b16 %v3138
    %v3613 = vunpack.c.l.b16 %v3139
    %v3614 = vunpack.c.h.b16 %v3139
    %v3615 = vunpack.c.l.b16 %v3140
    %v3616 = vunpack.c.h.b16 %v3140
    %v3617 = vunpack.c.l.b16 %v3141
    %v3618 = vunpack.c.h.b16 %v3141
    %v3619 = vunpack.c.l.b16 %v3142
    %v3620 = vunpack.c.h.b16 %v3142
    %v3621 = vunpack.c.l.b16 %v3143
    %v3622 = vunpack.c.h.b16 %v3143
    %v3623 = vunpack.c.l.b16 %v3144
    %v3624 = vunpack.c.h.b16 %v3144
    %v3625 = vunpack.c.l.b16 %v3145
    %v3626 = vunpack.c.h.b16 %v3145
    %v3627 = vunpack.c.l.b16 %v3146
    %v3628 = vunpack.c.h.b16 %v3146
    %v3629 = vunpack.c.l.b16 %v3147
    %v3630 = vunpack.c.h.b16 %v3147
    %v3631 = vunpack.c.l.b16 %v3148
    %v3632 = vunpack.c.h.b16 %v3148
    %v3633 = vunpack.c.l.b16 %v3149
    %v3634 = vunpack.c.h.b16 %v3149
    %v3635 = vpack.c.b16 %v3351, %v3347
    %v3636 = vpack.c.b16 %v3352, %v3348
    %v3637 = vpack.c.b16 %v3353, %v3349
    %v3638 = vpack.c.b16 %v3354, %v3350
    %v3639 = vpack.c.b16 %v3359, %v3355
    %v3640 = vpack.c.b16 %v3360, %v3356
    %v3641 = vpack.c.b16 %v3361, %v3357
    %v3642 = vpack.c.b16 %v3362, %v3358
    %v3643 = vpack.c.b16 %v3367, %v3363
    %v3644 = vpack.c.b16 %v3368, %v3364
    %v3645 = vpack.c.b16 %v3369, %v3365
    %v3646 = vpack.c.b16 %v3370, %v3366
    %v3647 = vpack.c.b16 %v3375, %v3371
    %v3648 = vpack.c.b16 %v3376, %v3372
    %v3649 = vpack.c.b16 %v3377, %v3373
    %v3650 = vpack.c.b16 %v3378, %v3374
    %v3651 = vpack.c.b16 %v3383, %v3379
    %v3652 = vpack.c.b16 %v3384, %v3380
    %v3653 = vpack.c.b16 %v3385, %v3381
    %v3654 = vpack.c.b16 %v3386, %v3382
    %v3655 = vpack.c.b16 %v3391, %v3387
    %v3656 = vpack.c.b16 %v3392, %v3388
    %v3657 = vpack.c.b16 %v3393, %v3389
    %v3658 = vpack.c.b16 %v3394, %v3390
    %v3659 = vpack.c.b16 %v3399, %v3395
    %v3660 = vpack.c.b16 %v3400, %v3396
    %v3661 = vpack.c.b16 %v3401, %v3397
    %v3662 = vpack.c.b16 %v3402, %v3398
    %v3663 = vpack.c.b16 %v3407, %v3403
    %v3664 = vpack.c.b16 %v3408, %v3404
    %v3665 = vpack.c.b16 %v3409, %v3405
    %v3666 = vpack.c.b16 %v3410, %v3406
    %v3667 = vpack.c.b16 %v3415, %v3411
    %v3668 = vpack.c.b16 %v3416, %v3412
    %v3669 = vpack.c.b16 %v3417, %v3413
    %v3670 = vpack.c.b16 %v3418, %v3414
    %v3671 = vpack.c.b16 %v3423, %v3419
    %v3672 = vpack.c.b16 %v3424, %v3420
    %v3673 = vpack.c.b16 %v3425, %v3421
    %v3674 = vpack.c.b16 %v3426, %v3422
    %v3675 = vpack.c.b16 %v3431, %v3427
    %v3676 = vpack.c.b16 %v3432, %v3428
    %v3677 = vpack.c.b16 %v3433, %v3429
    %v3678 = vpack.c.b16 %v3434, %v3430
    %v3679 = vpack.c.b16 %v3439, %v3435
    %v3680 = vpack.c.b16 %v3440, %v3436
    %v3681 = vpack.c.b16 %v3441, %v3437
    %v3682 = vpack.c.b16 %v3442, %v3438
    %v3683 = vpack.c.b16 %v3447, %v3443
    %v3684 = vpack.c.b16 %v3448, %v3444
    %v3685 = vpack.c.b16 %v3449, %v3445
    %v3686 = vpack.c.b16 %v3450, %v3446
    %v3687 = vpack.c.b16 %v3455, %v3451
    %v3688 = vpack.c.b16 %v3456, %v3452
    %v3689 = vpack.c.b16 %v3457, %v3453
    %v3690 = vpack.c.b16 %v3458, %v3454
    %v3691 = vpack.c.b16 %v3463, %v3459
    %v3692 = vpack.c.b16 %v3464, %v3460
    %v3693 = vpack.c.b16 %v3465, %v3461
    %v3694 = vpack.c.b16 %v3466, %v3462
    %v3695 = vpack.c.b16 %v3471, %v3467
    %v3696 = vpack.c.b16 %v3472, %v3468
    %v3697 = vpack.c.b16 %v3473, %v3469
    %v3698 = vpack.c.b16 %v3474, %v3470
    %v3699 = vpack.c.b16 %v3479, %v3475
    %v3700 = vpack.c.b16 %v3480, %v3476
    %v3701 = vpack.c.b16 %v3481, %v3477
    %v3702 = vpack.c.b16 %v3482, %v3478
    %v3703 = vpack.c.b16 %v3487, %v3483
    %v3704 = vpack.c.b16 %v3488, %v3484
    %v3705 = vpack.c.b16 %v3489, %v3485
    %v3706 = vpack.c.b16 %v3490, %v3486
    %v3707 = vpack.c.b16 %v3495, %v3491
    %v3708 = vpack.c.b16 %v3496, %v3492
    %v3709 = vpack.c.b16 %v3497, %v3493
    %v3710 = vpack.c.b16 %v3498, %v3494
    %v3711 = vpack.c.b16 %v3503, %v3499
    %v3712 = vpack.c.b16 %v3504, %v3500
    %v3713 = vpack.c.b16 %v3505, %v3501
    %v3714 = vpack.c.b16 %v3506, %v3502
    %v3715 = vpack.c.b16 %v3511, %v3507
    %v3716 = vpack.c.b16 %v3512, %v3508
    %v3717 = vpack.c.b16 %v3513, %v3509
    %v3718 = vpack.c.b16 %v3514, %v3510
    %v3719 = vpack.c.b16 %v3519, %v3515
    %v3720 = vpack.c.b16 %v3520, %v3516
    %v3721 = vpack.c.b16 %v3521, %v3517
    %v3722 = vpack.c.b16 %v3522, %v3518
    %v3723 = vpack.c.b16 %v3527, %v3523
    %v3724 = vpack.c.b16 %v3528, %v3524
    %v3725 = vpack.c.b16 %v3529, %v3525
    %v3726 = vpack.c.b16 %v3530, %v3526
    %v3727 = vpack.c.b16 %v3535, %v3531
    %v3728 = vpack.c.b16 %v3536, %v3532
    %v3729 = vpack.c.b16 %v3537, %v3533
    %v3730 = vpack.c.b16 %v3538, %v3534
    %v3731 = vpack.c.b16 %v3543, %v3539
    %v3732 = vpack.c.b16 %v3544, %v3540
    %v3733 = vpack.c.b16 %v3545, %v3541
    %v3734 = vpack.c.b16 %v3546, %v3542
    %v3735 = vpack.c.b16 %v3551, %v3547
    %v3736 = vpack.c.b16 %v3552, %v3548
    %v3737 = vpack.c.b16 %v3553, %v3549
    %v3738 = vpack.c.b16 %v3554, %v3550
    %v3739 = vpack.c.b16 %v3559, %v3555
    %v3740 = vpack.c.b16 %v3560, %v3556
    %v3741 = vpack.c.b16 %v3561, %v3557
    %v3742 = vpack.c.b16 %v3562, %v3558
    %v3743 = vpack.c.b16 %v3567, %v3563
    %v3744 = vpack.c.b16 %v3568, %v3564
    %v3745 = vpack.c.b16 %v3569, %v3565
    %v3746 = vpack.c.b16 %v3570, %v3566
    %v3747 = vpack.c.b16 %v3575, %v3571
    %v3748 = vpack.c.b16 %v3576, %v3572
    %v3749 = vpack.c.b16 %v3577, %v3573
    %v3750 = vpack.c.b16 %v3578, %v3574
    %v3751 = vpack.c.b16 %v3583, %v3579
    %v3752 = vpack.c.b16 %v3584, %v3580
    %v3753 = vpack.c.b16 %v3585, %v3581
    %v3754 = vpack.c.b16 %v3586, %v3582
    %v3755 = vpack.c.b16 %v3591, %v3587
    %v3756 = vpack.c.b16 %v3592, %v3588
    %v3757 = vpack.c.b16 %v3593, %v3589
    %v3758 = vpack.c.b16 %v3594, %v3590
    %v3759 = vpack.c.b16 %v3599, %v3595
    %v3760 = vpack.c.b16 %v3600, %v3596
    %v3761 = vpack.c.b16 %v3601, %v3597
    %v3762 = vpack.c.b16 %v3602, %v3598
    %v3763 = vpack.c.b16 %v3607, %v3603
    %v3764 = vpack.c.b16 %v3608, %v3604
    %v3765 = vpack.c.b16 %v3609, %v3605
    %v3766 = vpack.c.b16 %v3610, %v3606
    %v3767 = vpack.c.b16 %v3615, %v3611
    %v3768 = vpack.c.b16 %v3616, %v3612
    %v3769 = vpack.c.b16 %v3617, %v3613
    %v3770 = vpack.c.b16 %v3618, %v3614
    %v3771 = vpack.c.b16 %v3623, %v3619
    %v3772 = vpack.c.b16 %v3624, %v3620
    %v3773 = vpack.c.b16 %v3625, %v3621
    %v3774 = vpack.c.b16 %v3626, %v3622
    %v3775 = vpack.c.b16 %v3631, %v3627
    %v3776 = vpack.c.b16 %v3632, %v3628
    %v3777 = vpack.c.b16 %v3633, %v3629
    %v3778 = vpack.c.b16 %v3634, %v3630
    %v3924 = vsel %vm153, %v3180, 0
    %v3927 = vsel %vm153, %v3190, 0
    %v3930 = vsel %vm153, %v3189, 0
    %3932 = vmatprep.subr.bf16.mxu0 %v3636
    %3933 = vmatpush1.bf16.msra.mxu0 %v3635
    %3934 = vmatprep.subr.bf16.mxu0 %v3640
    %3935 = vmatpush1.bf16.msra.mxu0 %v3639
    %3936 = vmatprep.subr.bf16.mxu0 %v3644
    %3937 = vmatpush1.bf16.msra.mxu0 %v3643
    %3938 = vmatprep.subr.bf16.mxu0 %v3648
    %3939 = vmatpush1.bf16.msra.mxu0 %v3647
    %3940 = vmatprep.subr.bf16.mxu0 %v3652
    %3941 = vmatpush1.bf16.msra.mxu0 %v3651
    %3942 = vmatprep.subr.bf16.mxu0 %v3656
    %3943 = vmatpush1.bf16.msra.mxu0 %v3655
    %3944 = vmatprep.subr.bf16.mxu0 %v3660
    %3945 = vmatpush1.bf16.msra.mxu0 %v3659
    %3946 = vmatprep.subr.bf16.mxu0 %v3664
    %3947 = vmatpush1.bf16.msra.mxu0 %v3663
    %3948 = vmatprep.subr.bf16.mxu0 %v3668
    %3949 = vmatpush1.bf16.msra.mxu0 %v3667
    %3950 = vmatprep.subr.bf16.mxu0 %v3672
    %3951 = vmatpush1.bf16.msra.mxu0 %v3671
    %3952 = vmatprep.subr.bf16.mxu0 %v3676
    %3953 = vmatpush1.bf16.msra.mxu0 %v3675
    %3954 = vmatprep.subr.bf16.mxu0 %v3680
    %3955 = vmatpush1.bf16.msra.mxu0 %v3679
    %3956 = vmatprep.subr.bf16.mxu0 %v3684
    %3957 = vmatpush1.bf16.msra.mxu0 %v3683
    %3958 = vmatprep.subr.bf16.mxu0 %v3688
    %3959 = vmatpush1.bf16.msra.mxu0 %v3687
    %3960 = vmatprep.subr.bf16.mxu0 %v3692
    %3961 = vmatpush1.bf16.msra.mxu0 %v3691
    %3962 = vmatprep.subr.bf16.mxu0 %v3696
    %3963 = vmatpush1.bf16.msra.mxu0 %v3695
    %3964 = vmatprep.mubr.bf16.mxu0 %v3171
    %3965 = vmatmul.mubr.bf16.gmra.mrb[0].mxu0 %v3168
    %v3966 = vpop.f32.mrb[0].mxu0
    %v3967 = vadd.f32 0.0, %v3966
    %v3968 = vpop.f32.mrb[0].mxu0
    %v3969 = vadd.f32 0.0, %v3968
    %v3970 = vpop.f32.mrb[0].mxu0
    %v3971 = vadd.f32 0.0, %v3970
    %v3972 = vpop.f32.mrb[0].mxu0
    %v3973 = vadd.f32 0.0, %v3972
    %3974 = vmatprep.mubr.bf16.mxu0 %v3184
    %3975 = vmatmul.mubr.bf16.gmra.mrb[0].mxu0 %v3182
    %v3976 = vpop.f32.mrb[0].mxu0
    %v3977 = vadd.f32 0.0, %v3976
    %v3978 = vpop.f32.mrb[0].mxu0
    %v3979 = vadd.f32 0.0, %v3978
    %v3980 = vpop.f32.mrb[0].mxu0
    %v3981 = vadd.f32 0.0, %v3980
    %v3982 = vpop.f32.mrb[0].mxu0
    %v3983 = vadd.f32 0.0, %v3982
    %3984 = vmatprep.mubr.bf16.mxu0 %v3183
    %3985 = vmatmul.mubr.bf16.gmra.mrb[0].mxu0 %v3181
    %v3986 = vpop.f32.mrb[0].mxu0
    %v3987 = vadd.f32 0.0, %v3986
    %v3988 = vpop.f32.mrb[0].mxu0
    %v3989 = vadd.f32 0.0, %v3988
    %v3990 = vpop.f32.mrb[0].mxu0
    %v3991 = vpop.f32.mrb[0].mxu0
    %3992 = vdwg.mxu0
    %3993 = vmatprep.subr.bf16.mxu0 %v3700
    %3994 = vmatpush1.bf16.msra.mxu0 %v3699
    %3995 = vmatprep.subr.bf16.mxu0 %v3704
    %3996 = vmatpush1.bf16.msra.mxu0 %v3703
    %3997 = vmatprep.subr.bf16.mxu0 %v3708
    %3998 = vmatpush1.bf16.msra.mxu0 %v3707
    %3999 = vmatprep.subr.bf16.mxu0 %v3712
    %4000 = vmatpush1.bf16.msra.mxu0 %v3711
    %4001 = vmatprep.subr.bf16.mxu0 %v3716
    %4002 = vmatpush1.bf16.msra.mxu0 %v3715
    %4003 = vmatprep.subr.bf16.mxu0 %v3720
    %4004 = vmatpush1.bf16.msra.mxu0 %v3719
    %4005 = vmatprep.subr.bf16.mxu0 %v3724
    %4006 = vmatpush1.bf16.msra.mxu0 %v3723
    %4007 = vmatprep.subr.bf16.mxu0 %v3728
    %4008 = vmatpush1.bf16.msra.mxu0 %v3727
    %4009 = vmatprep.subr.bf16.mxu0 %v3732
    %4010 = vmatpush1.bf16.msra.mxu0 %v3731
    %4011 = vmatprep.subr.bf16.mxu0 %v3736
    %4012 = vmatpush1.bf16.msra.mxu0 %v3735
    %4013 = vmatprep.subr.bf16.mxu0 %v3740
    %4014 = vmatpush1.bf16.msra.mxu0 %v3739
    %4015 = vmatprep.subr.bf16.mxu0 %v3744
    %4016 = vmatpush1.bf16.msra.mxu0 %v3743
    %4017 = vmatprep.subr.bf16.mxu0 %v3748
    %4018 = vmatpush1.bf16.msra.mxu0 %v3747
    %4019 = vmatprep.subr.bf16.mxu0 %v3752
    %4020 = vmatpush1.bf16.msra.mxu0 %v3751
    %4021 = vmatprep.subr.bf16.mxu0 %v3756
    %4022 = vmatpush1.bf16.msra.mxu0 %v3755
    %4023 = vmatprep.subr.bf16.mxu0 %v3760
    %4024 = vmatpush1.bf16.msra.mxu0 %v3759
    %4025 = vmatprep.mubr.bf16.mxu0 %v3177
    %4026 = vmatmul.mubr.bf16.gmra.mrb[0].mxu0 %v3174
    %v4027 = vpop.f32.mrb[0].mxu0
    %v4028 = vadd.f32 %v3967, %v4027
    %v4029 = vpop.f32.mrb[0].mxu0
    %v4030 = vadd.f32 %v3969, %v4029
    %v4031 = vpop.f32.mrb[0].mxu0
    %v4032 = vadd.f32 %v3971, %v4031
    %v4033 = vpop.f32.mrb[0].mxu0
    %v4034 = vadd.f32 %v3973, %v4033
    %4035 = vmatprep.mubr.bf16.mxu0 %v3188
    %4036 = vmatmul.mubr.bf16.gmra.mrb[0].mxu0 %v3186
    %v4037 = vpop.f32.mrb[0].mxu0
    %v4038 = vadd.f32 %v3977, %v4037
    %v4039 = vpop.f32.mrb[0].mxu0
    %v4040 = vadd.f32 %v3979, %v4039
    %v4041 = vpop.f32.mrb[0].mxu0
    %v4042 = vadd.f32 %v3981, %v4041
    %v4043 = vpop.f32.mrb[0].mxu0
    %v4044 = vadd.f32 %v3983, %v4043
    %4045 = vmatprep.mubr.bf16.mxu0 %v3187
    %4046 = vmatmul.mubr.bf16.gmra.mrb[0].mxu0 %v3185
    %v4047 = vpop.f32.mrb[0].mxu0
    %v4048 = vadd.f32 %v3987, %v4047
    %v4049 = vpop.f32.mrb[0].mxu0
    %v4050 = vadd.f32 %v3989, %v4049
    %v4051 = vpop.f32.mrb[0].mxu0
    %v4052 = vpop.f32.mrb[0].mxu0
    %4053 = vdwg.mxu0
    %4054 = vmatprep.subr.bf16.mxu0 %v3764
    %4055 = vmatpush1.bf16.msra.mxu0 %v3763
    %4056 = vmatprep.subr.bf16.mxu0 %v3768
    %4057 = vmatpush1.bf16.msra.mxu0 %v3767
    %4058 = vmatprep.subr.bf16.mxu0 %v3772
    %4059 = vmatpush1.bf16.msra.mxu0 %v3771
    %4060 = vmatprep.subr.bf16.mxu0 %v3776
    %4061 = vmatpush1.bf16.msra.mxu0 %v3775
    %4062 = vmatprep.subr.bf16.mxu0 0
    %4063 = vmatpush1.bf16.msra.mxu0 0
    %4064 = vmatprep.subr.bf16.mxu0 0
    %4065 = vmatpush1.bf16.msra.mxu0 0
    %4066 = vmatprep.subr.bf16.mxu0 0
    %4067 = vmatpush1.bf16.msra.mxu0 0
    %4068 = vmatprep.subr.bf16.mxu0 0
    %4069 = vmatpush1.bf16.msra.mxu0 0
    %4070 = vmatprep.subr.bf16.mxu0 0
    %4071 = vmatpush1.bf16.msra.mxu0 0
    %4072 = vmatprep.subr.bf16.mxu0 0
    %4073 = vmatpush1.bf16.msra.mxu0 0
    %4074 = vmatprep.subr.bf16.mxu0 0
    %4075 = vmatpush1.bf16.msra.mxu0 0
    %4076 = vmatprep.subr.bf16.mxu0 0
    %4077 = vmatpush1.bf16.msra.mxu0 0
    %4078 = vmatprep.subr.bf16.mxu0 0
    %4079 = vmatpush1.bf16.msra.mxu0 0
    %4080 = vmatprep.subr.bf16.mxu0 0
    %4081 = vmatpush1.bf16.msra.mxu0 0
    %4082 = vmatprep.subr.bf16.mxu0 0
    %4083 = vmatpush1.bf16.msra.mxu0 0
    %4084 = vmatprep.subr.bf16.mxu0 0
    %4085 = vmatpush1.bf16.msra.mxu0 0
    %4086 = vmatprep.mubr.bf16.mxu0 0
    %4087 = vmatmul.mubr.bf16.gmra.mrb[0].mxu0 %v3924
    %v4088 = vpop.f32.mrb[0].mxu0
    %v4089 = vadd.f32 %v4028, %v4088
    %v4090 = vpop.f32.mrb[0].mxu0
    %v4091 = vadd.f32 %v4030, %v4090
    %v4092 = vpop.f32.mrb[0].mxu0
    %v4093 = vadd.f32 %v4032, %v4092
    %v4094 = vpop.f32.mrb[0].mxu0
    %v4095 = vadd.f32 %v4034, %v4094
    %4096 = vmatprep.mubr.bf16.mxu0 0
    %4097 = vmatmul.mubr.bf16.gmra.mrb[0].mxu0 %v3927
    %v4098 = vpop.f32.mrb[0].mxu0
    %v4099 = vadd.f32 %v4038, %v4098
    %v4100 = vpop.f32.mrb[0].mxu0
    %v4101 = vadd.f32 %v4040, %v4100
    %v4102 = vpop.f32.mrb[0].mxu0
    %v4103 = vadd.f32 %v4042, %v4102
    %v4104 = vpop.f32.mrb[0].mxu0
    %v4105 = vadd.f32 %v4044, %v4104
    %4106 = vmatprep.mubr.bf16.mxu0 0
    %4107 = vmatmul.mubr.bf16.gmra.mrb[0].mxu0 %v3930
    %v4108 = vpop.f32.mrb[0].mxu0
    %v4109 = vadd.f32 %v4048, %v4108
    %v4110 = vpop.f32.mrb[0].mxu0
    %v4111 = vadd.f32 %v4050, %v4110
    %v4112 = vpop.f32.mrb[0].mxu0
    %v4113 = vpop.f32.mrb[0].mxu0
    %4114 = vdwg.mxu0
    %4115 = vmatprep.subr.bf16.mxu0 %v3638
    %4116 = vmatpush1.bf16.msra.mxu0 %v3637
    %4117 = vmatprep.subr.bf16.mxu0 %v3642
    %4118 = vmatpush1.bf16.msra.mxu0 %v3641
    %4119 = vmatprep.subr.bf16.mxu0 %v3646
    %4120 = vmatpush1.bf16.msra.mxu0 %v3645
    %4121 = vmatprep.subr.bf16.mxu0 %v3650
    %4122 = vmatpush1.bf16.msra.mxu0 %v3649
    %4123 = vmatprep.subr.bf16.mxu0 %v3654
    %4124 = vmatpush1.bf16.msra.mxu0 %v3653
    %4125 = vmatprep.subr.bf16.mxu0 %v3658
    %4126 = vmatpush1.bf16.msra.mxu0 %v3657
    %4127 = vmatprep.subr.bf16.mxu0 %v3662
    %4128 = vmatpush1.bf16.msra.mxu0 %v3661
    %4129 = vmatprep.subr.bf16.mxu0 %v3666
    %4130 = vmatpush1.bf16.msra.mxu0 %v3665
    %4131 = vmatprep.subr.bf16.mxu0 %v3670
    %4132 = vmatpush1.bf16.msra.mxu0 %v3669
    %4133 = vmatprep.subr.bf16.mxu0 %v3674
    %4134 = vmatpush1.bf16.msra.mxu0 %v3673
    %4135 = vmatprep.subr.bf16.mxu0 %v3678
    %4136 = vmatpush1.bf16.msra.mxu0 %v3677
    %4137 = vmatprep.subr.bf16.mxu0 %v3682
    %4138 = vmatpush1.bf16.msra.mxu0 %v3681
    %4139 = vmatprep.subr.bf16.mxu0 %v3686
    %4140 = vmatpush1.bf16.msra.mxu0 %v3685
    %4141 = vmatprep.subr.bf16.mxu0 %v3690
    %4142 = vmatpush1.bf16.msra.mxu0 %v3689
    %4143 = vmatprep.subr.bf16.mxu0 %v3694
    %4144 = vmatpush1.bf16.msra.mxu0 %v3693
    %4145 = vmatprep.subr.bf16.mxu0 %v3698
    %4146 = vmatpush1.bf16.msra.mxu0 %v3697
    %4147 = vmatprep.mubr.bf16.mxu0 %v3171
    %4148 = vmatmul.mubr.bf16.gmra.mrb[0].mxu0 %v3168
    %v4149 = vpop.f32.mrb[0].mxu0
    %v4150 = vadd.f32 0.0, %v4149
    %v4151 = vpop.f32.mrb[0].mxu0
    %v4152 = vadd.f32 0.0, %v4151
    %v4153 = vpop.f32.mrb[0].mxu0
    %v4154 = vadd.f32 0.0, %v4153
    %v4155 = vpop.f32.mrb[0].mxu0
    %v4156 = vadd.f32 0.0, %v4155
    %4157 = vmatprep.mubr.bf16.mxu0 %v3184
    %4158 = vmatmul.mubr.bf16.gmra.mrb[0].mxu0 %v3182
    %v4159 = vpop.f32.mrb[0].mxu0
    %v4160 = vadd.f32 0.0, %v4159
    %v4161 = vpop.f32.mrb[0].mxu0
    %v4162 = vadd.f32 0.0, %v4161
    %v4163 = vpop.f32.mrb[0].mxu0
    %v4164 = vadd.f32 0.0, %v4163
    %v4165 = vpop.f32.mrb[0].mxu0
    %v4166 = vadd.f32 0.0, %v4165
    %4167 = vmatprep.mubr.bf16.mxu0 %v3183
    %4168 = vmatmul.mubr.bf16.gmra.mrb[0].mxu0 %v3181
    %v4169 = vpop.f32.mrb[0].mxu0
    %v4170 = vadd.f32 0.0, %v4169
    %v4171 = vpop.f32.mrb[0].mxu0
    %v4172 = vadd.f32 0.0, %v4171
    %v4173 = vpop.f32.mrb[0].mxu0
    %v4174 = vpop.f32.mrb[0].mxu0
    %4175 = vdwg.mxu0
    %4176 = vmatprep.subr.bf16.mxu0 %v3702
    %4177 = vmatpush1.bf16.msra.mxu0 %v3701
    %4178 = vmatprep.subr.bf16.mxu0 %v3706
    %4179 = vmatpush1.bf16.msra.mxu0 %v3705
    %4180 = vmatprep.subr.bf16.mxu0 %v3710
    %4181 = vmatpush1.bf16.msra.mxu0 %v3709
    %4182 = vmatprep.subr.bf16.mxu0 %v3714
    %4183 = vmatpush1.bf16.msra.mxu0 %v3713
    %4184 = vmatprep.subr.bf16.mxu0 %v3718
    %4185 = vmatpush1.bf16.msra.mxu0 %v3717
    %4186 = vmatprep.subr.bf16.mxu0 %v3722
    %4187 = vmatpush1.bf16.msra.mxu0 %v3721
    %4188 = vmatprep.subr.bf16.mxu0 %v3726
    %4189 = vmatpush1.bf16.msra.mxu0 %v3725
    %4190 = vmatprep.subr.bf16.mxu0 %v3730
    %4191 = vmatpush1.bf16.msra.mxu0 %v3729
    %4192 = vmatprep.subr.bf16.mxu0 %v3734
    %4193 = vmatpush1.bf16.msra.mxu0 %v3733
    %4194 = vmatprep.subr.bf16.mxu0 %v3738
    %4195 = vmatpush1.bf16.msra.mxu0 %v3737
    %4196 = vmatprep.subr.bf16.mxu0 %v3742
    %4197 = vmatpush1.bf16.msra.mxu0 %v3741
    %4198 = vmatprep.subr.bf16.mxu0 %v3746
    %4199 = vmatpush1.bf16.msra.mxu0 %v3745
    %4200 = vmatprep.subr.bf16.mxu0 %v3750
    %4201 = vmatpush1.bf16.msra.mxu0 %v3749
    %4202 = vmatprep.subr.bf16.mxu0 %v3754
    %4203 = vmatpush1.bf16.msra.mxu0 %v3753
    %4204 = vmatprep.subr.bf16.mxu0 %v3758
    %4205 = vmatpush1.bf16.msra.mxu0 %v3757
    %4206 = vmatprep.subr.bf16.mxu0 %v3762
    %4207 = vmatpush1.bf16.msra.mxu0 %v3761
    %4208 = vmatprep.mubr.bf16.mxu0 %v3177
    %4209 = vmatmul.mubr.bf16.gmra.mrb[0].mxu0 %v3174
    %v4210 = vpop.f32.mrb[0].mxu0
    %v4211 = vadd.f32 %v4150, %v4210
    %v4212 = vpop.f32.mrb[0].mxu0
    %v4213 = vadd.f32 %v4152, %v4212
    %v4214 = vpop.f32.mrb[0].mxu0
    %v4215 = vadd.f32 %v4154, %v4214
    %v4216 = vpop.f32.mrb[0].mxu0
    %v4217 = vadd.f32 %v4156, %v4216
    %4218 = vmatprep.mubr.bf16.mxu0 %v3188
    %4219 = vmatmul.mubr.bf16.gmra.mrb[0].mxu0 %v3186
    %v4220 = vpop.f32.mrb[0].mxu0
    %v4221 = vadd.f32 %v4160, %v4220
    %v4222 = vpop.f32.mrb[0].mxu0
    %v4223 = vadd.f32 %v4162, %v4222
    %v4224 = vpop.f32.mrb[0].mxu0
    %v4225 = vadd.f32 %v4164, %v4224
    %v4226 = vpop.f32.mrb[0].mxu0
    %v4227 = vadd.f32 %v4166, %v4226
    %4228 = vmatprep.mubr.bf16.mxu0 %v3187
    %4229 = vmatmul.mubr.bf16.gmra.mrb[0].mxu0 %v3185
    %v4230 = vpop.f32.mrb[0].mxu0
    %v4231 = vadd.f32 %v4170, %v4230
    %v4232 = vpop.f32.mrb[0].mxu0
    %v4233 = vadd.f32 %v4172, %v4232
    %v4234 = vpop.f32.mrb[0].mxu0
    %v4235 = vpop.f32.mrb[0].mxu0
    %4236 = vdwg.mxu0
    %4237 = vmatprep.subr.bf16.mxu0 %v3766
    %4238 = vmatpush1.bf16.msra.mxu0 %v3765
    %4239 = vmatprep.subr.bf16.mxu0 %v3770
    %4240 = vmatpush1.bf16.msra.mxu0 %v3769
    %4241 = vmatprep.subr.bf16.mxu0 %v3774
    %4242 = vmatpush1.bf16.msra.mxu0 %v3773
    %4243 = vmatprep.subr.bf16.mxu0 %v3778
    %4244 = vmatpush1.bf16.msra.mxu0 %v3777
    %4245 = vmatprep.subr.bf16.mxu0 0
    %4246 = vmatpush1.bf16.msra.mxu0 0
    %4247 = vmatprep.subr.bf16.mxu0 0
    %4248 = vmatpush1.bf16.msra.mxu0 0
    %4249 = vmatprep.subr.bf16.mxu0 0
    %4250 = vmatpush1.bf16.msra.mxu0 0
    %4251 = vmatprep.subr.bf16.mxu0 0
    %4252 = vmatpush1.bf16.msra.mxu0 0
    %4253 = vmatprep.subr.bf16.mxu0 0
    %4254 = vmatpush1.bf16.msra.mxu0 0
    %4255 = vmatprep.subr.bf16.mxu0 0
    %4256 = vmatpush1.bf16.msra.mxu0 0
    %4257 = vmatprep.subr.bf16.mxu0 0
    %4258 = vmatpush1.bf16.msra.mxu0 0
    %4259 = vmatprep.subr.bf16.mxu0 0
    %4260 = vmatpush1.bf16.msra.mxu0 0
    %4261 = vmatprep.subr.bf16.mxu0 0
    %4262 = vmatpush1.bf16.msra.mxu0 0
    %4263 = vmatprep.subr.bf16.mxu0 0
    %4264 = vmatpush1.bf16.msra.mxu0 0
    %4265 = vmatprep.subr.bf16.mxu0 0
    %4266 = vmatpush1.bf16.msra.mxu0 0
    %4267 = vmatprep.subr.bf16.mxu0 0
    %4268 = vmatpush1.bf16.msra.mxu0 0
    %4269 = vmatprep.mubr.bf16.mxu0 0
    %4270 = vmatmul.mubr.bf16.gmra.mrb[0].mxu0 %v3924
    %v4271 = vpop.f32.mrb[0].mxu0
    %v4272 = vadd.f32 %v4211, %v4271
    %v4273 = vpop.f32.mrb[0].mxu0
    %v4274 = vadd.f32 %v4213, %v4273
    %v4275 = vpop.f32.mrb[0].mxu0
    %v4276 = vadd.f32 %v4215, %v4275
    %v4277 = vpop.f32.mrb[0].mxu0
    %v4278 = vadd.f32 %v4217, %v4277
    %4279 = vmatprep.mubr.bf16.mxu0 0
    %4280 = vmatmul.mubr.bf16.gmra.mrb[0].mxu0 %v3927
    %v4281 = vpop.f32.mrb[0].mxu0
    %v4282 = vadd.f32 %v4221, %v4281
    %v4283 = vpop.f32.mrb[0].mxu0
    %v4284 = vadd.f32 %v4223, %v4283
    %v4285 = vpop.f32.mrb[0].mxu0
    %v4286 = vadd.f32 %v4225, %v4285
    %v4287 = vpop.f32.mrb[0].mxu0
    %v4288 = vadd.f32 %v4227, %v4287
    %4289 = vmatprep.mubr.bf16.mxu0 0
    %4290 = vmatmul.mubr.bf16.gmra.mrb[0].mxu0 %v3930
    %v4291 = vpop.f32.mrb[0].mxu0
    %v4292 = vadd.f32 %v4231, %v4291
    %v4293 = vpop.f32.mrb[0].mxu0
    %v4294 = vadd.f32 %v4233, %v4293
    %v4295 = vpop.f32.mrb[0].mxu0
    %v4296 = vpop.f32.mrb[0].mxu0
    %4297 = vdwg.mxu0
    %v4298 = vadd.f32 %v2796, %v4089
    %v4299 = vadd.f32 %v2798, %v4091
    %v4300 = vadd.f32 %v2979, %v4272
    %v4301 = vadd.f32 %v2981, %v4274
    %v4302 = vadd.f32 %v2800, %v4093
    %v4303 = vadd.f32 %v2802, %v4095
    %v4304 = vadd.f32 %v2983, %v4276
    %v4305 = vadd.f32 %v2985, %v4278
    %v4306 = vadd.f32 %v2806, %v4099
    %v4307 = vadd.f32 %v2808, %v4101
    %v4308 = vadd.f32 %v2989, %v4282
    %v4309 = vadd.f32 %v2991, %v4284
    %v4310 = vadd.f32 %v2810, %v4103
    %v4311 = vadd.f32 %v2812, %v4105
    %v4312 = vadd.f32 %v2993, %v4286
    %v4313 = vadd.f32 %v2995, %v4288
    %v4314 = vadd.f32 %v2816, %v4109
    %v4315 = vadd.f32 %v2818, %v4111
    %v4316 = vadd.f32 %v2999, %v4292
    %v4317 = vadd.f32 %v3001, %v4294
    %v4318 = vld [vmem:[#allocation7] sm:$0x1]
    %v4319 = vld [vmem:[#allocation9] sm:$0x1]
    %v4320 = vmul.f32 %v4298, %v4298
    %v4321 = vmul.f32 %v4299, %v4299
    %v4322 = vmul.f32 %v4300, %v4300
    %v4323 = vmul.f32 %v4301, %v4301
    %v4324 = vmul.f32 %v4302, %v4302
    %v4325 = vmul.f32 %v4303, %v4303
    %v4326 = vmul.f32 %v4304, %v4304
    %v4327 = vmul.f32 %v4305, %v4305
    %4328 = vmatprep.subr.mxu0 0.0
    %4329 = vmatpush1.msra.mxu0 %v175
    %4330 = vmatprep.subr.mxu0 0.0
    %4331 = vmatpush1.msra.mxu0 %v176
    %4332 = vmatprep.subr.mxu0 0.0
    %4333 = vmatpush1.msra.mxu0 %v177
    %4334 = vmatprep.subr.mxu0 0.0
    %4335 = vmatpush1.msra.mxu0 %v178
    %4336 = vmatprep.subr.mxu0 0.0
    %4337 = vmatpush1.msra.mxu0 %v179
    %4338 = vmatprep.subr.mxu0 0.0
    %4339 = vmatpush1.msra.mxu0 %v180
    %4340 = vmatprep.subr.mxu0 0.0
    %4341 = vmatpush1.msra.mxu0 %v181
    %4342 = vmatprep.subr.mxu0 0.0
    %4343 = vmatpush1.msra.mxu0 %v182
    %4344 = vmatprep.subr.mxu0 0.0
    %4345 = vmatpush1.msra.mxu0 %v183
    %4346 = vmatprep.subr.mxu0 0.0
    %4347 = vmatpush1.msra.mxu0 %v184
    %4348 = vmatprep.subr.mxu0 0.0
    %4349 = vmatpush1.msra.mxu0 %v185
    %4350 = vmatprep.subr.mxu0 0.0
    %4351 = vmatpush1.msra.mxu0 %v186
    %4352 = vmatprep.subr.mxu0 0.0
    %4353 = vmatpush1.msra.mxu0 %v187
    %4354 = vmatprep.subr.mxu0 0.0
    %4355 = vmatpush1.msra.mxu0 %v188
    %4356 = vmatprep.subr.mxu0 0.0
    %4357 = vmatpush1.msra.mxu0 %v189
    %4358 = vmatprep.subr.mxu0 0.0
    %4359 = vmatpush1.msra.mxu0 %v190
    %4360 = vmatprep.subr.mxu0 0.0
    %4361 = vmatpush1.msra.mxu0 %v191
    %4362 = vmatprep.subr.mxu0 0.0
    %4363 = vmatpush1.msra.mxu0 %v192
    %4364 = vmatprep.subr.mxu0 0.0
    %4365 = vmatpush1.msra.mxu0 %v193
    %4366 = vmatprep.subr.mxu0 0.0
    %4367 = vmatpush1.msra.mxu0 %v194
    %4368 = vmatprep.subr.mxu0 0.0
    %4369 = vmatpush1.msra.mxu0 %v195
    %4370 = vmatprep.subr.mxu0 0.0
    %4371 = vmatpush1.msra.mxu0 %v196
    %4372 = vmatprep.subr.mxu0 0.0
    %4373 = vmatpush1.msra.mxu0 %v197
    %4374 = vmatprep.subr.mxu0 0.0
    %4375 = vmatpush1.msra.mxu0 %v198
    %4376 = vmatprep.subr.mxu0 0.0
    %4377 = vmatpush1.msra.mxu0 %v199
    %4378 = vmatprep.subr.mxu0 0.0
    %4379 = vmatpush1.msra.mxu0 %v200
    %4380 = vmatprep.subr.mxu0 0.0
    %4381 = vmatpush1.msra.mxu0 %v201
    %4382 = vmatprep.subr.mxu0 0.0
    %4383 = vmatpush1.msra.mxu0 %v202
    %4384 = vmatprep.subr.mxu0 0.0
    %4385 = vmatpush1.msra.mxu0 %v203
    %4386 = vmatprep.subr.mxu0 0.0
    %4387 = vmatpush1.msra.mxu0 %v204
    %4388 = vmatprep.subr.mxu0 0.0
    %4389 = vmatpush1.msra.mxu0 %v205
    %4390 = vmatprep.subr.mxu0 0.0
    %4391 = vmatpush1.msra.mxu0 %v206
    %4392 = vmatprep.mubr.f32.mxu0 %v4299
    %4393 = vmatmul.mubr.f32.gmra.mrb[0].mxu0 %v4298
    %v4394 = vpop.f32.mrb[0].mxu0
    %v4395 = vadd.f32 0.0, %v4394
    %v4396 = vpop.f32.mrb[0].mxu0
    %4397 = vmatprep.mubr.f32.mxu0 %v4303
    %4398 = vmatmul.mubr.f32.gmra.mrb[0].mxu0 %v4302
    %v4399 = vpop.f32.mrb[0].mxu0
    %v4400 = vadd.f32 0.0, %v4399
    %v4401 = vpop.f32.mrb[0].mxu0
    %4402 = vmatprep.mubr.f32.mxu0 %v4321
    %4403 = vmatmul.mubr.f32.gmra.mrb[0].mxu0 %v4320
    %v4404 = vpop.f32.mrb[0].mxu0
    %v4405 = vadd.f32 0.0, %v4404
    %v4406 = vpop.f32.mrb[0].mxu0
    %4407 = vmatprep.mubr.f32.mxu0 %v4325
    %4408 = vmatmul.mubr.f32.gmra.mrb[0].mxu0 %v4324
    %v4409 = vpop.f32.mrb[0].mxu0
    %v4410 = vadd.f32 0.0, %v4409
    %v4411 = vpop.f32.mrb[0].mxu0
    %4412 = vdwg.mxu0
    %4413 = vmatprep.subr.mxu0 0.0
    %4414 = vmatpush1.msra.mxu0 %v207
    %4415 = vmatprep.subr.mxu0 0.0
    %4416 = vmatpush1.msra.mxu0 %v208
    %4417 = vmatprep.subr.mxu0 0.0
    %4418 = vmatpush1.msra.mxu0 %v209
    %4419 = vmatprep.subr.mxu0 0.0
    %4420 = vmatpush1.msra.mxu0 %v210
    %4421 = vmatprep.subr.mxu0 0.0
    %4422 = vmatpush1.msra.mxu0 %v211
    %4423 = vmatprep.subr.mxu0 0.0
    %4424 = vmatpush1.msra.mxu0 %v212
    %4425 = vmatprep.subr.mxu0 0.0
    %4426 = vmatpush1.msra.mxu0 %v213
    %4427 = vmatprep.subr.mxu0 0.0
    %4428 = vmatpush1.msra.mxu0 %v214
    %4429 = vmatprep.subr.mxu0 0.0
    %4430 = vmatpush1.msra.mxu0 %v215
    %4431 = vmatprep.subr.mxu0 0.0
    %4432 = vmatpush1.msra.mxu0 %v216
    %4433 = vmatprep.subr.mxu0 0.0
    %4434 = vmatpush1.msra.mxu0 %v217
    %4435 = vmatprep.subr.mxu0 0.0
    %4436 = vmatpush1.msra.mxu0 %v218
    %4437 = vmatprep.subr.mxu0 0.0
    %4438 = vmatpush1.msra.mxu0 %v219
    %4439 = vmatprep.subr.mxu0 0.0
    %4440 = vmatpush1.msra.mxu0 %v220
    %4441 = vmatprep.subr.mxu0 0.0
    %4442 = vmatpush1.msra.mxu0 %v221
    %4443 = vmatprep.subr.mxu0 0.0
    %4444 = vmatpush1.msra.mxu0 %v222
    %4445 = vmatprep.subr.mxu0 0.0
    %4446 = vmatpush1.msra.mxu0 %v223
    %4447 = vmatprep.subr.mxu0 0.0
    %4448 = vmatpush1.msra.mxu0 %v224
    %4449 = vmatprep.subr.mxu0 0.0
    %4450 = vmatpush1.msra.mxu0 %v225
    %4451 = vmatprep.subr.mxu0 0.0
    %4452 = vmatpush1.msra.mxu0 %v226
    %4453 = vmatprep.subr.mxu0 0.0
    %4454 = vmatpush1.msra.mxu0 %v227
    %4455 = vmatprep.subr.mxu0 0.0
    %4456 = vmatpush1.msra.mxu0 %v228
    %4457 = vmatprep.subr.mxu0 0.0
    %4458 = vmatpush1.msra.mxu0 %v229
    %4459 = vmatprep.subr.mxu0 0.0
    %4460 = vmatpush1.msra.mxu0 %v230
    %4461 = vmatprep.subr.mxu0 0.0
    %4462 = vmatpush1.msra.mxu0 %v231
    %4463 = vmatprep.subr.mxu0 0.0
    %4464 = vmatpush1.msra.mxu0 %v232
    %4465 = vmatprep.subr.mxu0 0.0
    %4466 = vmatpush1.msra.mxu0 %v233
    %4467 = vmatprep.subr.mxu0 0.0
    %4468 = vmatpush1.msra.mxu0 %v234
    %4469 = vmatprep.subr.mxu0 0.0
    %4470 = vmatpush1.msra.mxu0 %v235
    %4471 = vmatprep.subr.mxu0 0.0
    %4472 = vmatpush1.msra.mxu0 %v236
    %4473 = vmatprep.subr.mxu0 0.0
    %4474 = vmatpush1.msra.mxu0 %v237
    %4475 = vmatprep.subr.mxu0 0.0
    %4476 = vmatpush1.msra.mxu0 %v238
    %4477 = vmatprep.mubr.f32.mxu0 %v4301
    %4478 = vmatmul.mubr.f32.gmra.mrb[0].mxu0 %v4300
    %v4479 = vpop.f32.mrb[0].mxu0
    %v4480 = vadd.f32 %v4395, %v4479
    %v4481 = vpop.f32.mrb[0].mxu0
    %4482 = vmatprep.mubr.f32.mxu0 %v4305
    %4483 = vmatmul.mubr.f32.gmra.mrb[0].mxu0 %v4304
    %v4484 = vpop.f32.mrb[0].mxu0
    %v4485 = vadd.f32 %v4400, %v4484
    %v4486 = vpop.f32.mrb[0].mxu0
    %4487 = vmatprep.mubr.f32.mxu0 %v4323
    %4488 = vmatmul.mubr.f32.gmra.mrb[0].mxu0 %v4322
    %v4489 = vpop.f32.mrb[0].mxu0
    %v4490 = vadd.f32 %v4405, %v4489
    %v4491 = vpop.f32.mrb[0].mxu0
    %4492 = vmatprep.mubr.f32.mxu0 %v4327
    %4493 = vmatmul.mubr.f32.gmra.mrb[0].mxu0 %v4326
    %v4494 = vpop.f32.mrb[0].mxu0
    %v4495 = vadd.f32 %v4410, %v4494
    %v4496 = vpop.f32.mrb[0].mxu0
    %4497 = vdwg.mxu0
    %vm4498 = vcmask 261120
    %v4499 = vsel %vm4498, %v4480, 0.0
    %v4500 = vsel %vm4498, %v4485, 0.0
    %v4501 = vadd.f32 %v4499, %v4500
    %v4502 = vrot.slane %v4501, 4
    %v4503 = vadd.f32 %v4501, %v4502
    %v4504 = vrot.slane %v4503, 2
    %v4505 = vadd.f32 %v4503, %v4504
    %v4506 = vrot.slane %v4505, 1
    %v4507 = vadd.f32 %v4505, %v4506
    %v4508 = vsel %vm4498, %v4490, 0.0
    %v4509 = vsel %vm4498, %v4495, 0.0
    %v4510 = vadd.f32 %v4508, %v4509
    %v4511 = vrot.slane %v4510, 4
    %v4512 = vadd.f32 %v4510, %v4511
    %v4513 = vrot.slane %v4512, 2
    %v4514 = vadd.f32 %v4512, %v4513
    %v4515 = vrot.slane %v4514, 1
    %v4516 = vadd.f32 %v4514, %v4515
    %v4517 = vrcp.pop 256.0
    %v4518 = vmul.f32 %v4507, %v4517
    %v4519 = vmul.f32 %v4516, %v4517
    %v4520 = vmul.f32 %v4518, %v4518
    %v4521 = vsub.f32 %v4519, %v4520
    %v4522 = vadd.f32 %v4521, 1e-05
    %v4523 = vrsqrt.pop %v4522
    %v4524 = vmul.f32 %v4523, %v4318
    %v4525 = vmul.f32 %v4518, %v4524
    %v4526 = vsub.f32 %v4319, %v4525
    %v4528 = vlaneseq
    %v4529 = vshrl.u32 %v4528, 7
    %v4530 = vsub.s32 0, %v4529
    %v4531 = vrot.slane %v4526, %v4530
    %v4533 = vsel %vm271, %v4524, %v4531
    %v4535 = vsel %vm4498, %v4533, 0
    %4537 = vmatprep.subr.mxu0 %v240
    %4538 = vmatpush1.msra.mxu0 %v239
    %4539 = vmatprep.subr.mxu0 %v244
    %4540 = vmatpush1.msra.mxu0 %v243
    %4541 = vmatprep.subr.mxu0 %v248
    %4542 = vmatpush1.msra.mxu0 %v247
    %4543 = vmatprep.subr.mxu0 %v252
    %4544 = vmatpush1.msra.mxu0 %v251
    %4545 = vmatprep.subr.mxu0 0.0
    %4546 = vmatpush1.msra.mxu0 0.0
    %4547 = vmatprep.subr.mxu0 0.0
    %4548 = vmatpush1.msra.mxu0 0.0
    %4549 = vmatprep.subr.mxu0 0.0
    %4550 = vmatpush1.msra.mxu0 0.0
    %4551 = vmatprep.subr.mxu0 0.0
    %4552 = vmatpush1.msra.mxu0 0.0
    %4553 = vmatprep.subr.mxu0 0.0
    %4554 = vmatpush1.msra.mxu0 0.0
    %4555 = vmatprep.subr.mxu0 0.0
    %4556 = vmatpush1.msra.mxu0 0.0
    %4557 = vmatprep.subr.mxu0 0.0
    %4558 = vmatpush1.msra.mxu0 0.0
    %4559 = vmatprep.subr.mxu0 0.0
    %4560 = vmatpush1.msra.mxu0 0.0
    %4561 = vmatprep.subr.mxu0 0.0
    %4562 = vmatpush1.msra.mxu0 0.0
    %4563 = vmatprep.subr.mxu0 0.0
    %4564 = vmatpush1.msra.mxu0 0.0
    %4565 = vmatprep.subr.mxu0 0.0
    %4566 = vmatpush1.msra.mxu0 0.0
    %4567 = vmatprep.subr.mxu0 0.0
    %4568 = vmatpush1.msra.mxu0 0.0
    %4569 = vmatprep.subr.mxu0 0.0
    %4570 = vmatpush1.msra.mxu0 0.0
    %4571 = vmatprep.subr.mxu0 0.0
    %4572 = vmatpush1.msra.mxu0 0.0
    %4573 = vmatprep.subr.mxu0 0.0
    %4574 = vmatpush1.msra.mxu0 0.0
    %4575 = vmatprep.subr.mxu0 0.0
    %4576 = vmatpush1.msra.mxu0 0.0
    %4577 = vmatprep.subr.mxu0 0.0
    %4578 = vmatpush1.msra.mxu0 0.0
    %4579 = vmatprep.subr.mxu0 0.0
    %4580 = vmatpush1.msra.mxu0 0.0
    %4581 = vmatprep.subr.mxu0 0.0
    %4582 = vmatpush1.msra.mxu0 0.0
    %4583 = vmatprep.subr.mxu0 0.0
    %4584 = vmatpush1.msra.mxu0 0.0
    %4585 = vmatprep.subr.mxu0 0.0
    %4586 = vmatpush1.msra.mxu0 0.0
    %4587 = vmatprep.subr.mxu0 0.0
    %4588 = vmatpush1.msra.mxu0 0.0
    %4589 = vmatprep.subr.mxu0 0.0
    %4590 = vmatpush1.msra.mxu0 0.0
    %4591 = vmatprep.subr.mxu0 0.0
    %4592 = vmatpush1.msra.mxu0 0.0
    %4593 = vmatprep.subr.mxu0 0.0
    %4594 = vmatpush1.msra.mxu0 0.0
    %4595 = vmatprep.subr.mxu0 0.0
    %4596 = vmatpush1.msra.mxu0 0.0
    %4597 = vmatprep.subr.mxu0 0.0
    %4598 = vmatpush1.msra.mxu0 0.0
    %4599 = vmatprep.subr.mxu0 0.0
    %4600 = vmatpush1.msra.mxu0 0.0
    %4601 = vmatprep.mubr.f32.mxu0 0.0
    %4602 = vmatmul.mubr.f32.gmra.mrb[0].mxu0 %v4535
    %v4603 = vpop.f32.mrb[0].mxu0
    %v4604 = vadd.f32 0.0, %v4603
    %v4605 = vpop.f32.mrb[0].mxu0
    %v4606 = vadd.f32 0.0, %v4605
    %4607 = vdwg.mxu0
    %4608 = vmatprep.subr.mxu0 %v242
    %4609 = vmatpush1.msra.mxu0 %v241
    %4610 = vmatprep.subr.mxu0 %v246
    %4611 = vmatpush1.msra.mxu0 %v245
    %4612 = vmatprep.subr.mxu0 %v250
    %4613 = vmatpush1.msra.mxu0 %v249
    %4614 = vmatprep.subr.mxu0 %v254
    %4615 = vmatpush1.msra.mxu0 %v253
    %4616 = vmatprep.subr.mxu0 0.0
    %4617 = vmatpush1.msra.mxu0 0.0
    %4618 = vmatprep.subr.mxu0 0.0
    %4619 = vmatpush1.msra.mxu0 0.0
    %4620 = vmatprep.subr.mxu0 0.0
    %4621 = vmatpush1.msra.mxu0 0.0
    %4622 = vmatprep.subr.mxu0 0.0
    %4623 = vmatpush1.msra.mxu0 0.0
    %4624 = vmatprep.subr.mxu0 0.0
    %4625 = vmatpush1.msra.mxu0 0.0
    %4626 = vmatprep.subr.mxu0 0.0
    %4627 = vmatpush1.msra.mxu0 0.0
    %4628 = vmatprep.subr.mxu0 0.0
    %4629 = vmatpush1.msra.mxu0 0.0
    %4630 = vmatprep.subr.mxu0 0.0
    %4631 = vmatpush1.msra.mxu0 0.0
    %4632 = vmatprep.subr.mxu0 0.0
    %4633 = vmatpush1.msra.mxu0 0.0
    %4634 = vmatprep.subr.mxu0 0.0
    %4635 = vmatpush1.msra.mxu0 0.0
    %4636 = vmatprep.subr.mxu0 0.0
    %4637 = vmatpush1.msra.mxu0 0.0
    %4638 = vmatprep.subr.mxu0 0.0
    %4639 = vmatpush1.msra.mxu0 0.0
    %4640 = vmatprep.subr.mxu0 0.0
    %4641 = vmatpush1.msra.mxu0 0.0
    %4642 = vmatprep.subr.mxu0 0.0
    %4643 = vmatpush1.msra.mxu0 0.0
    %4644 = vmatprep.subr.mxu0 0.0
    %4645 = vmatpush1.msra.mxu0 0.0
    %4646 = vmatprep.subr.mxu0 0.0
    %4647 = vmatpush1.msra.mxu0 0.0
    %4648 = vmatprep.subr.mxu0 0.0
    %4649 = vmatpush1.msra.mxu0 0.0
    %4650 = vmatprep.subr.mxu0 0.0
    %4651 = vmatpush1.msra.mxu0 0.0
    %4652 = vmatprep.subr.mxu0 0.0
    %4653 = vmatpush1.msra.mxu0 0.0
    %4654 = vmatprep.subr.mxu0 0.0
    %4655 = vmatpush1.msra.mxu0 0.0
    %4656 = vmatprep.subr.mxu0 0.0
    %4657 = vmatpush1.msra.mxu0 0.0
    %4658 = vmatprep.subr.mxu0 0.0
    %4659 = vmatpush1.msra.mxu0 0.0
    %4660 = vmatprep.subr.mxu0 0.0
    %4661 = vmatpush1.msra.mxu0 0.0
    %4662 = vmatprep.subr.mxu0 0.0
    %4663 = vmatpush1.msra.mxu0 0.0
    %4664 = vmatprep.subr.mxu0 0.0
    %4665 = vmatpush1.msra.mxu0 0.0
    %4666 = vmatprep.subr.mxu0 0.0
    %4667 = vmatpush1.msra.mxu0 0.0
    %4668 = vmatprep.subr.mxu0 0.0
    %4669 = vmatpush1.msra.mxu0 0.0
    %4670 = vmatprep.subr.mxu0 0.0
    %4671 = vmatpush1.msra.mxu0 0.0
    %4672 = vmatprep.mubr.f32.mxu0 0.0
    %4673 = vmatmul.mubr.f32.gmra.mrb[0].mxu0 %v4535
    %v4674 = vpop.f32.mrb[0].mxu0
    %v4675 = vadd.f32 0.0, %v4674
    %v4676 = vpop.f32.mrb[0].mxu0
    %v4677 = vadd.f32 0.0, %v4676
    %4678 = vdwg.mxu0
    %v4679 = vlaneseq
    %v4680 = vshrl.u32 %v4679, 7
    %v4681 = vsub.s32 0, %v4680
    %v4682 = vrot.slane %v4604, %v4681
    %v4683 = vlaneseq
    %v4684 = vshrl.u32 %v4683, 7
    %v4685 = vsub.s32 0, %v4684
    %v4686 = vrot.slane %v4606, %v4685
    %v4687 = vlaneseq
    %v4688 = vshrl.u32 %v4687, 7
    %v4689 = vsub.s32 0, %v4688
    %v4690 = vrot.slane %v4675, %v4689
    %v4691 = vlaneseq
    %v4692 = vshrl.u32 %v4691, 7
    %v4693 = vsub.s32 0, %v4692
    %v4694 = vrot.slane %v4677, %v4693
    %v4695 = vmul.f32 %v4298, %v4682
    %v4696 = vmul.f32 %v4299, %v4686
    %v4697 = vmul.f32 %v4300, %v4690
    %v4698 = vmul.f32 %v4301, %v4694
    %v4699 = vmul.f32 %v4302, %v4682
    %v4700 = vmul.f32 %v4303, %v4686
    %v4701 = vmul.f32 %v4304, %v4690
    %v4702 = vmul.f32 %v4305, %v4694
    %v4703 = vlaneseq
    %v4704 = vshrl.u32 %v4703, 7
    %v4705 = vsub.s32 1, %v4704
    %v4706 = vrot.slane %v4604, %v4705
    %v4707 = vlaneseq
    %v4708 = vshrl.u32 %v4707, 7
    %v4709 = vsub.s32 1, %v4708
    %v4710 = vrot.slane %v4606, %v4709
    %v4711 = vlaneseq
    %v4712 = vshrl.u32 %v4711, 7
    %v4713 = vsub.s32 1, %v4712
    %v4714 = vrot.slane %v4675, %v4713
    %v4715 = vlaneseq
    %v4716 = vshrl.u32 %v4715, 7
    %v4717 = vsub.s32 1, %v4716
    %v4718 = vrot.slane %v4677, %v4717
    %v4719 = vadd.f32 %v4695, %v4706
    %v4720 = vadd.f32 %v4696, %v4710
    %v4721 = vadd.f32 %v4697, %v4714
    %v4722 = vadd.f32 %v4698, %v4718
    %v4723 = vadd.f32 %v4699, %v4706
    %v4724 = vadd.f32 %v4700, %v4710
    %v4725 = vadd.f32 %v4701, %v4714
    %v4726 = vadd.f32 %v4702, %v4718
    %v4727 = vmax.f32 %v4719, 0.0
    %v4728 = vmax.f32 %v4720, 0.0
    %v4729 = vmax.f32 %v4721, 0.0
    %v4730 = vmax.f32 %v4722, 0.0
    %v4731 = vmax.f32 %v4723, 0.0
    %v4732 = vmax.f32 %v4724, 0.0
    %v4733 = vmax.f32 %v4725, 0.0
    %v4734 = vmax.f32 %v4726, 0.0
    %v4743 = vrot.slane %v4727, 7
    %v4744 = vrot.slane %v4728, 7
    %v4745 = vrot.slane %v4729, 7
    %v4746 = vrot.slane %v4730, 7
    %v4747 = vrot.slane %v4731, 7
    %v4748 = vsel %vm271, %v4743, %v4747
    %v4749 = vrot.slane %v4732, 7
    %v4750 = vsel %vm271, %v4744, %v4749
    %v4751 = vrot.slane %v4733, 7
    %v4752 = vsel %vm271, %v4745, %v4751
    %v4753 = vrot.slane %v4734, 7
    %v4754 = vsel %vm271, %v4746, %v4753
    %4767 = vst [vmem:[#allocation2] sm:$0xfe] %v4743
    %4768 = vst [vmem:[#allocation2 + $0x8] sm:$0xfe] %v4744
    %4769 = vst [vmem:[#allocation2 + $0x10] sm:$0xfe] %v4745
    %4770 = vst [vmem:[#allocation2 + $0x18] sm:$0xfe] %v4746
    %4771 = vst [vmem:[#allocation2 + $0x28] sm:$0xff] %v4748
    %4772 = vst [vmem:[#allocation2 + $0x30] sm:$0xff] %v4750
    %4773 = vst [vmem:[#allocation2 + $0x38] sm:$0xff] %v4752
    %4774 = vst [vmem:[#allocation2 + $0x40] sm:$0xff] %v4754
    %4775 = vst [vmem:[#allocation2 + $0x50] sm:$0x1] %v4747
    %4776 = vst [vmem:[#allocation2 + $0x58] sm:$0x1] %v4749
    %4777 = vst [vmem:[#allocation2 + $0x60] sm:$0x1] %v4751
    %4778 = vst [vmem:[#allocation2 + $0x68] sm:$0x1] %v4753
    %v4779 = vld [vmem:[#allocation7] sm:$0x1]
    %v4780 = vld [vmem:[#allocation9] sm:$0x1]
    %v4781 = vmul.f32 %v4306, %v4306
    %v4782 = vmul.f32 %v4307, %v4307
    %v4783 = vmul.f32 %v4308, %v4308
    %v4784 = vmul.f32 %v4309, %v4309
    %v4785 = vmul.f32 %v4310, %v4310
    %v4786 = vmul.f32 %v4311, %v4311
    %v4787 = vmul.f32 %v4312, %v4312
    %v4788 = vmul.f32 %v4313, %v4313
    %v4789 = vmul.f32 %v4314, %v4314
    %v4790 = vmul.f32 %v4315, %v4315
    %v4791 = vmul.f32 %v4316, %v4316
    %v4792 = vmul.f32 %v4317, %v4317
    %vm4805 = vcmask 1045504
    %v4806 = vrot.slane %v4306, 2
    %v4807 = vrot.slane %v4310, 2
    %v4808 = vsel %vm4805, %v4806, %v4807
    %v4809 = vrot.slane %v4307, 2
    %v4810 = vrot.slane %v4311, 2
    %v4811 = vsel %vm4805, %v4809, %v4810
    %v4812 = vrot.slane %v4308, 2
    %v4813 = vrot.slane %v4312, 2
    %v4814 = vsel %vm4805, %v4812, %v4813
    %v4815 = vrot.slane %v4309, 2
    %v4816 = vrot.slane %v4313, 2
    %v4817 = vsel %vm4805, %v4815, %v4816
    %v4818 = vrot.slane %v4314, 2
    %v4819 = vsel %vm4805, %v4807, %v4818
    %v4820 = vrot.slane %v4315, 2
    %v4821 = vsel %vm4805, %v4810, %v4820
    %v4822 = vrot.slane %v4316, 2
    %v4823 = vsel %vm4805, %v4813, %v4822
    %v4824 = vrot.slane %v4317, 2
    %v4825 = vsel %vm4805, %v4816, %v4824
    %v4846 = vrot.slane %v4781, 2
    %v4847 = vrot.slane %v4785, 2
    %v4848 = vsel %vm4805, %v4846, %v4847
    %v4849 = vrot.slane %v4782, 2
    %v4850 = vrot.slane %v4786, 2
    %v4851 = vsel %vm4805, %v4849, %v4850
    %v4852 = vrot.slane %v4783, 2
    %v4853 = vrot.slane %v4787, 2
    %v4854 = vsel %vm4805, %v4852, %v4853
    %v4855 = vrot.slane %v4784, 2
    %v4856 = vrot.slane %v4788, 2
    %v4857 = vsel %vm4805, %v4855, %v4856
    %v4858 = vrot.slane %v4789, 2
    %v4859 = vsel %vm4805, %v4847, %v4858
    %v4860 = vrot.slane %v4790, 2
    %v4861 = vsel %vm4805, %v4850, %v4860
    %v4862 = vrot.slane %v4791, 2
    %v4863 = vsel %vm4805, %v4853, %v4862
    %v4864 = vrot.slane %v4792, 2
    %v4865 = vsel %vm4805, %v4856, %v4864
    %4874 = vmatprep.subr.mxu0 0.0
    %4875 = vmatpush1.msra.mxu0 %v175
    %4876 = vmatprep.subr.mxu0 0.0
    %4877 = vmatpush1.msra.mxu0 %v176
    %4878 = vmatprep.subr.mxu0 0.0
    %4879 = vmatpush1.msra.mxu0 %v177
    %4880 = vmatprep.subr.mxu0 0.0
    %4881 = vmatpush1.msra.mxu0 %v178
    %4882 = vmatprep.subr.mxu0 0.0
    %4883 = vmatpush1.msra.mxu0 %v179
    %4884 = vmatprep.subr.mxu0 0.0
    %4885 = vmatpush1.msra.mxu0 %v180
    %4886 = vmatprep.subr.mxu0 0.0
    %4887 = vmatpush1.msra.mxu0 %v181
    %4888 = vmatprep.subr.mxu0 0.0
    %4889 = vmatpush1.msra.mxu0 %v182
    %4890 = vmatprep.subr.mxu0 0.0
    %4891 = vmatpush1.msra.mxu0 %v183
    %4892 = vmatprep.subr.mxu0 0.0
    %4893 = vmatpush1.msra.mxu0 %v184
    %4894 = vmatprep.subr.mxu0 0.0
    %4895 = vmatpush1.msra.mxu0 %v185
    %4896 = vmatprep.subr.mxu0 0.0
    %4897 = vmatpush1.msra.mxu0 %v186
    %4898 = vmatprep.subr.mxu0 0.0
    %4899 = vmatpush1.msra.mxu0 %v187
    %4900 = vmatprep.subr.mxu0 0.0
    %4901 = vmatpush1.msra.mxu0 %v188
    %4902 = vmatprep.subr.mxu0 0.0
    %4903 = vmatpush1.msra.mxu0 %v189
    %4904 = vmatprep.subr.mxu0 0.0
    %4905 = vmatpush1.msra.mxu0 %v190
    %4906 = vmatprep.subr.mxu0 0.0
    %4907 = vmatpush1.msra.mxu0 %v191
    %4908 = vmatprep.subr.mxu0 0.0
    %4909 = vmatpush1.msra.mxu0 %v192
    %4910 = vmatprep.subr.mxu0 0.0
    %4911 = vmatpush1.msra.mxu0 %v193
    %4912 = vmatprep.subr.mxu0 0.0
    %4913 = vmatpush1.msra.mxu0 %v194
    %4914 = vmatprep.subr.mxu0 0.0
    %4915 = vmatpush1.msra.mxu0 %v195
    %4916 = vmatprep.subr.mxu0 0.0
    %4917 = vmatpush1.msra.mxu0 %v196
    %4918 = vmatprep.subr.mxu0 0.0
    %4919 = vmatpush1.msra.mxu0 %v197
    %4920 = vmatprep.subr.mxu0 0.0
    %4921 = vmatpush1.msra.mxu0 %v198
    %4922 = vmatprep.subr.mxu0 0.0
    %4923 = vmatpush1.msra.mxu0 %v199
    %4924 = vmatprep.subr.mxu0 0.0
    %4925 = vmatpush1.msra.mxu0 %v200
    %4926 = vmatprep.subr.mxu0 0.0
    %4927 = vmatpush1.msra.mxu0 %v201
    %4928 = vmatprep.subr.mxu0 0.0
    %4929 = vmatpush1.msra.mxu0 %v202
    %4930 = vmatprep.subr.mxu0 0.0
    %4931 = vmatpush1.msra.mxu0 %v203
    %4932 = vmatprep.subr.mxu0 0.0
    %4933 = vmatpush1.msra.mxu0 %v204
    %4934 = vmatprep.subr.mxu0 0.0
    %4935 = vmatpush1.msra.mxu0 %v205
    %4936 = vmatprep.subr.mxu0 0.0
    %4937 = vmatpush1.msra.mxu0 %v206
    %4938 = vmatprep.mubr.f32.mxu0 %v4811
    %4939 = vmatmul.mubr.f32.gmra.mrb[0].mxu0 %v4808
    %v4940 = vpop.f32.mrb[0].mxu0
    %v4941 = vadd.f32 0.0, %v4940
    %v4942 = vpop.f32.mrb[0].mxu0
    %4943 = vmatprep.mubr.f32.mxu0 %v4821
    %4944 = vmatmul.mubr.f32.gmra.mrb[0].mxu0 %v4819
    %v4945 = vpop.f32.mrb[0].mxu0
    %v4946 = vadd.f32 0.0, %v4945
    %v4947 = vpop.f32.mrb[0].mxu0
    %4948 = vmatprep.mubr.f32.mxu0 %v4851
    %4949 = vmatmul.mubr.f32.gmra.mrb[0].mxu0 %v4848
    %v4950 = vpop.f32.mrb[0].mxu0
    %v4951 = vadd.f32 0.0, %v4950
    %v4952 = vpop.f32.mrb[0].mxu0
    %4953 = vmatprep.mubr.f32.mxu0 %v4861
    %4954 = vmatmul.mubr.f32.gmra.mrb[0].mxu0 %v4859
    %v4955 = vpop.f32.mrb[0].mxu0
    %v4956 = vadd.f32 0.0, %v4955
    %v4957 = vpop.f32.mrb[0].mxu0
    %4958 = vdwg.mxu0
    %4959 = vmatprep.subr.mxu0 0.0
    %4960 = vmatpush1.msra.mxu0 %v207
    %4961 = vmatprep.subr.mxu0 0.0
    %4962 = vmatpush1.msra.mxu0 %v208
    %4963 = vmatprep.subr.mxu0 0.0
    %4964 = vmatpush1.msra.mxu0 %v209
    %4965 = vmatprep.subr.mxu0 0.0
    %4966 = vmatpush1.msra.mxu0 %v210
    %4967 = vmatprep.subr.mxu0 0.0
    %4968 = vmatpush1.msra.mxu0 %v211
    %4969 = vmatprep.subr.mxu0 0.0
    %4970 = vmatpush1.msra.mxu0 %v212
    %4971 = vmatprep.subr.mxu0 0.0
    %4972 = vmatpush1.msra.mxu0 %v213
    %4973 = vmatprep.subr.mxu0 0.0
    %4974 = vmatpush1.msra.mxu0 %v214
    %4975 = vmatprep.subr.mxu0 0.0
    %4976 = vmatpush1.msra.mxu0 %v215
    %4977 = vmatprep.subr.mxu0 0.0
    %4978 = vmatpush1.msra.mxu0 %v216
    %4979 = vmatprep.subr.mxu0 0.0
    %4980 = vmatpush1.msra.mxu0 %v217
    %4981 = vmatprep.subr.mxu0 0.0
    %4982 = vmatpush1.msra.mxu0 %v218
    %4983 = vmatprep.subr.mxu0 0.0
    %4984 = vmatpush1.msra.mxu0 %v219
    %4985 = vmatprep.subr.mxu0 0.0
    %4986 = vmatpush1.msra.mxu0 %v220
    %4987 = vmatprep.subr.mxu0 0.0
    %4988 = vmatpush1.msra.mxu0 %v221
    %4989 = vmatprep.subr.mxu0 0.0
    %4990 = vmatpush1.msra.mxu0 %v222
    %4991 = vmatprep.subr.mxu0 0.0
    %4992 = vmatpush1.msra.mxu0 %v223
    %4993 = vmatprep.subr.mxu0 0.0
    %4994 = vmatpush1.msra.mxu0 %v224
    %4995 = vmatprep.subr.mxu0 0.0
    %4996 = vmatpush1.msra.mxu0 %v225
    %4997 = vmatprep.subr.mxu0 0.0
    %4998 = vmatpush1.msra.mxu0 %v226
    %4999 = vmatprep.subr.mxu0 0.0
    %5000 = vmatpush1.msra.mxu0 %v227
    %5001 = vmatprep.subr.mxu0 0.0
    %5002 = vmatpush1.msra.mxu0 %v228
    %5003 = vmatprep.subr.mxu0 0.0
    %5004 = vmatpush1.msra.mxu0 %v229
    %5005 = vmatprep.subr.mxu0 0.0
    %5006 = vmatpush1.msra.mxu0 %v230
    %5007 = vmatprep.subr.mxu0 0.0
    %5008 = vmatpush1.msra.mxu0 %v231
    %5009 = vmatprep.subr.mxu0 0.0
    %5010 = vmatpush1.msra.mxu0 %v232
    %5011 = vmatprep.subr.mxu0 0.0
    %5012 = vmatpush1.msra.mxu0 %v233
    %5013 = vmatprep.subr.mxu0 0.0
    %5014 = vmatpush1.msra.mxu0 %v234
    %5015 = vmatprep.subr.mxu0 0.0
    %5016 = vmatpush1.msra.mxu0 %v235
    %5017 = vmatprep.subr.mxu0 0.0
    %5018 = vmatpush1.msra.mxu0 %v236
    %5019 = vmatprep.subr.mxu0 0.0
    %5020 = vmatpush1.msra.mxu0 %v237
    %5021 = vmatprep.subr.mxu0 0.0
    %5022 = vmatpush1.msra.mxu0 %v238
    %5023 = vmatprep.mubr.f32.mxu0 %v4817
    %5024 = vmatmul.mubr.f32.gmra.mrb[0].mxu0 %v4814
    %v5025 = vpop.f32.mrb[0].mxu0
    %v5026 = vadd.f32 %v4941, %v5025
    %v5027 = vpop.f32.mrb[0].mxu0
    %5028 = vmatprep.mubr.f32.mxu0 %v4825
    %5029 = vmatmul.mubr.f32.gmra.mrb[0].mxu0 %v4823
    %v5030 = vpop.f32.mrb[0].mxu0
    %v5031 = vadd.f32 %v4946, %v5030
    %v5032 = vpop.f32.mrb[0].mxu0
    %5033 = vmatprep.mubr.f32.mxu0 %v4857
    %5034 = vmatmul.mubr.f32.gmra.mrb[0].mxu0 %v4854
    %v5035 = vpop.f32.mrb[0].mxu0
    %v5036 = vadd.f32 %v4951, %v5035
    %v5037 = vpop.f32.mrb[0].mxu0
    %5038 = vmatprep.mubr.f32.mxu0 %v4865
    %5039 = vmatmul.mubr.f32.gmra.mrb[0].mxu0 %v4863
    %v5040 = vpop.f32.mrb[0].mxu0
    %v5041 = vadd.f32 %v4956, %v5040
    %v5042 = vpop.f32.mrb[0].mxu0
    %5043 = vdwg.mxu0
    %v5044 = vsel %vm4498, %v5026, 0.0
    %v5045 = vsel %vm4498, %v5031, 0.0
    %v5046 = vadd.f32 %v5044, %v5045
    %v5047 = vrot.slane %v5046, 4
    %v5048 = vadd.f32 %v5046, %v5047
    %v5049 = vrot.slane %v5048, 2
    %v5050 = vadd.f32 %v5048, %v5049
    %v5051 = vrot.slane %v5050, 1
    %v5052 = vadd.f32 %v5050, %v5051
    %v5053 = vsel %vm4498, %v5036, 0.0
    %v5054 = vsel %vm4498, %v5041, 0.0
    %v5055 = vadd.f32 %v5053, %v5054
    %v5056 = vrot.slane %v5055, 4
    %v5057 = vadd.f32 %v5055, %v5056
    %v5058 = vrot.slane %v5057, 2
    %v5059 = vadd.f32 %v5057, %v5058
    %v5060 = vrot.slane %v5059, 1
    %v5061 = vadd.f32 %v5059, %v5060
    %v5062 = vmul.f32 %v5052, %v4517
    %v5063 = vmul.f32 %v5061, %v4517
    %v5064 = vmul.f32 %v5062, %v5062
    %v5065 = vsub.f32 %v5063, %v5064
    %v5066 = vadd.f32 %v5065, 1e-05
    %v5067 = vrsqrt.pop %v5066
    %v5068 = vmul.f32 %v5067, %v4779
    %v5069 = vmul.f32 %v5062, %v5068
    %v5070 = vsub.f32 %v4780, %v5069
    %v5072 = vlaneseq
    %v5073 = vshrl.u32 %v5072, 7
    %v5074 = vsub.s32 0, %v5073
    %v5075 = vrot.slane %v5070, %v5074
    %v5077 = vsel %vm271, %v5068, %v5075
    %v5079 = vsel %vm4498, %v5077, 0
    %5081 = vmatprep.subr.mxu0 %v240
    %5082 = vmatpush1.msra.mxu0 %v239
    %5083 = vmatprep.subr.mxu0 %v244
    %5084 = vmatpush1.msra.mxu0 %v243
    %5085 = vmatprep.subr.mxu0 %v248
    %5086 = vmatpush1.msra.mxu0 %v247
    %5087 = vmatprep.subr.mxu0 %v252
    %5088 = vmatpush1.msra.mxu0 %v251
    %5089 = vmatprep.subr.mxu0 0.0
    %5090 = vmatpush1.msra.mxu0 0.0
    %5091 = vmatprep.subr.mxu0 0.0
    %5092 = vmatpush1.msra.mxu0 0.0
    %5093 = vmatprep.subr.mxu0 0.0
    %5094 = vmatpush1.msra.mxu0 0.0
    %5095 = vmatprep.subr.mxu0 0.0
    %5096 = vmatpush1.msra.mxu0 0.0
    %5097 = vmatprep.subr.mxu0 0.0
    %5098 = vmatpush1.msra.mxu0 0.0
    %5099 = vmatprep.subr.mxu0 0.0
    %5100 = vmatpush1.msra.mxu0 0.0
    %5101 = vmatprep.subr.mxu0 0.0
    %5102 = vmatpush1.msra.mxu0 0.0
    %5103 = vmatprep.subr.mxu0 0.0
    %5104 = vmatpush1.msra.mxu0 0.0
    %5105 = vmatprep.subr.mxu0 0.0
    %5106 = vmatpush1.msra.mxu0 0.0
    %5107 = vmatprep.subr.mxu0 0.0
    %5108 = vmatpush1.msra.mxu0 0.0
    %5109 = vmatprep.subr.mxu0 0.0
    %5110 = vmatpush1.msra.mxu0 0.0
    %5111 = vmatprep.subr.mxu0 0.0
    %5112 = vmatpush1.msra.mxu0 0.0
    %5113 = vmatprep.subr.mxu0 0.0
    %5114 = vmatpush1.msra.mxu0 0.0
    %5115 = vmatprep.subr.mxu0 0.0
    %5116 = vmatpush1.msra.mxu0 0.0
    %5117 = vmatprep.subr.mxu0 0.0
    %5118 = vmatpush1.msra.mxu0 0.0
    %5119 = vmatprep.subr.mxu0 0.0
    %5120 = vmatpush1.msra.mxu0 0.0
    %5121 = vmatprep.subr.mxu0 0.0
    %5122 = vmatpush1.msra.mxu0 0.0
    %5123 = vmatprep.subr.mxu0 0.0
    %5124 = vmatpush1.msra.mxu0 0.0
    %5125 = vmatprep.subr.mxu0 0.0
    %5126 = vmatpush1.msra.mxu0 0.0
    %5127 = vmatprep.subr.mxu0 0.0
    %5128 = vmatpush1.msra.mxu0 0.0
    %5129 = vmatprep.subr.mxu0 0.0
    %5130 = vmatpush1.msra.mxu0 0.0
    %5131 = vmatprep.subr.mxu0 0.0
    %5132 = vmatpush1.msra.mxu0 0.0
    %5133 = vmatprep.subr.mxu0 0.0
    %5134 = vmatpush1.msra.mxu0 0.0
    %5135 = vmatprep.subr.mxu0 0.0
    %5136 = vmatpush1.msra.mxu0 0.0
    %5137 = vmatprep.subr.mxu0 0.0
    %5138 = vmatpush1.msra.mxu0 0.0
    %5139 = vmatprep.subr.mxu0 0.0
    %5140 = vmatpush1.msra.mxu0 0.0
    %5141 = vmatprep.subr.mxu0 0.0
    %5142 = vmatpush1.msra.mxu0 0.0
    %5143 = vmatprep.subr.mxu0 0.0
    %5144 = vmatpush1.msra.mxu0 0.0
    %5145 = vmatprep.mubr.f32.mxu0 0.0
    %5146 = vmatmul.mubr.f32.gmra.mrb[0].mxu0 %v5079
    %v5147 = vpop.f32.mrb[0].mxu0
    %v5148 = vadd.f32 0.0, %v5147
    %v5149 = vpop.f32.mrb[0].mxu0
    %v5150 = vadd.f32 0.0, %v5149
    %5151 = vdwg.mxu0
    %5152 = vmatprep.subr.mxu0 %v242
    %5153 = vmatpush1.msra.mxu0 %v241
    %5154 = vmatprep.subr.mxu0 %v246
    %5155 = vmatpush1.msra.mxu0 %v245
    %5156 = vmatprep.subr.mxu0 %v250
    %5157 = vmatpush1.msra.mxu0 %v249
    %5158 = vmatprep.subr.mxu0 %v254
    %5159 = vmatpush1.msra.mxu0 %v253
    %5160 = vmatprep.subr.mxu0 0.0
    %5161 = vmatpush1.msra.mxu0 0.0
    %5162 = vmatprep.subr.mxu0 0.0
    %5163 = vmatpush1.msra.mxu0 0.0
    %5164 = vmatprep.subr.mxu0 0.0
    %5165 = vmatpush1.msra.mxu0 0.0
    %5166 = vmatprep.subr.mxu0 0.0
    %5167 = vmatpush1.msra.mxu0 0.0
    %5168 = vmatprep.subr.mxu0 0.0
    %5169 = vmatpush1.msra.mxu0 0.0
    %5170 = vmatprep.subr.mxu0 0.0
    %5171 = vmatpush1.msra.mxu0 0.0
    %5172 = vmatprep.subr.mxu0 0.0
    %5173 = vmatpush1.msra.mxu0 0.0
    %5174 = vmatprep.subr.mxu0 0.0
    %5175 = vmatpush1.msra.mxu0 0.0
    %5176 = vmatprep.subr.mxu0 0.0
    %5177 = vmatpush1.msra.mxu0 0.0
    %5178 = vmatprep.subr.mxu0 0.0
    %5179 = vmatpush1.msra.mxu0 0.0
    %5180 = vmatprep.subr.mxu0 0.0
    %5181 = vmatpush1.msra.mxu0 0.0
    %5182 = vmatprep.subr.mxu0 0.0
    %5183 = vmatpush1.msra.mxu0 0.0
    %5184 = vmatprep.subr.mxu0 0.0
    %5185 = vmatpush1.msra.mxu0 0.0
    %5186 = vmatprep.subr.mxu0 0.0
    %5187 = vmatpush1.msra.mxu0 0.0
    %5188 = vmatprep.subr.mxu0 0.0
    %5189 = vmatpush1.msra.mxu0 0.0
    %5190 = vmatprep.subr.mxu0 0.0
    %5191 = vmatpush1.msra.mxu0 0.0
    %5192 = vmatprep.subr.mxu0 0.0
    %5193 = vmatpush1.msra.mxu0 0.0
    %5194 = vmatprep.subr.mxu0 0.0
    %5195 = vmatpush1.msra.mxu0 0.0
    %5196 = vmatprep.subr.mxu0 0.0
    %5197 = vmatpush1.msra.mxu0 0.0
    %5198 = vmatprep.subr.mxu0 0.0
    %5199 = vmatpush1.msra.mxu0 0.0
    %5200 = vmatprep.subr.mxu0 0.0
    %5201 = vmatpush1.msra.mxu0 0.0
    %5202 = vmatprep.subr.mxu0 0.0
    %5203 = vmatpush1.msra.mxu0 0.0
    %5204 = vmatprep.subr.mxu0 0.0
    %5205 = vmatpush1.msra.mxu0 0.0
    %5206 = vmatprep.subr.mxu0 0.0
    %5207 = vmatpush1.msra.mxu0 0.0
    %5208 = vmatprep.subr.mxu0 0.0
    %5209 = vmatpush1.msra.mxu0 0.0
    %5210 = vmatprep.subr.mxu0 0.0
    %5211 = vmatpush1.msra.mxu0 0.0
    %5212 = vmatprep.subr.mxu0 0.0
    %5213 = vmatpush1.msra.mxu0 0.0
    %5214 = vmatprep.subr.mxu0 0.0
    %5215 = vmatpush1.msra.mxu0 0.0
    %5216 = vmatprep.mubr.f32.mxu0 0.0
    %5217 = vmatmul.mubr.f32.gmra.mrb[0].mxu0 %v5079
    %v5218 = vpop.f32.mrb[0].mxu0
    %v5219 = vadd.f32 0.0, %v5218
    %v5220 = vpop.f32.mrb[0].mxu0
    %v5221 = vadd.f32 0.0, %v5220
    %5222 = vdwg.mxu0
    %v5223 = vlaneseq
    %v5224 = vshrl.u32 %v5223, 7
    %v5225 = vsub.s32 0, %v5224
    %v5226 = vrot.slane %v5148, %v5225
    %v5227 = vlaneseq
    %v5228 = vshrl.u32 %v5227, 7
    %v5229 = vsub.s32 0, %v5228
    %v5230 = vrot.slane %v5150, %v5229
    %v5231 = vlaneseq
    %v5232 = vshrl.u32 %v5231, 7
    %v5233 = vsub.s32 0, %v5232
    %v5234 = vrot.slane %v5219, %v5233
    %v5235 = vlaneseq
    %v5236 = vshrl.u32 %v5235, 7
    %v5237 = vsub.s32 0, %v5236
    %v5238 = vrot.slane %v5221, %v5237
    %v5239 = vmul.f32 %v4306, %v5226
    %v5240 = vmul.f32 %v4307, %v5230
    %v5241 = vmul.f32 %v4308, %v5234
    %v5242 = vmul.f32 %v4309, %v5238
    %v5243 = vmul.f32 %v4310, %v5226
    %v5244 = vmul.f32 %v4311, %v5230
    %v5245 = vmul.f32 %v4312, %v5234
    %v5246 = vmul.f32 %v4313, %v5238
    %v5247 = vmul.f32 %v4314, %v5226
    %v5248 = vmul.f32 %v4315, %v5230
    %v5249 = vmul.f32 %v4316, %v5234
    %v5250 = vmul.f32 %v4317, %v5238
    %v5251 = vlaneseq
    %v5252 = vshrl.u32 %v5251, 7
    %v5253 = vsub.s32 1, %v5252
    %v5254 = vrot.slane %v5148, %v5253
    %v5255 = vlaneseq
    %v5256 = vshrl.u32 %v5255, 7
    %v5257 = vsub.s32 1, %v5256
    %v5258 = vrot.slane %v5150, %v5257
    %v5259 = vlaneseq
    %v5260 = vshrl.u32 %v5259, 7
    %v5261 = vsub.s32 1, %v5260
    %v5262 = vrot.slane %v5219, %v5261
    %v5263 = vlaneseq
    %v5264 = vshrl.u32 %v5263, 7
    %v5265 = vsub.s32 1, %v5264
    %v5266 = vrot.slane %v5221, %v5265
    %v5267 = vadd.f32 %v5239, %v5254
    %v5268 = vadd.f32 %v5240, %v5258
    %v5269 = vadd.f32 %v5241, %v5262
    %v5270 = vadd.f32 %v5242, %v5266
    %v5271 = vadd.f32 %v5243, %v5254
    %v5272 = vadd.f32 %v5244, %v5258
    %v5273 = vadd.f32 %v5245, %v5262
    %v5274 = vadd.f32 %v5246, %v5266
    %v5275 = vadd.f32 %v5247, %v5254
    %v5276 = vadd.f32 %v5248, %v5258
    %v5277 = vadd.f32 %v5249, %v5262
    %v5278 = vadd.f32 %v5250, %v5266
    %v5279 = vmax.f32 %v5267, 0.0
    %v5280 = vmax.f32 %v5268, 0.0
    %v5281 = vmax.f32 %v5269, 0.0
    %v5282 = vmax.f32 %v5270, 0.0
    %v5283 = vmax.f32 %v5271, 0.0
    %v5284 = vmax.f32 %v5272, 0.0
    %v5285 = vmax.f32 %v5273, 0.0
    %v5286 = vmax.f32 %v5274, 0.0
    %v5287 = vmax.f32 %v5275, 0.0
    %v5288 = vmax.f32 %v5276, 0.0
    %v5289 = vmax.f32 %v5277, 0.0
    %v5290 = vmax.f32 %v5278, 0.0
    %v5303 = vrot.slane %v5279, 7
    %v5304 = vrot.slane %v5280, 7
    %v5305 = vrot.slane %v5281, 7
    %v5306 = vrot.slane %v5282, 7
    %v5307 = vrot.slane %v5283, 7
    %v5308 = vsel %vm271, %v5303, %v5307
    %v5309 = vrot.slane %v5284, 7
    %v5310 = vsel %vm271, %v5304, %v5309
    %v5311 = vrot.slane %v5285, 7
    %v5312 = vsel %vm271, %v5305, %v5311
    %v5313 = vrot.slane %v5286, 7
    %v5314 = vsel %vm271, %v5306, %v5313
    %v5315 = vrot.slane %v5287, 7
    %v5316 = vsel %vm271, %v5307, %v5315
    %v5317 = vrot.slane %v5288, 7
    %v5318 = vsel %vm271, %v5309, %v5317
    %v5319 = vrot.slane %v5289, 7
    %v5320 = vsel %vm271, %v5311, %v5319
    %v5321 = vrot.slane %v5290, 7
    %v5322 = vsel %vm271, %v5313, %v5321
    %5335 = vst [vmem:[#allocation2 + $0x50] sm:$0xf8] %v5303
    %5336 = vst [vmem:[#allocation2 + $0x58] sm:$0xf8] %v5304
    %5337 = vst [vmem:[#allocation2 + $0x60] sm:$0xf8] %v5305
    %5338 = vst [vmem:[#allocation2 + $0x68] sm:$0xf8] %v5306
    %5339 = vst [vmem:[#allocation2 + $0x78] sm:$0xff] %v5308
    %5340 = vst [vmem:[#allocation2 + $0x80] sm:$0xff] %v5310
    %5341 = vst [vmem:[#allocation2 + $0x88] sm:$0xff] %v5312
    %5342 = vst [vmem:[#allocation2 + $0x90] sm:$0xff] %v5314
    %5343 = vst [vmem:[#allocation2 + $0xa0] sm:$0x7] %v5316
    %5344 = vst [vmem:[#allocation2 + $0xa8] sm:$0x7] %v5318
    %5345 = vst [vmem:[#allocation2 + $0xb0] sm:$0x7] %v5320
    %5346 = vst [vmem:[#allocation2 + $0xb8] sm:$0x7] %v5322
    %s5347 = smul.u32 4, 3
    %s5348 = smul.u32 %s5347, 72
    %s5349 = smul.u32 %s5348, 4
    %s5350 = sshll.u32 %s5349, 4
    %5351 = dma.done [#allocation4], %s5350
    %v5352 = vld [vmem:[#allocation2] sm:$0xff]
    %v5353 = vld [vmem:[#allocation2 + $0x8] sm:$0xff]
    %v5354 = vld [vmem:[#allocation2 + $0x10] sm:$0xff]
    %v5355 = vld [vmem:[#allocation2 + $0x18] sm:$0xff]
    %v5356 = vld [vmem:[#allocation2 + $0x20] sm:$0xff]
    %v5357 = vld [vmem:[#allocation2 + $0x28] sm:$0xff]
    %v5358 = vld [vmem:[#allocation2 + $0x30] sm:$0xff]
    %v5359 = vld [vmem:[#allocation2 + $0x38] sm:$0xff]
    %v5360 = vld [vmem:[#allocation2 + $0x40] sm:$0xff]
    %v5361 = vld [vmem:[#allocation2 + $0x48] sm:$0xff]
    %v5362 = vld [vmem:[#allocation2 + $0x50] sm:$0xff]
    %v5363 = vld [vmem:[#allocation2 + $0x58] sm:$0xff]
    %v5364 = vld [vmem:[#allocation2 + $0x60] sm:$0xff]
    %v5365 = vld [vmem:[#allocation2 + $0x68] sm:$0xff]
    %v5366 = vld [vmem:[#allocation2 + $0x70] sm:$0xff]
    %v5367 = vld [vmem:[#allocation2 + $0x78] sm:$0xff]
    %v5368 = vld [vmem:[#allocation2 + $0x80] sm:$0xff]
    %v5369 = vld [vmem:[#allocation2 + $0x88] sm:$0xff]
    %v5370 = vld [vmem:[#allocation2 + $0x90] sm:$0xff]
    %v5371 = vld [vmem:[#allocation2 + $0x98] sm:$0xff]
    %v5372 = vld [vmem:[#allocation2 + $0xa0] sm:$0xf]
    %v5373 = vld [vmem:[#allocation2 + $0xa8] sm:$0xf]
    %v5374 = vld [vmem:[#allocation2 + $0xb0] sm:$0xf]
    %v5375 = vld [vmem:[#allocation2 + $0xb8] sm:$0xf]
    %v5376 = vld [vmem:[#allocation2 + $0xc0] sm:$0xf]
    %v5377 = vpack.c.bf16 %v5357, %v5352
    %v5378 = vpack.c.bf16 %v5358, %v5353
    %v5379 = vpack.c.bf16 %v5359, %v5354
    %v5380 = vpack.c.bf16 %v5360, %v5355
    %v5381 = vpack.c.bf16 %v5361, %v5356
    %v5382 = vpack.c.bf16 %v5367, %v5362
    %v5383 = vpack.c.bf16 %v5368, %v5363
    %v5384 = vpack.c.bf16 %v5369, %v5364
    %v5385 = vpack.c.bf16 %v5370, %v5365
    %v5386 = vpack.c.bf16 %v5371, %v5366
    %v5387 = vpack.c.bf16 %v5372, %v5372
    %v5388 = vpack.c.bf16 %v5373, %v5373
    %v5389 = vpack.c.bf16 %v5374, %v5374
    %v5390 = vpack.c.bf16 %v5375, %v5375
    %v5391 = vpack.c.bf16 %v5376, %v5376
    %v5392 = vld [vmem:[#allocation3] sm:$0xff]
    %v5393 = vld [vmem:[#allocation3 + $0x8] sm:$0xff]
    %v5394 = vld [vmem:[#allocation3 + $0x10] sm:$0xff]
    %v5395 = vld [vmem:[#allocation3 + $0x18] sm:$0xff]
    %v5396 = vld [vmem:[#allocation3 + $0x20] sm:$0xff]
    %v5397 = vld [vmem:[#allocation3 + $0x28] sm:$0xff]
    %v5398 = vld [vmem:[#allocation3 + $0x30] sm:$0xff]
    %v5399 = vld [vmem:[#allocation3 + $0x38] sm:$0xff]
    %v5400 = vld [vmem:[#allocation3 + $0x40] sm:$0xff]
    %v5401 = vld [vmem:[#allocation3 + $0x48] sm:$0xff]
    %v5402 = vld [vmem:[#allocation3 + $0x50] sm:$0xff]
    %v5403 = vld [vmem:[#allocation3 + $0x58] sm:$0xff]
    %v5404 = vld [vmem:[#allocation3 + $0x60] sm:$0xff]
    %v5405 = vld [vmem:[#allocation3 + $0x68] sm:$0xff]
    %v5406 = vld [vmem:[#allocation3 + $0x70] sm:$0xff]
    %v5407 = vld [vmem:[#allocation3 + $0x78] sm:$0xff]
    %v5408 = vld [vmem:[#allocation3 + $0x80] sm:$0xff]
    %v5409 = vld [vmem:[#allocation3 + $0x88] sm:$0xff]
    %v5410 = vld [vmem:[#allocation3 + $0x90] sm:$0xff]
    %v5411 = vld [vmem:[#allocation3 + $0x98] sm:$0xff]
    %v5412 = vld [vmem:[#allocation3 + $0xa0] sm:$0xff]
    %v5413 = vld [vmem:[#allocation3 + $0xa8] sm:$0xff]
    %v5414 = vld [vmem:[#allocation3 + $0xb0] sm:$0xff]
    %v5415 = vld [vmem:[#allocation3 + $0xb8] sm:$0xff]
    %v5416 = vld [vmem:[#allocation3 + $0xc0] sm:$0xff]
    %v5417 = vld [vmem:[#allocation3 + $0xc8] sm:$0xff]
    %v5418 = vld [vmem:[#allocation3 + $0xd0] sm:$0xff]
    %v5419 = vld [vmem:[#allocation3 + $0xd8] sm:$0xff]
    %v5420 = vld [vmem:[#allocation3 + $0xe0] sm:$0xff]
    %v5421 = vld [vmem:[#allocation3 + $0xe8] sm:$0xff]
    %v5422 = vld [vmem:[#allocation3 + $0xf0] sm:$0xff]
    %v5423 = vld [vmem:[#allocation3 + $0xf8] sm:$0xff]
    %v5424 = vld [vmem:[#allocation3 + $0x100] sm:$0xff]
    %v5425 = vld [vmem:[#allocation3 + $0x108] sm:$0xff]
    %v5426 = vld [vmem:[#allocation3 + $0x110] sm:$0xff]
    %v5427 = vld [vmem:[#allocation3 + $0x118] sm:$0xff]
    %v5428 = vld [vmem:[#allocation3 + $0x120] sm:$0xff]
    %v5429 = vld [vmem:[#allocation3 + $0x128] sm:$0xff]
    %v5430 = vld [vmem:[#allocation3 + $0x130] sm:$0xff]
    %v5431 = vld [vmem:[#allocation3 + $0x138] sm:$0xff]
    %v5432 = vld [vmem:[#allocation3 + $0x140] sm:$0xff]
    %v5433 = vld [vmem:[#allocation3 + $0x148] sm:$0xff]
    %v5434 = vld [vmem:[#allocation3 + $0x150] sm:$0xff]
    %v5435 = vld [vmem:[#allocation3 + $0x158] sm:$0xff]
    %v5436 = vld [vmem:[#allocation3 + $0x160] sm:$0xff]
    %v5437 = vld [vmem:[#allocation3 + $0x168] sm:$0xff]
    %v5438 = vld [vmem:[#allocation3 + $0x170] sm:$0xff]
    %v5439 = vld [vmem:[#allocation3 + $0x178] sm:$0xff]
    %v5440 = vld [vmem:[#allocation3 + $0x180] sm:$0xff]
    %v5441 = vld [vmem:[#allocation3 + $0x188] sm:$0xff]
    %v5442 = vld [vmem:[#allocation3 + $0x190] sm:$0xff]
    %v5443 = vld [vmem:[#allocation3 + $0x198] sm:$0xff]
    %v5444 = vld [vmem:[#allocation3 + $0x1a0] sm:$0xff]
    %v5445 = vld [vmem:[#allocation3 + $0x1a8] sm:$0xff]
    %v5446 = vld [vmem:[#allocation3 + $0x1b0] sm:$0xff]
    %v5447 = vld [vmem:[#allocation3 + $0x1b8] sm:$0xff]
    %v5448 = vld [vmem:[#allocation3 + $0x1c0] sm:$0xff]
    %v5449 = vld [vmem:[#allocation3 + $0x1c8] sm:$0xff]
    %v5450 = vld [vmem:[#allocation3 + $0x1d0] sm:$0xff]
    %v5451 = vld [vmem:[#allocation3 + $0x1d8] sm:$0xff]
    %v5452 = vld [vmem:[#allocation3 + $0x1e0] sm:$0xff]
    %v5453 = vld [vmem:[#allocation3 + $0x1e8] sm:$0xff]
    %v5454 = vld [vmem:[#allocation3 + $0x1f0] sm:$0xff]
    %v5455 = vld [vmem:[#allocation3 + $0x1f8] sm:$0xff]
    %v5456 = vld [vmem:[#allocation3 + $0x200] sm:$0xff]
    %v5457 = vld [vmem:[#allocation3 + $0x208] sm:$0xff]
    %v5458 = vld [vmem:[#allocation3 + $0x210] sm:$0xff]
    %v5459 = vld [vmem:[#allocation3 + $0x218] sm:$0xff]
    %v5460 = vld [vmem:[#allocation3 + $0x220] sm:$0xff]
    %v5461 = vld [vmem:[#allocation3 + $0x228] sm:$0xff]
    %v5462 = vld [vmem:[#allocation3 + $0x230] sm:$0xff]
    %v5463 = vld [vmem:[#allocation3 + $0x238] sm:$0xff]
    %v5464 = vld [vmem:[#allocation3 + $0x240] sm:$0xff]
    %v5465 = vld [vmem:[#allocation3 + $0x248] sm:$0xff]
    %v5466 = vld [vmem:[#allocation3 + $0x250] sm:$0xff]
    %v5467 = vld [vmem:[#allocation3 + $0x258] sm:$0xff]
    %v5468 = vld [vmem:[#allocation3 + $0x260] sm:$0xff]
    %v5469 = vld [vmem:[#allocation3 + $0x268] sm:$0xff]
    %v5470 = vld [vmem:[#allocation3 + $0x270] sm:$0xff]
    %v5471 = vld [vmem:[#allocation3 + $0x278] sm:$0xff]
    %v5472 = vld [vmem:[#allocation3 + $0x280] sm:$0xff]
    %v5473 = vld [vmem:[#allocation3 + $0x288] sm:$0xff]
    %v5474 = vld [vmem:[#allocation3 + $0x290] sm:$0xff]
    %v5475 = vld [vmem:[#allocation3 + $0x298] sm:$0xff]
    %v5476 = vld [vmem:[#allocation3 + $0x2a0] sm:$0xff]
    %v5477 = vld [vmem:[#allocation3 + $0x2a8] sm:$0xff]
    %v5478 = vld [vmem:[#allocation3 + $0x2b0] sm:$0xff]
    %v5479 = vld [vmem:[#allocation3 + $0x2b8] sm:$0xff]
    %v5480 = vld [vmem:[#allocation3 + $0x2c0] sm:$0xff]
    %v5481 = vld [vmem:[#allocation3 + $0x2c8] sm:$0xff]
    %v5482 = vld [vmem:[#allocation3 + $0x2d0] sm:$0xff]
    %v5483 = vld [vmem:[#allocation3 + $0x2d8] sm:$0xff]
    %v5484 = vld [vmem:[#allocation3 + $0x2e0] sm:$0xff]
    %v5485 = vld [vmem:[#allocation3 + $0x2e8] sm:$0xff]
    %v5486 = vld [vmem:[#allocation3 + $0x2f0] sm:$0xff]
    %v5487 = vld [vmem:[#allocation3 + $0x2f8] sm:$0xff]
    %v5488 = vld [vmem:[#allocation3 + $0x300] sm:$0xff]
    %v5489 = vld [vmem:[#allocation3 + $0x308] sm:$0xff]
    %v5490 = vld [vmem:[#allocation3 + $0x310] sm:$0xff]
    %v5491 = vld [vmem:[#allocation3 + $0x318] sm:$0xff]
    %v5492 = vld [vmem:[#allocation3 + $0x320] sm:$0xff]
    %v5493 = vld [vmem:[#allocation3 + $0x328] sm:$0xff]
    %v5494 = vld [vmem:[#allocation3 + $0x330] sm:$0xff]
    %v5495 = vld [vmem:[#allocation3 + $0x338] sm:$0xff]
    %v5496 = vld [vmem:[#allocation3 + $0x340] sm:$0xff]
    %v5497 = vld [vmem:[#allocation3 + $0x348] sm:$0xff]
    %v5498 = vld [vmem:[#allocation3 + $0x350] sm:$0xff]
    %v5499 = vld [vmem:[#allocation3 + $0x358] sm:$0xff]
    %v5500 = vld [vmem:[#allocation3 + $0x360] sm:$0xff]
    %v5501 = vld [vmem:[#allocation3 + $0x368] sm:$0xff]
    %v5502 = vld [vmem:[#allocation3 + $0x370] sm:$0xff]
    %v5503 = vld [vmem:[#allocation3 + $0x378] sm:$0xff]
    %v5504 = vld [vmem:[#allocation3 + $0x380] sm:$0xff]
    %v5505 = vld [vmem:[#allocation3 + $0x388] sm:$0xff]
    %v5506 = vld [vmem:[#allocation3 + $0x390] sm:$0xff]
    %v5507 = vld [vmem:[#allocation3 + $0x398] sm:$0xff]
    %v5508 = vld [vmem:[#allocation3 + $0x3a0] sm:$0xff]
    %v5509 = vld [vmem:[#allocation3 + $0x3a8] sm:$0xff]
    %v5510 = vld [vmem:[#allocation3 + $0x3b0] sm:$0xff]
    %v5511 = vld [vmem:[#allocation3 + $0x3b8] sm:$0xff]
    %v5512 = vld [vmem:[#allocation3 + $0x3c0] sm:$0xff]
    %v5513 = vld [vmem:[#allocation3 + $0x3c8] sm:$0xff]
    %v5514 = vld [vmem:[#allocation3 + $0x3d0] sm:$0xff]
    %v5515 = vld [vmem:[#allocation3 + $0x3d8] sm:$0xff]
    %v5516 = vld [vmem:[#allocation3 + $0x3e0] sm:$0xff]
    %v5517 = vld [vmem:[#allocation3 + $0x3e8] sm:$0xff]
    %v5518 = vld [vmem:[#allocation3 + $0x3f0] sm:$0xff]
    %v5519 = vld [vmem:[#allocation3 + $0x3f8] sm:$0xff]
    %v5520 = vld [vmem:[#allocation3 + $0x400] sm:$0xff]
    %v5521 = vld [vmem:[#allocation3 + $0x408] sm:$0xff]
    %v5522 = vld [vmem:[#allocation3 + $0x410] sm:$0xff]
    %v5523 = vld [vmem:[#allocation3 + $0x418] sm:$0xff]
    %v5524 = vld [vmem:[#allocation3 + $0x420] sm:$0xff]
    %v5525 = vld [vmem:[#allocation3 + $0x428] sm:$0xff]
    %v5526 = vld [vmem:[#allocation3 + $0x430] sm:$0xff]
    %v5527 = vld [vmem:[#allocation3 + $0x438] sm:$0xff]
    %v5528 = vld [vmem:[#allocation3 + $0x440] sm:$0xff]
    %v5529 = vld [vmem:[#allocation3 + $0x448] sm:$0xff]
    %v5530 = vld [vmem:[#allocation3 + $0x450] sm:$0xff]
    %v5531 = vld [vmem:[#allocation3 + $0x458] sm:$0xff]
    %v5532 = vld [vmem:[#allocation3 + $0x460] sm:$0xff]
    %v5533 = vld [vmem:[#allocation3 + $0x468] sm:$0xff]
    %v5534 = vld [vmem:[#allocation3 + $0x470] sm:$0xff]
    %v5535 = vld [vmem:[#allocation3 + $0x478] sm:$0xff]
    %s5536 = scalar_lea.vmem [#allocation3], 1152
    %v5537 = vld [vmem:[%s5536] sm:$0xff]
    %v5538 = vld [vmem:[%s5536 + $0x8] sm:$0xff]
    %v5539 = vld [vmem:[%s5536 + $0x10] sm:$0xff]
    %v5540 = vld [vmem:[%s5536 + $0x18] sm:$0xff]
    %v5541 = vld [vmem:[%s5536 + $0x20] sm:$0xff]
    %v5542 = vld [vmem:[%s5536 + $0x28] sm:$0xff]
    %v5543 = vld [vmem:[%s5536 + $0x30] sm:$0xff]
    %v5544 = vld [vmem:[%s5536 + $0x38] sm:$0xff]
    %v5545 = vld [vmem:[%s5536 + $0x40] sm:$0xff]
    %v5546 = vld [vmem:[%s5536 + $0x48] sm:$0xff]
    %v5547 = vld [vmem:[%s5536 + $0x50] sm:$0xff]
    %v5548 = vld [vmem:[%s5536 + $0x58] sm:$0xff]
    %v5549 = vld [vmem:[%s5536 + $0x60] sm:$0xff]
    %v5550 = vld [vmem:[%s5536 + $0x68] sm:$0xff]
    %v5551 = vld [vmem:[%s5536 + $0x70] sm:$0xff]
    %v5552 = vld [vmem:[%s5536 + $0x78] sm:$0xff]
    %v5553 = vld [vmem:[%s5536 + $0x80] sm:$0xff]
    %v5554 = vld [vmem:[%s5536 + $0x88] sm:$0xff]
    %v5555 = vld [vmem:[%s5536 + $0x90] sm:$0xff]
    %v5556 = vld [vmem:[%s5536 + $0x98] sm:$0xff]
    %v5557 = vld [vmem:[%s5536 + $0xa0] sm:$0xff]
    %v5558 = vld [vmem:[%s5536 + $0xa8] sm:$0xff]
    %v5559 = vld [vmem:[%s5536 + $0xb0] sm:$0xff]
    %v5560 = vld [vmem:[%s5536 + $0xb8] sm:$0xff]
    %v5561 = vld [vmem:[%s5536 + $0xc0] sm:$0xff]
    %v5562 = vld [vmem:[%s5536 + $0xc8] sm:$0xff]
    %v5563 = vld [vmem:[%s5536 + $0xd0] sm:$0xff]
    %v5564 = vld [vmem:[%s5536 + $0xd8] sm:$0xff]
    %v5565 = vld [vmem:[%s5536 + $0xe0] sm:$0xff]
    %v5566 = vld [vmem:[%s5536 + $0xe8] sm:$0xff]
    %v5567 = vld [vmem:[%s5536 + $0xf0] sm:$0xff]
    %v5568 = vld [vmem:[%s5536 + $0xf8] sm:$0xff]
    %v5569 = vld [vmem:[%s5536 + $0x100] sm:$0xff]
    %v5570 = vld [vmem:[%s5536 + $0x108] sm:$0xff]
    %v5571 = vld [vmem:[%s5536 + $0x110] sm:$0xff]
    %v5572 = vld [vmem:[%s5536 + $0x118] sm:$0xff]
    %v5573 = vld [vmem:[%s5536 + $0x120] sm:$0xff]
    %v5574 = vld [vmem:[%s5536 + $0x128] sm:$0xff]
    %v5575 = vld [vmem:[%s5536 + $0x130] sm:$0xff]
    %v5576 = vld [vmem:[%s5536 + $0x138] sm:$0xff]
    %v5577 = vld [vmem:[%s5536 + $0x140] sm:$0xff]
    %v5578 = vld [vmem:[%s5536 + $0x148] sm:$0xff]
    %v5579 = vld [vmem:[%s5536 + $0x150] sm:$0xff]
    %v5580 = vld [vmem:[%s5536 + $0x158] sm:$0xff]
    %v5581 = vld [vmem:[%s5536 + $0x160] sm:$0xff]
    %v5582 = vld [vmem:[%s5536 + $0x168] sm:$0xff]
    %v5583 = vld [vmem:[%s5536 + $0x170] sm:$0xff]
    %v5584 = vld [vmem:[%s5536 + $0x178] sm:$0xff]
    %v5585 = vld [vmem:[%s5536 + $0x180] sm:$0xff]
    %v5586 = vld [vmem:[%s5536 + $0x188] sm:$0xff]
    %v5587 = vld [vmem:[%s5536 + $0x190] sm:$0xff]
    %v5588 = vld [vmem:[%s5536 + $0x198] sm:$0xff]
    %v5589 = vld [vmem:[%s5536 + $0x1a0] sm:$0xff]
    %v5590 = vld [vmem:[%s5536 + $0x1a8] sm:$0xff]
    %v5591 = vld [vmem:[%s5536 + $0x1b0] sm:$0xff]
    %v5592 = vld [vmem:[%s5536 + $0x1b8] sm:$0xff]
    %v5593 = vld [vmem:[%s5536 + $0x1c0] sm:$0xff]
    %v5594 = vld [vmem:[%s5536 + $0x1c8] sm:$0xff]
    %v5595 = vld [vmem:[%s5536 + $0x1d0] sm:$0xff]
    %v5596 = vld [vmem:[%s5536 + $0x1d8] sm:$0xff]
    %v5597 = vld [vmem:[%s5536 + $0x1e0] sm:$0xff]
    %v5598 = vld [vmem:[%s5536 + $0x1e8] sm:$0xff]
    %v5599 = vld [vmem:[%s5536 + $0x1f0] sm:$0xff]
    %v5600 = vld [vmem:[%s5536 + $0x1f8] sm:$0xff]
    %v5601 = vld [vmem:[%s5536 + $0x200] sm:$0xff]
    %v5602 = vld [vmem:[%s5536 + $0x208] sm:$0xff]
    %v5603 = vld [vmem:[%s5536 + $0x210] sm:$0xff]
    %v5604 = vld [vmem:[%s5536 + $0x218] sm:$0xff]
    %v5605 = vld [vmem:[%s5536 + $0x220] sm:$0xff]
    %v5606 = vld [vmem:[%s5536 + $0x228] sm:$0xff]
    %v5607 = vld [vmem:[%s5536 + $0x230] sm:$0xff]
    %v5608 = vld [vmem:[%s5536 + $0x238] sm:$0xff]
    %v5609 = vld [vmem:[%s5536 + $0x240] sm:$0xff]
    %v5610 = vld [vmem:[%s5536 + $0x248] sm:$0xff]
    %v5611 = vld [vmem:[%s5536 + $0x250] sm:$0xff]
    %v5612 = vld [vmem:[%s5536 + $0x258] sm:$0xff]
    %v5613 = vld [vmem:[%s5536 + $0x260] sm:$0xff]
    %v5614 = vld [vmem:[%s5536 + $0x268] sm:$0xff]
    %v5615 = vld [vmem:[%s5536 + $0x270] sm:$0xff]
    %v5616 = vld [vmem:[%s5536 + $0x278] sm:$0xff]
    %v5617 = vld [vmem:[%s5536 + $0x280] sm:$0xff]
    %v5618 = vld [vmem:[%s5536 + $0x288] sm:$0xff]
    %v5619 = vld [vmem:[%s5536 + $0x290] sm:$0xff]
    %v5620 = vld [vmem:[%s5536 + $0x298] sm:$0xff]
    %v5621 = vld [vmem:[%s5536 + $0x2a0] sm:$0xff]
    %v5622 = vld [vmem:[%s5536 + $0x2a8] sm:$0xff]
    %v5623 = vld [vmem:[%s5536 + $0x2b0] sm:$0xff]
    %v5624 = vld [vmem:[%s5536 + $0x2b8] sm:$0xff]
    %v5625 = vld [vmem:[%s5536 + $0x2c0] sm:$0xff]
    %v5626 = vld [vmem:[%s5536 + $0x2c8] sm:$0xff]
    %v5627 = vld [vmem:[%s5536 + $0x2d0] sm:$0xff]
    %v5628 = vld [vmem:[%s5536 + $0x2d8] sm:$0xff]
    %v5629 = vld [vmem:[%s5536 + $0x2e0] sm:$0xff]
    %v5630 = vld [vmem:[%s5536 + $0x2e8] sm:$0xff]
    %v5631 = vld [vmem:[%s5536 + $0x2f0] sm:$0xff]
    %v5632 = vld [vmem:[%s5536 + $0x2f8] sm:$0xff]
    %v5633 = vld [vmem:[%s5536 + $0x300] sm:$0xff]
    %v5634 = vld [vmem:[%s5536 + $0x308] sm:$0xff]
    %v5635 = vld [vmem:[%s5536 + $0x310] sm:$0xff]
    %v5636 = vld [vmem:[%s5536 + $0x318] sm:$0xff]
    %v5637 = vld [vmem:[%s5536 + $0x320] sm:$0xff]
    %v5638 = vld [vmem:[%s5536 + $0x328] sm:$0xff]
    %v5639 = vld [vmem:[%s5536 + $0x330] sm:$0xff]
    %v5640 = vld [vmem:[%s5536 + $0x338] sm:$0xff]
    %v5641 = vld [vmem:[%s5536 + $0x340] sm:$0xff]
    %v5642 = vld [vmem:[%s5536 + $0x348] sm:$0xff]
    %v5643 = vld [vmem:[%s5536 + $0x350] sm:$0xff]
    %v5644 = vld [vmem:[%s5536 + $0x358] sm:$0xff]
    %v5645 = vld [vmem:[%s5536 + $0x360] sm:$0xff]
    %v5646 = vld [vmem:[%s5536 + $0x368] sm:$0xff]
    %v5647 = vld [vmem:[%s5536 + $0x370] sm:$0xff]
    %v5648 = vld [vmem:[%s5536 + $0x378] sm:$0xff]
    %v5649 = vld [vmem:[%s5536 + $0x380] sm:$0xff]
    %v5650 = vld [vmem:[%s5536 + $0x388] sm:$0xff]
    %v5651 = vld [vmem:[%s5536 + $0x390] sm:$0xff]
    %v5652 = vld [vmem:[%s5536 + $0x398] sm:$0xff]
    %v5653 = vld [vmem:[%s5536 + $0x3a0] sm:$0xff]
    %v5654 = vld [vmem:[%s5536 + $0x3a8] sm:$0xff]
    %v5655 = vld [vmem:[%s5536 + $0x3b0] sm:$0xff]
    %v5656 = vld [vmem:[%s5536 + $0x3b8] sm:$0xff]
    %v5657 = vld [vmem:[%s5536 + $0x3c0] sm:$0xff]
    %v5658 = vld [vmem:[%s5536 + $0x3c8] sm:$0xff]
    %v5659 = vld [vmem:[%s5536 + $0x3d0] sm:$0xff]
    %v5660 = vld [vmem:[%s5536 + $0x3d8] sm:$0xff]
    %v5661 = vld [vmem:[%s5536 + $0x3e0] sm:$0xff]
    %v5662 = vld [vmem:[%s5536 + $0x3e8] sm:$0xff]
    %v5663 = vld [vmem:[%s5536 + $0x3f0] sm:$0xff]
    %v5664 = vld [vmem:[%s5536 + $0x3f8] sm:$0xff]
    %v5665 = vld [vmem:[%s5536 + $0x400] sm:$0xff]
    %v5666 = vld [vmem:[%s5536 + $0x408] sm:$0xff]
    %v5667 = vld [vmem:[%s5536 + $0x410] sm:$0xff]
    %v5668 = vld [vmem:[%s5536 + $0x418] sm:$0xff]
    %v5669 = vld [vmem:[%s5536 + $0x420] sm:$0xff]
    %v5670 = vld [vmem:[%s5536 + $0x428] sm:$0xff]
    %v5671 = vld [vmem:[%s5536 + $0x430] sm:$0xff]
    %v5672 = vld [vmem:[%s5536 + $0x438] sm:$0xff]
    %v5673 = vld [vmem:[%s5536 + $0x440] sm:$0xff]
    %v5674 = vld [vmem:[%s5536 + $0x448] sm:$0xff]
    %v5675 = vld [vmem:[%s5536 + $0x450] sm:$0xff]
    %v5676 = vld [vmem:[%s5536 + $0x458] sm:$0xff]
    %v5677 = vld [vmem:[%s5536 + $0x460] sm:$0xff]
    %v5678 = vld [vmem:[%s5536 + $0x468] sm:$0xff]
    %v5679 = vld [vmem:[%s5536 + $0x470] sm:$0xff]
    %v5680 = vld [vmem:[%s5536 + $0x478] sm:$0xff]
    %v5682 = vshrl.u32 %v5377, 16
    %v5684 = vshll.u32 %v5377, 16
    %v5686 = vrot.slane %v5684, 1
    %v5687 = vor.u32 %v5682, %v5686
    %v5689 = vshll.u32 %v5382, 16
    %v5691 = vrot.slane %v5689, 1
    %v5692 = vsel %vm690, %v5687, %v5691
    %v5694 = vshrl.u32 %v5378, 16
    %v5696 = vshll.u32 %v5378, 16
    %v5698 = vrot.slane %v5696, 1
    %v5699 = vor.u32 %v5694, %v5698
    %v5701 = vshll.u32 %v5383, 16
    %v5703 = vrot.slane %v5701, 1
    %v5704 = vsel %vm690, %v5699, %v5703
    %v5706 = vshrl.u32 %v5379, 16
    %v5708 = vshll.u32 %v5379, 16
    %v5710 = vrot.slane %v5708, 1
    %v5711 = vor.u32 %v5706, %v5710
    %v5713 = vshll.u32 %v5384, 16
    %v5715 = vrot.slane %v5713, 1
    %v5716 = vsel %vm690, %v5711, %v5715
    %v5718 = vshrl.u32 %v5380, 16
    %v5720 = vshll.u32 %v5380, 16
    %v5722 = vrot.slane %v5720, 1
    %v5723 = vor.u32 %v5718, %v5722
    %v5725 = vshll.u32 %v5385, 16
    %v5727 = vrot.slane %v5725, 1
    %v5728 = vsel %vm690, %v5723, %v5727
    %v5730 = vshrl.u32 %v5381, 16
    %v5732 = vshll.u32 %v5381, 16
    %v5734 = vrot.slane %v5732, 1
    %v5735 = vor.u32 %v5730, %v5734
    %v5737 = vshll.u32 %v5386, 16
    %v5739 = vrot.slane %v5737, 1
    %v5740 = vsel %vm690, %v5735, %v5739
    %v5741 = vshrl.u32 %v5382, 16
    %v5743 = vor.u32 %v5741, %v5691
    %v5745 = vshll.u32 %v5387, 16
    %v5747 = vrot.slane %v5745, 1
    %v5748 = vsel %vm690, %v5743, %v5747
    %v5749 = vshrl.u32 %v5383, 16
    %v5751 = vor.u32 %v5749, %v5703
    %v5753 = vshll.u32 %v5388, 16
    %v5755 = vrot.slane %v5753, 1
    %v5756 = vsel %vm690, %v5751, %v5755
    %v5757 = vshrl.u32 %v5384, 16
    %v5759 = vor.u32 %v5757, %v5715
    %v5761 = vshll.u32 %v5389, 16
    %v5763 = vrot.slane %v5761, 1
    %v5764 = vsel %vm690, %v5759, %v5763
    %v5765 = vshrl.u32 %v5385, 16
    %v5767 = vor.u32 %v5765, %v5727
    %v5769 = vshll.u32 %v5390, 16
    %v5771 = vrot.slane %v5769, 1
    %v5772 = vsel %vm690, %v5767, %v5771
    %v5773 = vshrl.u32 %v5386, 16
    %v5775 = vor.u32 %v5773, %v5739
    %v5777 = vshll.u32 %v5391, 16
    %v5779 = vrot.slane %v5777, 1
    %v5780 = vsel %vm690, %v5775, %v5779
    %v5781 = vshrl.u32 %v5387, 16
    %v5783 = vor.u32 %v5781, %v5747
    %v5784 = vshrl.u32 %v5388, 16
    %v5786 = vor.u32 %v5784, %v5755
    %v5787 = vshrl.u32 %v5389, 16
    %v5789 = vor.u32 %v5787, %v5763
    %v5790 = vshrl.u32 %v5390, 16
    %v5792 = vor.u32 %v5790, %v5771
    %v5793 = vshrl.u32 %v5391, 16
    %v5795 = vor.u32 %v5793, %v5779
    %v5809 = vsel %vm153, %v5740, 0
    %v5812 = vsel %vm153, %v5780, 0
    %v5815 = vsel %vm153, %v5795, 0
    %5817 = vmatprep.subr.bf16.mxu0 %v5538
    %5818 = vmatpush1.bf16.msra.mxu0 %v5537
    %5819 = vmatprep.subr.bf16.mxu0 %v5542
    %5820 = vmatpush1.bf16.msra.mxu0 %v5541
    %5821 = vmatprep.subr.bf16.mxu0 %v5546
    %5822 = vmatpush1.bf16.msra.mxu0 %v5545
    %5823 = vmatprep.subr.bf16.mxu0 %v5550
    %5824 = vmatpush1.bf16.msra.mxu0 %v5549
    %5825 = vmatprep.subr.bf16.mxu0 %v5554
    %5826 = vmatpush1.bf16.msra.mxu0 %v5553
    %5827 = vmatprep.subr.bf16.mxu0 %v5558
    %5828 = vmatpush1.bf16.msra.mxu0 %v5557
    %5829 = vmatprep.subr.bf16.mxu0 %v5562
    %5830 = vmatpush1.bf16.msra.mxu0 %v5561
    %5831 = vmatprep.subr.bf16.mxu0 %v5566
    %5832 = vmatpush1.bf16.msra.mxu0 %v5565
    %5833 = vmatprep.subr.bf16.mxu0 %v5570
    %5834 = vmatpush1.bf16.msra.mxu0 %v5569
    %5835 = vmatprep.subr.bf16.mxu0 %v5574
    %5836 = vmatpush1.bf16.msra.mxu0 %v5573
    %5837 = vmatprep.subr.bf16.mxu0 %v5578
    %5838 = vmatpush1.bf16.msra.mxu0 %v5577
    %5839 = vmatprep.subr.bf16.mxu0 %v5582
    %5840 = vmatpush1.bf16.msra.mxu0 %v5581
    %5841 = vmatprep.subr.bf16.mxu0 %v5586
    %5842 = vmatpush1.bf16.msra.mxu0 %v5585
    %5843 = vmatprep.subr.bf16.mxu0 %v5590
    %5844 = vmatpush1.bf16.msra.mxu0 %v5589
    %5845 = vmatprep.subr.bf16.mxu0 %v5594
    %5846 = vmatpush1.bf16.msra.mxu0 %v5593
    %5847 = vmatprep.subr.bf16.mxu0 %v5598
    %5848 = vmatpush1.bf16.msra.mxu0 %v5597
    %5849 = vmatprep.mubr.bf16.mxu0 %v5704
    %5850 = vmatmul.mubr.bf16.gmra.mrb[0].mxu0 %v5692
    %v5851 = vpop.f32.mrb[0].mxu0
    %v5852 = vadd.f32 0.0, %v5851
    %v5853 = vpop.f32.mrb[0].mxu0
    %v5854 = vadd.f32 0.0, %v5853
    %v5855 = vpop.f32.mrb[0].mxu0
    %v5856 = vadd.f32 0.0, %v5855
    %v5857 = vpop.f32.mrb[0].mxu0
    %v5858 = vadd.f32 0.0, %v5857
    %5859 = vmatprep.mubr.bf16.mxu0 %v5756
    %5860 = vmatmul.mubr.bf16.gmra.mrb[0].mxu0 %v5748
    %v5861 = vpop.f32.mrb[0].mxu0
    %v5862 = vadd.f32 0.0, %v5861
    %v5863 = vpop.f32.mrb[0].mxu0
    %v5864 = vadd.f32 0.0, %v5863
    %v5865 = vpop.f32.mrb[0].mxu0
    %v5866 = vadd.f32 0.0, %v5865
    %v5867 = vpop.f32.mrb[0].mxu0
    %v5868 = vadd.f32 0.0, %v5867
    %5869 = vmatprep.mubr.bf16.mxu0 %v5786
    %5870 = vmatmul.mubr.bf16.gmra.mrb[0].mxu0 %v5783
    %v5871 = vpop.f32.mrb[0].mxu0
    %v5872 = vadd.f32 0.0, %v5871
    %v5873 = vpop.f32.mrb[0].mxu0
    %v5874 = vadd.f32 0.0, %v5873
    %v5875 = vpop.f32.mrb[0].mxu0
    %v5876 = vpop.f32.mrb[0].mxu0
    %5877 = vdwg.mxu0
    %5878 = vmatprep.subr.bf16.mxu0 %v5602
    %5879 = vmatpush1.bf16.msra.mxu0 %v5601
    %5880 = vmatprep.subr.bf16.mxu0 %v5606
    %5881 = vmatpush1.bf16.msra.mxu0 %v5605
    %5882 = vmatprep.subr.bf16.mxu0 %v5610
    %5883 = vmatpush1.bf16.msra.mxu0 %v5609
    %5884 = vmatprep.subr.bf16.mxu0 %v5614
    %5885 = vmatpush1.bf16.msra.mxu0 %v5613
    %5886 = vmatprep.subr.bf16.mxu0 %v5618
    %5887 = vmatpush1.bf16.msra.mxu0 %v5617
    %5888 = vmatprep.subr.bf16.mxu0 %v5622
    %5889 = vmatpush1.bf16.msra.mxu0 %v5621
    %5890 = vmatprep.subr.bf16.mxu0 %v5626
    %5891 = vmatpush1.bf16.msra.mxu0 %v5625
    %5892 = vmatprep.subr.bf16.mxu0 %v5630
    %5893 = vmatpush1.bf16.msra.mxu0 %v5629
    %5894 = vmatprep.subr.bf16.mxu0 %v5634
    %5895 = vmatpush1.bf16.msra.mxu0 %v5633
    %5896 = vmatprep.subr.bf16.mxu0 %v5638
    %5897 = vmatpush1.bf16.msra.mxu0 %v5637
    %5898 = vmatprep.subr.bf16.mxu0 %v5642
    %5899 = vmatpush1.bf16.msra.mxu0 %v5641
    %5900 = vmatprep.subr.bf16.mxu0 %v5646
    %5901 = vmatpush1.bf16.msra.mxu0 %v5645
    %5902 = vmatprep.subr.bf16.mxu0 %v5650
    %5903 = vmatpush1.bf16.msra.mxu0 %v5649
    %5904 = vmatprep.subr.bf16.mxu0 %v5654
    %5905 = vmatpush1.bf16.msra.mxu0 %v5653
    %5906 = vmatprep.subr.bf16.mxu0 %v5658
    %5907 = vmatpush1.bf16.msra.mxu0 %v5657
    %5908 = vmatprep.subr.bf16.mxu0 %v5662
    %5909 = vmatpush1.bf16.msra.mxu0 %v5661
    %5910 = vmatprep.mubr.bf16.mxu0 %v5728
    %5911 = vmatmul.mubr.bf16.gmra.mrb[0].mxu0 %v5716
    %v5912 = vpop.f32.mrb[0].mxu0
    %v5913 = vadd.f32 %v5852, %v5912
    %v5914 = vpop.f32.mrb[0].mxu0
    %v5915 = vadd.f32 %v5854, %v5914
    %v5916 = vpop.f32.mrb[0].mxu0
    %v5917 = vadd.f32 %v5856, %v5916
    %v5918 = vpop.f32.mrb[0].mxu0
    %v5919 = vadd.f32 %v5858, %v5918
    %5920 = vmatprep.mubr.bf16.mxu0 %v5772
    %5921 = vmatmul.mubr.bf16.gmra.mrb[0].mxu0 %v5764
    %v5922 = vpop.f32.mrb[0].mxu0
    %v5923 = vadd.f32 %v5862, %v5922
    %v5924 = vpop.f32.mrb[0].mxu0
    %v5925 = vadd.f32 %v5864, %v5924
    %v5926 = vpop.f32.mrb[0].mxu0
    %v5927 = vadd.f32 %v5866, %v5926
    %v5928 = vpop.f32.mrb[0].mxu0
    %v5929 = vadd.f32 %v5868, %v5928
    %5930 = vmatprep.mubr.bf16.mxu0 %v5792
    %5931 = vmatmul.mubr.bf16.gmra.mrb[0].mxu0 %v5789
    %v5932 = vpop.f32.mrb[0].mxu0
    %v5933 = vadd.f32 %v5872, %v5932
    %v5934 = vpop.f32.mrb[0].mxu0
    %v5935 = vadd.f32 %v5874, %v5934
    %v5936 = vpop.f32.mrb[0].mxu0
    %v5937 = vpop.f32.mrb[0].mxu0
    %5938 = vdwg.mxu0
    %5939 = vmatprep.subr.bf16.mxu0 %v5666
    %5940 = vmatpush1.bf16.msra.mxu0 %v5665
    %5941 = vmatprep.subr.bf16.mxu0 %v5670
    %5942 = vmatpush1.bf16.msra.mxu0 %v5669
    %5943 = vmatprep.subr.bf16.mxu0 %v5674
    %5944 = vmatpush1.bf16.msra.mxu0 %v5673
    %5945 = vmatprep.subr.bf16.mxu0 %v5678
    %5946 = vmatpush1.bf16.msra.mxu0 %v5677
    %5947 = vmatprep.subr.bf16.mxu0 0
    %5948 = vmatpush1.bf16.msra.mxu0 0
    %5949 = vmatprep.subr.bf16.mxu0 0
    %5950 = vmatpush1.bf16.msra.mxu0 0
    %5951 = vmatprep.subr.bf16.mxu0 0
    %5952 = vmatpush1.bf16.msra.mxu0 0
    %5953 = vmatprep.subr.bf16.mxu0 0
    %5954 = vmatpush1.bf16.msra.mxu0 0
    %5955 = vmatprep.subr.bf16.mxu0 0
    %5956 = vmatpush1.bf16.msra.mxu0 0
    %5957 = vmatprep.subr.bf16.mxu0 0
    %5958 = vmatpush1.bf16.msra.mxu0 0
    %5959 = vmatprep.subr.bf16.mxu0 0
    %5960 = vmatpush1.bf16.msra.mxu0 0
    %5961 = vmatprep.subr.bf16.mxu0 0
    %5962 = vmatpush1.bf16.msra.mxu0 0
    %5963 = vmatprep.subr.bf16.mxu0 0
    %5964 = vmatpush1.bf16.msra.mxu0 0
    %5965 = vmatprep.subr.bf16.mxu0 0
    %5966 = vmatpush1.bf16.msra.mxu0 0
    %5967 = vmatprep.subr.bf16.mxu0 0
    %5968 = vmatpush1.bf16.msra.mxu0 0
    %5969 = vmatprep.subr.bf16.mxu0 0
    %5970 = vmatpush1.bf16.msra.mxu0 0
    %5971 = vmatprep.mubr.bf16.mxu0 0
    %5972 = vmatmul.mubr.bf16.gmra.mrb[0].mxu0 %v5809
    %v5973 = vpop.f32.mrb[0].mxu0
    %v5974 = vadd.f32 %v5913, %v5973
    %v5975 = vpop.f32.mrb[0].mxu0
    %v5976 = vadd.f32 %v5915, %v5975
    %v5977 = vpop.f32.mrb[0].mxu0
    %v5978 = vadd.f32 %v5917, %v5977
    %v5979 = vpop.f32.mrb[0].mxu0
    %v5980 = vadd.f32 %v5919, %v5979
    %5981 = vmatprep.mubr.bf16.mxu0 0
    %5982 = vmatmul.mubr.bf16.gmra.mrb[0].mxu0 %v5812
    %v5983 = vpop.f32.mrb[0].mxu0
    %v5984 = vadd.f32 %v5923, %v5983
    %v5985 = vpop.f32.mrb[0].mxu0
    %v5986 = vadd.f32 %v5925, %v5985
    %v5987 = vpop.f32.mrb[0].mxu0
    %v5988 = vadd.f32 %v5927, %v5987
    %v5989 = vpop.f32.mrb[0].mxu0
    %v5990 = vadd.f32 %v5929, %v5989
    %5991 = vmatprep.mubr.bf16.mxu0 0
    %5992 = vmatmul.mubr.bf16.gmra.mrb[0].mxu0 %v5815
    %v5993 = vpop.f32.mrb[0].mxu0
    %v5994 = vadd.f32 %v5933, %v5993
    %v5995 = vpop.f32.mrb[0].mxu0
    %v5996 = vadd.f32 %v5935, %v5995
    %v5997 = vpop.f32.mrb[0].mxu0
    %v5998 = vpop.f32.mrb[0].mxu0
    %5999 = vdwg.mxu0
    %6000 = vmatprep.subr.bf16.mxu0 %v5540
    %6001 = vmatpush1.bf16.msra.mxu0 %v5539
    %6002 = vmatprep.subr.bf16.mxu0 %v5544
    %6003 = vmatpush1.bf16.msra.mxu0 %v5543
    %6004 = vmatprep.subr.bf16.mxu0 %v5548
    %6005 = vmatpush1.bf16.msra.mxu0 %v5547
    %6006 = vmatprep.subr.bf16.mxu0 %v5552
    %6007 = vmatpush1.bf16.msra.mxu0 %v5551
    %6008 = vmatprep.subr.bf16.mxu0 %v5556
    %6009 = vmatpush1.bf16.msra.mxu0 %v5555
    %6010 = vmatprep.subr.bf16.mxu0 %v5560
    %6011 = vmatpush1.bf16.msra.mxu0 %v5559
    %6012 = vmatprep.subr.bf16.mxu0 %v5564
    %6013 = vmatpush1.bf16.msra.mxu0 %v5563
    %6014 = vmatprep.subr.bf16.mxu0 %v5568
    %6015 = vmatpush1.bf16.msra.mxu0 %v5567
    %6016 = vmatprep.subr.bf16.mxu0 %v5572
    %6017 = vmatpush1.bf16.msra.mxu0 %v5571
    %6018 = vmatprep.subr.bf16.mxu0 %v5576
    %6019 = vmatpush1.bf16.msra.mxu0 %v5575
    %6020 = vmatprep.subr.bf16.mxu0 %v5580
    %6021 = vmatpush1.bf16.msra.mxu0 %v5579
    %6022 = vmatprep.subr.bf16.mxu0 %v5584
    %6023 = vmatpush1.bf16.msra.mxu0 %v5583
    %6024 = vmatprep.subr.bf16.mxu0 %v5588
    %6025 = vmatpush1.bf16.msra.mxu0 %v5587
    %6026 = vmatprep.subr.bf16.mxu0 %v5592
    %6027 = vmatpush1.bf16.msra.mxu0 %v5591
    %6028 = vmatprep.subr.bf16.mxu0 %v5596
    %6029 = vmatpush1.bf16.msra.mxu0 %v5595
    %6030 = vmatprep.subr.bf16.mxu0 %v5600
    %6031 = vmatpush1.bf16.msra.mxu0 %v5599
    %6032 = vmatprep.mubr.bf16.mxu0 %v5704
    %6033 = vmatmul.mubr.bf16.gmra.mrb[0].mxu0 %v5692
    %v6034 = vpop.f32.mrb[0].mxu0
    %v6035 = vadd.f32 0.0, %v6034
    %v6036 = vpop.f32.mrb[0].mxu0
    %v6037 = vadd.f32 0.0, %v6036
    %v6038 = vpop.f32.mrb[0].mxu0
    %v6039 = vadd.f32 0.0, %v6038
    %v6040 = vpop.f32.mrb[0].mxu0
    %v6041 = vadd.f32 0.0, %v6040
    %6042 = vmatprep.mubr.bf16.mxu0 %v5756
    %6043 = vmatmul.mubr.bf16.gmra.mrb[0].mxu0 %v5748
    %v6044 = vpop.f32.mrb[0].mxu0
    %v6045 = vadd.f32 0.0, %v6044
    %v6046 = vpop.f32.mrb[0].mxu0
    %v6047 = vadd.f32 0.0, %v6046
    %v6048 = vpop.f32.mrb[0].mxu0
    %v6049 = vadd.f32 0.0, %v6048
    %v6050 = vpop.f32.mrb[0].mxu0
    %v6051 = vadd.f32 0.0, %v6050
    %6052 = vmatprep.mubr.bf16.mxu0 %v5786
    %6053 = vmatmul.mubr.bf16.gmra.mrb[0].mxu0 %v5783
    %v6054 = vpop.f32.mrb[0].mxu0
    %v6055 = vadd.f32 0.0, %v6054
    %v6056 = vpop.f32.mrb[0].mxu0
    %v6057 = vadd.f32 0.0, %v6056
    %v6058 = vpop.f32.mrb[0].mxu0
    %v6059 = vpop.f32.mrb[0].mxu0
    %6060 = vdwg.mxu0
    %6061 = vmatprep.subr.bf16.mxu0 %v5604
    %6062 = vmatpush1.bf16.msra.mxu0 %v5603
    %6063 = vmatprep.subr.bf16.mxu0 %v5608
    %6064 = vmatpush1.bf16.msra.mxu0 %v5607
    %6065 = vmatprep.subr.bf16.mxu0 %v5612
    %6066 = vmatpush1.bf16.msra.mxu0 %v5611
    %6067 = vmatprep.subr.bf16.mxu0 %v5616
    %6068 = vmatpush1.bf16.msra.mxu0 %v5615
    %6069 = vmatprep.subr.bf16.mxu0 %v5620
    %6070 = vmatpush1.bf16.msra.mxu0 %v5619
    %6071 = vmatprep.subr.bf16.mxu0 %v5624
    %6072 = vmatpush1.bf16.msra.mxu0 %v5623
    %6073 = vmatprep.subr.bf16.mxu0 %v5628
    %6074 = vmatpush1.bf16.msra.mxu0 %v5627
    %6075 = vmatprep.subr.bf16.mxu0 %v5632
    %6076 = vmatpush1.bf16.msra.mxu0 %v5631
    %6077 = vmatprep.subr.bf16.mxu0 %v5636
    %6078 = vmatpush1.bf16.msra.mxu0 %v5635
    %6079 = vmatprep.subr.bf16.mxu0 %v5640
    %6080 = vmatpush1.bf16.msra.mxu0 %v5639
    %6081 = vmatprep.subr.bf16.mxu0 %v5644
    %6082 = vmatpush1.bf16.msra.mxu0 %v5643
    %6083 = vmatprep.subr.bf16.mxu0 %v5648
    %6084 = vmatpush1.bf16.msra.mxu0 %v5647
    %6085 = vmatprep.subr.bf16.mxu0 %v5652
    %6086 = vmatpush1.bf16.msra.mxu0 %v5651
    %6087 = vmatprep.subr.bf16.mxu0 %v5656
    %6088 = vmatpush1.bf16.msra.mxu0 %v5655
    %6089 = vmatprep.subr.bf16.mxu0 %v5660
    %6090 = vmatpush1.bf16.msra.mxu0 %v5659
    %6091 = vmatprep.subr.bf16.mxu0 %v5664
    %6092 = vmatpush1.bf16.msra.mxu0 %v5663
    %6093 = vmatprep.mubr.bf16.mxu0 %v5728
    %6094 = vmatmul.mubr.bf16.gmra.mrb[0].mxu0 %v5716
    %v6095 = vpop.f32.mrb[0].mxu0
    %v6096 = vadd.f32 %v6035, %v6095
    %v6097 = vpop.f32.mrb[0].mxu0
    %v6098 = vadd.f32 %v6037, %v6097
    %v6099 = vpop.f32.mrb[0].mxu0
    %v6100 = vadd.f32 %v6039, %v6099
    %v6101 = vpop.f32.mrb[0].mxu0
    %v6102 = vadd.f32 %v6041, %v6101
    %6103 = vmatprep.mubr.bf16.mxu0 %v5772
    %6104 = vmatmul.mubr.bf16.gmra.mrb[0].mxu0 %v5764
    %v6105 = vpop.f32.mrb[0].mxu0
    %v6106 = vadd.f32 %v6045, %v6105
    %v6107 = vpop.f32.mrb[0].mxu0
    %v6108 = vadd.f32 %v6047, %v6107
    %v6109 = vpop.f32.mrb[0].mxu0
    %v6110 = vadd.f32 %v6049, %v6109
    %v6111 = vpop.f32.mrb[0].mxu0
    %v6112 = vadd.f32 %v6051, %v6111
    %6113 = vmatprep.mubr.bf16.mxu0 %v5792
    %6114 = vmatmul.mubr.bf16.gmra.mrb[0].mxu0 %v5789
    %v6115 = vpop.f32.mrb[0].mxu0
    %v6116 = vadd.f32 %v6055, %v6115
    %v6117 = vpop.f32.mrb[0].mxu0
    %v6118 = vadd.f32 %v6057, %v6117
    %v6119 = vpop.f32.mrb[0].mxu0
    %v6120 = vpop.f32.mrb[0].mxu0
    %6121 = vdwg.mxu0
    %6122 = vmatprep.subr.bf16.mxu0 %v5668
    %6123 = vmatpush1.bf16.msra.mxu0 %v5667
    %6124 = vmatprep.subr.bf16.mxu0 %v5672
    %6125 = vmatpush1.bf16.msra.mxu0 %v5671
    %6126 = vmatprep.subr.bf16.mxu0 %v5676
    %6127 = vmatpush1.bf16.msra.mxu0 %v5675
    %6128 = vmatprep.subr.bf16.mxu0 %v5680
    %6129 = vmatpush1.bf16.msra.mxu0 %v5679
    %6130 = vmatprep.subr.bf16.mxu0 0
    %6131 = vmatpush1.bf16.msra.mxu0 0
    %6132 = vmatprep.subr.bf16.mxu0 0
    %6133 = vmatpush1.bf16.msra.mxu0 0
    %6134 = vmatprep.subr.bf16.mxu0 0
    %6135 = vmatpush1.bf16.msra.mxu0 0
    %6136 = vmatprep.subr.bf16.mxu0 0
    %6137 = vmatpush1.bf16.msra.mxu0 0
    %6138 = vmatprep.subr.bf16.mxu0 0
    %6139 = vmatpush1.bf16.msra.mxu0 0
    %6140 = vmatprep.subr.bf16.mxu0 0
    %6141 = vmatpush1.bf16.msra.mxu0 0
    %6142 = vmatprep.subr.bf16.mxu0 0
    %6143 = vmatpush1.bf16.msra.mxu0 0
    %6144 = vmatprep.subr.bf16.mxu0 0
    %6145 = vmatpush1.bf16.msra.mxu0 0
    %6146 = vmatprep.subr.bf16.mxu0 0
    %6147 = vmatpush1.bf16.msra.mxu0 0
    %6148 = vmatprep.subr.bf16.mxu0 0
    %6149 = vmatpush1.bf16.msra.mxu0 0
    %6150 = vmatprep.subr.bf16.mxu0 0
    %6151 = vmatpush1.bf16.msra.mxu0 0
    %6152 = vmatprep.subr.bf16.mxu0 0
    %6153 = vmatpush1.bf16.msra.mxu0 0
    %6154 = vmatprep.mubr.bf16.mxu0 0
    %6155 = vmatmul.mubr.bf16.gmra.mrb[0].mxu0 %v5809
    %v6156 = vpop.f32.mrb[0].mxu0
    %v6157 = vadd.f32 %v6096, %v6156
    %v6158 = vpop.f32.mrb[0].mxu0
    %v6159 = vadd.f32 %v6098, %v6158
    %v6160 = vpop.f32.mrb[0].mxu0
    %v6161 = vadd.f32 %v6100, %v6160
    %v6162 = vpop.f32.mrb[0].mxu0
    %v6163 = vadd.f32 %v6102, %v6162
    %6164 = vmatprep.mubr.bf16.mxu0 0
    %6165 = vmatmul.mubr.bf16.gmra.mrb[0].mxu0 %v5812
    %v6166 = vpop.f32.mrb[0].mxu0
    %v6167 = vadd.f32 %v6106, %v6166
    %v6168 = vpop.f32.mrb[0].mxu0
    %v6169 = vadd.f32 %v6108, %v6168
    %v6170 = vpop.f32.mrb[0].mxu0
    %v6171 = vadd.f32 %v6110, %v6170
    %v6172 = vpop.f32.mrb[0].mxu0
    %v6173 = vadd.f32 %v6112, %v6172
    %6174 = vmatprep.mubr.bf16.mxu0 0
    %6175 = vmatmul.mubr.bf16.gmra.mrb[0].mxu0 %v5815
    %v6176 = vpop.f32.mrb[0].mxu0
    %v6177 = vadd.f32 %v6116, %v6176
    %v6178 = vpop.f32.mrb[0].mxu0
    %v6179 = vadd.f32 %v6118, %v6178
    %v6180 = vpop.f32.mrb[0].mxu0
    %v6181 = vpop.f32.mrb[0].mxu0
    %6182 = vdwg.mxu0
    %v6183 = vsel %vm153, %v5381, 0
    %v6185 = vsel %vm153, %v5386, 0
    %v6187 = vsel %vm153, %v5391, 0
    %6189 = vmatprep.subr.bf16.mxu0 %v5393
    %6190 = vmatpush1.bf16.msra.mxu0 %v5392
    %6191 = vmatprep.subr.bf16.mxu0 %v5397
    %6192 = vmatpush1.bf16.msra.mxu0 %v5396
    %6193 = vmatprep.subr.bf16.mxu0 %v5401
    %6194 = vmatpush1.bf16.msra.mxu0 %v5400
    %6195 = vmatprep.subr.bf16.mxu0 %v5405
    %6196 = vmatpush1.bf16.msra.mxu0 %v5404
    %6197 = vmatprep.subr.bf16.mxu0 %v5409
    %6198 = vmatpush1.bf16.msra.mxu0 %v5408
    %6199 = vmatprep.subr.bf16.mxu0 %v5413
    %6200 = vmatpush1.bf16.msra.mxu0 %v5412
    %6201 = vmatprep.subr.bf16.mxu0 %v5417
    %6202 = vmatpush1.bf16.msra.mxu0 %v5416
    %6203 = vmatprep.subr.bf16.mxu0 %v5421
    %6204 = vmatpush1.bf16.msra.mxu0 %v5420
    %6205 = vmatprep.subr.bf16.mxu0 %v5425
    %6206 = vmatpush1.bf16.msra.mxu0 %v5424
    %6207 = vmatprep.subr.bf16.mxu0 %v5429
    %6208 = vmatpush1.bf16.msra.mxu0 %v5428
    %6209 = vmatprep.subr.bf16.mxu0 %v5433
    %6210 = vmatpush1.bf16.msra.mxu0 %v5432
    %6211 = vmatprep.subr.bf16.mxu0 %v5437
    %6212 = vmatpush1.bf16.msra.mxu0 %v5436
    %6213 = vmatprep.subr.bf16.mxu0 %v5441
    %6214 = vmatpush1.bf16.msra.mxu0 %v5440
    %6215 = vmatprep.subr.bf16.mxu0 %v5445
    %6216 = vmatpush1.bf16.msra.mxu0 %v5444
    %6217 = vmatprep.subr.bf16.mxu0 %v5449
    %6218 = vmatpush1.bf16.msra.mxu0 %v5448
    %6219 = vmatprep.subr.bf16.mxu0 %v5453
    %6220 = vmatpush1.bf16.msra.mxu0 %v5452
    %6221 = vmatprep.mubr.bf16.mxu0 %v5378
    %6222 = vmatmul.mubr.bf16.gmra.mrb[0].mxu0 %v5377
    %v6223 = vpop.f32.mrb[0].mxu0
    %v6224 = vadd.f32 %v5974, %v6223
    %v6225 = vpop.f32.mrb[0].mxu0
    %v6226 = vadd.f32 %v5976, %v6225
    %v6227 = vpop.f32.mrb[0].mxu0
    %v6228 = vadd.f32 %v5978, %v6227
    %v6229 = vpop.f32.mrb[0].mxu0
    %v6230 = vadd.f32 %v5980, %v6229
    %6231 = vmatprep.mubr.bf16.mxu0 %v5383
    %6232 = vmatmul.mubr.bf16.gmra.mrb[0].mxu0 %v5382
    %v6233 = vpop.f32.mrb[0].mxu0
    %v6234 = vadd.f32 %v5984, %v6233
    %v6235 = vpop.f32.mrb[0].mxu0
    %v6236 = vadd.f32 %v5986, %v6235
    %v6237 = vpop.f32.mrb[0].mxu0
    %v6238 = vadd.f32 %v5988, %v6237
    %v6239 = vpop.f32.mrb[0].mxu0
    %v6240 = vadd.f32 %v5990, %v6239
    %6241 = vmatprep.mubr.bf16.mxu0 %v5388
    %6242 = vmatmul.mubr.bf16.gmra.mrb[0].mxu0 %v5387
    %v6243 = vpop.f32.mrb[0].mxu0
    %v6244 = vadd.f32 %v5994, %v6243
    %v6245 = vpop.f32.mrb[0].mxu0
    %v6246 = vadd.f32 %v5996, %v6245
    %v6247 = vpop.f32.mrb[0].mxu0
    %v6248 = vpop.f32.mrb[0].mxu0
    %6249 = vdwg.mxu0
    %6250 = vmatprep.subr.bf16.mxu0 %v5457
    %6251 = vmatpush1.bf16.msra.mxu0 %v5456
    %6252 = vmatprep.subr.bf16.mxu0 %v5461
    %6253 = vmatpush1.bf16.msra.mxu0 %v5460
    %6254 = vmatprep.subr.bf16.mxu0 %v5465
    %6255 = vmatpush1.bf16.msra.mxu0 %v5464
    %6256 = vmatprep.subr.bf16.mxu0 %v5469
    %6257 = vmatpush1.bf16.msra.mxu0 %v5468
    %6258 = vmatprep.subr.bf16.mxu0 %v5473
    %6259 = vmatpush1.bf16.msra.mxu0 %v5472
    %6260 = vmatprep.subr.bf16.mxu0 %v5477
    %6261 = vmatpush1.bf16.msra.mxu0 %v5476
    %6262 = vmatprep.subr.bf16.mxu0 %v5481
    %6263 = vmatpush1.bf16.msra.mxu0 %v5480
    %6264 = vmatprep.subr.bf16.mxu0 %v5485
    %6265 = vmatpush1.bf16.msra.mxu0 %v5484
    %6266 = vmatprep.subr.bf16.mxu0 %v5489
    %6267 = vmatpush1.bf16.msra.mxu0 %v5488
    %6268 = vmatprep.subr.bf16.mxu0 %v5493
    %6269 = vmatpush1.bf16.msra.mxu0 %v5492
    %6270 = vmatprep.subr.bf16.mxu0 %v5497
    %6271 = vmatpush1.bf16.msra.mxu0 %v5496
    %6272 = vmatprep.subr.bf16.mxu0 %v5501
    %6273 = vmatpush1.bf16.msra.mxu0 %v5500
    %6274 = vmatprep.subr.bf16.mxu0 %v5505
    %6275 = vmatpush1.bf16.msra.mxu0 %v5504
    %6276 = vmatprep.subr.bf16.mxu0 %v5509
    %6277 = vmatpush1.bf16.msra.mxu0 %v5508
    %6278 = vmatprep.subr.bf16.mxu0 %v5513
    %6279 = vmatpush1.bf16.msra.mxu0 %v5512
    %6280 = vmatprep.subr.bf16.mxu0 %v5517
    %6281 = vmatpush1.bf16.msra.mxu0 %v5516
    %6282 = vmatprep.mubr.bf16.mxu0 %v5380
    %6283 = vmatmul.mubr.bf16.gmra.mrb[0].mxu0 %v5379
    %v6284 = vpop.f32.mrb[0].mxu0
    %v6285 = vadd.f32 %v6224, %v6284
    %v6286 = vpop.f32.mrb[0].mxu0
    %v6287 = vadd.f32 %v6226, %v6286
    %v6288 = vpop.f32.mrb[0].mxu0
    %v6289 = vadd.f32 %v6228, %v6288
    %v6290 = vpop.f32.mrb[0].mxu0
    %v6291 = vadd.f32 %v6230, %v6290
    %6292 = vmatprep.mubr.bf16.mxu0 %v5385
    %6293 = vmatmul.mubr.bf16.gmra.mrb[0].mxu0 %v5384
    %v6294 = vpop.f32.mrb[0].mxu0
    %v6295 = vadd.f32 %v6234, %v6294
    %v6296 = vpop.f32.mrb[0].mxu0
    %v6297 = vadd.f32 %v6236, %v6296
    %v6298 = vpop.f32.mrb[0].mxu0
    %v6299 = vadd.f32 %v6238, %v6298
    %v6300 = vpop.f32.mrb[0].mxu0
    %v6301 = vadd.f32 %v6240, %v6300
    %6302 = vmatprep.mubr.bf16.mxu0 %v5390
    %6303 = vmatmul.mubr.bf16.gmra.mrb[0].mxu0 %v5389
    %v6304 = vpop.f32.mrb[0].mxu0
    %v6305 = vadd.f32 %v6244, %v6304
    %v6306 = vpop.f32.mrb[0].mxu0
    %v6307 = vadd.f32 %v6246, %v6306
    %v6308 = vpop.f32.mrb[0].mxu0
    %v6309 = vpop.f32.mrb[0].mxu0
    %6310 = vdwg.mxu0
    %6311 = vmatprep.subr.bf16.mxu0 %v5521
    %6312 = vmatpush1.bf16.msra.mxu0 %v5520
    %6313 = vmatprep.subr.bf16.mxu0 %v5525
    %6314 = vmatpush1.bf16.msra.mxu0 %v5524
    %6315 = vmatprep.subr.bf16.mxu0 %v5529
    %6316 = vmatpush1.bf16.msra.mxu0 %v5528
    %6317 = vmatprep.subr.bf16.mxu0 %v5533
    %6318 = vmatpush1.bf16.msra.mxu0 %v5532
    %6319 = vmatprep.subr.bf16.mxu0 0
    %6320 = vmatpush1.bf16.msra.mxu0 0
    %6321 = vmatprep.subr.bf16.mxu0 0
    %6322 = vmatpush1.bf16.msra.mxu0 0
    %6323 = vmatprep.subr.bf16.mxu0 0
    %6324 = vmatpush1.bf16.msra.mxu0 0
    %6325 = vmatprep.subr.bf16.mxu0 0
    %6326 = vmatpush1.bf16.msra.mxu0 0
    %6327 = vmatprep.subr.bf16.mxu0 0
    %6328 = vmatpush1.bf16.msra.mxu0 0
    %6329 = vmatprep.subr.bf16.mxu0 0
    %6330 = vmatpush1.bf16.msra.mxu0 0
    %6331 = vmatprep.subr.bf16.mxu0 0
    %6332 = vmatpush1.bf16.msra.mxu0 0
    %6333 = vmatprep.subr.bf16.mxu0 0
    %6334 = vmatpush1.bf16.msra.mxu0 0
    %6335 = vmatprep.subr.bf16.mxu0 0
    %6336 = vmatpush1.bf16.msra.mxu0 0
    %6337 = vmatprep.subr.bf16.mxu0 0
    %6338 = vmatpush1.bf16.msra.mxu0 0
    %6339 = vmatprep.subr.bf16.mxu0 0
    %6340 = vmatpush1.bf16.msra.mxu0 0
    %6341 = vmatprep.subr.bf16.mxu0 0
    %6342 = vmatpush1.bf16.msra.mxu0 0
    %6343 = vmatprep.mubr.bf16.mxu0 0
    %6344 = vmatmul.mubr.bf16.gmra.mrb[0].mxu0 %v6183
    %v6345 = vpop.f32.mrb[0].mxu0
    %v6346 = vadd.f32 %v6285, %v6345
    %v6347 = vpop.f32.mrb[0].mxu0
    %v6348 = vadd.f32 %v6287, %v6347
    %v6349 = vpop.f32.mrb[0].mxu0
    %v6350 = vadd.f32 %v6289, %v6349
    %v6351 = vpop.f32.mrb[0].mxu0
    %v6352 = vadd.f32 %v6291, %v6351
    %6353 = vmatprep.mubr.bf16.mxu0 0
    %6354 = vmatmul.mubr.bf16.gmra.mrb[0].mxu0 %v6185
    %v6355 = vpop.f32.mrb[0].mxu0
    %v6356 = vadd.f32 %v6295, %v6355
    %v6357 = vpop.f32.mrb[0].mxu0
    %v6358 = vadd.f32 %v6297, %v6357
    %v6359 = vpop.f32.mrb[0].mxu0
    %v6360 = vadd.f32 %v6299, %v6359
    %v6361 = vpop.f32.mrb[0].mxu0
    %v6362 = vadd.f32 %v6301, %v6361
    %6363 = vmatprep.mubr.bf16.mxu0 0
    %6364 = vmatmul.mubr.bf16.gmra.mrb[0].mxu0 %v6187
    %v6365 = vpop.f32.mrb[0].mxu0
    %v6366 = vadd.f32 %v6305, %v6365
    %v6367 = vpop.f32.mrb[0].mxu0
    %v6368 = vadd.f32 %v6307, %v6367
    %v6369 = vpop.f32.mrb[0].mxu0
    %v6370 = vpop.f32.mrb[0].mxu0
    %6371 = vdwg.mxu0
    %6372 = vmatprep.subr.bf16.mxu0 %v5395
    %6373 = vmatpush1.bf16.msra.mxu0 %v5394
    %6374 = vmatprep.subr.bf16.mxu0 %v5399
    %6375 = vmatpush1.bf16.msra.mxu0 %v5398
    %6376 = vmatprep.subr.bf16.mxu0 %v5403
    %6377 = vmatpush1.bf16.msra.mxu0 %v5402
    %6378 = vmatprep.subr.bf16.mxu0 %v5407
    %6379 = vmatpush1.bf16.msra.mxu0 %v5406
    %6380 = vmatprep.subr.bf16.mxu0 %v5411
    %6381 = vmatpush1.bf16.msra.mxu0 %v5410
    %6382 = vmatprep.subr.bf16.mxu0 %v5415
    %6383 = vmatpush1.bf16.msra.mxu0 %v5414
    %6384 = vmatprep.subr.bf16.mxu0 %v5419
    %6385 = vmatpush1.bf16.msra.mxu0 %v5418
    %6386 = vmatprep.subr.bf16.mxu0 %v5423
    %6387 = vmatpush1.bf16.msra.mxu0 %v5422
    %6388 = vmatprep.subr.bf16.mxu0 %v5427
    %6389 = vmatpush1.bf16.msra.mxu0 %v5426
    %6390 = vmatprep.subr.bf16.mxu0 %v5431
    %6391 = vmatpush1.bf16.msra.mxu0 %v5430
    %6392 = vmatprep.subr.bf16.mxu0 %v5435
    %6393 = vmatpush1.bf16.msra.mxu0 %v5434
    %6394 = vmatprep.subr.bf16.mxu0 %v5439
    %6395 = vmatpush1.bf16.msra.mxu0 %v5438
    %6396 = vmatprep.subr.bf16.mxu0 %v5443
    %6397 = vmatpush1.bf16.msra.mxu0 %v5442
    %6398 = vmatprep.subr.bf16.mxu0 %v5447
    %6399 = vmatpush1.bf16.msra.mxu0 %v5446
    %6400 = vmatprep.subr.bf16.mxu0 %v5451
    %6401 = vmatpush1.bf16.msra.mxu0 %v5450
    %6402 = vmatprep.subr.bf16.mxu0 %v5455
    %6403 = vmatpush1.bf16.msra.mxu0 %v5454
    %6404 = vmatprep.mubr.bf16.mxu0 %v5378
    %6405 = vmatmul.mubr.bf16.gmra.mrb[0].mxu0 %v5377
    %v6406 = vpop.f32.mrb[0].mxu0
    %v6407 = vadd.f32 %v6157, %v6406
    %v6408 = vpop.f32.mrb[0].mxu0
    %v6409 = vadd.f32 %v6159, %v6408
    %v6410 = vpop.f32.mrb[0].mxu0
    %v6411 = vadd.f32 %v6161, %v6410
    %v6412 = vpop.f32.mrb[0].mxu0
    %v6413 = vadd.f32 %v6163, %v6412
    %6414 = vmatprep.mubr.bf16.mxu0 %v5383
    %6415 = vmatmul.mubr.bf16.gmra.mrb[0].mxu0 %v5382
    %v6416 = vpop.f32.mrb[0].mxu0
    %v6417 = vadd.f32 %v6167, %v6416
    %v6418 = vpop.f32.mrb[0].mxu0
    %v6419 = vadd.f32 %v6169, %v6418
    %v6420 = vpop.f32.mrb[0].mxu0
    %v6421 = vadd.f32 %v6171, %v6420
    %v6422 = vpop.f32.mrb[0].mxu0
    %v6423 = vadd.f32 %v6173, %v6422
    %6424 = vmatprep.mubr.bf16.mxu0 %v5388
    %6425 = vmatmul.mubr.bf16.gmra.mrb[0].mxu0 %v5387
    %v6426 = vpop.f32.mrb[0].mxu0
    %v6427 = vadd.f32 %v6177, %v6426
    %v6428 = vpop.f32.mrb[0].mxu0
    %v6429 = vadd.f32 %v6179, %v6428
    %v6430 = vpop.f32.mrb[0].mxu0
    %v6431 = vpop.f32.mrb[0].mxu0
    %6432 = vdwg.mxu0
    %6433 = vmatprep.subr.bf16.mxu0 %v5459
    %6434 = vmatpush1.bf16.msra.mxu0 %v5458
    %6435 = vmatprep.subr.bf16.mxu0 %v5463
    %6436 = vmatpush1.bf16.msra.mxu0 %v5462
    %6437 = vmatprep.subr.bf16.mxu0 %v5467
    %6438 = vmatpush1.bf16.msra.mxu0 %v5466
    %6439 = vmatprep.subr.bf16.mxu0 %v5471
    %6440 = vmatpush1.bf16.msra.mxu0 %v5470
    %6441 = vmatprep.subr.bf16.mxu0 %v5475
    %6442 = vmatpush1.bf16.msra.mxu0 %v5474
    %6443 = vmatprep.subr.bf16.mxu0 %v5479
    %6444 = vmatpush1.bf16.msra.mxu0 %v5478
    %6445 = vmatprep.subr.bf16.mxu0 %v5483
    %6446 = vmatpush1.bf16.msra.mxu0 %v5482
    %6447 = vmatprep.subr.bf16.mxu0 %v5487
    %6448 = vmatpush1.bf16.msra.mxu0 %v5486
    %6449 = vmatprep.subr.bf16.mxu0 %v5491
    %6450 = vmatpush1.bf16.msra.mxu0 %v5490
    %6451 = vmatprep.subr.bf16.mxu0 %v5495
    %6452 = vmatpush1.bf16.msra.mxu0 %v5494
    %6453 = vmatprep.subr.bf16.mxu0 %v5499
    %6454 = vmatpush1.bf16.msra.mxu0 %v5498
    %6455 = vmatprep.subr.bf16.mxu0 %v5503
    %6456 = vmatpush1.bf16.msra.mxu0 %v5502
    %6457 = vmatprep.subr.bf16.mxu0 %v5507
    %6458 = vmatpush1.bf16.msra.mxu0 %v5506
    %6459 = vmatprep.subr.bf16.mxu0 %v5511
    %6460 = vmatpush1.bf16.msra.mxu0 %v5510
    %6461 = vmatprep.subr.bf16.mxu0 %v5515
    %6462 = vmatpush1.bf16.msra.mxu0 %v5514
    %6463 = vmatprep.subr.bf16.mxu0 %v5519
    %6464 = vmatpush1.bf16.msra.mxu0 %v5518
    %6465 = vmatprep.mubr.bf16.mxu0 %v5380
    %6466 = vmatmul.mubr.bf16.gmra.mrb[0].mxu0 %v5379
    %v6467 = vpop.f32.mrb[0].mxu0
    %v6468 = vadd.f32 %v6407, %v6467
    %v6469 = vpop.f32.mrb[0].mxu0
    %v6470 = vadd.f32 %v6409, %v6469
    %v6471 = vpop.f32.mrb[0].mxu0
    %v6472 = vadd.f32 %v6411, %v6471
    %v6473 = vpop.f32.mrb[0].mxu0
    %v6474 = vadd.f32 %v6413, %v6473
    %6475 = vmatprep.mubr.bf16.mxu0 %v5385
    %6476 = vmatmul.mubr.bf16.gmra.mrb[0].mxu0 %v5384
    %v6477 = vpop.f32.mrb[0].mxu0
    %v6478 = vadd.f32 %v6417, %v6477
    %v6479 = vpop.f32.mrb[0].mxu0
    %v6480 = vadd.f32 %v6419, %v6479
    %v6481 = vpop.f32.mrb[0].mxu0
    %v6482 = vadd.f32 %v6421, %v6481
    %v6483 = vpop.f32.mrb[0].mxu0
    %v6484 = vadd.f32 %v6423, %v6483
    %6485 = vmatprep.mubr.bf16.mxu0 %v5390
    %6486 = vmatmul.mubr.bf16.gmra.mrb[0].mxu0 %v5389
    %v6487 = vpop.f32.mrb[0].mxu0
    %v6488 = vadd.f32 %v6427, %v6487
    %v6489 = vpop.f32.mrb[0].mxu0
    %v6490 = vadd.f32 %v6429, %v6489
    %v6491 = vpop.f32.mrb[0].mxu0
    %v6492 = vpop.f32.mrb[0].mxu0
    %6493 = vdwg.mxu0
    %6494 = vmatprep.subr.bf16.mxu0 %v5523
    %6495 = vmatpush1.bf16.msra.mxu0 %v5522
    %6496 = vmatprep.subr.bf16.mxu0 %v5527
    %6497 = vmatpush1.bf16.msra.mxu0 %v5526
    %6498 = vmatprep.subr.bf16.mxu0 %v5531
    %6499 = vmatpush1.bf16.msra.mxu0 %v5530
    %6500 = vmatprep.subr.bf16.mxu0 %v5535
    %6501 = vmatpush1.bf16.msra.mxu0 %v5534
    %6502 = vmatprep.subr.bf16.mxu0 0
    %6503 = vmatpush1.bf16.msra.mxu0 0
    %6504 = vmatprep.subr.bf16.mxu0 0
    %6505 = vmatpush1.bf16.msra.mxu0 0
    %6506 = vmatprep.subr.bf16.mxu0 0
    %6507 = vmatpush1.bf16.msra.mxu0 0
    %6508 = vmatprep.subr.bf16.mxu0 0
    %6509 = vmatpush1.bf16.msra.mxu0 0
    %6510 = vmatprep.subr.bf16.mxu0 0
    %6511 = vmatpush1.bf16.msra.mxu0 0
    %6512 = vmatprep.subr.bf16.mxu0 0
    %6513 = vmatpush1.bf16.msra.mxu0 0
    %6514 = vmatprep.subr.bf16.mxu0 0
    %6515 = vmatpush1.bf16.msra.mxu0 0
    %6516 = vmatprep.subr.bf16.mxu0 0
    %6517 = vmatpush1.bf16.msra.mxu0 0
    %6518 = vmatprep.subr.bf16.mxu0 0
    %6519 = vmatpush1.bf16.msra.mxu0 0
    %6520 = vmatprep.subr.bf16.mxu0 0
    %6521 = vmatpush1.bf16.msra.mxu0 0
    %6522 = vmatprep.subr.bf16.mxu0 0
    %6523 = vmatpush1.bf16.msra.mxu0 0
    %6524 = vmatprep.subr.bf16.mxu0 0
    %6525 = vmatpush1.bf16.msra.mxu0 0
    %6526 = vmatprep.mubr.bf16.mxu0 0
    %6527 = vmatmul.mubr.bf16.gmra.mrb[0].mxu0 %v6183
    %v6528 = vpop.f32.mrb[0].mxu0
    %v6529 = vadd.f32 %v6468, %v6528
    %v6530 = vpop.f32.mrb[0].mxu0
    %v6531 = vadd.f32 %v6470, %v6530
    %v6532 = vpop.f32.mrb[0].mxu0
    %v6533 = vadd.f32 %v6472, %v6532
    %v6534 = vpop.f32.mrb[0].mxu0
    %v6535 = vadd.f32 %v6474, %v6534
    %6536 = vmatprep.mubr.bf16.mxu0 0
    %6537 = vmatmul.mubr.bf16.gmra.mrb[0].mxu0 %v6185
    %v6538 = vpop.f32.mrb[0].mxu0
    %v6539 = vadd.f32 %v6478, %v6538
    %v6540 = vpop.f32.mrb[0].mxu0
    %v6541 = vadd.f32 %v6480, %v6540
    %v6542 = vpop.f32.mrb[0].mxu0
    %v6543 = vadd.f32 %v6482, %v6542
    %v6544 = vpop.f32.mrb[0].mxu0
    %v6545 = vadd.f32 %v6484, %v6544
    %6546 = vmatprep.mubr.bf16.mxu0 0
    %6547 = vmatmul.mubr.bf16.gmra.mrb[0].mxu0 %v6187
    %v6548 = vpop.f32.mrb[0].mxu0
    %v6549 = vadd.f32 %v6488, %v6548
    %v6550 = vpop.f32.mrb[0].mxu0
    %v6551 = vadd.f32 %v6490, %v6550
    %v6552 = vpop.f32.mrb[0].mxu0
    %v6553 = vpop.f32.mrb[0].mxu0
    %6554 = vdwg.mxu0
    %s6555 = scalar_lea.vmem [#allocation3], 2304
    %v6556 = vld [vmem:[%s6555] sm:$0xff]
    %v6557 = vld [vmem:[%s6555 + $0x8] sm:$0xff]
    %v6558 = vld [vmem:[%s6555 + $0x10] sm:$0xff]
    %v6559 = vld [vmem:[%s6555 + $0x18] sm:$0xff]
    %v6560 = vld [vmem:[%s6555 + $0x20] sm:$0xff]
    %v6561 = vld [vmem:[%s6555 + $0x28] sm:$0xff]
    %v6562 = vld [vmem:[%s6555 + $0x30] sm:$0xff]
    %v6563 = vld [vmem:[%s6555 + $0x38] sm:$0xff]
    %v6564 = vld [vmem:[%s6555 + $0x40] sm:$0xff]
    %v6565 = vld [vmem:[%s6555 + $0x48] sm:$0xff]
    %v6566 = vld [vmem:[%s6555 + $0x50] sm:$0xff]
    %v6567 = vld [vmem:[%s6555 + $0x58] sm:$0xff]
    %v6568 = vld [vmem:[%s6555 + $0x60] sm:$0xff]
    %v6569 = vld [vmem:[%s6555 + $0x68] sm:$0xff]
    %v6570 = vld [vmem:[%s6555 + $0x70] sm:$0xff]
    %v6571 = vld [vmem:[%s6555 + $0x78] sm:$0xff]
    %v6572 = vld [vmem:[%s6555 + $0x80] sm:$0xff]
    %v6573 = vld [vmem:[%s6555 + $0x88] sm:$0xff]
    %v6574 = vld [vmem:[%s6555 + $0x90] sm:$0xff]
    %v6575 = vld [vmem:[%s6555 + $0x98] sm:$0xff]
    %v6576 = vld [vmem:[%s6555 + $0xa0] sm:$0xff]
    %v6577 = vld [vmem:[%s6555 + $0xa8] sm:$0xff]
    %v6578 = vld [vmem:[%s6555 + $0xb0] sm:$0xff]
    %v6579 = vld [vmem:[%s6555 + $0xb8] sm:$0xff]
    %v6580 = vld [vmem:[%s6555 + $0xc0] sm:$0xff]
    %v6581 = vld [vmem:[%s6555 + $0xc8] sm:$0xff]
    %v6582 = vld [vmem:[%s6555 + $0xd0] sm:$0xff]
    %v6583 = vld [vmem:[%s6555 + $0xd8] sm:$0xff]
    %v6584 = vld [vmem:[%s6555 + $0xe0] sm:$0xff]
    %v6585 = vld [vmem:[%s6555 + $0xe8] sm:$0xff]
    %v6586 = vld [vmem:[%s6555 + $0xf0] sm:$0xff]
    %v6587 = vld [vmem:[%s6555 + $0xf8] sm:$0xff]
    %v6588 = vld [vmem:[%s6555 + $0x100] sm:$0xff]
    %v6589 = vld [vmem:[%s6555 + $0x108] sm:$0xff]
    %v6590 = vld [vmem:[%s6555 + $0x110] sm:$0xff]
    %v6591 = vld [vmem:[%s6555 + $0x118] sm:$0xff]
    %v6592 = vld [vmem:[%s6555 + $0x120] sm:$0xff]
    %v6593 = vld [vmem:[%s6555 + $0x128] sm:$0xff]
    %v6594 = vld [vmem:[%s6555 + $0x130] sm:$0xff]
    %v6595 = vld [vmem:[%s6555 + $0x138] sm:$0xff]
    %v6596 = vld [vmem:[%s6555 + $0x140] sm:$0xff]
    %v6597 = vld [vmem:[%s6555 + $0x148] sm:$0xff]
    %v6598 = vld [vmem:[%s6555 + $0x150] sm:$0xff]
    %v6599 = vld [vmem:[%s6555 + $0x158] sm:$0xff]
    %v6600 = vld [vmem:[%s6555 + $0x160] sm:$0xff]
    %v6601 = vld [vmem:[%s6555 + $0x168] sm:$0xff]
    %v6602 = vld [vmem:[%s6555 + $0x170] sm:$0xff]
    %v6603 = vld [vmem:[%s6555 + $0x178] sm:$0xff]
    %v6604 = vld [vmem:[%s6555 + $0x180] sm:$0xff]
    %v6605 = vld [vmem:[%s6555 + $0x188] sm:$0xff]
    %v6606 = vld [vmem:[%s6555 + $0x190] sm:$0xff]
    %v6607 = vld [vmem:[%s6555 + $0x198] sm:$0xff]
    %v6608 = vld [vmem:[%s6555 + $0x1a0] sm:$0xff]
    %v6609 = vld [vmem:[%s6555 + $0x1a8] sm:$0xff]
    %v6610 = vld [vmem:[%s6555 + $0x1b0] sm:$0xff]
    %v6611 = vld [vmem:[%s6555 + $0x1b8] sm:$0xff]
    %v6612 = vld [vmem:[%s6555 + $0x1c0] sm:$0xff]
    %v6613 = vld [vmem:[%s6555 + $0x1c8] sm:$0xff]
    %v6614 = vld [vmem:[%s6555 + $0x1d0] sm:$0xff]
    %v6615 = vld [vmem:[%s6555 + $0x1d8] sm:$0xff]
    %v6616 = vld [vmem:[%s6555 + $0x1e0] sm:$0xff]
    %v6617 = vld [vmem:[%s6555 + $0x1e8] sm:$0xff]
    %v6618 = vld [vmem:[%s6555 + $0x1f0] sm:$0xff]
    %v6619 = vld [vmem:[%s6555 + $0x1f8] sm:$0xff]
    %v6620 = vld [vmem:[%s6555 + $0x200] sm:$0xff]
    %v6621 = vld [vmem:[%s6555 + $0x208] sm:$0xff]
    %v6622 = vld [vmem:[%s6555 + $0x210] sm:$0xff]
    %v6623 = vld [vmem:[%s6555 + $0x218] sm:$0xff]
    %v6624 = vld [vmem:[%s6555 + $0x220] sm:$0xff]
    %v6625 = vld [vmem:[%s6555 + $0x228] sm:$0xff]
    %v6626 = vld [vmem:[%s6555 + $0x230] sm:$0xff]
    %v6627 = vld [vmem:[%s6555 + $0x238] sm:$0xff]
    %v6628 = vld [vmem:[%s6555 + $0x240] sm:$0xff]
    %v6629 = vld [vmem:[%s6555 + $0x248] sm:$0xff]
    %v6630 = vld [vmem:[%s6555 + $0x250] sm:$0xff]
    %v6631 = vld [vmem:[%s6555 + $0x258] sm:$0xff]
    %v6632 = vld [vmem:[%s6555 + $0x260] sm:$0xff]
    %v6633 = vld [vmem:[%s6555 + $0x268] sm:$0xff]
    %v6634 = vld [vmem:[%s6555 + $0x270] sm:$0xff]
    %v6635 = vld [vmem:[%s6555 + $0x278] sm:$0xff]
    %v6636 = vld [vmem:[%s6555 + $0x280] sm:$0xff]
    %v6637 = vld [vmem:[%s6555 + $0x288] sm:$0xff]
    %v6638 = vld [vmem:[%s6555 + $0x290] sm:$0xff]
    %v6639 = vld [vmem:[%s6555 + $0x298] sm:$0xff]
    %v6640 = vld [vmem:[%s6555 + $0x2a0] sm:$0xff]
    %v6641 = vld [vmem:[%s6555 + $0x2a8] sm:$0xff]
    %v6642 = vld [vmem:[%s6555 + $0x2b0] sm:$0xff]
    %v6643 = vld [vmem:[%s6555 + $0x2b8] sm:$0xff]
    %v6644 = vld [vmem:[%s6555 + $0x2c0] sm:$0xff]
    %v6645 = vld [vmem:[%s6555 + $0x2c8] sm:$0xff]
    %v6646 = vld [vmem:[%s6555 + $0x2d0] sm:$0xff]
    %v6647 = vld [vmem:[%s6555 + $0x2d8] sm:$0xff]
    %v6648 = vld [vmem:[%s6555 + $0x2e0] sm:$0xff]
    %v6649 = vld [vmem:[%s6555 + $0x2e8] sm:$0xff]
    %v6650 = vld [vmem:[%s6555 + $0x2f0] sm:$0xff]
    %v6651 = vld [vmem:[%s6555 + $0x2f8] sm:$0xff]
    %v6652 = vld [vmem:[%s6555 + $0x300] sm:$0xff]
    %v6653 = vld [vmem:[%s6555 + $0x308] sm:$0xff]
    %v6654 = vld [vmem:[%s6555 + $0x310] sm:$0xff]
    %v6655 = vld [vmem:[%s6555 + $0x318] sm:$0xff]
    %v6656 = vld [vmem:[%s6555 + $0x320] sm:$0xff]
    %v6657 = vld [vmem:[%s6555 + $0x328] sm:$0xff]
    %v6658 = vld [vmem:[%s6555 + $0x330] sm:$0xff]
    %v6659 = vld [vmem:[%s6555 + $0x338] sm:$0xff]
    %v6660 = vld [vmem:[%s6555 + $0x340] sm:$0xff]
    %v6661 = vld [vmem:[%s6555 + $0x348] sm:$0xff]
    %v6662 = vld [vmem:[%s6555 + $0x350] sm:$0xff]
    %v6663 = vld [vmem:[%s6555 + $0x358] sm:$0xff]
    %v6664 = vld [vmem:[%s6555 + $0x360] sm:$0xff]
    %v6665 = vld [vmem:[%s6555 + $0x368] sm:$0xff]
    %v6666 = vld [vmem:[%s6555 + $0x370] sm:$0xff]
    %v6667 = vld [vmem:[%s6555 + $0x378] sm:$0xff]
    %v6668 = vld [vmem:[%s6555 + $0x380] sm:$0xff]
    %v6669 = vld [vmem:[%s6555 + $0x388] sm:$0xff]
    %v6670 = vld [vmem:[%s6555 + $0x390] sm:$0xff]
    %v6671 = vld [vmem:[%s6555 + $0x398] sm:$0xff]
    %v6672 = vld [vmem:[%s6555 + $0x3a0] sm:$0xff]
    %v6673 = vld [vmem:[%s6555 + $0x3a8] sm:$0xff]
    %v6674 = vld [vmem:[%s6555 + $0x3b0] sm:$0xff]
    %v6675 = vld [vmem:[%s6555 + $0x3b8] sm:$0xff]
    %v6676 = vld [vmem:[%s6555 + $0x3c0] sm:$0xff]
    %v6677 = vld [vmem:[%s6555 + $0x3c8] sm:$0xff]
    %v6678 = vld [vmem:[%s6555 + $0x3d0] sm:$0xff]
    %v6679 = vld [vmem:[%s6555 + $0x3d8] sm:$0xff]
    %v6680 = vld [vmem:[%s6555 + $0x3e0] sm:$0xff]
    %v6681 = vld [vmem:[%s6555 + $0x3e8] sm:$0xff]
    %v6682 = vld [vmem:[%s6555 + $0x3f0] sm:$0xff]
    %v6683 = vld [vmem:[%s6555 + $0x3f8] sm:$0xff]
    %v6684 = vld [vmem:[%s6555 + $0x400] sm:$0xff]
    %v6685 = vld [vmem:[%s6555 + $0x408] sm:$0xff]
    %v6686 = vld [vmem:[%s6555 + $0x410] sm:$0xff]
    %v6687 = vld [vmem:[%s6555 + $0x418] sm:$0xff]
    %v6688 = vld [vmem:[%s6555 + $0x420] sm:$0xff]
    %v6689 = vld [vmem:[%s6555 + $0x428] sm:$0xff]
    %v6690 = vld [vmem:[%s6555 + $0x430] sm:$0xff]
    %v6691 = vld [vmem:[%s6555 + $0x438] sm:$0xff]
    %v6692 = vld [vmem:[%s6555 + $0x440] sm:$0xff]
    %v6693 = vld [vmem:[%s6555 + $0x448] sm:$0xff]
    %v6694 = vld [vmem:[%s6555 + $0x450] sm:$0xff]
    %v6695 = vld [vmem:[%s6555 + $0x458] sm:$0xff]
    %v6696 = vld [vmem:[%s6555 + $0x460] sm:$0xff]
    %v6697 = vld [vmem:[%s6555 + $0x468] sm:$0xff]
    %v6698 = vld [vmem:[%s6555 + $0x470] sm:$0xff]
    %v6699 = vld [vmem:[%s6555 + $0x478] sm:$0xff]
    %v6715 = vrot.slane %v5377, 1
    %v6716 = vrot.slane %v5382, 1
    %v6717 = vsel %vm3165, %v6715, %v6716
    %v6718 = vrot.slane %v5378, 1
    %v6719 = vrot.slane %v5383, 1
    %v6720 = vsel %vm3165, %v6718, %v6719
    %v6721 = vrot.slane %v5379, 1
    %v6722 = vrot.slane %v5384, 1
    %v6723 = vsel %vm3165, %v6721, %v6722
    %v6724 = vrot.slane %v5380, 1
    %v6725 = vrot.slane %v5385, 1
    %v6726 = vsel %vm3165, %v6724, %v6725
    %v6727 = vrot.slane %v5381, 1
    %v6728 = vrot.slane %v5386, 1
    %v6729 = vsel %vm3165, %v6727, %v6728
    %v6730 = vrot.slane %v5387, 1
    %v6731 = vsel %vm3165, %v6716, %v6730
    %v6732 = vrot.slane %v5388, 1
    %v6733 = vsel %vm3165, %v6719, %v6732
    %v6734 = vrot.slane %v5389, 1
    %v6735 = vsel %vm3165, %v6722, %v6734
    %v6736 = vrot.slane %v5390, 1
    %v6737 = vsel %vm3165, %v6725, %v6736
    %v6738 = vrot.slane %v5391, 1
    %v6739 = vsel %vm3165, %v6728, %v6738
    %v6753 = vsel %vm153, %v6729, 0
    %v6756 = vsel %vm153, %v6739, 0
    %v6759 = vsel %vm153, %v6738, 0
    %6761 = vmatprep.subr.bf16.mxu0 %v6557
    %6762 = vmatpush1.bf16.msra.mxu0 %v6556
    %6763 = vmatprep.subr.bf16.mxu0 %v6561
    %6764 = vmatpush1.bf16.msra.mxu0 %v6560
    %6765 = vmatprep.subr.bf16.mxu0 %v6565
    %6766 = vmatpush1.bf16.msra.mxu0 %v6564
    %6767 = vmatprep.subr.bf16.mxu0 %v6569
    %6768 = vmatpush1.bf16.msra.mxu0 %v6568
    %6769 = vmatprep.subr.bf16.mxu0 %v6573
    %6770 = vmatpush1.bf16.msra.mxu0 %v6572
    %6771 = vmatprep.subr.bf16.mxu0 %v6577
    %6772 = vmatpush1.bf16.msra.mxu0 %v6576
    %6773 = vmatprep.subr.bf16.mxu0 %v6581
    %6774 = vmatpush1.bf16.msra.mxu0 %v6580
    %6775 = vmatprep.subr.bf16.mxu0 %v6585
    %6776 = vmatpush1.bf16.msra.mxu0 %v6584
    %6777 = vmatprep.subr.bf16.mxu0 %v6589
    %6778 = vmatpush1.bf16.msra.mxu0 %v6588
    %6779 = vmatprep.subr.bf16.mxu0 %v6593
    %6780 = vmatpush1.bf16.msra.mxu0 %v6592
    %6781 = vmatprep.subr.bf16.mxu0 %v6597
    %6782 = vmatpush1.bf16.msra.mxu0 %v6596
    %6783 = vmatprep.subr.bf16.mxu0 %v6601
    %6784 = vmatpush1.bf16.msra.mxu0 %v6600
    %6785 = vmatprep.subr.bf16.mxu0 %v6605
    %6786 = vmatpush1.bf16.msra.mxu0 %v6604
    %6787 = vmatprep.subr.bf16.mxu0 %v6609
    %6788 = vmatpush1.bf16.msra.mxu0 %v6608
    %6789 = vmatprep.subr.bf16.mxu0 %v6613
    %6790 = vmatpush1.bf16.msra.mxu0 %v6612
    %6791 = vmatprep.subr.bf16.mxu0 %v6617
    %6792 = vmatpush1.bf16.msra.mxu0 %v6616
    %6793 = vmatprep.mubr.bf16.mxu0 %v6720
    %6794 = vmatmul.mubr.bf16.gmra.mrb[0].mxu0 %v6717
    %v6795 = vpop.f32.mrb[0].mxu0
    %v6796 = vadd.f32 0.0, %v6795
    %v6797 = vpop.f32.mrb[0].mxu0
    %v6798 = vadd.f32 0.0, %v6797
    %v6799 = vpop.f32.mrb[0].mxu0
    %v6800 = vadd.f32 0.0, %v6799
    %v6801 = vpop.f32.mrb[0].mxu0
    %v6802 = vadd.f32 0.0, %v6801
    %6803 = vmatprep.mubr.bf16.mxu0 %v6733
    %6804 = vmatmul.mubr.bf16.gmra.mrb[0].mxu0 %v6731
    %v6805 = vpop.f32.mrb[0].mxu0
    %v6806 = vadd.f32 0.0, %v6805
    %v6807 = vpop.f32.mrb[0].mxu0
    %v6808 = vadd.f32 0.0, %v6807
    %v6809 = vpop.f32.mrb[0].mxu0
    %v6810 = vadd.f32 0.0, %v6809
    %v6811 = vpop.f32.mrb[0].mxu0
    %v6812 = vadd.f32 0.0, %v6811
    %6813 = vmatprep.mubr.bf16.mxu0 %v6732
    %6814 = vmatmul.mubr.bf16.gmra.mrb[0].mxu0 %v6730
    %v6815 = vpop.f32.mrb[0].mxu0
    %v6816 = vadd.f32 0.0, %v6815
    %v6817 = vpop.f32.mrb[0].mxu0
    %v6818 = vadd.f32 0.0, %v6817
    %v6819 = vpop.f32.mrb[0].mxu0
    %v6820 = vpop.f32.mrb[0].mxu0
    %6821 = vdwg.mxu0
    %6822 = vmatprep.subr.bf16.mxu0 %v6621
    %6823 = vmatpush1.bf16.msra.mxu0 %v6620
    %6824 = vmatprep.subr.bf16.mxu0 %v6625
    %6825 = vmatpush1.bf16.msra.mxu0 %v6624
    %6826 = vmatprep.subr.bf16.mxu0 %v6629
    %6827 = vmatpush1.bf16.msra.mxu0 %v6628
    %6828 = vmatprep.subr.bf16.mxu0 %v6633
    %6829 = vmatpush1.bf16.msra.mxu0 %v6632
    %6830 = vmatprep.subr.bf16.mxu0 %v6637
    %6831 = vmatpush1.bf16.msra.mxu0 %v6636
    %6832 = vmatprep.subr.bf16.mxu0 %v6641
    %6833 = vmatpush1.bf16.msra.mxu0 %v6640
    %6834 = vmatprep.subr.bf16.mxu0 %v6645
    %6835 = vmatpush1.bf16.msra.mxu0 %v6644
    %6836 = vmatprep.subr.bf16.mxu0 %v6649
    %6837 = vmatpush1.bf16.msra.mxu0 %v6648
    %6838 = vmatprep.subr.bf16.mxu0 %v6653
    %6839 = vmatpush1.bf16.msra.mxu0 %v6652
    %6840 = vmatprep.subr.bf16.mxu0 %v6657
    %6841 = vmatpush1.bf16.msra.mxu0 %v6656
    %6842 = vmatprep.subr.bf16.mxu0 %v6661
    %6843 = vmatpush1.bf16.msra.mxu0 %v6660
    %6844 = vmatprep.subr.bf16.mxu0 %v6665
    %6845 = vmatpush1.bf16.msra.mxu0 %v6664
    %6846 = vmatprep.subr.bf16.mxu0 %v6669
    %6847 = vmatpush1.bf16.msra.mxu0 %v6668
    %6848 = vmatprep.subr.bf16.mxu0 %v6673
    %6849 = vmatpush1.bf16.msra.mxu0 %v6672
    %6850 = vmatprep.subr.bf16.mxu0 %v6677
    %6851 = vmatpush1.bf16.msra.mxu0 %v6676
    %6852 = vmatprep.subr.bf16.mxu0 %v6681
    %6853 = vmatpush1.bf16.msra.mxu0 %v6680
    %6854 = vmatprep.mubr.bf16.mxu0 %v6726
    %6855 = vmatmul.mubr.bf16.gmra.mrb[0].mxu0 %v6723
    %v6856 = vpop.f32.mrb[0].mxu0
    %v6857 = vadd.f32 %v6796, %v6856
    %v6858 = vpop.f32.mrb[0].mxu0
    %v6859 = vadd.f32 %v6798, %v6858
    %v6860 = vpop.f32.mrb[0].mxu0
    %v6861 = vadd.f32 %v6800, %v6860
    %v6862 = vpop.f32.mrb[0].mxu0
    %v6863 = vadd.f32 %v6802, %v6862
    %6864 = vmatprep.mubr.bf16.mxu0 %v6737
    %6865 = vmatmul.mubr.bf16.gmra.mrb[0].mxu0 %v6735
    %v6866 = vpop.f32.mrb[0].mxu0
    %v6867 = vadd.f32 %v6806, %v6866
    %v6868 = vpop.f32.mrb[0].mxu0
    %v6869 = vadd.f32 %v6808, %v6868
    %v6870 = vpop.f32.mrb[0].mxu0
    %v6871 = vadd.f32 %v6810, %v6870
    %v6872 = vpop.f32.mrb[0].mxu0
    %v6873 = vadd.f32 %v6812, %v6872
    %6874 = vmatprep.mubr.bf16.mxu0 %v6736
    %6875 = vmatmul.mubr.bf16.gmra.mrb[0].mxu0 %v6734
    %v6876 = vpop.f32.mrb[0].mxu0
    %v6877 = vadd.f32 %v6816, %v6876
    %v6878 = vpop.f32.mrb[0].mxu0
    %v6879 = vadd.f32 %v6818, %v6878
    %v6880 = vpop.f32.mrb[0].mxu0
    %v6881 = vpop.f32.mrb[0].mxu0
    %6882 = vdwg.mxu0
    %6883 = vmatprep.subr.bf16.mxu0 %v6685
    %6884 = vmatpush1.bf16.msra.mxu0 %v6684
    %6885 = vmatprep.subr.bf16.mxu0 %v6689
    %6886 = vmatpush1.bf16.msra.mxu0 %v6688
    %6887 = vmatprep.subr.bf16.mxu0 %v6693
    %6888 = vmatpush1.bf16.msra.mxu0 %v6692
    %6889 = vmatprep.subr.bf16.mxu0 %v6697
    %6890 = vmatpush1.bf16.msra.mxu0 %v6696
    %6891 = vmatprep.subr.bf16.mxu0 0
    %6892 = vmatpush1.bf16.msra.mxu0 0
    %6893 = vmatprep.subr.bf16.mxu0 0
    %6894 = vmatpush1.bf16.msra.mxu0 0
    %6895 = vmatprep.subr.bf16.mxu0 0
    %6896 = vmatpush1.bf16.msra.mxu0 0
    %6897 = vmatprep.subr.bf16.mxu0 0
    %6898 = vmatpush1.bf16.msra.mxu0 0
    %6899 = vmatprep.subr.bf16.mxu0 0
    %6900 = vmatpush1.bf16.msra.mxu0 0
    %6901 = vmatprep.subr.bf16.mxu0 0
    %6902 = vmatpush1.bf16.msra.mxu0 0
    %6903 = vmatprep.subr.bf16.mxu0 0
    %6904 = vmatpush1.bf16.msra.mxu0 0
    %6905 = vmatprep.subr.bf16.mxu0 0
    %6906 = vmatpush1.bf16.msra.mxu0 0
    %6907 = vmatprep.subr.bf16.mxu0 0
    %6908 = vmatpush1.bf16.msra.mxu0 0
    %6909 = vmatprep.subr.bf16.mxu0 0
    %6910 = vmatpush1.bf16.msra.mxu0 0
    %6911 = vmatprep.subr.bf16.mxu0 0
    %6912 = vmatpush1.bf16.msra.mxu0 0
    %6913 = vmatprep.subr.bf16.mxu0 0
    %6914 = vmatpush1.bf16.msra.mxu0 0
    %6915 = vmatprep.mubr.bf16.mxu0 0
    %6916 = vmatmul.mubr.bf16.gmra.mrb[0].mxu0 %v6753
    %v6917 = vpop.f32.mrb[0].mxu0
    %v6918 = vadd.f32 %v6857, %v6917
    %v6919 = vpop.f32.mrb[0].mxu0
    %v6920 = vadd.f32 %v6859, %v6919
    %v6921 = vpop.f32.mrb[0].mxu0
    %v6922 = vadd.f32 %v6861, %v6921
    %v6923 = vpop.f32.mrb[0].mxu0
    %v6924 = vadd.f32 %v6863, %v6923
    %6925 = vmatprep.mubr.bf16.mxu0 0
    %6926 = vmatmul.mubr.bf16.gmra.mrb[0].mxu0 %v6756
    %v6927 = vpop.f32.mrb[0].mxu0
    %v6928 = vadd.f32 %v6867, %v6927
    %v6929 = vpop.f32.mrb[0].mxu0
    %v6930 = vadd.f32 %v6869, %v6929
    %v6931 = vpop.f32.mrb[0].mxu0
    %v6932 = vadd.f32 %v6871, %v6931
    %v6933 = vpop.f32.mrb[0].mxu0
    %v6934 = vadd.f32 %v6873, %v6933
    %6935 = vmatprep.mubr.bf16.mxu0 0
    %6936 = vmatmul.mubr.bf16.gmra.mrb[0].mxu0 %v6759
    %v6937 = vpop.f32.mrb[0].mxu0
    %v6938 = vadd.f32 %v6877, %v6937
    %v6939 = vpop.f32.mrb[0].mxu0
    %v6940 = vadd.f32 %v6879, %v6939
    %v6941 = vpop.f32.mrb[0].mxu0
    %v6942 = vpop.f32.mrb[0].mxu0
    %6943 = vdwg.mxu0
    %6944 = vmatprep.subr.bf16.mxu0 %v6559
    %6945 = vmatpush1.bf16.msra.mxu0 %v6558
    %6946 = vmatprep.subr.bf16.mxu0 %v6563
    %6947 = vmatpush1.bf16.msra.mxu0 %v6562
    %6948 = vmatprep.subr.bf16.mxu0 %v6567
    %6949 = vmatpush1.bf16.msra.mxu0 %v6566
    %6950 = vmatprep.subr.bf16.mxu0 %v6571
    %6951 = vmatpush1.bf16.msra.mxu0 %v6570
    %6952 = vmatprep.subr.bf16.mxu0 %v6575
    %6953 = vmatpush1.bf16.msra.mxu0 %v6574
    %6954 = vmatprep.subr.bf16.mxu0 %v6579
    %6955 = vmatpush1.bf16.msra.mxu0 %v6578
    %6956 = vmatprep.subr.bf16.mxu0 %v6583
    %6957 = vmatpush1.bf16.msra.mxu0 %v6582
    %6958 = vmatprep.subr.bf16.mxu0 %v6587
    %6959 = vmatpush1.bf16.msra.mxu0 %v6586
    %6960 = vmatprep.subr.bf16.mxu0 %v6591
    %6961 = vmatpush1.bf16.msra.mxu0 %v6590
    %6962 = vmatprep.subr.bf16.mxu0 %v6595
    %6963 = vmatpush1.bf16.msra.mxu0 %v6594
    %6964 = vmatprep.subr.bf16.mxu0 %v6599
    %6965 = vmatpush1.bf16.msra.mxu0 %v6598
    %6966 = vmatprep.subr.bf16.mxu0 %v6603
    %6967 = vmatpush1.bf16.msra.mxu0 %v6602
    %6968 = vmatprep.subr.bf16.mxu0 %v6607
    %6969 = vmatpush1.bf16.msra.mxu0 %v6606
    %6970 = vmatprep.subr.bf16.mxu0 %v6611
    %6971 = vmatpush1.bf16.msra.mxu0 %v6610
    %6972 = vmatprep.subr.bf16.mxu0 %v6615
    %6973 = vmatpush1.bf16.msra.mxu0 %v6614
    %6974 = vmatprep.subr.bf16.mxu0 %v6619
    %6975 = vmatpush1.bf16.msra.mxu0 %v6618
    %6976 = vmatprep.mubr.bf16.mxu0 %v6720
    %6977 = vmatmul.mubr.bf16.gmra.mrb[0].mxu0 %v6717
    %v6978 = vpop.f32.mrb[0].mxu0
    %v6979 = vadd.f32 0.0, %v6978
    %v6980 = vpop.f32.mrb[0].mxu0
    %v6981 = vadd.f32 0.0, %v6980
    %v6982 = vpop.f32.mrb[0].mxu0
    %v6983 = vadd.f32 0.0, %v6982
    %v6984 = vpop.f32.mrb[0].mxu0
    %v6985 = vadd.f32 0.0, %v6984
    %6986 = vmatprep.mubr.bf16.mxu0 %v6733
    %6987 = vmatmul.mubr.bf16.gmra.mrb[0].mxu0 %v6731
    %v6988 = vpop.f32.mrb[0].mxu0
    %v6989 = vadd.f32 0.0, %v6988
    %v6990 = vpop.f32.mrb[0].mxu0
    %v6991 = vadd.f32 0.0, %v6990
    %v6992 = vpop.f32.mrb[0].mxu0
    %v6993 = vadd.f32 0.0, %v6992
    %v6994 = vpop.f32.mrb[0].mxu0
    %v6995 = vadd.f32 0.0, %v6994
    %6996 = vmatprep.mubr.bf16.mxu0 %v6732
    %6997 = vmatmul.mubr.bf16.gmra.mrb[0].mxu0 %v6730
    %v6998 = vpop.f32.mrb[0].mxu0
    %v6999 = vadd.f32 0.0, %v6998
    %v7000 = vpop.f32.mrb[0].mxu0
    %v7001 = vadd.f32 0.0, %v7000
    %v7002 = vpop.f32.mrb[0].mxu0
    %v7003 = vpop.f32.mrb[0].mxu0
    %7004 = vdwg.mxu0
    %7005 = vmatprep.subr.bf16.mxu0 %v6623
    %7006 = vmatpush1.bf16.msra.mxu0 %v6622
    %7007 = vmatprep.subr.bf16.mxu0 %v6627
    %7008 = vmatpush1.bf16.msra.mxu0 %v6626
    %7009 = vmatprep.subr.bf16.mxu0 %v6631
    %7010 = vmatpush1.bf16.msra.mxu0 %v6630
    %7011 = vmatprep.subr.bf16.mxu0 %v6635
    %7012 = vmatpush1.bf16.msra.mxu0 %v6634
    %7013 = vmatprep.subr.bf16.mxu0 %v6639
    %7014 = vmatpush1.bf16.msra.mxu0 %v6638
    %7015 = vmatprep.subr.bf16.mxu0 %v6643
    %7016 = vmatpush1.bf16.msra.mxu0 %v6642
    %7017 = vmatprep.subr.bf16.mxu0 %v6647
    %7018 = vmatpush1.bf16.msra.mxu0 %v6646
    %7019 = vmatprep.subr.bf16.mxu0 %v6651
    %7020 = vmatpush1.bf16.msra.mxu0 %v6650
    %7021 = vmatprep.subr.bf16.mxu0 %v6655
    %7022 = vmatpush1.bf16.msra.mxu0 %v6654
    %7023 = vmatprep.subr.bf16.mxu0 %v6659
    %7024 = vmatpush1.bf16.msra.mxu0 %v6658
    %7025 = vmatprep.subr.bf16.mxu0 %v6663
    %7026 = vmatpush1.bf16.msra.mxu0 %v6662
    %7027 = vmatprep.subr.bf16.mxu0 %v6667
    %7028 = vmatpush1.bf16.msra.mxu0 %v6666
    %7029 = vmatprep.subr.bf16.mxu0 %v6671
    %7030 = vmatpush1.bf16.msra.mxu0 %v6670
    %7031 = vmatprep.subr.bf16.mxu0 %v6675
    %7032 = vmatpush1.bf16.msra.mxu0 %v6674
    %7033 = vmatprep.subr.bf16.mxu0 %v6679
    %7034 = vmatpush1.bf16.msra.mxu0 %v6678
    %7035 = vmatprep.subr.bf16.mxu0 %v6683
    %7036 = vmatpush1.bf16.msra.mxu0 %v6682
    %7037 = vmatprep.mubr.bf16.mxu0 %v6726
    %7038 = vmatmul.mubr.bf16.gmra.mrb[0].mxu0 %v6723
    %v7039 = vpop.f32.mrb[0].mxu0
    %v7040 = vadd.f32 %v6979, %v7039
    %v7041 = vpop.f32.mrb[0].mxu0
    %v7042 = vadd.f32 %v6981, %v7041
    %v7043 = vpop.f32.mrb[0].mxu0
    %v7044 = vadd.f32 %v6983, %v7043
    %v7045 = vpop.f32.mrb[0].mxu0
    %v7046 = vadd.f32 %v6985, %v7045
    %7047 = vmatprep.mubr.bf16.mxu0 %v6737
    %7048 = vmatmul.mubr.bf16.gmra.mrb[0].mxu0 %v6735
    %v7049 = vpop.f32.mrb[0].mxu0
    %v7050 = vadd.f32 %v6989, %v7049
    %v7051 = vpop.f32.mrb[0].mxu0
    %v7052 = vadd.f32 %v6991, %v7051
    %v7053 = vpop.f32.mrb[0].mxu0
    %v7054 = vadd.f32 %v6993, %v7053
    %v7055 = vpop.f32.mrb[0].mxu0
    %v7056 = vadd.f32 %v6995, %v7055
    %7057 = vmatprep.mubr.bf16.mxu0 %v6736
    %7058 = vmatmul.mubr.bf16.gmra.mrb[0].mxu0 %v6734
    %v7059 = vpop.f32.mrb[0].mxu0
    %v7060 = vadd.f32 %v6999, %v7059
    %v7061 = vpop.f32.mrb[0].mxu0
    %v7062 = vadd.f32 %v7001, %v7061
    %v7063 = vpop.f32.mrb[0].mxu0
    %v7064 = vpop.f32.mrb[0].mxu0
    %7065 = vdwg.mxu0
    %7066 = vmatprep.subr.bf16.mxu0 %v6687
    %7067 = vmatpush1.bf16.msra.mxu0 %v6686
    %7068 = vmatprep.subr.bf16.mxu0 %v6691
    %7069 = vmatpush1.bf16.msra.mxu0 %v6690
    %7070 = vmatprep.subr.bf16.mxu0 %v6695
    %7071 = vmatpush1.bf16.msra.mxu0 %v6694
    %7072 = vmatprep.subr.bf16.mxu0 %v6699
    %7073 = vmatpush1.bf16.msra.mxu0 %v6698
    %7074 = vmatprep.subr.bf16.mxu0 0
    %7075 = vmatpush1.bf16.msra.mxu0 0
    %7076 = vmatprep.subr.bf16.mxu0 0
    %7077 = vmatpush1.bf16.msra.mxu0 0
    %7078 = vmatprep.subr.bf16.mxu0 0
    %7079 = vmatpush1.bf16.msra.mxu0 0
    %7080 = vmatprep.subr.bf16.mxu0 0
    %7081 = vmatpush1.bf16.msra.mxu0 0
    %7082 = vmatprep.subr.bf16.mxu0 0
    %7083 = vmatpush1.bf16.msra.mxu0 0
    %7084 = vmatprep.subr.bf16.mxu0 0
    %7085 = vmatpush1.bf16.msra.mxu0 0
    %7086 = vmatprep.subr.bf16.mxu0 0
    %7087 = vmatpush1.bf16.msra.mxu0 0
    %7088 = vmatprep.subr.bf16.mxu0 0
    %7089 = vmatpush1.bf16.msra.mxu0 0
    %7090 = vmatprep.subr.bf16.mxu0 0
    %7091 = vmatpush1.bf16.msra.mxu0 0
    %7092 = vmatprep.subr.bf16.mxu0 0
    %7093 = vmatpush1.bf16.msra.mxu0 0
    %7094 = vmatprep.subr.bf16.mxu0 0
    %7095 = vmatpush1.bf16.msra.mxu0 0
    %7096 = vmatprep.subr.bf16.mxu0 0
    %7097 = vmatpush1.bf16.msra.mxu0 0
    %7098 = vmatprep.mubr.bf16.mxu0 0
    %7099 = vmatmul.mubr.bf16.gmra.mrb[0].mxu0 %v6753
    %v7100 = vpop.f32.mrb[0].mxu0
    %v7101 = vadd.f32 %v7040, %v7100
    %v7102 = vpop.f32.mrb[0].mxu0
    %v7103 = vadd.f32 %v7042, %v7102
    %v7104 = vpop.f32.mrb[0].mxu0
    %v7105 = vadd.f32 %v7044, %v7104
    %v7106 = vpop.f32.mrb[0].mxu0
    %v7107 = vadd.f32 %v7046, %v7106
    %7108 = vmatprep.mubr.bf16.mxu0 0
    %7109 = vmatmul.mubr.bf16.gmra.mrb[0].mxu0 %v6756
    %v7110 = vpop.f32.mrb[0].mxu0
    %v7111 = vadd.f32 %v7050, %v7110
    %v7112 = vpop.f32.mrb[0].mxu0
    %v7113 = vadd.f32 %v7052, %v7112
    %v7114 = vpop.f32.mrb[0].mxu0
    %v7115 = vadd.f32 %v7054, %v7114
    %v7116 = vpop.f32.mrb[0].mxu0
    %v7117 = vadd.f32 %v7056, %v7116
    %7118 = vmatprep.mubr.bf16.mxu0 0
    %7119 = vmatmul.mubr.bf16.gmra.mrb[0].mxu0 %v6759
    %v7120 = vpop.f32.mrb[0].mxu0
    %v7121 = vadd.f32 %v7060, %v7120
    %v7122 = vpop.f32.mrb[0].mxu0
    %v7123 = vadd.f32 %v7062, %v7122
    %v7124 = vpop.f32.mrb[0].mxu0
    %v7125 = vpop.f32.mrb[0].mxu0
    %7126 = vdwg.mxu0
    %v7127 = vadd.f32 %v6346, %v6918
    %v7128 = vadd.f32 %v6348, %v6920
    %v7129 = vadd.f32 %v6529, %v7101
    %v7130 = vadd.f32 %v6531, %v7103
    %v7131 = vadd.f32 %v6350, %v6922
    %v7132 = vadd.f32 %v6352, %v6924
    %v7133 = vadd.f32 %v6533, %v7105
    %v7134 = vadd.f32 %v6535, %v7107
    %v7135 = vadd.f32 %v6356, %v6928
    %v7136 = vadd.f32 %v6358, %v6930
    %v7137 = vadd.f32 %v6539, %v7111
    %v7138 = vadd.f32 %v6541, %v7113
    %v7139 = vadd.f32 %v6360, %v6932
    %v7140 = vadd.f32 %v6362, %v6934
    %v7141 = vadd.f32 %v6543, %v7115
    %v7142 = vadd.f32 %v6545, %v7117
    %v7143 = vadd.f32 %v6366, %v6938
    %v7144 = vadd.f32 %v6368, %v6940
    %v7145 = vadd.f32 %v6549, %v7121
    %v7146 = vadd.f32 %v6551, %v7123
    %v7147 = vld [vmem:[#allocation10] sm:$0x1]
    %v7148 = vld [vmem:[#allocation12] sm:$0x1]
    %v7149 = vmul.f32 %v7127, %v7127
    %v7150 = vmul.f32 %v7128, %v7128
    %v7151 = vmul.f32 %v7129, %v7129
    %v7152 = vmul.f32 %v7130, %v7130
    %v7153 = vmul.f32 %v7131, %v7131
    %v7154 = vmul.f32 %v7132, %v7132
    %v7155 = vmul.f32 %v7133, %v7133
    %v7156 = vmul.f32 %v7134, %v7134
    %7157 = vmatprep.subr.mxu0 0.0
    %7158 = vmatpush1.msra.mxu0 %v175
    %7159 = vmatprep.subr.mxu0 0.0
    %7160 = vmatpush1.msra.mxu0 %v176
    %7161 = vmatprep.subr.mxu0 0.0
    %7162 = vmatpush1.msra.mxu0 %v177
    %7163 = vmatprep.subr.mxu0 0.0
    %7164 = vmatpush1.msra.mxu0 %v178
    %7165 = vmatprep.subr.mxu0 0.0
    %7166 = vmatpush1.msra.mxu0 %v179
    %7167 = vmatprep.subr.mxu0 0.0
    %7168 = vmatpush1.msra.mxu0 %v180
    %7169 = vmatprep.subr.mxu0 0.0
    %7170 = vmatpush1.msra.mxu0 %v181
    %7171 = vmatprep.subr.mxu0 0.0
    %7172 = vmatpush1.msra.mxu0 %v182
    %7173 = vmatprep.subr.mxu0 0.0
    %7174 = vmatpush1.msra.mxu0 %v183
    %7175 = vmatprep.subr.mxu0 0.0
    %7176 = vmatpush1.msra.mxu0 %v184
    %7177 = vmatprep.subr.mxu0 0.0
    %7178 = vmatpush1.msra.mxu0 %v185
    %7179 = vmatprep.subr.mxu0 0.0
    %7180 = vmatpush1.msra.mxu0 %v186
    %7181 = vmatprep.subr.mxu0 0.0
    %7182 = vmatpush1.msra.mxu0 %v187
    %7183 = vmatprep.subr.mxu0 0.0
    %7184 = vmatpush1.msra.mxu0 %v188
    %7185 = vmatprep.subr.mxu0 0.0
    %7186 = vmatpush1.msra.mxu0 %v189
    %7187 = vmatprep.subr.mxu0 0.0
    %7188 = vmatpush1.msra.mxu0 %v190
    %7189 = vmatprep.subr.mxu0 0.0
    %7190 = vmatpush1.msra.mxu0 %v191
    %7191 = vmatprep.subr.mxu0 0.0
    %7192 = vmatpush1.msra.mxu0 %v192
    %7193 = vmatprep.subr.mxu0 0.0
    %7194 = vmatpush1.msra.mxu0 %v193
    %7195 = vmatprep.subr.mxu0 0.0
    %7196 = vmatpush1.msra.mxu0 %v194
    %7197 = vmatprep.subr.mxu0 0.0
    %7198 = vmatpush1.msra.mxu0 %v195
    %7199 = vmatprep.subr.mxu0 0.0
    %7200 = vmatpush1.msra.mxu0 %v196
    %7201 = vmatprep.subr.mxu0 0.0
    %7202 = vmatpush1.msra.mxu0 %v197
    %7203 = vmatprep.subr.mxu0 0.0
    %7204 = vmatpush1.msra.mxu0 %v198
    %7205 = vmatprep.subr.mxu0 0.0
    %7206 = vmatpush1.msra.mxu0 %v199
    %7207 = vmatprep.subr.mxu0 0.0
    %7208 = vmatpush1.msra.mxu0 %v200
    %7209 = vmatprep.subr.mxu0 0.0
    %7210 = vmatpush1.msra.mxu0 %v201
    %7211 = vmatprep.subr.mxu0 0.0
    %7212 = vmatpush1.msra.mxu0 %v202
    %7213 = vmatprep.subr.mxu0 0.0
    %7214 = vmatpush1.msra.mxu0 %v203
    %7215 = vmatprep.subr.mxu0 0.0
    %7216 = vmatpush1.msra.mxu0 %v204
    %7217 = vmatprep.subr.mxu0 0.0
    %7218 = vmatpush1.msra.mxu0 %v205
    %7219 = vmatprep.subr.mxu0 0.0
    %7220 = vmatpush1.msra.mxu0 %v206
    %7221 = vmatprep.mubr.f32.mxu0 %v7128
    %7222 = vmatmul.mubr.f32.gmra.mrb[0].mxu0 %v7127
    %v7223 = vpop.f32.mrb[0].mxu0
    %v7224 = vadd.f32 0.0, %v7223
    %v7225 = vpop.f32.mrb[0].mxu0
    %7226 = vmatprep.mubr.f32.mxu0 %v7132
    %7227 = vmatmul.mubr.f32.gmra.mrb[0].mxu0 %v7131
    %v7228 = vpop.f32.mrb[0].mxu0
    %v7229 = vadd.f32 0.0, %v7228
    %v7230 = vpop.f32.mrb[0].mxu0
    %7231 = vmatprep.mubr.f32.mxu0 %v7150
    %7232 = vmatmul.mubr.f32.gmra.mrb[0].mxu0 %v7149
    %v7233 = vpop.f32.mrb[0].mxu0
    %v7234 = vadd.f32 0.0, %v7233
    %v7235 = vpop.f32.mrb[0].mxu0
    %7236 = vmatprep.mubr.f32.mxu0 %v7154
    %7237 = vmatmul.mubr.f32.gmra.mrb[0].mxu0 %v7153
    %v7238 = vpop.f32.mrb[0].mxu0
    %v7239 = vadd.f32 0.0, %v7238
    %v7240 = vpop.f32.mrb[0].mxu0
    %7241 = vdwg.mxu0
    %7242 = vmatprep.subr.mxu0 0.0
    %7243 = vmatpush1.msra.mxu0 %v207
    %7244 = vmatprep.subr.mxu0 0.0
    %7245 = vmatpush1.msra.mxu0 %v208
    %7246 = vmatprep.subr.mxu0 0.0
    %7247 = vmatpush1.msra.mxu0 %v209
    %7248 = vmatprep.subr.mxu0 0.0
    %7249 = vmatpush1.msra.mxu0 %v210
    %7250 = vmatprep.subr.mxu0 0.0
    %7251 = vmatpush1.msra.mxu0 %v211
    %7252 = vmatprep.subr.mxu0 0.0
    %7253 = vmatpush1.msra.mxu0 %v212
    %7254 = vmatprep.subr.mxu0 0.0
    %7255 = vmatpush1.msra.mxu0 %v213
    %7256 = vmatprep.subr.mxu0 0.0
    %7257 = vmatpush1.msra.mxu0 %v214
    %7258 = vmatprep.subr.mxu0 0.0
    %7259 = vmatpush1.msra.mxu0 %v215
    %7260 = vmatprep.subr.mxu0 0.0
    %7261 = vmatpush1.msra.mxu0 %v216
    %7262 = vmatprep.subr.mxu0 0.0
    %7263 = vmatpush1.msra.mxu0 %v217
    %7264 = vmatprep.subr.mxu0 0.0
    %7265 = vmatpush1.msra.mxu0 %v218
    %7266 = vmatprep.subr.mxu0 0.0
    %7267 = vmatpush1.msra.mxu0 %v219
    %7268 = vmatprep.subr.mxu0 0.0
    %7269 = vmatpush1.msra.mxu0 %v220
    %7270 = vmatprep.subr.mxu0 0.0
    %7271 = vmatpush1.msra.mxu0 %v221
    %7272 = vmatprep.subr.mxu0 0.0
    %7273 = vmatpush1.msra.mxu0 %v222
    %7274 = vmatprep.subr.mxu0 0.0
    %7275 = vmatpush1.msra.mxu0 %v223
    %7276 = vmatprep.subr.mxu0 0.0
    %7277 = vmatpush1.msra.mxu0 %v224
    %7278 = vmatprep.subr.mxu0 0.0
    %7279 = vmatpush1.msra.mxu0 %v225
    %7280 = vmatprep.subr.mxu0 0.0
    %7281 = vmatpush1.msra.mxu0 %v226
    %7282 = vmatprep.subr.mxu0 0.0
    %7283 = vmatpush1.msra.mxu0 %v227
    %7284 = vmatprep.subr.mxu0 0.0
    %7285 = vmatpush1.msra.mxu0 %v228
    %7286 = vmatprep.subr.mxu0 0.0
    %7287 = vmatpush1.msra.mxu0 %v229
    %7288 = vmatprep.subr.mxu0 0.0
    %7289 = vmatpush1.msra.mxu0 %v230
    %7290 = vmatprep.subr.mxu0 0.0
    %7291 = vmatpush1.msra.mxu0 %v231
    %7292 = vmatprep.subr.mxu0 0.0
    %7293 = vmatpush1.msra.mxu0 %v232
    %7294 = vmatprep.subr.mxu0 0.0
    %7295 = vmatpush1.msra.mxu0 %v233
    %7296 = vmatprep.subr.mxu0 0.0
    %7297 = vmatpush1.msra.mxu0 %v234
    %7298 = vmatprep.subr.mxu0 0.0
    %7299 = vmatpush1.msra.mxu0 %v235
    %7300 = vmatprep.subr.mxu0 0.0
    %7301 = vmatpush1.msra.mxu0 %v236
    %7302 = vmatprep.subr.mxu0 0.0
    %7303 = vmatpush1.msra.mxu0 %v237
    %7304 = vmatprep.subr.mxu0 0.0
    %7305 = vmatpush1.msra.mxu0 %v238
    %7306 = vmatprep.mubr.f32.mxu0 %v7130
    %7307 = vmatmul.mubr.f32.gmra.mrb[0].mxu0 %v7129
    %v7308 = vpop.f32.mrb[0].mxu0
    %v7309 = vadd.f32 %v7224, %v7308
    %v7310 = vpop.f32.mrb[0].mxu0
    %7311 = vmatprep.mubr.f32.mxu0 %v7134
    %7312 = vmatmul.mubr.f32.gmra.mrb[0].mxu0 %v7133
    %v7313 = vpop.f32.mrb[0].mxu0
    %v7314 = vadd.f32 %v7229, %v7313
    %v7315 = vpop.f32.mrb[0].mxu0
    %7316 = vmatprep.mubr.f32.mxu0 %v7152
    %7317 = vmatmul.mubr.f32.gmra.mrb[0].mxu0 %v7151
    %v7318 = vpop.f32.mrb[0].mxu0
    %v7319 = vadd.f32 %v7234, %v7318
    %v7320 = vpop.f32.mrb[0].mxu0
    %7321 = vmatprep.mubr.f32.mxu0 %v7156
    %7322 = vmatmul.mubr.f32.gmra.mrb[0].mxu0 %v7155
    %v7323 = vpop.f32.mrb[0].mxu0
    %v7324 = vadd.f32 %v7239, %v7323
    %v7325 = vpop.f32.mrb[0].mxu0
    %7326 = vdwg.mxu0
    %v7327 = vsel %vm4498, %v7309, 0.0
    %v7328 = vsel %vm4498, %v7314, 0.0
    %v7329 = vadd.f32 %v7327, %v7328
    %v7330 = vrot.slane %v7329, 4
    %v7331 = vadd.f32 %v7329, %v7330
    %v7332 = vrot.slane %v7331, 2
    %v7333 = vadd.f32 %v7331, %v7332
    %v7334 = vrot.slane %v7333, 1
    %v7335 = vadd.f32 %v7333, %v7334
    %v7336 = vsel %vm4498, %v7319, 0.0
    %v7337 = vsel %vm4498, %v7324, 0.0
    %v7338 = vadd.f32 %v7336, %v7337
    %v7339 = vrot.slane %v7338, 4
    %v7340 = vadd.f32 %v7338, %v7339
    %v7341 = vrot.slane %v7340, 2
    %v7342 = vadd.f32 %v7340, %v7341
    %v7343 = vrot.slane %v7342, 1
    %v7344 = vadd.f32 %v7342, %v7343
    %v7345 = vmul.f32 %v7335, %v4517
    %v7346 = vmul.f32 %v7344, %v4517
    %v7347 = vmul.f32 %v7345, %v7345
    %v7348 = vsub.f32 %v7346, %v7347
    %v7349 = vadd.f32 %v7348, 1e-05
    %v7350 = vrsqrt.pop %v7349
    %v7351 = vmul.f32 %v7350, %v7147
    %v7352 = vmul.f32 %v7345, %v7351
    %v7353 = vsub.f32 %v7148, %v7352
    %v7355 = vlaneseq
    %v7356 = vshrl.u32 %v7355, 7
    %v7357 = vsub.s32 0, %v7356
    %v7358 = vrot.slane %v7353, %v7357
    %v7360 = vsel %vm271, %v7351, %v7358
    %v7362 = vsel %vm4498, %v7360, 0
    %7364 = vmatprep.subr.mxu0 %v240
    %7365 = vmatpush1.msra.mxu0 %v239
    %7366 = vmatprep.subr.mxu0 %v244
    %7367 = vmatpush1.msra.mxu0 %v243
    %7368 = vmatprep.subr.mxu0 %v248
    %7369 = vmatpush1.msra.mxu0 %v247
    %7370 = vmatprep.subr.mxu0 %v252
    %7371 = vmatpush1.msra.mxu0 %v251
    %7372 = vmatprep.subr.mxu0 0.0
    %7373 = vmatpush1.msra.mxu0 0.0
    %7374 = vmatprep.subr.mxu0 0.0
    %7375 = vmatpush1.msra.mxu0 0.0
    %7376 = vmatprep.subr.mxu0 0.0
    %7377 = vmatpush1.msra.mxu0 0.0
    %7378 = vmatprep.subr.mxu0 0.0
    %7379 = vmatpush1.msra.mxu0 0.0
    %7380 = vmatprep.subr.mxu0 0.0
    %7381 = vmatpush1.msra.mxu0 0.0
    %7382 = vmatprep.subr.mxu0 0.0
    %7383 = vmatpush1.msra.mxu0 0.0
    %7384 = vmatprep.subr.mxu0 0.0
    %7385 = vmatpush1.msra.mxu0 0.0
    %7386 = vmatprep.subr.mxu0 0.0
    %7387 = vmatpush1.msra.mxu0 0.0
    %7388 = vmatprep.subr.mxu0 0.0
    %7389 = vmatpush1.msra.mxu0 0.0
    %7390 = vmatprep.subr.mxu0 0.0
    %7391 = vmatpush1.msra.mxu0 0.0
    %7392 = vmatprep.subr.mxu0 0.0
    %7393 = vmatpush1.msra.mxu0 0.0
    %7394 = vmatprep.subr.mxu0 0.0
    %7395 = vmatpush1.msra.mxu0 0.0
    %7396 = vmatprep.subr.mxu0 0.0
    %7397 = vmatpush1.msra.mxu0 0.0
    %7398 = vmatprep.subr.mxu0 0.0
    %7399 = vmatpush1.msra.mxu0 0.0
    %7400 = vmatprep.subr.mxu0 0.0
    %7401 = vmatpush1.msra.mxu0 0.0
    %7402 = vmatprep.subr.mxu0 0.0
    %7403 = vmatpush1.msra.mxu0 0.0
    %7404 = vmatprep.subr.mxu0 0.0
    %7405 = vmatpush1.msra.mxu0 0.0
    %7406 = vmatprep.subr.mxu0 0.0
    %7407 = vmatpush1.msra.mxu0 0.0
    %7408 = vmatprep.subr.mxu0 0.0
    %7409 = vmatpush1.msra.mxu0 0.0
    %7410 = vmatprep.subr.mxu0 0.0
    %7411 = vmatpush1.msra.mxu0 0.0
    %7412 = vmatprep.subr.mxu0 0.0
    %7413 = vmatpush1.msra.mxu0 0.0
    %7414 = vmatprep.subr.mxu0 0.0
    %7415 = vmatpush1.msra.mxu0 0.0
    %7416 = vmatprep.subr.mxu0 0.0
    %7417 = vmatpush1.msra.mxu0 0.0
    %7418 = vmatprep.subr.mxu0 0.0
    %7419 = vmatpush1.msra.mxu0 0.0
    %7420 = vmatprep.subr.mxu0 0.0
    %7421 = vmatpush1.msra.mxu0 0.0
    %7422 = vmatprep.subr.mxu0 0.0
    %7423 = vmatpush1.msra.mxu0 0.0
    %7424 = vmatprep.subr.mxu0 0.0
    %7425 = vmatpush1.msra.mxu0 0.0
    %7426 = vmatprep.subr.mxu0 0.0
    %7427 = vmatpush1.msra.mxu0 0.0
    %7428 = vmatprep.mubr.f32.mxu0 0.0
    %7429 = vmatmul.mubr.f32.gmra.mrb[0].mxu0 %v7362
    %v7430 = vpop.f32.mrb[0].mxu0
    %v7431 = vadd.f32 0.0, %v7430
    %v7432 = vpop.f32.mrb[0].mxu0
    %v7433 = vadd.f32 0.0, %v7432
    %7434 = vdwg.mxu0
    %7435 = vmatprep.subr.mxu0 %v242
    %7436 = vmatpush1.msra.mxu0 %v241
    %7437 = vmatprep.subr.mxu0 %v246
    %7438 = vmatpush1.msra.mxu0 %v245
    %7439 = vmatprep.subr.mxu0 %v250
    %7440 = vmatpush1.msra.mxu0 %v249
    %7441 = vmatprep.subr.mxu0 %v254
    %7442 = vmatpush1.msra.mxu0 %v253
    %7443 = vmatprep.subr.mxu0 0.0
    %7444 = vmatpush1.msra.mxu0 0.0
    %7445 = vmatprep.subr.mxu0 0.0
    %7446 = vmatpush1.msra.mxu0 0.0
    %7447 = vmatprep.subr.mxu0 0.0
    %7448 = vmatpush1.msra.mxu0 0.0
    %7449 = vmatprep.subr.mxu0 0.0
    %7450 = vmatpush1.msra.mxu0 0.0
    %7451 = vmatprep.subr.mxu0 0.0
    %7452 = vmatpush1.msra.mxu0 0.0
    %7453 = vmatprep.subr.mxu0 0.0
    %7454 = vmatpush1.msra.mxu0 0.0
    %7455 = vmatprep.subr.mxu0 0.0
    %7456 = vmatpush1.msra.mxu0 0.0
    %7457 = vmatprep.subr.mxu0 0.0
    %7458 = vmatpush1.msra.mxu0 0.0
    %7459 = vmatprep.subr.mxu0 0.0
    %7460 = vmatpush1.msra.mxu0 0.0
    %7461 = vmatprep.subr.mxu0 0.0
    %7462 = vmatpush1.msra.mxu0 0.0
    %7463 = vmatprep.subr.mxu0 0.0
    %7464 = vmatpush1.msra.mxu0 0.0
    %7465 = vmatprep.subr.mxu0 0.0
    %7466 = vmatpush1.msra.mxu0 0.0
    %7467 = vmatprep.subr.mxu0 0.0
    %7468 = vmatpush1.msra.mxu0 0.0
    %7469 = vmatprep.subr.mxu0 0.0
    %7470 = vmatpush1.msra.mxu0 0.0
    %7471 = vmatprep.subr.mxu0 0.0
    %7472 = vmatpush1.msra.mxu0 0.0
    %7473 = vmatprep.subr.mxu0 0.0
    %7474 = vmatpush1.msra.mxu0 0.0
    %7475 = vmatprep.subr.mxu0 0.0
    %7476 = vmatpush1.msra.mxu0 0.0
    %7477 = vmatprep.subr.mxu0 0.0
    %7478 = vmatpush1.msra.mxu0 0.0
    %7479 = vmatprep.subr.mxu0 0.0
    %7480 = vmatpush1.msra.mxu0 0.0
    %7481 = vmatprep.subr.mxu0 0.0
    %7482 = vmatpush1.msra.mxu0 0.0
    %7483 = vmatprep.subr.mxu0 0.0
    %7484 = vmatpush1.msra.mxu0 0.0
    %7485 = vmatprep.subr.mxu0 0.0
    %7486 = vmatpush1.msra.mxu0 0.0
    %7487 = vmatprep.subr.mxu0 0.0
    %7488 = vmatpush1.msra.mxu0 0.0
    %7489 = vmatprep.subr.mxu0 0.0
    %7490 = vmatpush1.msra.mxu0 0.0
    %7491 = vmatprep.subr.mxu0 0.0
    %7492 = vmatpush1.msra.mxu0 0.0
    %7493 = vmatprep.subr.mxu0 0.0
    %7494 = vmatpush1.msra.mxu0 0.0
    %7495 = vmatprep.subr.mxu0 0.0
    %7496 = vmatpush1.msra.mxu0 0.0
    %7497 = vmatprep.subr.mxu0 0.0
    %7498 = vmatpush1.msra.mxu0 0.0
    %7499 = vmatprep.mubr.f32.mxu0 0.0
    %7500 = vmatmul.mubr.f32.gmra.mrb[0].mxu0 %v7362
    %v7501 = vpop.f32.mrb[0].mxu0
    %v7502 = vadd.f32 0.0, %v7501
    %v7503 = vpop.f32.mrb[0].mxu0
    %v7504 = vadd.f32 0.0, %v7503
    %7505 = vdwg.mxu0
    %v7506 = vlaneseq
    %v7507 = vshrl.u32 %v7506, 7
    %v7508 = vsub.s32 0, %v7507
    %v7509 = vrot.slane %v7431, %v7508
    %v7510 = vlaneseq
    %v7511 = vshrl.u32 %v7510, 7
    %v7512 = vsub.s32 0, %v7511
    %v7513 = vrot.slane %v7433, %v7512
    %v7514 = vlaneseq
    %v7515 = vshrl.u32 %v7514, 7
    %v7516 = vsub.s32 0, %v7515
    %v7517 = vrot.slane %v7502, %v7516
    %v7518 = vlaneseq
    %v7519 = vshrl.u32 %v7518, 7
    %v7520 = vsub.s32 0, %v7519
    %v7521 = vrot.slane %v7504, %v7520
    %v7522 = vmul.f32 %v7127, %v7509
    %v7523 = vmul.f32 %v7128, %v7513
    %v7524 = vmul.f32 %v7129, %v7517
    %v7525 = vmul.f32 %v7130, %v7521
    %v7526 = vmul.f32 %v7131, %v7509
    %v7527 = vmul.f32 %v7132, %v7513
    %v7528 = vmul.f32 %v7133, %v7517
    %v7529 = vmul.f32 %v7134, %v7521
    %v7530 = vlaneseq
    %v7531 = vshrl.u32 %v7530, 7
    %v7532 = vsub.s32 1, %v7531
    %v7533 = vrot.slane %v7431, %v7532
    %v7534 = vlaneseq
    %v7535 = vshrl.u32 %v7534, 7
    %v7536 = vsub.s32 1, %v7535
    %v7537 = vrot.slane %v7433, %v7536
    %v7538 = vlaneseq
    %v7539 = vshrl.u32 %v7538, 7
    %v7540 = vsub.s32 1, %v7539
    %v7541 = vrot.slane %v7502, %v7540
    %v7542 = vlaneseq
    %v7543 = vshrl.u32 %v7542, 7
    %v7544 = vsub.s32 1, %v7543
    %v7545 = vrot.slane %v7504, %v7544
    %v7546 = vadd.f32 %v7522, %v7533
    %v7547 = vadd.f32 %v7523, %v7537
    %v7548 = vadd.f32 %v7524, %v7541
    %v7549 = vadd.f32 %v7525, %v7545
    %v7550 = vadd.f32 %v7526, %v7533
    %v7551 = vadd.f32 %v7527, %v7537
    %v7552 = vadd.f32 %v7528, %v7541
    %v7553 = vadd.f32 %v7529, %v7545
    %v7554 = vld [vmem:[%s0] sm:$0xff]
    %v7555 = vld [vmem:[%s0 + $0x8] sm:$0xff]
    %v7556 = vld [vmem:[%s0 + $0x10] sm:$0xff]
    %v7557 = vld [vmem:[%s0 + $0x18] sm:$0xff]
    %v7558 = vld [vmem:[%s0 + $0x20] sm:$0xff]
    %v7559 = vld [vmem:[%s0 + $0x28] sm:$0xff]
    %v7560 = vld [vmem:[%s0 + $0x30] sm:$0xff]
    %v7561 = vld [vmem:[%s0 + $0x38] sm:$0xff]
    %v7562 = vadd.f32 %v7546, %v7554
    %v7563 = vadd.f32 %v7547, %v7555
    %v7564 = vadd.f32 %v7548, %v7556
    %v7565 = vadd.f32 %v7549, %v7557
    %v7566 = vadd.f32 %v7550, %v7558
    %v7567 = vadd.f32 %v7551, %v7559
    %v7568 = vadd.f32 %v7552, %v7560
    %v7569 = vadd.f32 %v7553, %v7561
    %v7570 = vmax.f32 %v7562, 0.0
    %v7571 = vmax.f32 %v7563, 0.0
    %v7572 = vmax.f32 %v7564, 0.0
    %v7573 = vmax.f32 %v7565, 0.0
    %v7574 = vmax.f32 %v7566, 0.0
    %v7575 = vmax.f32 %v7567, 0.0
    %v7576 = vmax.f32 %v7568, 0.0
    %v7577 = vmax.f32 %v7569, 0.0
    %7578 = vst [vmem:[%s9] sm:$0xff] %v7570
    %7579 = vst [vmem:[%s9 + $0x8] sm:$0xff] %v7571
    %7580 = vst [vmem:[%s9 + $0x10] sm:$0xff] %v7572
    %7581 = vst [vmem:[%s9 + $0x18] sm:$0xff] %v7573
    %7582 = vst [vmem:[%s9 + $0x20] sm:$0xff] %v7574
    %7583 = vst [vmem:[%s9 + $0x28] sm:$0xff] %v7575
    %7584 = vst [vmem:[%s9 + $0x30] sm:$0xff] %v7576
    %7585 = vst [vmem:[%s9 + $0x38] sm:$0xff] %v7577
    %v7586 = vld [vmem:[#allocation10] sm:$0x1]
    %v7587 = vld [vmem:[#allocation12] sm:$0x1]
    %v7588 = vmul.f32 %v7135, %v7135
    %v7589 = vmul.f32 %v7136, %v7136
    %v7590 = vmul.f32 %v7137, %v7137
    %v7591 = vmul.f32 %v7138, %v7138
    %v7592 = vmul.f32 %v7139, %v7139
    %v7593 = vmul.f32 %v7140, %v7140
    %v7594 = vmul.f32 %v7141, %v7141
    %v7595 = vmul.f32 %v7142, %v7142
    %v7596 = vmul.f32 %v7143, %v7143
    %v7597 = vmul.f32 %v7144, %v7144
    %v7598 = vmul.f32 %v7145, %v7145
    %v7599 = vmul.f32 %v7146, %v7146
    %v7612 = vrot.slane %v7135, 2
    %v7613 = vrot.slane %v7139, 2
    %v7614 = vsel %vm4805, %v7612, %v7613
    %v7615 = vrot.slane %v7136, 2
    %v7616 = vrot.slane %v7140, 2
    %v7617 = vsel %vm4805, %v7615, %v7616
    %v7618 = vrot.slane %v7137, 2
    %v7619 = vrot.slane %v7141, 2
    %v7620 = vsel %vm4805, %v7618, %v7619
    %v7621 = vrot.slane %v7138, 2
    %v7622 = vrot.slane %v7142, 2
    %v7623 = vsel %vm4805, %v7621, %v7622
    %v7624 = vrot.slane %v7143, 2
    %v7625 = vsel %vm4805, %v7613, %v7624
    %v7626 = vrot.slane %v7144, 2
    %v7627 = vsel %vm4805, %v7616, %v7626
    %v7628 = vrot.slane %v7145, 2
    %v7629 = vsel %vm4805, %v7619, %v7628
    %v7630 = vrot.slane %v7146, 2
    %v7631 = vsel %vm4805, %v7622, %v7630
    %v7652 = vrot.slane %v7588, 2
    %v7653 = vrot.slane %v7592, 2
    %v7654 = vsel %vm4805, %v7652, %v7653
    %v7655 = vrot.slane %v7589, 2
    %v7656 = vrot.slane %v7593, 2
    %v7657 = vsel %vm4805, %v7655, %v7656
    %v7658 = vrot.slane %v7590, 2
    %v7659 = vrot.slane %v7594, 2
    %v7660 = vsel %vm4805, %v7658, %v7659
    %v7661 = vrot.slane %v7591, 2
    %v7662 = vrot.slane %v7595, 2
    %v7663 = vsel %vm4805, %v7661, %v7662
    %v7664 = vrot.slane %v7596, 2
    %v7665 = vsel %vm4805, %v7653, %v7664
    %v7666 = vrot.slane %v7597, 2
    %v7667 = vsel %vm4805, %v7656, %v7666
    %v7668 = vrot.slane %v7598, 2
    %v7669 = vsel %vm4805, %v7659, %v7668
    %v7670 = vrot.slane %v7599, 2
    %v7671 = vsel %vm4805, %v7662, %v7670
    %7680 = vmatprep.subr.mxu0 0.0
    %7681 = vmatpush1.msra.mxu0 %v175
    %7682 = vmatprep.subr.mxu0 0.0
    %7683 = vmatpush1.msra.mxu0 %v176
    %7684 = vmatprep.subr.mxu0 0.0
    %7685 = vmatpush1.msra.mxu0 %v177
    %7686 = vmatprep.subr.mxu0 0.0
    %7687 = vmatpush1.msra.mxu0 %v178
    %7688 = vmatprep.subr.mxu0 0.0
    %7689 = vmatpush1.msra.mxu0 %v179
    %7690 = vmatprep.subr.mxu0 0.0
    %7691 = vmatpush1.msra.mxu0 %v180
    %7692 = vmatprep.subr.mxu0 0.0
    %7693 = vmatpush1.msra.mxu0 %v181
    %7694 = vmatprep.subr.mxu0 0.0
    %7695 = vmatpush1.msra.mxu0 %v182
    %7696 = vmatprep.subr.mxu0 0.0
    %7697 = vmatpush1.msra.mxu0 %v183
    %7698 = vmatprep.subr.mxu0 0.0
    %7699 = vmatpush1.msra.mxu0 %v184
    %7700 = vmatprep.subr.mxu0 0.0
    %7701 = vmatpush1.msra.mxu0 %v185
    %7702 = vmatprep.subr.mxu0 0.0
    %7703 = vmatpush1.msra.mxu0 %v186
    %7704 = vmatprep.subr.mxu0 0.0
    %7705 = vmatpush1.msra.mxu0 %v187
    %7706 = vmatprep.subr.mxu0 0.0
    %7707 = vmatpush1.msra.mxu0 %v188
    %7708 = vmatprep.subr.mxu0 0.0
    %7709 = vmatpush1.msra.mxu0 %v189
    %7710 = vmatprep.subr.mxu0 0.0
    %7711 = vmatpush1.msra.mxu0 %v190
    %7712 = vmatprep.subr.mxu0 0.0
    %7713 = vmatpush1.msra.mxu0 %v191
    %7714 = vmatprep.subr.mxu0 0.0
    %7715 = vmatpush1.msra.mxu0 %v192
    %7716 = vmatprep.subr.mxu0 0.0
    %7717 = vmatpush1.msra.mxu0 %v193
    %7718 = vmatprep.subr.mxu0 0.0
    %7719 = vmatpush1.msra.mxu0 %v194
    %7720 = vmatprep.subr.mxu0 0.0
    %7721 = vmatpush1.msra.mxu0 %v195
    %7722 = vmatprep.subr.mxu0 0.0
    %7723 = vmatpush1.msra.mxu0 %v196
    %7724 = vmatprep.subr.mxu0 0.0
    %7725 = vmatpush1.msra.mxu0 %v197
    %7726 = vmatprep.subr.mxu0 0.0
    %7727 = vmatpush1.msra.mxu0 %v198
    %7728 = vmatprep.subr.mxu0 0.0
    %7729 = vmatpush1.msra.mxu0 %v199
    %7730 = vmatprep.subr.mxu0 0.0
    %7731 = vmatpush1.msra.mxu0 %v200
    %7732 = vmatprep.subr.mxu0 0.0
    %7733 = vmatpush1.msra.mxu0 %v201
    %7734 = vmatprep.subr.mxu0 0.0
    %7735 = vmatpush1.msra.mxu0 %v202
    %7736 = vmatprep.subr.mxu0 0.0
    %7737 = vmatpush1.msra.mxu0 %v203
    %7738 = vmatprep.subr.mxu0 0.0
    %7739 = vmatpush1.msra.mxu0 %v204
    %7740 = vmatprep.subr.mxu0 0.0
    %7741 = vmatpush1.msra.mxu0 %v205
    %7742 = vmatprep.subr.mxu0 0.0
    %7743 = vmatpush1.msra.mxu0 %v206
    %7744 = vmatprep.mubr.f32.mxu0 %v7617
    %7745 = vmatmul.mubr.f32.gmra.mrb[0].mxu0 %v7614
    %v7746 = vpop.f32.mrb[0].mxu0
    %v7747 = vadd.f32 0.0, %v7746
    %v7748 = vpop.f32.mrb[0].mxu0
    %7749 = vmatprep.mubr.f32.mxu0 %v7627
    %7750 = vmatmul.mubr.f32.gmra.mrb[0].mxu0 %v7625
    %v7751 = vpop.f32.mrb[0].mxu0
    %v7752 = vadd.f32 0.0, %v7751
    %v7753 = vpop.f32.mrb[0].mxu0
    %7754 = vmatprep.mubr.f32.mxu0 %v7657
    %7755 = vmatmul.mubr.f32.gmra.mrb[0].mxu0 %v7654
    %v7756 = vpop.f32.mrb[0].mxu0
    %v7757 = vadd.f32 0.0, %v7756
    %v7758 = vpop.f32.mrb[0].mxu0
    %7759 = vmatprep.mubr.f32.mxu0 %v7667
    %7760 = vmatmul.mubr.f32.gmra.mrb[0].mxu0 %v7665
    %v7761 = vpop.f32.mrb[0].mxu0
    %v7762 = vadd.f32 0.0, %v7761
    %v7763 = vpop.f32.mrb[0].mxu0
    %7764 = vdwg.mxu0
    %7765 = vmatprep.subr.mxu0 0.0
    %7766 = vmatpush1.msra.mxu0 %v207
    %7767 = vmatprep.subr.mxu0 0.0
    %7768 = vmatpush1.msra.mxu0 %v208
    %7769 = vmatprep.subr.mxu0 0.0
    %7770 = vmatpush1.msra.mxu0 %v209
    %7771 = vmatprep.subr.mxu0 0.0
    %7772 = vmatpush1.msra.mxu0 %v210
    %7773 = vmatprep.subr.mxu0 0.0
    %7774 = vmatpush1.msra.mxu0 %v211
    %7775 = vmatprep.subr.mxu0 0.0
    %7776 = vmatpush1.msra.mxu0 %v212
    %7777 = vmatprep.subr.mxu0 0.0
    %7778 = vmatpush1.msra.mxu0 %v213
    %7779 = vmatprep.subr.mxu0 0.0
    %7780 = vmatpush1.msra.mxu0 %v214
    %7781 = vmatprep.subr.mxu0 0.0
    %7782 = vmatpush1.msra.mxu0 %v215
    %7783 = vmatprep.subr.mxu0 0.0
    %7784 = vmatpush1.msra.mxu0 %v216
    %7785 = vmatprep.subr.mxu0 0.0
    %7786 = vmatpush1.msra.mxu0 %v217
    %7787 = vmatprep.subr.mxu0 0.0
    %7788 = vmatpush1.msra.mxu0 %v218
    %7789 = vmatprep.subr.mxu0 0.0
    %7790 = vmatpush1.msra.mxu0 %v219
    %7791 = vmatprep.subr.mxu0 0.0
    %7792 = vmatpush1.msra.mxu0 %v220
    %7793 = vmatprep.subr.mxu0 0.0
    %7794 = vmatpush1.msra.mxu0 %v221
    %7795 = vmatprep.subr.mxu0 0.0
    %7796 = vmatpush1.msra.mxu0 %v222
    %7797 = vmatprep.subr.mxu0 0.0
    %7798 = vmatpush1.msra.mxu0 %v223
    %7799 = vmatprep.subr.mxu0 0.0
    %7800 = vmatpush1.msra.mxu0 %v224
    %7801 = vmatprep.subr.mxu0 0.0
    %7802 = vmatpush1.msra.mxu0 %v225
    %7803 = vmatprep.subr.mxu0 0.0
    %7804 = vmatpush1.msra.mxu0 %v226
    %7805 = vmatprep.subr.mxu0 0.0
    %7806 = vmatpush1.msra.mxu0 %v227
    %7807 = vmatprep.subr.mxu0 0.0
    %7808 = vmatpush1.msra.mxu0 %v228
    %7809 = vmatprep.subr.mxu0 0.0
    %7810 = vmatpush1.msra.mxu0 %v229
    %7811 = vmatprep.subr.mxu0 0.0
    %7812 = vmatpush1.msra.mxu0 %v230
    %7813 = vmatprep.subr.mxu0 0.0
    %7814 = vmatpush1.msra.mxu0 %v231
    %7815 = vmatprep.subr.mxu0 0.0
    %7816 = vmatpush1.msra.mxu0 %v232
    %7817 = vmatprep.subr.mxu0 0.0
    %7818 = vmatpush1.msra.mxu0 %v233
    %7819 = vmatprep.subr.mxu0 0.0
    %7820 = vmatpush1.msra.mxu0 %v234
    %7821 = vmatprep.subr.mxu0 0.0
    %7822 = vmatpush1.msra.mxu0 %v235
    %7823 = vmatprep.subr.mxu0 0.0
    %7824 = vmatpush1.msra.mxu0 %v236
    %7825 = vmatprep.subr.mxu0 0.0
    %7826 = vmatpush1.msra.mxu0 %v237
    %7827 = vmatprep.subr.mxu0 0.0
    %7828 = vmatpush1.msra.mxu0 %v238
    %7829 = vmatprep.mubr.f32.mxu0 %v7623
    %7830 = vmatmul.mubr.f32.gmra.mrb[0].mxu0 %v7620
    %v7831 = vpop.f32.mrb[0].mxu0
    %v7832 = vadd.f32 %v7747, %v7831
    %v7833 = vpop.f32.mrb[0].mxu0
    %7834 = vmatprep.mubr.f32.mxu0 %v7631
    %7835 = vmatmul.mubr.f32.gmra.mrb[0].mxu0 %v7629
    %v7836 = vpop.f32.mrb[0].mxu0
    %v7837 = vadd.f32 %v7752, %v7836
    %v7838 = vpop.f32.mrb[0].mxu0
    %7839 = vmatprep.mubr.f32.mxu0 %v7663
    %7840 = vmatmul.mubr.f32.gmra.mrb[0].mxu0 %v7660
    %v7841 = vpop.f32.mrb[0].mxu0
    %v7842 = vadd.f32 %v7757, %v7841
    %v7843 = vpop.f32.mrb[0].mxu0
    %7844 = vmatprep.mubr.f32.mxu0 %v7671
    %7845 = vmatmul.mubr.f32.gmra.mrb[0].mxu0 %v7669
    %v7846 = vpop.f32.mrb[0].mxu0
    %v7847 = vadd.f32 %v7762, %v7846
    %v7848 = vpop.f32.mrb[0].mxu0
    %7849 = vdwg.mxu0
    %v7850 = vsel %vm4498, %v7832, 0.0
    %v7851 = vsel %vm4498, %v7837, 0.0
    %v7852 = vadd.f32 %v7850, %v7851
    %v7853 = vrot.slane %v7852, 4
    %v7854 = vadd.f32 %v7852, %v7853
    %v7855 = vrot.slane %v7854, 2
    %v7856 = vadd.f32 %v7854, %v7855
    %v7857 = vrot.slane %v7856, 1
    %v7858 = vadd.f32 %v7856, %v7857
    %v7859 = vsel %vm4498, %v7842, 0.0
    %v7860 = vsel %vm4498, %v7847, 0.0
    %v7861 = vadd.f32 %v7859, %v7860
    %v7862 = vrot.slane %v7861, 4
    %v7863 = vadd.f32 %v7861, %v7862
    %v7864 = vrot.slane %v7863, 2
    %v7865 = vadd.f32 %v7863, %v7864
    %v7866 = vrot.slane %v7865, 1
    %v7867 = vadd.f32 %v7865, %v7866
    %v7868 = vmul.f32 %v7858, %v4517
    %v7869 = vmul.f32 %v7867, %v4517
    %v7870 = vmul.f32 %v7868, %v7868
    %v7871 = vsub.f32 %v7869, %v7870
    %v7872 = vadd.f32 %v7871, 1e-05
    %v7873 = vrsqrt.pop %v7872
    %v7874 = vmul.f32 %v7873, %v7586
    %v7875 = vmul.f32 %v7868, %v7874
    %v7876 = vsub.f32 %v7587, %v7875
    %v7878 = vlaneseq
    %v7879 = vshrl.u32 %v7878, 7
    %v7880 = vsub.s32 0, %v7879
    %v7881 = vrot.slane %v7876, %v7880
    %v7883 = vsel %vm271, %v7874, %v7881
    %v7885 = vsel %vm4498, %v7883, 0
    %7887 = vmatprep.subr.mxu0 %v240
    %7888 = vmatpush1.msra.mxu0 %v239
    %7889 = vmatprep.subr.mxu0 %v244
    %7890 = vmatpush1.msra.mxu0 %v243
    %7891 = vmatprep.subr.mxu0 %v248
    %7892 = vmatpush1.msra.mxu0 %v247
    %7893 = vmatprep.subr.mxu0 %v252
    %7894 = vmatpush1.msra.mxu0 %v251
    %7895 = vmatprep.subr.mxu0 0.0
    %7896 = vmatpush1.msra.mxu0 0.0
    %7897 = vmatprep.subr.mxu0 0.0
    %7898 = vmatpush1.msra.mxu0 0.0
    %7899 = vmatprep.subr.mxu0 0.0
    %7900 = vmatpush1.msra.mxu0 0.0
    %7901 = vmatprep.subr.mxu0 0.0
    %7902 = vmatpush1.msra.mxu0 0.0
    %7903 = vmatprep.subr.mxu0 0.0
    %7904 = vmatpush1.msra.mxu0 0.0
    %7905 = vmatprep.subr.mxu0 0.0
    %7906 = vmatpush1.msra.mxu0 0.0
    %7907 = vmatprep.subr.mxu0 0.0
    %7908 = vmatpush1.msra.mxu0 0.0
    %7909 = vmatprep.subr.mxu0 0.0
    %7910 = vmatpush1.msra.mxu0 0.0
    %7911 = vmatprep.subr.mxu0 0.0
    %7912 = vmatpush1.msra.mxu0 0.0
    %7913 = vmatprep.subr.mxu0 0.0
    %7914 = vmatpush1.msra.mxu0 0.0
    %7915 = vmatprep.subr.mxu0 0.0
    %7916 = vmatpush1.msra.mxu0 0.0
    %7917 = vmatprep.subr.mxu0 0.0
    %7918 = vmatpush1.msra.mxu0 0.0
    %7919 = vmatprep.subr.mxu0 0.0
    %7920 = vmatpush1.msra.mxu0 0.0
    %7921 = vmatprep.subr.mxu0 0.0
    %7922 = vmatpush1.msra.mxu0 0.0
    %7923 = vmatprep.subr.mxu0 0.0
    %7924 = vmatpush1.msra.mxu0 0.0
    %7925 = vmatprep.subr.mxu0 0.0
    %7926 = vmatpush1.msra.mxu0 0.0
    %7927 = vmatprep.subr.mxu0 0.0
    %7928 = vmatpush1.msra.mxu0 0.0
    %7929 = vmatprep.subr.mxu0 0.0
    %7930 = vmatpush1.msra.mxu0 0.0
    %7931 = vmatprep.subr.mxu0 0.0
    %7932 = vmatpush1.msra.mxu0 0.0
    %7933 = vmatprep.subr.mxu0 0.0
    %7934 = vmatpush1.msra.mxu0 0.0
    %7935 = vmatprep.subr.mxu0 0.0
    %7936 = vmatpush1.msra.mxu0 0.0
    %7937 = vmatprep.subr.mxu0 0.0
    %7938 = vmatpush1.msra.mxu0 0.0
    %7939 = vmatprep.subr.mxu0 0.0
    %7940 = vmatpush1.msra.mxu0 0.0
    %7941 = vmatprep.subr.mxu0 0.0
    %7942 = vmatpush1.msra.mxu0 0.0
    %7943 = vmatprep.subr.mxu0 0.0
    %7944 = vmatpush1.msra.mxu0 0.0
    %7945 = vmatprep.subr.mxu0 0.0
    %7946 = vmatpush1.msra.mxu0 0.0
    %7947 = vmatprep.subr.mxu0 0.0
    %7948 = vmatpush1.msra.mxu0 0.0
    %7949 = vmatprep.subr.mxu0 0.0
    %7950 = vmatpush1.msra.mxu0 0.0
    %7951 = vmatprep.mubr.f32.mxu0 0.0
    %7952 = vmatmul.mubr.f32.gmra.mrb[0].mxu0 %v7885
    %v7953 = vpop.f32.mrb[0].mxu0
    %v7954 = vadd.f32 0.0, %v7953
    %v7955 = vpop.f32.mrb[0].mxu0
    %v7956 = vadd.f32 0.0, %v7955
    %7957 = vdwg.mxu0
    %7958 = vmatprep.subr.mxu0 %v242
    %7959 = vmatpush1.msra.mxu0 %v241
    %7960 = vmatprep.subr.mxu0 %v246
    %7961 = vmatpush1.msra.mxu0 %v245
    %7962 = vmatprep.subr.mxu0 %v250
    %7963 = vmatpush1.msra.mxu0 %v249
    %7964 = vmatprep.subr.mxu0 %v254
    %7965 = vmatpush1.msra.mxu0 %v253
    %7966 = vmatprep.subr.mxu0 0.0
    %7967 = vmatpush1.msra.mxu0 0.0
    %7968 = vmatprep.subr.mxu0 0.0
    %7969 = vmatpush1.msra.mxu0 0.0
    %7970 = vmatprep.subr.mxu0 0.0
    %7971 = vmatpush1.msra.mxu0 0.0
    %7972 = vmatprep.subr.mxu0 0.0
    %7973 = vmatpush1.msra.mxu0 0.0
    %7974 = vmatprep.subr.mxu0 0.0
    %7975 = vmatpush1.msra.mxu0 0.0
    %7976 = vmatprep.subr.mxu0 0.0
    %7977 = vmatpush1.msra.mxu0 0.0
    %7978 = vmatprep.subr.mxu0 0.0
    %7979 = vmatpush1.msra.mxu0 0.0
    %7980 = vmatprep.subr.mxu0 0.0
    %7981 = vmatpush1.msra.mxu0 0.0
    %7982 = vmatprep.subr.mxu0 0.0
    %7983 = vmatpush1.msra.mxu0 0.0
    %7984 = vmatprep.subr.mxu0 0.0
    %7985 = vmatpush1.msra.mxu0 0.0
    %7986 = vmatprep.subr.mxu0 0.0
    %7987 = vmatpush1.msra.mxu0 0.0
    %7988 = vmatprep.subr.mxu0 0.0
    %7989 = vmatpush1.msra.mxu0 0.0
    %7990 = vmatprep.subr.mxu0 0.0
    %7991 = vmatpush1.msra.mxu0 0.0
    %7992 = vmatprep.subr.mxu0 0.0
    %7993 = vmatpush1.msra.mxu0 0.0
    %7994 = vmatprep.subr.mxu0 0.0
    %7995 = vmatpush1.msra.mxu0 0.0
    %7996 = vmatprep.subr.mxu0 0.0
    %7997 = vmatpush1.msra.mxu0 0.0
    %7998 = vmatprep.subr.mxu0 0.0
    %7999 = vmatpush1.msra.mxu0 0.0
    %8000 = vmatprep.subr.mxu0 0.0
    %8001 = vmatpush1.msra.mxu0 0.0
    %8002 = vmatprep.subr.mxu0 0.0
    %8003 = vmatpush1.msra.mxu0 0.0
    %8004 = vmatprep.subr.mxu0 0.0
    %8005 = vmatpush1.msra.mxu0 0.0
    %8006 = vmatprep.subr.mxu0 0.0
    %8007 = vmatpush1.msra.mxu0 0.0
    %8008 = vmatprep.subr.mxu0 0.0
    %8009 = vmatpush1.msra.mxu0 0.0
    %8010 = vmatprep.subr.mxu0 0.0
    %8011 = vmatpush1.msra.mxu0 0.0
    %8012 = vmatprep.subr.mxu0 0.0
    %8013 = vmatpush1.msra.mxu0 0.0
    %8014 = vmatprep.subr.mxu0 0.0
    %8015 = vmatpush1.msra.mxu0 0.0
    %8016 = vmatprep.subr.mxu0 0.0
    %8017 = vmatpush1.msra.mxu0 0.0
    %8018 = vmatprep.subr.mxu0 0.0
    %8019 = vmatpush1.msra.mxu0 0.0
    %8020 = vmatprep.subr.mxu0 0.0
    %8021 = vmatpush1.msra.mxu0 0.0
    %8022 = vmatprep.mubr.f32.mxu0 0.0
    %8023 = vmatmul.mubr.f32.gmra.mrb[0].mxu0 %v7885
    %v8024 = vpop.f32.mrb[0].mxu0
    %v8025 = vadd.f32 0.0, %v8024
    %v8026 = vpop.f32.mrb[0].mxu0
    %v8027 = vadd.f32 0.0, %v8026
    %8028 = vdwg.mxu0
    %v8029 = vlaneseq
    %v8030 = vshrl.u32 %v8029, 7
    %v8031 = vsub.s32 0, %v8030
    %v8032 = vrot.slane %v7954, %v8031
    %v8033 = vlaneseq
    %v8034 = vshrl.u32 %v8033, 7
    %v8035 = vsub.s32 0, %v8034
    %v8036 = vrot.slane %v7956, %v8035
    %v8037 = vlaneseq
    %v8038 = vshrl.u32 %v8037, 7
    %v8039 = vsub.s32 0, %v8038
    %v8040 = vrot.slane %v8025, %v8039
    %v8041 = vlaneseq
    %v8042 = vshrl.u32 %v8041, 7
    %v8043 = vsub.s32 0, %v8042
    %v8044 = vrot.slane %v8027, %v8043
    %v8045 = vmul.f32 %v7135, %v8032
    %v8046 = vmul.f32 %v7136, %v8036
    %v8047 = vmul.f32 %v7137, %v8040
    %v8048 = vmul.f32 %v7138, %v8044
    %v8049 = vmul.f32 %v7139, %v8032
    %v8050 = vmul.f32 %v7140, %v8036
    %v8051 = vmul.f32 %v7141, %v8040
    %v8052 = vmul.f32 %v7142, %v8044
    %v8053 = vmul.f32 %v7143, %v8032
    %v8054 = vmul.f32 %v7144, %v8036
    %v8055 = vmul.f32 %v7145, %v8040
    %v8056 = vmul.f32 %v7146, %v8044
    %v8057 = vlaneseq
    %v8058 = vshrl.u32 %v8057, 7
    %v8059 = vsub.s32 1, %v8058
    %v8060 = vrot.slane %v7954, %v8059
    %v8061 = vlaneseq
    %v8062 = vshrl.u32 %v8061, 7
    %v8063 = vsub.s32 1, %v8062
    %v8064 = vrot.slane %v7956, %v8063
    %v8065 = vlaneseq
    %v8066 = vshrl.u32 %v8065, 7
    %v8067 = vsub.s32 1, %v8066
    %v8068 = vrot.slane %v8025, %v8067
    %v8069 = vlaneseq
    %v8070 = vshrl.u32 %v8069, 7
    %v8071 = vsub.s32 1, %v8070
    %v8072 = vrot.slane %v8027, %v8071
    %v8073 = vadd.f32 %v8045, %v8060
    %v8074 = vadd.f32 %v8046, %v8064
    %v8075 = vadd.f32 %v8047, %v8068
    %v8076 = vadd.f32 %v8048, %v8072
    %v8077 = vadd.f32 %v8049, %v8060
    %v8078 = vadd.f32 %v8050, %v8064
    %v8079 = vadd.f32 %v8051, %v8068
    %v8080 = vadd.f32 %v8052, %v8072
    %v8081 = vadd.f32 %v8053, %v8060
    %v8082 = vadd.f32 %v8054, %v8064
    %v8083 = vadd.f32 %v8055, %v8068
    %v8084 = vadd.f32 %v8056, %v8072
    %v8085 = vld [vmem:[%s0 + $0x40] sm:$0xff]
    %v8086 = vld [vmem:[%s0 + $0x48] sm:$0xff]
    %v8087 = vld [vmem:[%s0 + $0x50] sm:$0xff]
    %v8088 = vld [vmem:[%s0 + $0x58] sm:$0xff]
    %v8089 = vld [vmem:[%s0 + $0x60] sm:$0xff]
    %v8090 = vld [vmem:[%s0 + $0x68] sm:$0xff]
    %v8091 = vld [vmem:[%s0 + $0x70] sm:$0xff]
    %v8092 = vld [vmem:[%s0 + $0x78] sm:$0xff]
    %vm8101 = vcmask 1041408
    %v8102 = vrot.slane %v8085, 6
    %v8103 = vrot.slane %v8086, 6
    %v8104 = vrot.slane %v8087, 6
    %v8105 = vrot.slane %v8088, 6
    %v8106 = vrot.slane %v8089, 6
    %v8107 = vsel %vm8101, %v8102, %v8106
    %v8108 = vrot.slane %v8090, 6
    %v8109 = vsel %vm8101, %v8103, %v8108
    %v8110 = vrot.slane %v8091, 6
    %v8111 = vsel %vm8101, %v8104, %v8110
    %v8112 = vrot.slane %v8092, 6
    %v8113 = vsel %vm8101, %v8105, %v8112
    %v8126 = vadd.f32 %v8073, %v8102
    %v8127 = vadd.f32 %v8074, %v8103
    %v8128 = vadd.f32 %v8075, %v8104
    %v8129 = vadd.f32 %v8076, %v8105
    %v8130 = vadd.f32 %v8077, %v8107
    %v8131 = vadd.f32 %v8078, %v8109
    %v8132 = vadd.f32 %v8079, %v8111
    %v8133 = vadd.f32 %v8080, %v8113
    %v8134 = vadd.f32 %v8081, %v8106
    %v8135 = vadd.f32 %v8082, %v8108
    %v8136 = vadd.f32 %v8083, %v8110
    %v8137 = vadd.f32 %v8084, %v8112
    %v8138 = vmax.f32 %v8126, 0.0
    %v8139 = vmax.f32 %v8127, 0.0
    %v8140 = vmax.f32 %v8128, 0.0
    %v8141 = vmax.f32 %v8129, 0.0
    %v8142 = vmax.f32 %v8130, 0.0
    %v8143 = vmax.f32 %v8131, 0.0
    %v8144 = vmax.f32 %v8132, 0.0
    %v8145 = vmax.f32 %v8133, 0.0
    %v8146 = vmax.f32 %v8134, 0.0
    %v8147 = vmax.f32 %v8135, 0.0
    %v8148 = vmax.f32 %v8136, 0.0
    %v8149 = vmax.f32 %v8137, 0.0
    %v8162 = vrot.slane %v8138, 2
    %v8163 = vrot.slane %v8142, 2
    %v8164 = vsel %vm4805, %v8162, %v8163
    %v8165 = vrot.slane %v8139, 2
    %v8166 = vrot.slane %v8143, 2
    %v8167 = vsel %vm4805, %v8165, %v8166
    %v8168 = vrot.slane %v8140, 2
    %v8169 = vrot.slane %v8144, 2
    %v8170 = vsel %vm4805, %v8168, %v8169
    %v8171 = vrot.slane %v8141, 2
    %v8172 = vrot.slane %v8145, 2
    %v8173 = vsel %vm4805, %v8171, %v8172
    %v8174 = vrot.slane %v8146, 2
    %v8175 = vsel %vm4805, %v8163, %v8174
    %v8176 = vrot.slane %v8147, 2
    %v8177 = vsel %vm4805, %v8166, %v8176
    %v8178 = vrot.slane %v8148, 2
    %v8179 = vsel %vm4805, %v8169, %v8178
    %v8180 = vrot.slane %v8149, 2
    %v8181 = vsel %vm4805, %v8172, %v8180
    %8190 = vst [vmem:[%s9 + $0x40] sm:$0xff] %v8164
    %8191 = vst [vmem:[%s9 + $0x48] sm:$0xff] %v8167
    %8192 = vst [vmem:[%s9 + $0x50] sm:$0xff] %v8170
    %8193 = vst [vmem:[%s9 + $0x58] sm:$0xff] %v8173
    %8194 = vst [vmem:[%s9 + $0x60] sm:$0xff] %v8175
    %8195 = vst [vmem:[%s9 + $0x68] sm:$0xff] %v8177
    %8196 = vst [vmem:[%s9 + $0x70] sm:$0xff] %v8179
    %8197 = vst [vmem:[%s9 + $0x78] sm:$0xff] %v8181
    // Predicated region
    $region62: #{_basic_block_pallas.1} parent=1 // pred_check
      _
    $region63: #{_basic_block_pallas.1} parent=1 // pred_check_branch
      %8199 = sbr.rel (0) target = $region65
    $region64: #{_basic_block_pallas.1} parent=1 // pred_region
      _
    $region65: #{_basic_block_pallas.1} parent=1 // pred_fallthru
      _
    // Predicated region
    $region66: #{_basic_block_pallas.1} parent=1 // pred_check
      _
    $region67: #{_basic_block_pallas.1} parent=1 // pred_check_branch
      %8201 = sbr.rel (0) target = $region69
    $region68: #{_basic_block_pallas.1} parent=1 // pred_region
      _
    $region69: #{_basic_block_pallas.1} parent=1 // pred_fallthru
      _
    %8202 = vsyncpa [#allocation6], 1
    %8203 = vsyncpa [#allocation8], 1
    %8204 = vsyncpa [#allocation11], 1
    %8205 = vsyncpa [#allocation14], 1
  %8206 = vsyncmov [#allocation4]
  %s8207 = vpop.sfrf %8206
  %p8208 = scmp.eq.s32.totalorder %s8207, 0
  %p8209 = pneg %p8208
  %8211 = shalt.err (%p8209)

</llo_original>
